<compile_context>
chip_gen: v7x
topology: tpu7x:2x2x1
jax: 0.10.0
libtpu: 0.0.40
codegen_flags: <defaults>
</compile_context>

<pallas_src>
import functools

import numpy as np

import jax
import jax.numpy as jnp
from jax.experimental import pallas as pl
from jax.experimental.pallas import tpu as pltpu

EPS = 1e-5
C_PAD = 128                      # lane-width padding for every channel dim
K_IM2COL = 3 * C_PAD             # im2col contraction depth (3 taps x 128 ch)
NUM_LAYERS = 4
NUM_CONVS = 1 + NUM_LAYERS * 5   # stem + 4 x (conv1, ds, conv2, conv1', conv2')

_VMEM = pl.BlockSpec(memory_space=pltpu.MemorySpace.VMEM)
_ANY = pl.BlockSpec(memory_space=pl.ANY)


# ----------------------------------------------------------------------------
# Static plan shared by the wrapper (packing) and the kernel (consumption).
# ----------------------------------------------------------------------------
def _out_len(l_in, stride):
    # PyTorch Conv1d, kernel_size=3, padding=1.
    return (l_in - 1) // stride + 1


def _slab_taps(stride):
    # For stride 1 the centre tap is the identity -> no gather matrix needed.
    return (0, 1, 2) if stride != 1 else (0, 2)


def _tap_is_empty(l_in, l_out, stride, tap):
    # True when every output position of this tap falls into the conv zero-pad.
    return not any(0 <= j * stride + tap - 1 < l_in for j in range(l_out))


def _slab_plan(seq_len):
    """Ordered (l_in, stride) of every im2col slab the kernel builds."""
    plan = [(seq_len, 1)]                      # stem
    l = seq_len
    for _ in range(NUM_LAYERS):
        l_dn = _out_len(l, 2)
        #          conv1+ds     conv2        conv1'       conv2'
        plan += [(l, 2), (l_dn, 1), (l_dn, 1), (l_dn, 1)]
        l = l_dn
    return plan, l                             # l == final length


# ----------------------------------------------------------------------------
# Trace-time (numpy) constant builders: conv tap gathers and avg-pool matrix.
# ----------------------------------------------------------------------------
def _np_gather(batch, reg, l_in, l_out, stride, tap):
    """(B*reg, B*reg) 0/1 matrix: out row (b, j) <- in row (b, j*stride+tap-1)."""
    m = batch * reg
    g = np.zeros((m, m), np.float32)
    for b in range(batch):
        for j in range(l_out):
            p = j * stride + tap - 1
            if 0 <= p < l_in:
                g[b * reg + j, b * reg + p] = 1.0
    return g


def _np_pool(batch, reg, l):
    """(B*reg, B*reg): row b*reg <- mean over the l valid rows of batch b."""
    m = batch * reg
    g = np.zeros((m, m), np.float32)
    for b in range(batch):
        g[b * reg, b * reg:b * reg + l] = 1.0 / l
    return g


def _build_gathers(batch, seq_len):
    plan, l_final = _slab_plan(seq_len)
    mats = []
    for l_in, stride in plan:
        l_out = _out_len(l_in, stride)
        for tap in _slab_taps(stride):
            mats.append(_np_gather(batch, seq_len, l_in, l_out, stride, tap))
    if l_final > 1:            # AdaptiveAvgPool1d(1); skipped when l_final == 1
        mats.append(_np_pool(batch, seq_len, l_final))
    # Selection matrices are exact in bf16 (0/1 entries; 1/l only for the pool).
    return jnp.asarray(np.stack(mats), dtype=jnp.bfloat16)


# ----------------------------------------------------------------------------
# The single fused Pallas kernel: the whole ResNet1D forward pass.
# ----------------------------------------------------------------------------
def _resnet1d_kernel(x_ref, g_ref, gamma_ref, beta_ref, fcw_ref, fcb_ref,
                     w_hbm, o_ref, w_vmem, w_sem, *, batch, seq_len, half):
    """Whole network on one resident (B*L, 128) channels-last VMEM slab."""
    reg = seq_len                       # fixed per-batch row region length
    m_rows = batch * reg

    # ---- per-conv weight DMA: fire everything up front, wait just before use.
    def w_copy(i):
        return pltpu.make_async_copy(w_hbm.at[i], w_vmem.at[i], w_sem.at[i])

    for i in range(NUM_CONVS):
        w_copy(i).start()

    gather_i = [0]                      # running gather-matrix index
    conv_i = [0]                        # running conv / weight index
    valid_masks = {}                    # one tiny iota mask per distinct length

    def row_valid(l):
        # (m_rows, 128) bool; True on rows (b, j) with j < l.  Built once per
        # distinct length (<= 4 times total) -- negligible VALU work.
        if l not in valid_masks:
            r = jax.lax.broadcasted_iota(jnp.int32, (m_rows, C_PAD), 0)
            ok = None
            for b in range(batch):
                hit = (r >= b * reg) & (r < b * reg + l)
                ok = hit if ok is None else (ok | hit)
            valid_masks[l] = ok
        return valid_masks[l]

    def make_slab(h, l_in, stride):
        """(M, 384) bf16 im2col slab [tap0 | tap1 | tap2] and the out length."""
        l_out = _out_len(l_in, stride)
        hb = h.astype(jnp.bfloat16)
        pieces = []
        for tap in range(3):
            if stride == 1 and tap == 1:            # centre tap == identity
                pieces.append(hb)                   # (padded rows of h are 0)
                continue
            gi = gather_i[0]
            gather_i[0] += 1
            if _tap_is_empty(l_in, l_out, stride, tap):
                pieces.append(jnp.zeros_like(hb))   # fully in the conv zero-pad
            else:
                # 0/1 selection matmul (exact); pop f32, one cheap cast back.
                pieces.append(
                    jnp.dot(g_ref[gi], hb, preferred_element_type=jnp.float32
                            ).astype(jnp.bfloat16))
        return jnp.concatenate(pieces, axis=1), l_out

    def conv_bn(slab, l_out, relu, residual=None):
        """One K=384 im2col matmul + training-mode BatchNorm [+res] [+ReLU]."""
        ci = conv_i[0]
        conv_i[0] += 1
        w_copy(ci).wait()                           # only this conv's weights
        acc = jnp.dot(slab, w_vmem[ci], preferred_element_type=jnp.float32)

        # Single-pass batch statistics over the batch*l_out valid rows; rows
        # past the valid length in `acc` are exactly zero, so full-slab sums
        # are correct.  The Conv1d bias is omitted: BN's mean subtraction
        # cancels it exactly under batch statistics.
        n = float(batch * l_out)
        s1 = jnp.sum(acc, axis=0, keepdims=True)            # (1, 128)
        s2 = jnp.sum(acc * acc, axis=0, keepdims=True)       # (1, 128)
        mean = s1 * (1.0 / n)
        var = jnp.maximum(s2 * (1.0 / n) - mean * mean, 0.0)
        scale = gamma_ref[ci] * jax.lax.rsqrt(var + EPS)     # EUP rsqrt
        shift = beta_ref[ci] - mean * scale
        out = acc * scale + shift                            # one FMA pass
        if residual is not None:
            out = out + residual
        if relu:
            out = jnp.maximum(out, 0.0)
        if l_out < reg:               # keep rows past the valid length at zero
            out = jnp.where(row_valid(l_out), out, 0.0)
        return out

    h = x_ref[...]                      # (B*L, 128) f32, channels-last
    l = seq_len

    # Stem: conv + bn (the reference forward applies NO ReLU here).
    slab, l = make_slab(h, l, stride=1)
    h = conv_bn(slab, l, relu=False)

    for _ in range(NUM_LAYERS):
        # Block 0: stride 2; conv1 and the downsample conv share one slab.
        slab2, l_dn = make_slab(h, l, stride=2)
        out = conv_bn(slab2, l_dn, relu=True)                 # conv1/bn1/relu
        res = conv_bn(slab2, l_dn, relu=False)                # downsample conv/bn
        slab, _ = make_slab(out, l_dn, stride=1)
        h = conv_bn(slab, l_dn, relu=True, residual=res)      # conv2/bn2/+res/relu
        l = l_dn
        # Block 1: stride 1, identity residual.
        slab, _ = make_slab(h, l, stride=1)
        out = conv_bn(slab, l, relu=True)                     # conv1/bn1/relu
        slab, _ = make_slab(out, l, stride=1)
        h = conv_bn(slab, l, relu=True, residual=h)           # conv2/bn2/+res/relu

    # Head: AdaptiveAvgPool1d(1) (a no-op selection when l == 1), flatten,
    # Linear, then ReLU on the second half of the classes.
    if l == 1:
        feats = h                                             # valid rows at b*reg
    else:
        gi = gather_i[0]
        gather_i[0] += 1
        feats = jnp.dot(g_ref[gi], h.astype(jnp.bfloat16),
                        preferred_element_type=jnp.float32)
    logits = jnp.dot(feats.astype(jnp.bfloat16), fcw_ref[...],
                     preferred_element_type=jnp.float32) + fcb_ref[...]
    cols = jax.lax.broadcasted_iota(jnp.int32, logits.shape, 1)
    o_ref[...] = jnp.where(cols >= half, jnp.maximum(logits, 0.0), logits)


# ----------------------------------------------------------------------------
# Parameter packing / lane padding (pure data movement, JAX-side).
# ----------------------------------------------------------------------------
def _pad_conv_w(w):
    # w: (3, cin, cout) -> (3, 128, 128).  (A real PyTorch Conv1d weight of
    # shape (cout, cin, 3) maps here via w_jax[t, ci, co] = w_torch[co, ci, t].)
    _, cin, cout = w.shape
    return jnp.pad(w, ((0, 0), (0, C_PAD - cin), (0, C_PAD - cout)))


def _pad_row(v):
    return jnp.pad(v, (0, C_PAD - v.shape[0])).reshape(1, C_PAD)


def _pack_conv_params(params):
    """Flatten conv/BN params in EXACTLY the order the kernel consumes them."""
    convs = [params["stem"]]
    for blk0, blk1 in params["layers"]:
        convs += [blk0["conv1"], blk0["ds"], blk0["conv2"],
                  blk1["conv1"], blk1["conv2"]]
    assert len(convs) == NUM_CONVS
    # (NUM_CONVS, 3, 128, 128) -> (NUM_CONVS, 384, 128): rows are tap-major /
    # cin-minor, matching the [tap0 | tap1 | tap2] lane layout of the slab.
    w_all = jnp.stack([_pad_conv_w(w) for (w, _b, _g, _bt) in convs])
    w_all = w_all.reshape(NUM_CONVS, K_IM2COL, C_PAD).astype(jnp.bfloat16)
    gammas = jnp.stack([_pad_row(g) for (_w, _b, g, _bt) in convs])   # (21,1,128)
    betas = jnp.stack([_pad_row(bt) for (_w, _b, _g, bt) in convs])   # (21,1,128)
    return w_all, gammas, betas


def _cost_estimate(batch, seq_len, g_all):
    m = batch * seq_len
    plan, l_final = _slab_plan(seq_len)
    flops = NUM_CONVS * 2 * m * K_IM2COL * C_PAD          # im2col weight matmuls
    flops += 2 * m * C_PAD * C_PAD                        # fc
    n_gather = 0
    for l_in, stride in plan:
        l_out = _out_len(l_in, stride)
        for tap in _slab_taps(stride):
            if not _tap_is_empty(l_in, l_out, stride, tap):
                n_gather += 1
    if l_final > 1:
        n_gather += 1
    flops += n_gather * 2 * m * m * C_PAD                 # gather matmuls
    bytes_accessed = (2 * m * C_PAD * 4                   # x in + logits out
                      + NUM_CONVS * K_IM2COL * C_PAD * 2  # packed conv weights
                      + int(g_all.size) * 2               # gather matrices
                      + 2 * NUM_CONVS * C_PAD * 4         # gamma / beta
                      + C_PAD * C_PAD * 2 + C_PAD * 4)    # fc weight / bias
    return pl.CostEstimate(flops=int(flops),
                           transcendentals=int(NUM_CONVS * C_PAD),
                           bytes_accessed=int(bytes_accessed))


def resnet1d_forward(params, x, output_classes):
    """x: (B, C_in, L) in PyTorch NCW layout -> (B, output_classes)."""
    b, cin, l = x.shape
    assert cin <= C_PAD and output_classes <= C_PAD
    # NCW -> NWC, zero-pad channels to the 128-lane width, flatten to 2-D.
    h = jnp.transpose(x, (0, 2, 1)).astype(jnp.float32)
    h = jnp.pad(h, ((0, 0), (0, 0), (0, C_PAD - cin))).reshape(b * l, C_PAD)

    w_all, gammas, betas = _pack_conv_params(params)
    g_all = _build_gathers(b, l)
    feat, ncls = params["fc_w"].shape
    fcw = jnp.pad(params["fc_w"],
                  ((0, C_PAD - feat), (0, C_PAD - ncls))).astype(jnp.bfloat16)
    fcb = _pad_row(params["fc_b"])

    # Single fused, gridless call: the whole net in one TensorCore invocation
    # (VMEM footprint ~2.6 MiB, far under every generation's limit).  The
    # packed conv weights stay in HBM (ANY) and are DMA'd per conv inside the
    # kernel, overlapping the first layers' compute with the weight fetch.
    # TODO(synk): if B*L is scaled up, add an M-tiled "parallel" grid axis
    # (2 TCs on v7x) with a cross-tile sum/sumsq BatchNorm reduction.
    out = pl.pallas_call(
        functools.partial(_resnet1d_kernel, batch=b, seq_len=l,
                          half=output_classes // 2),
        out_shape=jax.ShapeDtypeStruct((b * l, C_PAD), jnp.float32),
        in_specs=[_VMEM, _VMEM, _VMEM, _VMEM, _VMEM, _VMEM, _ANY],
        out_specs=_VMEM,
        scratch_shapes=[pltpu.VMEM((NUM_CONVS, K_IM2COL, C_PAD), jnp.bfloat16),
                        pltpu.SemaphoreType.DMA((NUM_CONVS,))],
        cost_estimate=_cost_estimate(b, l, g_all),
    )(h, g_all, gammas, betas, fcw, fcb, w_all)

    # Pooled logits live at row 0 of each batch's 16-row region.
    return out.reshape(b, l, C_PAD)[:, 0, :output_classes]


# ----------------------------------------------------------------------------
# Parameter construction (deterministic, synthetic; mirrors the module layout).
# ----------------------------------------------------------------------------
def _init_conv_bn(key, cin, cout):
    kw, kb = jax.random.split(key)
    w = jax.random.normal(kw, (3, cin, cout), jnp.float32) / jnp.sqrt(3.0 * cin)
    # Conv1d(bias=True) bias kept for structural fidelity; it is an exact
    # no-op under training-mode BatchNorm, so the kernel never reads it.
    bias = 0.05 * jax.random.normal(kb, (cout,), jnp.float32)
    gamma = jnp.ones((cout,), jnp.float32)
    beta = jnp.zeros((cout,), jnp.float32)
    return (w, bias, gamma, beta)


def init_resnet1d_params(key, output_classes, input_channels=1,
                         start_channels=12):
    keys = iter(jax.random.split(key, 64))
    params = {"stem": _init_conv_bn(next(keys), input_channels, start_channels)}

    layers = []
    in_c = start_channels
    cur = start_channels
    for _ in range(NUM_LAYERS):
        out_c = cur
        blk0 = {"conv1": _init_conv_bn(next(keys), in_c, out_c),
                "conv2": _init_conv_bn(next(keys), out_c, out_c),
                "ds": _init_conv_bn(next(keys), in_c, out_c)}
        blk1 = {"conv1": _init_conv_bn(next(keys), out_c, out_c),
                "conv2": _init_conv_bn(next(keys), out_c, out_c)}
        layers.append([blk0, blk1])
        in_c = out_c
        cur *= 2
    params["layers"] = layers

    feat = start_channels * 8        # 96 for start_channels=12
    kfc, kfb = jax.random.split(next(keys))
    params["fc_w"] = jax.random.normal(kfc, (feat, output_classes),
                                       jnp.float32) / jnp.sqrt(float(feat))
    params["fc_b"] = 0.05 * jax.random.normal(kfb, (output_classes,),
                                              jnp.float32)
    return params


# ----------------------------------------------------------------------------
if __name__ == "__main__":
    OUTPUT_CLASSES = 6
    INPUT_CHANNELS = 1
    START_CHANNELS = 12
    B, L = 2, 16

    key = jax.random.PRNGKey(0)
    kx, kp = jax.random.split(key)
    x = jax.random.normal(kx, (B, INPUT_CHANNELS, L), jnp.float32)  # NCW
    params = init_resnet1d_params(kp, OUTPUT_CLASSES,
                                  input_channels=INPUT_CHANNELS,
                                  start_channels=START_CHANNELS)

    out = resnet1d_forward(params, x, OUTPUT_CLASSES)
    out = jax.block_until_ready(out)
    assert out.shape == (B, OUTPUT_CLASSES), out.shape
    assert bool(jnp.all(jnp.isfinite(out)))
    print("KERNEL_OK")
</pallas_src>

<mosaic_0001>
module attributes {stable_mosaic.version = 11 : i64} {
  func.func @_resnet1d_kernel(%arg0: memref<32x128xf32, #tpu.memory_space<vmem>>, %arg1: memref<38x32x32xbf16, #tpu.memory_space<vmem>>, %arg2: memref<21x1x128xf32, #tpu.memory_space<vmem>>, %arg3: memref<21x1x128xf32, #tpu.memory_space<vmem>>, %arg4: memref<128x128xbf16, #tpu.memory_space<vmem>>, %arg5: memref<1x128xf32, #tpu.memory_space<vmem>>, %arg6: memref<21x384x128xbf16, #tpu.memory_space<any>>, %arg7: memref<32x128xf32, #tpu.memory_space<vmem>>, %arg8: memref<21x384x128xbf16, #tpu.memory_space<vmem>>, %arg9: memref<21x!tpu.dma_semaphore, #tpu.memory_space<semaphore_mem>>) attributes {dimension_semantics = [], scalar_prefetch = 0 : i64, scratch_operands = 2 : i64, tpu.core_type = #tpu.core_type<tc>} {
    %c0_i32 = arith.constant 0 : i32
    %c0_i32_0 = arith.constant 0 : i32
    %c0_i32_1 = arith.constant 0 : i32
    %c0_i32_2 = arith.constant 0 : i32
    %c0_i32_3 = arith.constant 0 : i32
    %0 = tpu.memref_slice %arg6[%c0_i32, %c0_i32_2, %c0_i32_3] : memref<21x384x128xbf16, #tpu.memory_space<any>> -> memref<1x384x128xbf16, #tpu.memory_space<any>>
    %1 = tpu.memref_squeeze %0 : memref<1x384x128xbf16, #tpu.memory_space<any>> -> memref<384x128xbf16, #tpu.memory_space<any>>
    %c0_i32_4 = arith.constant 0 : i32
    %c0_i32_5 = arith.constant 0 : i32
    %2 = tpu.memref_slice %arg8[%c0_i32_0, %c0_i32_4, %c0_i32_5] : memref<21x384x128xbf16, #tpu.memory_space<vmem>> -> memref<1x384x128xbf16, #tpu.memory_space<vmem>>
    %3 = tpu.memref_squeeze %2 : memref<1x384x128xbf16, #tpu.memory_space<vmem>> -> memref<384x128xbf16, #tpu.memory_space<vmem>>
    %4 = tpu.memref_slice %arg9[%c0_i32_1] : memref<21x!tpu.dma_semaphore, #tpu.memory_space<semaphore_mem>> -> memref<1x!tpu.dma_semaphore, #tpu.memory_space<semaphore_mem>>
    %5 = tpu.memref_squeeze %4 : memref<1x!tpu.dma_semaphore, #tpu.memory_space<semaphore_mem>> -> memref<!tpu.dma_semaphore, #tpu.memory_space<semaphore_mem>>
    tpu.enqueue_dma source(%1 : memref<384x128xbf16, #tpu.memory_space<any>>) target(%3 : memref<384x128xbf16, #tpu.memory_space<vmem>>) target_semaphore(%5 : memref<!tpu.dma_semaphore, #tpu.memory_space<semaphore_mem>>)
    %c1_i32 = arith.constant 1 : i32
    %c1_i32_6 = arith.constant 1 : i32
    %c1_i32_7 = arith.constant 1 : i32
    %c0_i32_8 = arith.constant 0 : i32
    %c0_i32_9 = arith.constant 0 : i32
    %6 = tpu.memref_slice %arg6[%c1_i32, %c0_i32_8, %c0_i32_9] : memref<21x384x128xbf16, #tpu.memory_space<any>> -> memref<1x384x128xbf16, #tpu.memory_space<any>>
    %7 = tpu.memref_squeeze %6 : memref<1x384x128xbf16, #tpu.memory_space<any>> -> memref<384x128xbf16, #tpu.memory_space<any>>
    %c0_i32_10 = arith.constant 0 : i32
    %c0_i32_11 = arith.constant 0 : i32
    %8 = tpu.memref_slice %arg8[%c1_i32_6, %c0_i32_10, %c0_i32_11] : memref<21x384x128xbf16, #tpu.memory_space<vmem>> -> memref<1x384x128xbf16, #tpu.memory_space<vmem>>
    %9 = tpu.memref_squeeze %8 : memref<1x384x128xbf16, #tpu.memory_space<vmem>> -> memref<384x128xbf16, #tpu.memory_space<vmem>>
    %10 = tpu.memref_slice %arg9[%c1_i32_7] : memref<21x!tpu.dma_semaphore, #tpu.memory_space<semaphore_mem>> -> memref<1x!tpu.dma_semaphore, #tpu.memory_space<semaphore_mem>>
    %11 = tpu.memref_squeeze %10 : memref<1x!tpu.dma_semaphore, #tpu.memory_space<semaphore_mem>> -> memref<!tpu.dma_semaphore, #tpu.memory_space<semaphore_mem>>
    tpu.enqueue_dma source(%7 : memref<384x128xbf16, #tpu.memory_space<any>>) target(%9 : memref<384x128xbf16, #tpu.memory_space<vmem>>) target_semaphore(%11 : memref<!tpu.dma_semaphore, #tpu.memory_space<semaphore_mem>>)
    %c2_i32 = arith.constant 2 : i32
    %c2_i32_12 = arith.constant 2 : i32
    %c2_i32_13 = arith.constant 2 : i32
    %c0_i32_14 = arith.constant 0 : i32
    %c0_i32_15 = arith.constant 0 : i32
    %12 = tpu.memref_slice %arg6[%c2_i32, %c0_i32_14, %c0_i32_15] : memref<21x384x128xbf16, #tpu.memory_space<any>> -> memref<1x384x128xbf16, #tpu.memory_space<any>>
    %13 = tpu.memref_squeeze %12 : memref<1x384x128xbf16, #tpu.memory_space<any>> -> memref<384x128xbf16, #tpu.memory_space<any>>
    %c0_i32_16 = arith.constant 0 : i32
    %c0_i32_17 = arith.constant 0 : i32
    %14 = tpu.memref_slice %arg8[%c2_i32_12, %c0_i32_16, %c0_i32_17] : memref<21x384x128xbf16, #tpu.memory_space<vmem>> -> memref<1x384x128xbf16, #tpu.memory_space<vmem>>
    %15 = tpu.memref_squeeze %14 : memref<1x384x128xbf16, #tpu.memory_space<vmem>> -> memref<384x128xbf16, #tpu.memory_space<vmem>>
    %16 = tpu.memref_slice %arg9[%c2_i32_13] : memref<21x!tpu.dma_semaphore, #tpu.memory_space<semaphore_mem>> -> memref<1x!tpu.dma_semaphore, #tpu.memory_space<semaphore_mem>>
    %17 = tpu.memref_squeeze %16 : memref<1x!tpu.dma_semaphore, #tpu.memory_space<semaphore_mem>> -> memref<!tpu.dma_semaphore, #tpu.memory_space<semaphore_mem>>
    tpu.enqueue_dma source(%13 : memref<384x128xbf16, #tpu.memory_space<any>>) target(%15 : memref<384x128xbf16, #tpu.memory_space<vmem>>) target_semaphore(%17 : memref<!tpu.dma_semaphore, #tpu.memory_space<semaphore_mem>>)
    %c3_i32 = arith.constant 3 : i32
    %c3_i32_18 = arith.constant 3 : i32
    %c3_i32_19 = arith.constant 3 : i32
    %c0_i32_20 = arith.constant 0 : i32
    %c0_i32_21 = arith.constant 0 : i32
    %18 = tpu.memref_slice %arg6[%c3_i32, %c0_i32_20, %c0_i32_21] : memref<21x384x128xbf16, #tpu.memory_space<any>> -> memref<1x384x128xbf16, #tpu.memory_space<any>>
    %19 = tpu.memref_squeeze %18 : memref<1x384x128xbf16, #tpu.memory_space<any>> -> memref<384x128xbf16, #tpu.memory_space<any>>
    %c0_i32_22 = arith.constant 0 : i32
    %c0_i32_23 = arith.constant 0 : i32
    %20 = tpu.memref_slice %arg8[%c3_i32_18, %c0_i32_22, %c0_i32_23] : memref<21x384x128xbf16, #tpu.memory_space<vmem>> -> memref<1x384x128xbf16, #tpu.memory_space<vmem>>
    %21 = tpu.memref_squeeze %20 : memref<1x384x128xbf16, #tpu.memory_space<vmem>> -> memref<384x128xbf16, #tpu.memory_space<vmem>>
    %22 = tpu.memref_slice %arg9[%c3_i32_19] : memref<21x!tpu.dma_semaphore, #tpu.memory_space<semaphore_mem>> -> memref<1x!tpu.dma_semaphore, #tpu.memory_space<semaphore_mem>>
    %23 = tpu.memref_squeeze %22 : memref<1x!tpu.dma_semaphore, #tpu.memory_space<semaphore_mem>> -> memref<!tpu.dma_semaphore, #tpu.memory_space<semaphore_mem>>
    tpu.enqueue_dma source(%19 : memref<384x128xbf16, #tpu.memory_space<any>>) target(%21 : memref<384x128xbf16, #tpu.memory_space<vmem>>) target_semaphore(%23 : memref<!tpu.dma_semaphore, #tpu.memory_space<semaphore_mem>>)
    %c4_i32 = arith.constant 4 : i32
    %c4_i32_24 = arith.constant 4 : i32
    %c4_i32_25 = arith.constant 4 : i32
    %c0_i32_26 = arith.constant 0 : i32
    %c0_i32_27 = arith.constant 0 : i32
    %24 = tpu.memref_slice %arg6[%c4_i32, %c0_i32_26, %c0_i32_27] : memref<21x384x128xbf16, #tpu.memory_space<any>> -> memref<1x384x128xbf16, #tpu.memory_space<any>>
    %25 = tpu.memref_squeeze %24 : memref<1x384x128xbf16, #tpu.memory_space<any>> -> memref<384x128xbf16, #tpu.memory_space<any>>
    %c0_i32_28 = arith.constant 0 : i32
    %c0_i32_29 = arith.constant 0 : i32
    %26 = tpu.memref_slice %arg8[%c4_i32_24, %c0_i32_28, %c0_i32_29] : memref<21x384x128xbf16, #tpu.memory_space<vmem>> -> memref<1x384x128xbf16, #tpu.memory_space<vmem>>
    %27 = tpu.memref_squeeze %26 : memref<1x384x128xbf16, #tpu.memory_space<vmem>> -> memref<384x128xbf16, #tpu.memory_space<vmem>>
    %28 = tpu.memref_slice %arg9[%c4_i32_25] : memref<21x!tpu.dma_semaphore, #tpu.memory_space<semaphore_mem>> -> memref<1x!tpu.dma_semaphore, #tpu.memory_space<semaphore_mem>>
    %29 = tpu.memref_squeeze %28 : memref<1x!tpu.dma_semaphore, #tpu.memory_space<semaphore_mem>> -> memref<!tpu.dma_semaphore, #tpu.memory_space<semaphore_mem>>
    tpu.enqueue_dma source(%25 : memref<384x128xbf16, #tpu.memory_space<any>>) target(%27 : memref<384x128xbf16, #tpu.memory_space<vmem>>) target_semaphore(%29 : memref<!tpu.dma_semaphore, #tpu.memory_space<semaphore_mem>>)
    %c5_i32 = arith.constant 5 : i32
    %c5_i32_30 = arith.constant 5 : i32
    %c5_i32_31 = arith.constant 5 : i32
    %c0_i32_32 = arith.constant 0 : i32
    %c0_i32_33 = arith.constant 0 : i32
    %30 = tpu.memref_slice %arg6[%c5_i32, %c0_i32_32, %c0_i32_33] : memref<21x384x128xbf16, #tpu.memory_space<any>> -> memref<1x384x128xbf16, #tpu.memory_space<any>>
    %31 = tpu.memref_squeeze %30 : memref<1x384x128xbf16, #tpu.memory_space<any>> -> memref<384x128xbf16, #tpu.memory_space<any>>
    %c0_i32_34 = arith.constant 0 : i32
    %c0_i32_35 = arith.constant 0 : i32
    %32 = tpu.memref_slice %arg8[%c5_i32_30, %c0_i32_34, %c0_i32_35] : memref<21x384x128xbf16, #tpu.memory_space<vmem>> -> memref<1x384x128xbf16, #tpu.memory_space<vmem>>
    %33 = tpu.memref_squeeze %32 : memref<1x384x128xbf16, #tpu.memory_space<vmem>> -> memref<384x128xbf16, #tpu.memory_space<vmem>>
    %34 = tpu.memref_slice %arg9[%c5_i32_31] : memref<21x!tpu.dma_semaphore, #tpu.memory_space<semaphore_mem>> -> memref<1x!tpu.dma_semaphore, #tpu.memory_space<semaphore_mem>>
    %35 = tpu.memref_squeeze %34 : memref<1x!tpu.dma_semaphore, #tpu.memory_space<semaphore_mem>> -> memref<!tpu.dma_semaphore, #tpu.memory_space<semaphore_mem>>
    tpu.enqueue_dma source(%31 : memref<384x128xbf16, #tpu.memory_space<any>>) target(%33 : memref<384x128xbf16, #tpu.memory_space<vmem>>) target_semaphore(%35 : memref<!tpu.dma_semaphore, #tpu.memory_space<semaphore_mem>>)
    %c6_i32 = arith.constant 6 : i32
    %c6_i32_36 = arith.constant 6 : i32
    %c6_i32_37 = arith.constant 6 : i32
    %c0_i32_38 = arith.constant 0 : i32
    %c0_i32_39 = arith.constant 0 : i32
    %36 = tpu.memref_slice %arg6[%c6_i32, %c0_i32_38, %c0_i32_39] : memref<21x384x128xbf16, #tpu.memory_space<any>> -> memref<1x384x128xbf16, #tpu.memory_space<any>>
    %37 = tpu.memref_squeeze %36 : memref<1x384x128xbf16, #tpu.memory_space<any>> -> memref<384x128xbf16, #tpu.memory_space<any>>
    %c0_i32_40 = arith.constant 0 : i32
    %c0_i32_41 = arith.constant 0 : i32
    %38 = tpu.memref_slice %arg8[%c6_i32_36, %c0_i32_40, %c0_i32_41] : memref<21x384x128xbf16, #tpu.memory_space<vmem>> -> memref<1x384x128xbf16, #tpu.memory_space<vmem>>
    %39 = tpu.memref_squeeze %38 : memref<1x384x128xbf16, #tpu.memory_space<vmem>> -> memref<384x128xbf16, #tpu.memory_space<vmem>>
    %40 = tpu.memref_slice %arg9[%c6_i32_37] : memref<21x!tpu.dma_semaphore, #tpu.memory_space<semaphore_mem>> -> memref<1x!tpu.dma_semaphore, #tpu.memory_space<semaphore_mem>>
    %41 = tpu.memref_squeeze %40 : memref<1x!tpu.dma_semaphore, #tpu.memory_space<semaphore_mem>> -> memref<!tpu.dma_semaphore, #tpu.memory_space<semaphore_mem>>
    tpu.enqueue_dma source(%37 : memref<384x128xbf16, #tpu.memory_space<any>>) target(%39 : memref<384x128xbf16, #tpu.memory_space<vmem>>) target_semaphore(%41 : memref<!tpu.dma_semaphore, #tpu.memory_space<semaphore_mem>>)
    %c7_i32 = arith.constant 7 : i32
    %c7_i32_42 = arith.constant 7 : i32
    %c7_i32_43 = arith.constant 7 : i32
    %c0_i32_44 = arith.constant 0 : i32
    %c0_i32_45 = arith.constant 0 : i32
    %42 = tpu.memref_slice %arg6[%c7_i32, %c0_i32_44, %c0_i32_45] : memref<21x384x128xbf16, #tpu.memory_space<any>> -> memref<1x384x128xbf16, #tpu.memory_space<any>>
    %43 = tpu.memref_squeeze %42 : memref<1x384x128xbf16, #tpu.memory_space<any>> -> memref<384x128xbf16, #tpu.memory_space<any>>
    %c0_i32_46 = arith.constant 0 : i32
    %c0_i32_47 = arith.constant 0 : i32
    %44 = tpu.memref_slice %arg8[%c7_i32_42, %c0_i32_46, %c0_i32_47] : memref<21x384x128xbf16, #tpu.memory_space<vmem>> -> memref<1x384x128xbf16, #tpu.memory_space<vmem>>
    %45 = tpu.memref_squeeze %44 : memref<1x384x128xbf16, #tpu.memory_space<vmem>> -> memref<384x128xbf16, #tpu.memory_space<vmem>>
    %46 = tpu.memref_slice %arg9[%c7_i32_43] : memref<21x!tpu.dma_semaphore, #tpu.memory_space<semaphore_mem>> -> memref<1x!tpu.dma_semaphore, #tpu.memory_space<semaphore_mem>>
    %47 = tpu.memref_squeeze %46 : memref<1x!tpu.dma_semaphore, #tpu.memory_space<semaphore_mem>> -> memref<!tpu.dma_semaphore, #tpu.memory_space<semaphore_mem>>
    tpu.enqueue_dma source(%43 : memref<384x128xbf16, #tpu.memory_space<any>>) target(%45 : memref<384x128xbf16, #tpu.memory_space<vmem>>) target_semaphore(%47 : memref<!tpu.dma_semaphore, #tpu.memory_space<semaphore_mem>>)
    %c8_i32 = arith.constant 8 : i32
    %c8_i32_48 = arith.constant 8 : i32
    %c8_i32_49 = arith.constant 8 : i32
    %c0_i32_50 = arith.constant 0 : i32
    %c0_i32_51 = arith.constant 0 : i32
    %48 = tpu.memref_slice %arg6[%c8_i32, %c0_i32_50, %c0_i32_51] : memref<21x384x128xbf16, #tpu.memory_space<any>> -> memref<1x384x128xbf16, #tpu.memory_space<any>>
    %49 = tpu.memref_squeeze %48 : memref<1x384x128xbf16, #tpu.memory_space<any>> -> memref<384x128xbf16, #tpu.memory_space<any>>
    %c0_i32_52 = arith.constant 0 : i32
    %c0_i32_53 = arith.constant 0 : i32
    %50 = tpu.memref_slice %arg8[%c8_i32_48, %c0_i32_52, %c0_i32_53] : memref<21x384x128xbf16, #tpu.memory_space<vmem>> -> memref<1x384x128xbf16, #tpu.memory_space<vmem>>
    %51 = tpu.memref_squeeze %50 : memref<1x384x128xbf16, #tpu.memory_space<vmem>> -> memref<384x128xbf16, #tpu.memory_space<vmem>>
    %52 = tpu.memref_slice %arg9[%c8_i32_49] : memref<21x!tpu.dma_semaphore, #tpu.memory_space<semaphore_mem>> -> memref<1x!tpu.dma_semaphore, #tpu.memory_space<semaphore_mem>>
    %53 = tpu.memref_squeeze %52 : memref<1x!tpu.dma_semaphore, #tpu.memory_space<semaphore_mem>> -> memref<!tpu.dma_semaphore, #tpu.memory_space<semaphore_mem>>
    tpu.enqueue_dma source(%49 : memref<384x128xbf16, #tpu.memory_space<any>>) target(%51 : memref<384x128xbf16, #tpu.memory_space<vmem>>) target_semaphore(%53 : memref<!tpu.dma_semaphore, #tpu.memory_space<semaphore_mem>>)
    %c9_i32 = arith.constant 9 : i32
    %c9_i32_54 = arith.constant 9 : i32
    %c9_i32_55 = arith.constant 9 : i32
    %c0_i32_56 = arith.constant 0 : i32
    %c0_i32_57 = arith.constant 0 : i32
    %54 = tpu.memref_slice %arg6[%c9_i32, %c0_i32_56, %c0_i32_57] : memref<21x384x128xbf16, #tpu.memory_space<any>> -> memref<1x384x128xbf16, #tpu.memory_space<any>>
    %55 = tpu.memref_squeeze %54 : memref<1x384x128xbf16, #tpu.memory_space<any>> -> memref<384x128xbf16, #tpu.memory_space<any>>
    %c0_i32_58 = arith.constant 0 : i32
    %c0_i32_59 = arith.constant 0 : i32
    %56 = tpu.memref_slice %arg8[%c9_i32_54, %c0_i32_58, %c0_i32_59] : memref<21x384x128xbf16, #tpu.memory_space<vmem>> -> memref<1x384x128xbf16, #tpu.memory_space<vmem>>
    %57 = tpu.memref_squeeze %56 : memref<1x384x128xbf16, #tpu.memory_space<vmem>> -> memref<384x128xbf16, #tpu.memory_space<vmem>>
    %58 = tpu.memref_slice %arg9[%c9_i32_55] : memref<21x!tpu.dma_semaphore, #tpu.memory_space<semaphore_mem>> -> memref<1x!tpu.dma_semaphore, #tpu.memory_space<semaphore_mem>>
    %59 = tpu.memref_squeeze %58 : memref<1x!tpu.dma_semaphore, #tpu.memory_space<semaphore_mem>> -> memref<!tpu.dma_semaphore, #tpu.memory_space<semaphore_mem>>
    tpu.enqueue_dma source(%55 : memref<384x128xbf16, #tpu.memory_space<any>>) target(%57 : memref<384x128xbf16, #tpu.memory_space<vmem>>) target_semaphore(%59 : memref<!tpu.dma_semaphore, #tpu.memory_space<semaphore_mem>>)
    %c10_i32 = arith.constant 10 : i32
    %c10_i32_60 = arith.constant 10 : i32
    %c10_i32_61 = arith.constant 10 : i32
    %c0_i32_62 = arith.constant 0 : i32
    %c0_i32_63 = arith.constant 0 : i32
    %60 = tpu.memref_slice %arg6[%c10_i32, %c0_i32_62, %c0_i32_63] : memref<21x384x128xbf16, #tpu.memory_space<any>> -> memref<1x384x128xbf16, #tpu.memory_space<any>>
    %61 = tpu.memref_squeeze %60 : memref<1x384x128xbf16, #tpu.memory_space<any>> -> memref<384x128xbf16, #tpu.memory_space<any>>
    %c0_i32_64 = arith.constant 0 : i32
    %c0_i32_65 = arith.constant 0 : i32
    %62 = tpu.memref_slice %arg8[%c10_i32_60, %c0_i32_64, %c0_i32_65] : memref<21x384x128xbf16, #tpu.memory_space<vmem>> -> memref<1x384x128xbf16, #tpu.memory_space<vmem>>
    %63 = tpu.memref_squeeze %62 : memref<1x384x128xbf16, #tpu.memory_space<vmem>> -> memref<384x128xbf16, #tpu.memory_space<vmem>>
    %64 = tpu.memref_slice %arg9[%c10_i32_61] : memref<21x!tpu.dma_semaphore, #tpu.memory_space<semaphore_mem>> -> memref<1x!tpu.dma_semaphore, #tpu.memory_space<semaphore_mem>>
    %65 = tpu.memref_squeeze %64 : memref<1x!tpu.dma_semaphore, #tpu.memory_space<semaphore_mem>> -> memref<!tpu.dma_semaphore, #tpu.memory_space<semaphore_mem>>
    tpu.enqueue_dma source(%61 : memref<384x128xbf16, #tpu.memory_space<any>>) target(%63 : memref<384x128xbf16, #tpu.memory_space<vmem>>) target_semaphore(%65 : memref<!tpu.dma_semaphore, #tpu.memory_space<semaphore_mem>>)
    %c11_i32 = arith.constant 11 : i32
    %c11_i32_66 = arith.constant 11 : i32
    %c11_i32_67 = arith.constant 11 : i32
    %c0_i32_68 = arith.constant 0 : i32
    %c0_i32_69 = arith.constant 0 : i32
    %66 = tpu.memref_slice %arg6[%c11_i32, %c0_i32_68, %c0_i32_69] : memref<21x384x128xbf16, #tpu.memory_space<any>> -> memref<1x384x128xbf16, #tpu.memory_space<any>>
    %67 = tpu.memref_squeeze %66 : memref<1x384x128xbf16, #tpu.memory_space<any>> -> memref<384x128xbf16, #tpu.memory_space<any>>
    %c0_i32_70 = arith.constant 0 : i32
    %c0_i32_71 = arith.constant 0 : i32
    %68 = tpu.memref_slice %arg8[%c11_i32_66, %c0_i32_70, %c0_i32_71] : memref<21x384x128xbf16, #tpu.memory_space<vmem>> -> memref<1x384x128xbf16, #tpu.memory_space<vmem>>
    %69 = tpu.memref_squeeze %68 : memref<1x384x128xbf16, #tpu.memory_space<vmem>> -> memref<384x128xbf16, #tpu.memory_space<vmem>>
    %70 = tpu.memref_slice %arg9[%c11_i32_67] : memref<21x!tpu.dma_semaphore, #tpu.memory_space<semaphore_mem>> -> memref<1x!tpu.dma_semaphore, #tpu.memory_space<semaphore_mem>>
    %71 = tpu.memref_squeeze %70 : memref<1x!tpu.dma_semaphore, #tpu.memory_space<semaphore_mem>> -> memref<!tpu.dma_semaphore, #tpu.memory_space<semaphore_mem>>
    tpu.enqueue_dma source(%67 : memref<384x128xbf16, #tpu.memory_space<any>>) target(%69 : memref<384x128xbf16, #tpu.memory_space<vmem>>) target_semaphore(%71 : memref<!tpu.dma_semaphore, #tpu.memory_space<semaphore_mem>>)
    %c12_i32 = arith.constant 12 : i32
    %c12_i32_72 = arith.constant 12 : i32
    %c12_i32_73 = arith.constant 12 : i32
    %c0_i32_74 = arith.constant 0 : i32
    %c0_i32_75 = arith.constant 0 : i32
    %72 = tpu.memref_slice %arg6[%c12_i32, %c0_i32_74, %c0_i32_75] : memref<21x384x128xbf16, #tpu.memory_space<any>> -> memref<1x384x128xbf16, #tpu.memory_space<any>>
    %73 = tpu.memref_squeeze %72 : memref<1x384x128xbf16, #tpu.memory_space<any>> -> memref<384x128xbf16, #tpu.memory_space<any>>
    %c0_i32_76 = arith.constant 0 : i32
    %c0_i32_77 = arith.constant 0 : i32
    %74 = tpu.memref_slice %arg8[%c12_i32_72, %c0_i32_76, %c0_i32_77] : memref<21x384x128xbf16, #tpu.memory_space<vmem>> -> memref<1x384x128xbf16, #tpu.memory_space<vmem>>
    %75 = tpu.memref_squeeze %74 : memref<1x384x128xbf16, #tpu.memory_space<vmem>> -> memref<384x128xbf16, #tpu.memory_space<vmem>>
    %76 = tpu.memref_slice %arg9[%c12_i32_73] : memref<21x!tpu.dma_semaphore, #tpu.memory_space<semaphore_mem>> -> memref<1x!tpu.dma_semaphore, #tpu.memory_space<semaphore_mem>>
    %77 = tpu.memref_squeeze %76 : memref<1x!tpu.dma_semaphore, #tpu.memory_space<semaphore_mem>> -> memref<!tpu.dma_semaphore, #tpu.memory_space<semaphore_mem>>
    tpu.enqueue_dma source(%73 : memref<384x128xbf16, #tpu.memory_space<any>>) target(%75 : memref<384x128xbf16, #tpu.memory_space<vmem>>) target_semaphore(%77 : memref<!tpu.dma_semaphore, #tpu.memory_space<semaphore_mem>>)
    %c13_i32 = arith.constant 13 : i32
    %c13_i32_78 = arith.constant 13 : i32
    %c13_i32_79 = arith.constant 13 : i32
    %c0_i32_80 = arith.constant 0 : i32
    %c0_i32_81 = arith.constant 0 : i32
    %78 = tpu.memref_slice %arg6[%c13_i32, %c0_i32_80, %c0_i32_81] : memref<21x384x128xbf16, #tpu.memory_space<any>> -> memref<1x384x128xbf16, #tpu.memory_space<any>>
    %79 = tpu.memref_squeeze %78 : memref<1x384x128xbf16, #tpu.memory_space<any>> -> memref<384x128xbf16, #tpu.memory_space<any>>
    %c0_i32_82 = arith.constant 0 : i32
    %c0_i32_83 = arith.constant 0 : i32
    %80 = tpu.memref_slice %arg8[%c13_i32_78, %c0_i32_82, %c0_i32_83] : memref<21x384x128xbf16, #tpu.memory_space<vmem>> -> memref<1x384x128xbf16, #tpu.memory_space<vmem>>
    %81 = tpu.memref_squeeze %80 : memref<1x384x128xbf16, #tpu.memory_space<vmem>> -> memref<384x128xbf16, #tpu.memory_space<vmem>>
    %82 = tpu.memref_slice %arg9[%c13_i32_79] : memref<21x!tpu.dma_semaphore, #tpu.memory_space<semaphore_mem>> -> memref<1x!tpu.dma_semaphore, #tpu.memory_space<semaphore_mem>>
    %83 = tpu.memref_squeeze %82 : memref<1x!tpu.dma_semaphore, #tpu.memory_space<semaphore_mem>> -> memref<!tpu.dma_semaphore, #tpu.memory_space<semaphore_mem>>
    tpu.enqueue_dma source(%79 : memref<384x128xbf16, #tpu.memory_space<any>>) target(%81 : memref<384x128xbf16, #tpu.memory_space<vmem>>) target_semaphore(%83 : memref<!tpu.dma_semaphore, #tpu.memory_space<semaphore_mem>>)
    %c14_i32 = arith.constant 14 : i32
    %c14_i32_84 = arith.constant 14 : i32
    %c14_i32_85 = arith.constant 14 : i32
    %c0_i32_86 = arith.constant 0 : i32
    %c0_i32_87 = arith.constant 0 : i32
    %84 = tpu.memref_slice %arg6[%c14_i32, %c0_i32_86, %c0_i32_87] : memref<21x384x128xbf16, #tpu.memory_space<any>> -> memref<1x384x128xbf16, #tpu.memory_space<any>>
    %85 = tpu.memref_squeeze %84 : memref<1x384x128xbf16, #tpu.memory_space<any>> -> memref<384x128xbf16, #tpu.memory_space<any>>
    %c0_i32_88 = arith.constant 0 : i32
    %c0_i32_89 = arith.constant 0 : i32
    %86 = tpu.memref_slice %arg8[%c14_i32_84, %c0_i32_88, %c0_i32_89] : memref<21x384x128xbf16, #tpu.memory_space<vmem>> -> memref<1x384x128xbf16, #tpu.memory_space<vmem>>
    %87 = tpu.memref_squeeze %86 : memref<1x384x128xbf16, #tpu.memory_space<vmem>> -> memref<384x128xbf16, #tpu.memory_space<vmem>>
    %88 = tpu.memref_slice %arg9[%c14_i32_85] : memref<21x!tpu.dma_semaphore, #tpu.memory_space<semaphore_mem>> -> memref<1x!tpu.dma_semaphore, #tpu.memory_space<semaphore_mem>>
    %89 = tpu.memref_squeeze %88 : memref<1x!tpu.dma_semaphore, #tpu.memory_space<semaphore_mem>> -> memref<!tpu.dma_semaphore, #tpu.memory_space<semaphore_mem>>
    tpu.enqueue_dma source(%85 : memref<384x128xbf16, #tpu.memory_space<any>>) target(%87 : memref<384x128xbf16, #tpu.memory_space<vmem>>) target_semaphore(%89 : memref<!tpu.dma_semaphore, #tpu.memory_space<semaphore_mem>>)
    %c15_i32 = arith.constant 15 : i32
    %c15_i32_90 = arith.constant 15 : i32
    %c15_i32_91 = arith.constant 15 : i32
    %c0_i32_92 = arith.constant 0 : i32
    %c0_i32_93 = arith.constant 0 : i32
    %90 = tpu.memref_slice %arg6[%c15_i32, %c0_i32_92, %c0_i32_93] : memref<21x384x128xbf16, #tpu.memory_space<any>> -> memref<1x384x128xbf16, #tpu.memory_space<any>>
    %91 = tpu.memref_squeeze %90 : memref<1x384x128xbf16, #tpu.memory_space<any>> -> memref<384x128xbf16, #tpu.memory_space<any>>
    %c0_i32_94 = arith.constant 0 : i32
    %c0_i32_95 = arith.constant 0 : i32
    %92 = tpu.memref_slice %arg8[%c15_i32_90, %c0_i32_94, %c0_i32_95] : memref<21x384x128xbf16, #tpu.memory_space<vmem>> -> memref<1x384x128xbf16, #tpu.memory_space<vmem>>
    %93 = tpu.memref_squeeze %92 : memref<1x384x128xbf16, #tpu.memory_space<vmem>> -> memref<384x128xbf16, #tpu.memory_space<vmem>>
    %94 = tpu.memref_slice %arg9[%c15_i32_91] : memref<21x!tpu.dma_semaphore, #tpu.memory_space<semaphore_mem>> -> memref<1x!tpu.dma_semaphore, #tpu.memory_space<semaphore_mem>>
    %95 = tpu.memref_squeeze %94 : memref<1x!tpu.dma_semaphore, #tpu.memory_space<semaphore_mem>> -> memref<!tpu.dma_semaphore, #tpu.memory_space<semaphore_mem>>
    tpu.enqueue_dma source(%91 : memref<384x128xbf16, #tpu.memory_space<any>>) target(%93 : memref<384x128xbf16, #tpu.memory_space<vmem>>) target_semaphore(%95 : memref<!tpu.dma_semaphore, #tpu.memory_space<semaphore_mem>>)
    %c16_i32 = arith.constant 16 : i32
    %c16_i32_96 = arith.constant 16 : i32
    %c16_i32_97 = arith.constant 16 : i32
    %c0_i32_98 = arith.constant 0 : i32
    %c0_i32_99 = arith.constant 0 : i32
    %96 = tpu.memref_slice %arg6[%c16_i32, %c0_i32_98, %c0_i32_99] : memref<21x384x128xbf16, #tpu.memory_space<any>> -> memref<1x384x128xbf16, #tpu.memory_space<any>>
    %97 = tpu.memref_squeeze %96 : memref<1x384x128xbf16, #tpu.memory_space<any>> -> memref<384x128xbf16, #tpu.memory_space<any>>
    %c0_i32_100 = arith.constant 0 : i32
    %c0_i32_101 = arith.constant 0 : i32
    %98 = tpu.memref_slice %arg8[%c16_i32_96, %c0_i32_100, %c0_i32_101] : memref<21x384x128xbf16, #tpu.memory_space<vmem>> -> memref<1x384x128xbf16, #tpu.memory_space<vmem>>
    %99 = tpu.memref_squeeze %98 : memref<1x384x128xbf16, #tpu.memory_space<vmem>> -> memref<384x128xbf16, #tpu.memory_space<vmem>>
    %100 = tpu.memref_slice %arg9[%c16_i32_97] : memref<21x!tpu.dma_semaphore, #tpu.memory_space<semaphore_mem>> -> memref<1x!tpu.dma_semaphore, #tpu.memory_space<semaphore_mem>>
    %101 = tpu.memref_squeeze %100 : memref<1x!tpu.dma_semaphore, #tpu.memory_space<semaphore_mem>> -> memref<!tpu.dma_semaphore, #tpu.memory_space<semaphore_mem>>
    tpu.enqueue_dma source(%97 : memref<384x128xbf16, #tpu.memory_space<any>>) target(%99 : memref<384x128xbf16, #tpu.memory_space<vmem>>) target_semaphore(%101 : memref<!tpu.dma_semaphore, #tpu.memory_space<semaphore_mem>>)
    %c17_i32 = arith.constant 17 : i32
    %c17_i32_102 = arith.constant 17 : i32
    %c17_i32_103 = arith.constant 17 : i32
    %c0_i32_104 = arith.constant 0 : i32
    %c0_i32_105 = arith.constant 0 : i32
    %102 = tpu.memref_slice %arg6[%c17_i32, %c0_i32_104, %c0_i32_105] : memref<21x384x128xbf16, #tpu.memory_space<any>> -> memref<1x384x128xbf16, #tpu.memory_space<any>>
    %103 = tpu.memref_squeeze %102 : memref<1x384x128xbf16, #tpu.memory_space<any>> -> memref<384x128xbf16, #tpu.memory_space<any>>
    %c0_i32_106 = arith.constant 0 : i32
    %c0_i32_107 = arith.constant 0 : i32
    %104 = tpu.memref_slice %arg8[%c17_i32_102, %c0_i32_106, %c0_i32_107] : memref<21x384x128xbf16, #tpu.memory_space<vmem>> -> memref<1x384x128xbf16, #tpu.memory_space<vmem>>
    %105 = tpu.memref_squeeze %104 : memref<1x384x128xbf16, #tpu.memory_space<vmem>> -> memref<384x128xbf16, #tpu.memory_space<vmem>>
    %106 = tpu.memref_slice %arg9[%c17_i32_103] : memref<21x!tpu.dma_semaphore, #tpu.memory_space<semaphore_mem>> -> memref<1x!tpu.dma_semaphore, #tpu.memory_space<semaphore_mem>>
    %107 = tpu.memref_squeeze %106 : memref<1x!tpu.dma_semaphore, #tpu.memory_space<semaphore_mem>> -> memref<!tpu.dma_semaphore, #tpu.memory_space<semaphore_mem>>
    tpu.enqueue_dma source(%103 : memref<384x128xbf16, #tpu.memory_space<any>>) target(%105 : memref<384x128xbf16, #tpu.memory_space<vmem>>) target_semaphore(%107 : memref<!tpu.dma_semaphore, #tpu.memory_space<semaphore_mem>>)
    %c18_i32 = arith.constant 18 : i32
    %c18_i32_108 = arith.constant 18 : i32
    %c18_i32_109 = arith.constant 18 : i32
    %c0_i32_110 = arith.constant 0 : i32
    %c0_i32_111 = arith.constant 0 : i32
    %108 = tpu.memref_slice %arg6[%c18_i32, %c0_i32_110, %c0_i32_111] : memref<21x384x128xbf16, #tpu.memory_space<any>> -> memref<1x384x128xbf16, #tpu.memory_space<any>>
    %109 = tpu.memref_squeeze %108 : memref<1x384x128xbf16, #tpu.memory_space<any>> -> memref<384x128xbf16, #tpu.memory_space<any>>
    %c0_i32_112 = arith.constant 0 : i32
    %c0_i32_113 = arith.constant 0 : i32
    %110 = tpu.memref_slice %arg8[%c18_i32_108, %c0_i32_112, %c0_i32_113] : memref<21x384x128xbf16, #tpu.memory_space<vmem>> -> memref<1x384x128xbf16, #tpu.memory_space<vmem>>
    %111 = tpu.memref_squeeze %110 : memref<1x384x128xbf16, #tpu.memory_space<vmem>> -> memref<384x128xbf16, #tpu.memory_space<vmem>>
    %112 = tpu.memref_slice %arg9[%c18_i32_109] : memref<21x!tpu.dma_semaphore, #tpu.memory_space<semaphore_mem>> -> memref<1x!tpu.dma_semaphore, #tpu.memory_space<semaphore_mem>>
    %113 = tpu.memref_squeeze %112 : memref<1x!tpu.dma_semaphore, #tpu.memory_space<semaphore_mem>> -> memref<!tpu.dma_semaphore, #tpu.memory_space<semaphore_mem>>
    tpu.enqueue_dma source(%109 : memref<384x128xbf16, #tpu.memory_space<any>>) target(%111 : memref<384x128xbf16, #tpu.memory_space<vmem>>) target_semaphore(%113 : memref<!tpu.dma_semaphore, #tpu.memory_space<semaphore_mem>>)
    %c19_i32 = arith.constant 19 : i32
    %c19_i32_114 = arith.constant 19 : i32
    %c19_i32_115 = arith.constant 19 : i32
    %c0_i32_116 = arith.constant 0 : i32
    %c0_i32_117 = arith.constant 0 : i32
    %114 = tpu.memref_slice %arg6[%c19_i32, %c0_i32_116, %c0_i32_117] : memref<21x384x128xbf16, #tpu.memory_space<any>> -> memref<1x384x128xbf16, #tpu.memory_space<any>>
    %115 = tpu.memref_squeeze %114 : memref<1x384x128xbf16, #tpu.memory_space<any>> -> memref<384x128xbf16, #tpu.memory_space<any>>
    %c0_i32_118 = arith.constant 0 : i32
    %c0_i32_119 = arith.constant 0 : i32
    %116 = tpu.memref_slice %arg8[%c19_i32_114, %c0_i32_118, %c0_i32_119] : memref<21x384x128xbf16, #tpu.memory_space<vmem>> -> memref<1x384x128xbf16, #tpu.memory_space<vmem>>
    %117 = tpu.memref_squeeze %116 : memref<1x384x128xbf16, #tpu.memory_space<vmem>> -> memref<384x128xbf16, #tpu.memory_space<vmem>>
    %118 = tpu.memref_slice %arg9[%c19_i32_115] : memref<21x!tpu.dma_semaphore, #tpu.memory_space<semaphore_mem>> -> memref<1x!tpu.dma_semaphore, #tpu.memory_space<semaphore_mem>>
    %119 = tpu.memref_squeeze %118 : memref<1x!tpu.dma_semaphore, #tpu.memory_space<semaphore_mem>> -> memref<!tpu.dma_semaphore, #tpu.memory_space<semaphore_mem>>
    tpu.enqueue_dma source(%115 : memref<384x128xbf16, #tpu.memory_space<any>>) target(%117 : memref<384x128xbf16, #tpu.memory_space<vmem>>) target_semaphore(%119 : memref<!tpu.dma_semaphore, #tpu.memory_space<semaphore_mem>>)
    %c20_i32 = arith.constant 20 : i32
    %c20_i32_120 = arith.constant 20 : i32
    %c20_i32_121 = arith.constant 20 : i32
    %c0_i32_122 = arith.constant 0 : i32
    %c0_i32_123 = arith.constant 0 : i32
    %120 = tpu.memref_slice %arg6[%c20_i32, %c0_i32_122, %c0_i32_123] : memref<21x384x128xbf16, #tpu.memory_space<any>> -> memref<1x384x128xbf16, #tpu.memory_space<any>>
    %121 = tpu.memref_squeeze %120 : memref<1x384x128xbf16, #tpu.memory_space<any>> -> memref<384x128xbf16, #tpu.memory_space<any>>
    %c0_i32_124 = arith.constant 0 : i32
    %c0_i32_125 = arith.constant 0 : i32
    %122 = tpu.memref_slice %arg8[%c20_i32_120, %c0_i32_124, %c0_i32_125] : memref<21x384x128xbf16, #tpu.memory_space<vmem>> -> memref<1x384x128xbf16, #tpu.memory_space<vmem>>
    %123 = tpu.memref_squeeze %122 : memref<1x384x128xbf16, #tpu.memory_space<vmem>> -> memref<384x128xbf16, #tpu.memory_space<vmem>>
    %124 = tpu.memref_slice %arg9[%c20_i32_121] : memref<21x!tpu.dma_semaphore, #tpu.memory_space<semaphore_mem>> -> memref<1x!tpu.dma_semaphore, #tpu.memory_space<semaphore_mem>>
    %125 = tpu.memref_squeeze %124 : memref<1x!tpu.dma_semaphore, #tpu.memory_space<semaphore_mem>> -> memref<!tpu.dma_semaphore, #tpu.memory_space<semaphore_mem>>
    tpu.enqueue_dma source(%121 : memref<384x128xbf16, #tpu.memory_space<any>>) target(%123 : memref<384x128xbf16, #tpu.memory_space<vmem>>) target_semaphore(%125 : memref<!tpu.dma_semaphore, #tpu.memory_space<semaphore_mem>>)
    %c0 = arith.constant 0 : index
    %c0_126 = arith.constant 0 : index
    %126 = vector.load %arg0[%c0, %c0_126] : memref<32x128xf32, #tpu.memory_space<vmem>>, vector<32x128xf32>
    %127 = arith.truncf %126 : vector<32x128xf32> to vector<32x128xbf16>
    %c0_127 = arith.constant 0 : index
    %c0_128 = arith.constant 0 : index
    %c0_129 = arith.constant 0 : index
    %128 = vector.load %arg1[%c0_127, %c0_128, %c0_129] : memref<38x32x32xbf16, #tpu.memory_space<vmem>>, vector<1x32x32xbf16>
    %129 = vector.shape_cast %128 : vector<1x32x32xbf16> to vector<32x32xbf16>
    %cst = arith.constant dense<0.000000e+00> : vector<32x128xf32>
    %130 = tpu.matmul %129, %127, %cst {dimension_numbers = #tpu.dot_dimension_numbers<[1], [0], [0], [1], [0, 0, 1, 1], [], []>} : vector<32x32xbf16>, vector<32x128xbf16>, vector<32x128xf32> -> vector<32x128xf32>
    %131 = arith.truncf %130 : vector<32x128xf32> to vector<32x128xbf16>
    %c1 = arith.constant 1 : index
    %c0_130 = arith.constant 0 : index
    %c0_131 = arith.constant 0 : index
    %132 = vector.load %arg1[%c1, %c0_130, %c0_131] : memref<38x32x32xbf16, #tpu.memory_space<vmem>>, vector<1x32x32xbf16>
    %133 = vector.shape_cast %132 : vector<1x32x32xbf16> to vector<32x32xbf16>
    %cst_132 = arith.constant dense<0.000000e+00> : vector<32x128xf32>
    %134 = tpu.matmul %133, %127, %cst_132 {dimension_numbers = #tpu.dot_dimension_numbers<[1], [0], [0], [1], [0, 0, 1, 1], [], []>} : vector<32x32xbf16>, vector<32x128xbf16>, vector<32x128xf32> -> vector<32x128xf32>
    %135 = arith.truncf %134 : vector<32x128xf32> to vector<32x128xbf16>
    %136 = tpu.concatenate %131, %127, %135 in 1 : vector<32x128xbf16>, vector<32x128xbf16>, vector<32x128xbf16> -> vector<32x384xbf16>
    %c0_i32_133 = arith.constant 0 : i32
    %c0_i32_134 = arith.constant 0 : i32
    %c0_i32_135 = arith.constant 0 : i32
    %c0_i32_136 = arith.constant 0 : i32
    %c0_i32_137 = arith.constant 0 : i32
    %137 = tpu.memref_slice %arg6[%c0_i32_133, %c0_i32_136, %c0_i32_137] : memref<21x384x128xbf16, #tpu.memory_space<any>> -> memref<1x384x128xbf16, #tpu.memory_space<any>>
    %138 = tpu.memref_squeeze %137 : memref<1x384x128xbf16, #tpu.memory_space<any>> -> memref<384x128xbf16, #tpu.memory_space<any>>
    %c0_i32_138 = arith.constant 0 : i32
    %c0_i32_139 = arith.constant 0 : i32
    %139 = tpu.memref_slice %arg8[%c0_i32_134, %c0_i32_138, %c0_i32_139] : memref<21x384x128xbf16, #tpu.memory_space<vmem>> -> memref<1x384x128xbf16, #tpu.memory_space<vmem>>
    %140 = tpu.memref_squeeze %139 : memref<1x384x128xbf16, #tpu.memory_space<vmem>> -> memref<384x128xbf16, #tpu.memory_space<vmem>>
    %141 = tpu.memref_slice %arg9[%c0_i32_135] : memref<21x!tpu.dma_semaphore, #tpu.memory_space<semaphore_mem>> -> memref<1x!tpu.dma_semaphore, #tpu.memory_space<semaphore_mem>>
    %142 = tpu.memref_squeeze %141 : memref<1x!tpu.dma_semaphore, #tpu.memory_space<semaphore_mem>> -> memref<!tpu.dma_semaphore, #tpu.memory_space<semaphore_mem>>
    tpu.wait_dma2 semaphore(%142 : memref<!tpu.dma_semaphore, #tpu.memory_space<semaphore_mem>>) src(%138 : memref<384x128xbf16, #tpu.memory_space<any>>) dst(%140 : memref<384x128xbf16, #tpu.memory_space<vmem>>)
    %c0_140 = arith.constant 0 : index
    %c0_141 = arith.constant 0 : index
    %c0_142 = arith.constant 0 : index
    %143 = vector.load %arg8[%c0_140, %c0_141, %c0_142] : memref<21x384x128xbf16, #tpu.memory_space<vmem>>, vector<1x384x128xbf16>
    %144 = vector.shape_cast %143 : vector<1x384x128xbf16> to vector<384x128xbf16>
    %cst_143 = arith.constant dense<0.000000e+00> : vector<32x128xf32>
    %145 = tpu.matmul %136, %144, %cst_143 {dimension_numbers = #tpu.dot_dimension_numbers<[1], [0], [0], [1], [0, 0, 1, 1], [], []>} : vector<32x384xbf16>, vector<384x128xbf16>, vector<32x128xf32> -> vector<32x128xf32>
    %cst_144 = arith.constant dense<0.000000e+00> : vector<128xf32>
    %146 = vector.multi_reduction <add>, %145, %cst_144 [0] : vector<32x128xf32> to vector<128xf32>
    %147 = vector.shape_cast %146 : vector<128xf32> to vector<1x128xf32>
    %148 = arith.mulf %145, %145 : vector<32x128xf32>
    %cst_145 = arith.constant dense<0.000000e+00> : vector<128xf32>
    %149 = vector.multi_reduction <add>, %148, %cst_145 [0] : vector<32x128xf32> to vector<128xf32>
    %150 = vector.shape_cast %149 : vector<128xf32> to vector<1x128xf32>
    %cst_146 = arith.constant 3.125000e-02 : f32
    %151 = vector.broadcast %cst_146 : f32 to vector<1x128xf32>
    %152 = arith.mulf %147, %151 : vector<1x128xf32>
    %cst_147 = arith.constant 3.125000e-02 : f32
    %153 = vector.broadcast %cst_147 : f32 to vector<1x128xf32>
    %154 = arith.mulf %150, %153 : vector<1x128xf32>
    %155 = arith.mulf %152, %152 : vector<1x128xf32>
    %156 = arith.subf %154, %155 : vector<1x128xf32>
    %cst_148 = arith.constant 0.000000e+00 : f32
    %157 = vector.broadcast %cst_148 : f32 to vector<1x128xf32>
    %158 = arith.maximumf %156, %157 : vector<1x128xf32>
    %c0_149 = arith.constant 0 : index
    %c0_150 = arith.constant 0 : index
    %c0_151 = arith.constant 0 : index
    %159 = vector.load %arg2[%c0_149, %c0_150, %c0_151] : memref<21x1x128xf32, #tpu.memory_space<vmem>>, vector<1x1x128xf32>
    %160 = vector.shape_cast %159 : vector<1x1x128xf32> to vector<1x128xf32>
    %cst_152 = arith.constant 9.99999974E-6 : f32
    %161 = vector.broadcast %cst_152 : f32 to vector<1x128xf32>
    %162 = arith.addf %158, %161 : vector<1x128xf32>
    %163 = math.rsqrt %162 : vector<1x128xf32>
    %164 = arith.mulf %160, %163 : vector<1x128xf32>
    %c0_153 = arith.constant 0 : index
    %c0_154 = arith.constant 0 : index
    %c0_155 = arith.constant 0 : index
    %165 = vector.load %arg3[%c0_153, %c0_154, %c0_155] : memref<21x1x128xf32, #tpu.memory_space<vmem>>, vector<1x1x128xf32>
    %166 = vector.shape_cast %165 : vector<1x1x128xf32> to vector<1x128xf32>
    %167 = arith.mulf %152, %164 : vector<1x128xf32>
    %168 = arith.subf %166, %167 : vector<1x128xf32>
    %169 = vector.broadcast %164 : vector<1x128xf32> to vector<32x128xf32>
    %170 = arith.mulf %145, %169 : vector<32x128xf32>
    %171 = vector.broadcast %168 : vector<1x128xf32> to vector<32x128xf32>
    %172 = arith.addf %170, %171 : vector<32x128xf32>
    %173 = arith.truncf %172 : vector<32x128xf32> to vector<32x128xbf16>
    %c2 = arith.constant 2 : index
    %c0_156 = arith.constant 0 : index
    %c0_157 = arith.constant 0 : index
    %174 = vector.load %arg1[%c2, %c0_156, %c0_157] : memref<38x32x32xbf16, #tpu.memory_space<vmem>>, vector<1x32x32xbf16>
    %175 = vector.shape_cast %174 : vector<1x32x32xbf16> to vector<32x32xbf16>
    %cst_158 = arith.constant dense<0.000000e+00> : vector<32x128xf32>
    %176 = tpu.matmul %175, %173, %cst_158 {dimension_numbers = #tpu.dot_dimension_numbers<[1], [0], [0], [1], [0, 0, 1, 1], [], []>} : vector<32x32xbf16>, vector<32x128xbf16>, vector<32x128xf32> -> vector<32x128xf32>
    %177 = arith.truncf %176 : vector<32x128xf32> to vector<32x128xbf16>
    %c3 = arith.constant 3 : index
    %c0_159 = arith.constant 0 : index
    %c0_160 = arith.constant 0 : index
    %178 = vector.load %arg1[%c3, %c0_159, %c0_160] : memref<38x32x32xbf16, #tpu.memory_space<vmem>>, vector<1x32x32xbf16>
    %179 = vector.shape_cast %178 : vector<1x32x32xbf16> to vector<32x32xbf16>
    %cst_161 = arith.constant dense<0.000000e+00> : vector<32x128xf32>
    %180 = tpu.matmul %179, %173, %cst_161 {dimension_numbers = #tpu.dot_dimension_numbers<[1], [0], [0], [1], [0, 0, 1, 1], [], []>} : vector<32x32xbf16>, vector<32x128xbf16>, vector<32x128xf32> -> vector<32x128xf32>
    %181 = arith.truncf %180 : vector<32x128xf32> to vector<32x128xbf16>
    %c4 = arith.constant 4 : index
    %c0_162 = arith.constant 0 : index
    %c0_163 = arith.constant 0 : index
    %182 = vector.load %arg1[%c4, %c0_162, %c0_163] : memref<38x32x32xbf16, #tpu.memory_space<vmem>>, vector<1x32x32xbf16>
    %183 = vector.shape_cast %182 : vector<1x32x32xbf16> to vector<32x32xbf16>
    %cst_164 = arith.constant dense<0.000000e+00> : vector<32x128xf32>
    %184 = tpu.matmul %183, %173, %cst_164 {dimension_numbers = #tpu.dot_dimension_numbers<[1], [0], [0], [1], [0, 0, 1, 1], [], []>} : vector<32x32xbf16>, vector<32x128xbf16>, vector<32x128xf32> -> vector<32x128xf32>
    %185 = arith.truncf %184 : vector<32x128xf32> to vector<32x128xbf16>
    %186 = tpu.concatenate %177, %181, %185 in 1 : vector<32x128xbf16>, vector<32x128xbf16>, vector<32x128xbf16> -> vector<32x384xbf16>
    %c1_i32_165 = arith.constant 1 : i32
    %c1_i32_166 = arith.constant 1 : i32
    %c1_i32_167 = arith.constant 1 : i32
    %c0_i32_168 = arith.constant 0 : i32
    %c0_i32_169 = arith.constant 0 : i32
    %187 = tpu.memref_slice %arg6[%c1_i32_165, %c0_i32_168, %c0_i32_169] : memref<21x384x128xbf16, #tpu.memory_space<any>> -> memref<1x384x128xbf16, #tpu.memory_space<any>>
    %188 = tpu.memref_squeeze %187 : memref<1x384x128xbf16, #tpu.memory_space<any>> -> memref<384x128xbf16, #tpu.memory_space<any>>
    %c0_i32_170 = arith.constant 0 : i32
    %c0_i32_171 = arith.constant 0 : i32
    %189 = tpu.memref_slice %arg8[%c1_i32_166, %c0_i32_170, %c0_i32_171] : memref<21x384x128xbf16, #tpu.memory_space<vmem>> -> memref<1x384x128xbf16, #tpu.memory_space<vmem>>
    %190 = tpu.memref_squeeze %189 : memref<1x384x128xbf16, #tpu.memory_space<vmem>> -> memref<384x128xbf16, #tpu.memory_space<vmem>>
    %191 = tpu.memref_slice %arg9[%c1_i32_167] : memref<21x!tpu.dma_semaphore, #tpu.memory_space<semaphore_mem>> -> memref<1x!tpu.dma_semaphore, #tpu.memory_space<semaphore_mem>>
    %192 = tpu.memref_squeeze %191 : memref<1x!tpu.dma_semaphore, #tpu.memory_space<semaphore_mem>> -> memref<!tpu.dma_semaphore, #tpu.memory_space<semaphore_mem>>
    tpu.wait_dma2 semaphore(%192 : memref<!tpu.dma_semaphore, #tpu.memory_space<semaphore_mem>>) src(%188 : memref<384x128xbf16, #tpu.memory_space<any>>) dst(%190 : memref<384x128xbf16, #tpu.memory_space<vmem>>)
    %c1_172 = arith.constant 1 : index
    %c0_173 = arith.constant 0 : index
    %c0_174 = arith.constant 0 : index
    %193 = vector.load %arg8[%c1_172, %c0_173, %c0_174] : memref<21x384x128xbf16, #tpu.memory_space<vmem>>, vector<1x384x128xbf16>
    %194 = vector.shape_cast %193 : vector<1x384x128xbf16> to vector<384x128xbf16>
    %cst_175 = arith.constant dense<0.000000e+00> : vector<32x128xf32>
    %195 = tpu.matmul %186, %194, %cst_175 {dimension_numbers = #tpu.dot_dimension_numbers<[1], [0], [0], [1], [0, 0, 1, 1], [], []>} : vector<32x384xbf16>, vector<384x128xbf16>, vector<32x128xf32> -> vector<32x128xf32>
    %cst_176 = arith.constant dense<0.000000e+00> : vector<128xf32>
    %196 = vector.multi_reduction <add>, %195, %cst_176 [0] : vector<32x128xf32> to vector<128xf32>
    %197 = vector.shape_cast %196 : vector<128xf32> to vector<1x128xf32>
    %198 = arith.mulf %195, %195 : vector<32x128xf32>
    %cst_177 = arith.constant dense<0.000000e+00> : vector<128xf32>
    %199 = vector.multi_reduction <add>, %198, %cst_177 [0] : vector<32x128xf32> to vector<128xf32>
    %200 = vector.shape_cast %199 : vector<128xf32> to vector<1x128xf32>
    %cst_178 = arith.constant 6.250000e-02 : f32
    %201 = vector.broadcast %cst_178 : f32 to vector<1x128xf32>
    %202 = arith.mulf %197, %201 : vector<1x128xf32>
    %cst_179 = arith.constant 6.250000e-02 : f32
    %203 = vector.broadcast %cst_179 : f32 to vector<1x128xf32>
    %204 = arith.mulf %200, %203 : vector<1x128xf32>
    %205 = arith.mulf %202, %202 : vector<1x128xf32>
    %206 = arith.subf %204, %205 : vector<1x128xf32>
    %cst_180 = arith.constant 0.000000e+00 : f32
    %207 = vector.broadcast %cst_180 : f32 to vector<1x128xf32>
    %208 = arith.maximumf %206, %207 : vector<1x128xf32>
    %c1_181 = arith.constant 1 : index
    %c0_182 = arith.constant 0 : index
    %c0_183 = arith.constant 0 : index
    %209 = vector.load %arg2[%c1_181, %c0_182, %c0_183] : memref<21x1x128xf32, #tpu.memory_space<vmem>>, vector<1x1x128xf32>
    %210 = vector.shape_cast %209 : vector<1x1x128xf32> to vector<1x128xf32>
    %cst_184 = arith.constant 9.99999974E-6 : f32
    %211 = vector.broadcast %cst_184 : f32 to vector<1x128xf32>
    %212 = arith.addf %208, %211 : vector<1x128xf32>
    %213 = math.rsqrt %212 : vector<1x128xf32>
    %214 = arith.mulf %210, %213 : vector<1x128xf32>
    %c1_185 = arith.constant 1 : index
    %c0_186 = arith.constant 0 : index
    %c0_187 = arith.constant 0 : index
    %215 = vector.load %arg3[%c1_185, %c0_186, %c0_187] : memref<21x1x128xf32, #tpu.memory_space<vmem>>, vector<1x1x128xf32>
    %216 = vector.shape_cast %215 : vector<1x1x128xf32> to vector<1x128xf32>
    %217 = arith.mulf %202, %214 : vector<1x128xf32>
    %218 = arith.subf %216, %217 : vector<1x128xf32>
    %219 = vector.broadcast %214 : vector<1x128xf32> to vector<32x128xf32>
    %220 = arith.mulf %195, %219 : vector<32x128xf32>
    %221 = vector.broadcast %218 : vector<1x128xf32> to vector<32x128xf32>
    %222 = arith.addf %220, %221 : vector<32x128xf32>
    %cst_188 = arith.constant 0.000000e+00 : f32
    %223 = vector.broadcast %cst_188 : f32 to vector<32x128xf32>
    %224 = arith.maximumf %222, %223 : vector<32x128xf32>
    %225 = tpu.iota {dimensions = array<i32: 0>} : vector<32x128xi32>
    %c0_i32_189 = arith.constant 0 : i32
    %226 = vector.broadcast %c0_i32_189 : i32 to vector<32x128xi32>
    %227 = arith.cmpi sge, %225, %226 : vector<32x128xi32>
    %c8_i32_190 = arith.constant 8 : i32
    %228 = vector.broadcast %c8_i32_190 : i32 to vector<32x128xi32>
    %229 = arith.cmpi slt, %225, %228 : vector<32x128xi32>
    %230 = arith.andi %227, %229 : vector<32x128xi1>
    %c16_i32_191 = arith.constant 16 : i32
    %231 = vector.broadcast %c16_i32_191 : i32 to vector<32x128xi32>
    %232 = arith.cmpi sge, %225, %231 : vector<32x128xi32>
    %c24_i32 = arith.constant 24 : i32
    %233 = vector.broadcast %c24_i32 : i32 to vector<32x128xi32>
    %234 = arith.cmpi slt, %225, %233 : vector<32x128xi32>
    %235 = arith.andi %232, %234 : vector<32x128xi1>
    %236 = arith.ori %230, %235 : vector<32x128xi1>
    %cst_192 = arith.constant 0.000000e+00 : f32
    %237 = vector.broadcast %cst_192 : f32 to vector<32x128xf32>
    %238 = arith.select %236, %224, %237 : vector<32x128xi1>, vector<32x128xf32>
    %c2_i32_193 = arith.constant 2 : i32
    %c2_i32_194 = arith.constant 2 : i32
    %c2_i32_195 = arith.constant 2 : i32
    %c0_i32_196 = arith.constant 0 : i32
    %c0_i32_197 = arith.constant 0 : i32
    %239 = tpu.memref_slice %arg6[%c2_i32_193, %c0_i32_196, %c0_i32_197] : memref<21x384x128xbf16, #tpu.memory_space<any>> -> memref<1x384x128xbf16, #tpu.memory_space<any>>
    %240 = tpu.memref_squeeze %239 : memref<1x384x128xbf16, #tpu.memory_space<any>> -> memref<384x128xbf16, #tpu.memory_space<any>>
    %c0_i32_198 = arith.constant 0 : i32
    %c0_i32_199 = arith.constant 0 : i32
    %241 = tpu.memref_slice %arg8[%c2_i32_194, %c0_i32_198, %c0_i32_199] : memref<21x384x128xbf16, #tpu.memory_space<vmem>> -> memref<1x384x128xbf16, #tpu.memory_space<vmem>>
    %242 = tpu.memref_squeeze %241 : memref<1x384x128xbf16, #tpu.memory_space<vmem>> -> memref<384x128xbf16, #tpu.memory_space<vmem>>
    %243 = tpu.memref_slice %arg9[%c2_i32_195] : memref<21x!tpu.dma_semaphore, #tpu.memory_space<semaphore_mem>> -> memref<1x!tpu.dma_semaphore, #tpu.memory_space<semaphore_mem>>
    %244 = tpu.memref_squeeze %243 : memref<1x!tpu.dma_semaphore, #tpu.memory_space<semaphore_mem>> -> memref<!tpu.dma_semaphore, #tpu.memory_space<semaphore_mem>>
    tpu.wait_dma2 semaphore(%244 : memref<!tpu.dma_semaphore, #tpu.memory_space<semaphore_mem>>) src(%240 : memref<384x128xbf16, #tpu.memory_space<any>>) dst(%242 : memref<384x128xbf16, #tpu.memory_space<vmem>>)
    %c2_200 = arith.constant 2 : index
    %c0_201 = arith.constant 0 : index
    %c0_202 = arith.constant 0 : index
    %245 = vector.load %arg8[%c2_200, %c0_201, %c0_202] : memref<21x384x128xbf16, #tpu.memory_space<vmem>>, vector<1x384x128xbf16>
    %246 = vector.shape_cast %245 : vector<1x384x128xbf16> to vector<384x128xbf16>
    %cst_203 = arith.constant dense<0.000000e+00> : vector<32x128xf32>
    %247 = tpu.matmul %186, %246, %cst_203 {dimension_numbers = #tpu.dot_dimension_numbers<[1], [0], [0], [1], [0, 0, 1, 1], [], []>} : vector<32x384xbf16>, vector<384x128xbf16>, vector<32x128xf32> -> vector<32x128xf32>
    %cst_204 = arith.constant dense<0.000000e+00> : vector<128xf32>
    %248 = vector.multi_reduction <add>, %247, %cst_204 [0] : vector<32x128xf32> to vector<128xf32>
    %249 = vector.shape_cast %248 : vector<128xf32> to vector<1x128xf32>
    %250 = arith.mulf %247, %247 : vector<32x128xf32>
    %cst_205 = arith.constant dense<0.000000e+00> : vector<128xf32>
    %251 = vector.multi_reduction <add>, %250, %cst_205 [0] : vector<32x128xf32> to vector<128xf32>
    %252 = vector.shape_cast %251 : vector<128xf32> to vector<1x128xf32>
    %cst_206 = arith.constant 6.250000e-02 : f32
    %253 = vector.broadcast %cst_206 : f32 to vector<1x128xf32>
    %254 = arith.mulf %249, %253 : vector<1x128xf32>
    %cst_207 = arith.constant 6.250000e-02 : f32
    %255 = vector.broadcast %cst_207 : f32 to vector<1x128xf32>
    %256 = arith.mulf %252, %255 : vector<1x128xf32>
    %257 = arith.mulf %254, %254 : vector<1x128xf32>
    %258 = arith.subf %256, %257 : vector<1x128xf32>
    %cst_208 = arith.constant 0.000000e+00 : f32
    %259 = vector.broadcast %cst_208 : f32 to vector<1x128xf32>
    %260 = arith.maximumf %258, %259 : vector<1x128xf32>
    %c2_209 = arith.constant 2 : index
    %c0_210 = arith.constant 0 : index
    %c0_211 = arith.constant 0 : index
    %261 = vector.load %arg2[%c2_209, %c0_210, %c0_211] : memref<21x1x128xf32, #tpu.memory_space<vmem>>, vector<1x1x128xf32>
    %262 = vector.shape_cast %261 : vector<1x1x128xf32> to vector<1x128xf32>
    %cst_212 = arith.constant 9.99999974E-6 : f32
    %263 = vector.broadcast %cst_212 : f32 to vector<1x128xf32>
    %264 = arith.addf %260, %263 : vector<1x128xf32>
    %265 = math.rsqrt %264 : vector<1x128xf32>
    %266 = arith.mulf %262, %265 : vector<1x128xf32>
    %c2_213 = arith.constant 2 : index
    %c0_214 = arith.constant 0 : index
    %c0_215 = arith.constant 0 : index
    %267 = vector.load %arg3[%c2_213, %c0_214, %c0_215] : memref<21x1x128xf32, #tpu.memory_space<vmem>>, vector<1x1x128xf32>
    %268 = vector.shape_cast %267 : vector<1x1x128xf32> to vector<1x128xf32>
    %269 = arith.mulf %254, %266 : vector<1x128xf32>
    %270 = arith.subf %268, %269 : vector<1x128xf32>
    %271 = vector.broadcast %266 : vector<1x128xf32> to vector<32x128xf32>
    %272 = arith.mulf %247, %271 : vector<32x128xf32>
    %273 = vector.broadcast %270 : vector<1x128xf32> to vector<32x128xf32>
    %274 = arith.addf %272, %273 : vector<32x128xf32>
    %cst_216 = arith.constant 0.000000e+00 : f32
    %275 = vector.broadcast %cst_216 : f32 to vector<32x128xf32>
    %276 = arith.select %236, %274, %275 : vector<32x128xi1>, vector<32x128xf32>
    %277 = arith.truncf %238 : vector<32x128xf32> to vector<32x128xbf16>
    %c5 = arith.constant 5 : index
    %c0_217 = arith.constant 0 : index
    %c0_218 = arith.constant 0 : index
    %278 = vector.load %arg1[%c5, %c0_217, %c0_218] : memref<38x32x32xbf16, #tpu.memory_space<vmem>>, vector<1x32x32xbf16>
    %279 = vector.shape_cast %278 : vector<1x32x32xbf16> to vector<32x32xbf16>
    %cst_219 = arith.constant dense<0.000000e+00> : vector<32x128xf32>
    %280 = tpu.matmul %279, %277, %cst_219 {dimension_numbers = #tpu.dot_dimension_numbers<[1], [0], [0], [1], [0, 0, 1, 1], [], []>} : vector<32x32xbf16>, vector<32x128xbf16>, vector<32x128xf32> -> vector<32x128xf32>
    %281 = arith.truncf %280 : vector<32x128xf32> to vector<32x128xbf16>
    %c6 = arith.constant 6 : index
    %c0_220 = arith.constant 0 : index
    %c0_221 = arith.constant 0 : index
    %282 = vector.load %arg1[%c6, %c0_220, %c0_221] : memref<38x32x32xbf16, #tpu.memory_space<vmem>>, vector<1x32x32xbf16>
    %283 = vector.shape_cast %282 : vector<1x32x32xbf16> to vector<32x32xbf16>
    %cst_222 = arith.constant dense<0.000000e+00> : vector<32x128xf32>
    %284 = tpu.matmul %283, %277, %cst_222 {dimension_numbers = #tpu.dot_dimension_numbers<[1], [0], [0], [1], [0, 0, 1, 1], [], []>} : vector<32x32xbf16>, vector<32x128xbf16>, vector<32x128xf32> -> vector<32x128xf32>
    %285 = arith.truncf %284 : vector<32x128xf32> to vector<32x128xbf16>
    %286 = tpu.concatenate %281, %277, %285 in 1 : vector<32x128xbf16>, vector<32x128xbf16>, vector<32x128xbf16> -> vector<32x384xbf16>
    %c3_i32_223 = arith.constant 3 : i32
    %c3_i32_224 = arith.constant 3 : i32
    %c3_i32_225 = arith.constant 3 : i32
    %c0_i32_226 = arith.constant 0 : i32
    %c0_i32_227 = arith.constant 0 : i32
    %287 = tpu.memref_slice %arg6[%c3_i32_223, %c0_i32_226, %c0_i32_227] : memref<21x384x128xbf16, #tpu.memory_space<any>> -> memref<1x384x128xbf16, #tpu.memory_space<any>>
    %288 = tpu.memref_squeeze %287 : memref<1x384x128xbf16, #tpu.memory_space<any>> -> memref<384x128xbf16, #tpu.memory_space<any>>
    %c0_i32_228 = arith.constant 0 : i32
    %c0_i32_229 = arith.constant 0 : i32
    %289 = tpu.memref_slice %arg8[%c3_i32_224, %c0_i32_228, %c0_i32_229] : memref<21x384x128xbf16, #tpu.memory_space<vmem>> -> memref<1x384x128xbf16, #tpu.memory_space<vmem>>
    %290 = tpu.memref_squeeze %289 : memref<1x384x128xbf16, #tpu.memory_space<vmem>> -> memref<384x128xbf16, #tpu.memory_space<vmem>>
    %291 = tpu.memref_slice %arg9[%c3_i32_225] : memref<21x!tpu.dma_semaphore, #tpu.memory_space<semaphore_mem>> -> memref<1x!tpu.dma_semaphore, #tpu.memory_space<semaphore_mem>>
    %292 = tpu.memref_squeeze %291 : memref<1x!tpu.dma_semaphore, #tpu.memory_space<semaphore_mem>> -> memref<!tpu.dma_semaphore, #tpu.memory_space<semaphore_mem>>
    tpu.wait_dma2 semaphore(%292 : memref<!tpu.dma_semaphore, #tpu.memory_space<semaphore_mem>>) src(%288 : memref<384x128xbf16, #tpu.memory_space<any>>) dst(%290 : memref<384x128xbf16, #tpu.memory_space<vmem>>)
    %c3_230 = arith.constant 3 : index
    %c0_231 = arith.constant 0 : index
    %c0_232 = arith.constant 0 : index
    %293 = vector.load %arg8[%c3_230, %c0_231, %c0_232] : memref<21x384x128xbf16, #tpu.memory_space<vmem>>, vector<1x384x128xbf16>
    %294 = vector.shape_cast %293 : vector<1x384x128xbf16> to vector<384x128xbf16>
    %cst_233 = arith.constant dense<0.000000e+00> : vector<32x128xf32>
    %295 = tpu.matmul %286, %294, %cst_233 {dimension_numbers = #tpu.dot_dimension_numbers<[1], [0], [0], [1], [0, 0, 1, 1], [], []>} : vector<32x384xbf16>, vector<384x128xbf16>, vector<32x128xf32> -> vector<32x128xf32>
    %cst_234 = arith.constant dense<0.000000e+00> : vector<128xf32>
    %296 = vector.multi_reduction <add>, %295, %cst_234 [0] : vector<32x128xf32> to vector<128xf32>
    %297 = vector.shape_cast %296 : vector<128xf32> to vector<1x128xf32>
    %298 = arith.mulf %295, %295 : vector<32x128xf32>
    %cst_235 = arith.constant dense<0.000000e+00> : vector<128xf32>
    %299 = vector.multi_reduction <add>, %298, %cst_235 [0] : vector<32x128xf32> to vector<128xf32>
    %300 = vector.shape_cast %299 : vector<128xf32> to vector<1x128xf32>
    %cst_236 = arith.constant 6.250000e-02 : f32
    %301 = vector.broadcast %cst_236 : f32 to vector<1x128xf32>
    %302 = arith.mulf %297, %301 : vector<1x128xf32>
    %cst_237 = arith.constant 6.250000e-02 : f32
    %303 = vector.broadcast %cst_237 : f32 to vector<1x128xf32>
    %304 = arith.mulf %300, %303 : vector<1x128xf32>
    %305 = arith.mulf %302, %302 : vector<1x128xf32>
    %306 = arith.subf %304, %305 : vector<1x128xf32>
    %cst_238 = arith.constant 0.000000e+00 : f32
    %307 = vector.broadcast %cst_238 : f32 to vector<1x128xf32>
    %308 = arith.maximumf %306, %307 : vector<1x128xf32>
    %c3_239 = arith.constant 3 : index
    %c0_240 = arith.constant 0 : index
    %c0_241 = arith.constant 0 : index
    %309 = vector.load %arg2[%c3_239, %c0_240, %c0_241] : memref<21x1x128xf32, #tpu.memory_space<vmem>>, vector<1x1x128xf32>
    %310 = vector.shape_cast %309 : vector<1x1x128xf32> to vector<1x128xf32>
    %cst_242 = arith.constant 9.99999974E-6 : f32
    %311 = vector.broadcast %cst_242 : f32 to vector<1x128xf32>
    %312 = arith.addf %308, %311 : vector<1x128xf32>
    %313 = math.rsqrt %312 : vector<1x128xf32>
    %314 = arith.mulf %310, %313 : vector<1x128xf32>
    %c3_243 = arith.constant 3 : index
    %c0_244 = arith.constant 0 : index
    %c0_245 = arith.constant 0 : index
    %315 = vector.load %arg3[%c3_243, %c0_244, %c0_245] : memref<21x1x128xf32, #tpu.memory_space<vmem>>, vector<1x1x128xf32>
    %316 = vector.shape_cast %315 : vector<1x1x128xf32> to vector<1x128xf32>
    %317 = arith.mulf %302, %314 : vector<1x128xf32>
    %318 = arith.subf %316, %317 : vector<1x128xf32>
    %319 = vector.broadcast %314 : vector<1x128xf32> to vector<32x128xf32>
    %320 = arith.mulf %295, %319 : vector<32x128xf32>
    %321 = vector.broadcast %318 : vector<1x128xf32> to vector<32x128xf32>
    %322 = arith.addf %320, %321 : vector<32x128xf32>
    %323 = arith.addf %322, %276 : vector<32x128xf32>
    %cst_246 = arith.constant 0.000000e+00 : f32
    %324 = vector.broadcast %cst_246 : f32 to vector<32x128xf32>
    %325 = arith.maximumf %323, %324 : vector<32x128xf32>
    %cst_247 = arith.constant 0.000000e+00 : f32
    %326 = vector.broadcast %cst_247 : f32 to vector<32x128xf32>
    %327 = arith.select %236, %325, %326 : vector<32x128xi1>, vector<32x128xf32>
    %328 = arith.truncf %327 : vector<32x128xf32> to vector<32x128xbf16>
    %c7 = arith.constant 7 : index
    %c0_248 = arith.constant 0 : index
    %c0_249 = arith.constant 0 : index
    %329 = vector.load %arg1[%c7, %c0_248, %c0_249] : memref<38x32x32xbf16, #tpu.memory_space<vmem>>, vector<1x32x32xbf16>
    %330 = vector.shape_cast %329 : vector<1x32x32xbf16> to vector<32x32xbf16>
    %cst_250 = arith.constant dense<0.000000e+00> : vector<32x128xf32>
    %331 = tpu.matmul %330, %328, %cst_250 {dimension_numbers = #tpu.dot_dimension_numbers<[1], [0], [0], [1], [0, 0, 1, 1], [], []>} : vector<32x32xbf16>, vector<32x128xbf16>, vector<32x128xf32> -> vector<32x128xf32>
    %332 = arith.truncf %331 : vector<32x128xf32> to vector<32x128xbf16>
    %c8 = arith.constant 8 : index
    %c0_251 = arith.constant 0 : index
    %c0_252 = arith.constant 0 : index
    %333 = vector.load %arg1[%c8, %c0_251, %c0_252] : memref<38x32x32xbf16, #tpu.memory_space<vmem>>, vector<1x32x32xbf16>
    %334 = vector.shape_cast %333 : vector<1x32x32xbf16> to vector<32x32xbf16>
    %cst_253 = arith.constant dense<0.000000e+00> : vector<32x128xf32>
    %335 = tpu.matmul %334, %328, %cst_253 {dimension_numbers = #tpu.dot_dimension_numbers<[1], [0], [0], [1], [0, 0, 1, 1], [], []>} : vector<32x32xbf16>, vector<32x128xbf16>, vector<32x128xf32> -> vector<32x128xf32>
    %336 = arith.truncf %335 : vector<32x128xf32> to vector<32x128xbf16>
    %337 = tpu.concatenate %332, %328, %336 in 1 : vector<32x128xbf16>, vector<32x128xbf16>, vector<32x128xbf16> -> vector<32x384xbf16>
    %c4_i32_254 = arith.constant 4 : i32
    %c4_i32_255 = arith.constant 4 : i32
    %c4_i32_256 = arith.constant 4 : i32
    %c0_i32_257 = arith.constant 0 : i32
    %c0_i32_258 = arith.constant 0 : i32
    %338 = tpu.memref_slice %arg6[%c4_i32_254, %c0_i32_257, %c0_i32_258] : memref<21x384x128xbf16, #tpu.memory_space<any>> -> memref<1x384x128xbf16, #tpu.memory_space<any>>
    %339 = tpu.memref_squeeze %338 : memref<1x384x128xbf16, #tpu.memory_space<any>> -> memref<384x128xbf16, #tpu.memory_space<any>>
    %c0_i32_259 = arith.constant 0 : i32
    %c0_i32_260 = arith.constant 0 : i32
    %340 = tpu.memref_slice %arg8[%c4_i32_255, %c0_i32_259, %c0_i32_260] : memref<21x384x128xbf16, #tpu.memory_space<vmem>> -> memref<1x384x128xbf16, #tpu.memory_space<vmem>>
    %341 = tpu.memref_squeeze %340 : memref<1x384x128xbf16, #tpu.memory_space<vmem>> -> memref<384x128xbf16, #tpu.memory_space<vmem>>
    %342 = tpu.memref_slice %arg9[%c4_i32_256] : memref<21x!tpu.dma_semaphore, #tpu.memory_space<semaphore_mem>> -> memref<1x!tpu.dma_semaphore, #tpu.memory_space<semaphore_mem>>
    %343 = tpu.memref_squeeze %342 : memref<1x!tpu.dma_semaphore, #tpu.memory_space<semaphore_mem>> -> memref<!tpu.dma_semaphore, #tpu.memory_space<semaphore_mem>>
    tpu.wait_dma2 semaphore(%343 : memref<!tpu.dma_semaphore, #tpu.memory_space<semaphore_mem>>) src(%339 : memref<384x128xbf16, #tpu.memory_space<any>>) dst(%341 : memref<384x128xbf16, #tpu.memory_space<vmem>>)
    %c4_261 = arith.constant 4 : index
    %c0_262 = arith.constant 0 : index
    %c0_263 = arith.constant 0 : index
    %344 = vector.load %arg8[%c4_261, %c0_262, %c0_263] : memref<21x384x128xbf16, #tpu.memory_space<vmem>>, vector<1x384x128xbf16>
    %345 = vector.shape_cast %344 : vector<1x384x128xbf16> to vector<384x128xbf16>
    %cst_264 = arith.constant dense<0.000000e+00> : vector<32x128xf32>
    %346 = tpu.matmul %337, %345, %cst_264 {dimension_numbers = #tpu.dot_dimension_numbers<[1], [0], [0], [1], [0, 0, 1, 1], [], []>} : vector<32x384xbf16>, vector<384x128xbf16>, vector<32x128xf32> -> vector<32x128xf32>
    %cst_265 = arith.constant dense<0.000000e+00> : vector<128xf32>
    %347 = vector.multi_reduction <add>, %346, %cst_265 [0] : vector<32x128xf32> to vector<128xf32>
    %348 = vector.shape_cast %347 : vector<128xf32> to vector<1x128xf32>
    %349 = arith.mulf %346, %346 : vector<32x128xf32>
    %cst_266 = arith.constant dense<0.000000e+00> : vector<128xf32>
    %350 = vector.multi_reduction <add>, %349, %cst_266 [0] : vector<32x128xf32> to vector<128xf32>
    %351 = vector.shape_cast %350 : vector<128xf32> to vector<1x128xf32>
    %cst_267 = arith.constant 6.250000e-02 : f32
    %352 = vector.broadcast %cst_267 : f32 to vector<1x128xf32>
    %353 = arith.mulf %348, %352 : vector<1x128xf32>
    %cst_268 = arith.constant 6.250000e-02 : f32
    %354 = vector.broadcast %cst_268 : f32 to vector<1x128xf32>
    %355 = arith.mulf %351, %354 : vector<1x128xf32>
    %356 = arith.mulf %353, %353 : vector<1x128xf32>
    %357 = arith.subf %355, %356 : vector<1x128xf32>
    %cst_269 = arith.constant 0.000000e+00 : f32
    %358 = vector.broadcast %cst_269 : f32 to vector<1x128xf32>
    %359 = arith.maximumf %357, %358 : vector<1x128xf32>
    %c4_270 = arith.constant 4 : index
    %c0_271 = arith.constant 0 : index
    %c0_272 = arith.constant 0 : index
    %360 = vector.load %arg2[%c4_270, %c0_271, %c0_272] : memref<21x1x128xf32, #tpu.memory_space<vmem>>, vector<1x1x128xf32>
    %361 = vector.shape_cast %360 : vector<1x1x128xf32> to vector<1x128xf32>
    %cst_273 = arith.constant 9.99999974E-6 : f32
    %362 = vector.broadcast %cst_273 : f32 to vector<1x128xf32>
    %363 = arith.addf %359, %362 : vector<1x128xf32>
    %364 = math.rsqrt %363 : vector<1x128xf32>
    %365 = arith.mulf %361, %364 : vector<1x128xf32>
    %c4_274 = arith.constant 4 : index
    %c0_275 = arith.constant 0 : index
    %c0_276 = arith.constant 0 : index
    %366 = vector.load %arg3[%c4_274, %c0_275, %c0_276] : memref<21x1x128xf32, #tpu.memory_space<vmem>>, vector<1x1x128xf32>
    %367 = vector.shape_cast %366 : vector<1x1x128xf32> to vector<1x128xf32>
    %368 = arith.mulf %353, %365 : vector<1x128xf32>
    %369 = arith.subf %367, %368 : vector<1x128xf32>
    %370 = vector.broadcast %365 : vector<1x128xf32> to vector<32x128xf32>
    %371 = arith.mulf %346, %370 : vector<32x128xf32>
    %372 = vector.broadcast %369 : vector<1x128xf32> to vector<32x128xf32>
    %373 = arith.addf %371, %372 : vector<32x128xf32>
    %cst_277 = arith.constant 0.000000e+00 : f32
    %374 = vector.broadcast %cst_277 : f32 to vector<32x128xf32>
    %375 = arith.maximumf %373, %374 : vector<32x128xf32>
    %cst_278 = arith.constant 0.000000e+00 : f32
    %376 = vector.broadcast %cst_278 : f32 to vector<32x128xf32>
    %377 = arith.select %236, %375, %376 : vector<32x128xi1>, vector<32x128xf32>
    %378 = arith.truncf %377 : vector<32x128xf32> to vector<32x128xbf16>
    %c9 = arith.constant 9 : index
    %c0_279 = arith.constant 0 : index
    %c0_280 = arith.constant 0 : index
    %379 = vector.load %arg1[%c9, %c0_279, %c0_280] : memref<38x32x32xbf16, #tpu.memory_space<vmem>>, vector<1x32x32xbf16>
    %380 = vector.shape_cast %379 : vector<1x32x32xbf16> to vector<32x32xbf16>
    %cst_281 = arith.constant dense<0.000000e+00> : vector<32x128xf32>
    %381 = tpu.matmul %380, %378, %cst_281 {dimension_numbers = #tpu.dot_dimension_numbers<[1], [0], [0], [1], [0, 0, 1, 1], [], []>} : vector<32x32xbf16>, vector<32x128xbf16>, vector<32x128xf32> -> vector<32x128xf32>
    %382 = arith.truncf %381 : vector<32x128xf32> to vector<32x128xbf16>
    %c10 = arith.constant 10 : index
    %c0_282 = arith.constant 0 : index
    %c0_283 = arith.constant 0 : index
    %383 = vector.load %arg1[%c10, %c0_282, %c0_283] : memref<38x32x32xbf16, #tpu.memory_space<vmem>>, vector<1x32x32xbf16>
    %384 = vector.shape_cast %383 : vector<1x32x32xbf16> to vector<32x32xbf16>
    %cst_284 = arith.constant dense<0.000000e+00> : vector<32x128xf32>
    %385 = tpu.matmul %384, %378, %cst_284 {dimension_numbers = #tpu.dot_dimension_numbers<[1], [0], [0], [1], [0, 0, 1, 1], [], []>} : vector<32x32xbf16>, vector<32x128xbf16>, vector<32x128xf32> -> vector<32x128xf32>
    %386 = arith.truncf %385 : vector<32x128xf32> to vector<32x128xbf16>
    %387 = tpu.concatenate %382, %378, %386 in 1 : vector<32x128xbf16>, vector<32x128xbf16>, vector<32x128xbf16> -> vector<32x384xbf16>
    %c5_i32_285 = arith.constant 5 : i32
    %c5_i32_286 = arith.constant 5 : i32
    %c5_i32_287 = arith.constant 5 : i32
    %c0_i32_288 = arith.constant 0 : i32
    %c0_i32_289 = arith.constant 0 : i32
    %388 = tpu.memref_slice %arg6[%c5_i32_285, %c0_i32_288, %c0_i32_289] : memref<21x384x128xbf16, #tpu.memory_space<any>> -> memref<1x384x128xbf16, #tpu.memory_space<any>>
    %389 = tpu.memref_squeeze %388 : memref<1x384x128xbf16, #tpu.memory_space<any>> -> memref<384x128xbf16, #tpu.memory_space<any>>
    %c0_i32_290 = arith.constant 0 : i32
    %c0_i32_291 = arith.constant 0 : i32
    %390 = tpu.memref_slice %arg8[%c5_i32_286, %c0_i32_290, %c0_i32_291] : memref<21x384x128xbf16, #tpu.memory_space<vmem>> -> memref<1x384x128xbf16, #tpu.memory_space<vmem>>
    %391 = tpu.memref_squeeze %390 : memref<1x384x128xbf16, #tpu.memory_space<vmem>> -> memref<384x128xbf16, #tpu.memory_space<vmem>>
    %392 = tpu.memref_slice %arg9[%c5_i32_287] : memref<21x!tpu.dma_semaphore, #tpu.memory_space<semaphore_mem>> -> memref<1x!tpu.dma_semaphore, #tpu.memory_space<semaphore_mem>>
    %393 = tpu.memref_squeeze %392 : memref<1x!tpu.dma_semaphore, #tpu.memory_space<semaphore_mem>> -> memref<!tpu.dma_semaphore, #tpu.memory_space<semaphore_mem>>
    tpu.wait_dma2 semaphore(%393 : memref<!tpu.dma_semaphore, #tpu.memory_space<semaphore_mem>>) src(%389 : memref<384x128xbf16, #tpu.memory_space<any>>) dst(%391 : memref<384x128xbf16, #tpu.memory_space<vmem>>)
    %c5_292 = arith.constant 5 : index
    %c0_293 = arith.constant 0 : index
    %c0_294 = arith.constant 0 : index
    %394 = vector.load %arg8[%c5_292, %c0_293, %c0_294] : memref<21x384x128xbf16, #tpu.memory_space<vmem>>, vector<1x384x128xbf16>
    %395 = vector.shape_cast %394 : vector<1x384x128xbf16> to vector<384x128xbf16>
    %cst_295 = arith.constant dense<0.000000e+00> : vector<32x128xf32>
    %396 = tpu.matmul %387, %395, %cst_295 {dimension_numbers = #tpu.dot_dimension_numbers<[1], [0], [0], [1], [0, 0, 1, 1], [], []>} : vector<32x384xbf16>, vector<384x128xbf16>, vector<32x128xf32> -> vector<32x128xf32>
    %cst_296 = arith.constant dense<0.000000e+00> : vector<128xf32>
    %397 = vector.multi_reduction <add>, %396, %cst_296 [0] : vector<32x128xf32> to vector<128xf32>
    %398 = vector.shape_cast %397 : vector<128xf32> to vector<1x128xf32>
    %399 = arith.mulf %396, %396 : vector<32x128xf32>
    %cst_297 = arith.constant dense<0.000000e+00> : vector<128xf32>
    %400 = vector.multi_reduction <add>, %399, %cst_297 [0] : vector<32x128xf32> to vector<128xf32>
    %401 = vector.shape_cast %400 : vector<128xf32> to vector<1x128xf32>
    %cst_298 = arith.constant 6.250000e-02 : f32
    %402 = vector.broadcast %cst_298 : f32 to vector<1x128xf32>
    %403 = arith.mulf %398, %402 : vector<1x128xf32>
    %cst_299 = arith.constant 6.250000e-02 : f32
    %404 = vector.broadcast %cst_299 : f32 to vector<1x128xf32>
    %405 = arith.mulf %401, %404 : vector<1x128xf32>
    %406 = arith.mulf %403, %403 : vector<1x128xf32>
    %407 = arith.subf %405, %406 : vector<1x128xf32>
    %cst_300 = arith.constant 0.000000e+00 : f32
    %408 = vector.broadcast %cst_300 : f32 to vector<1x128xf32>
    %409 = arith.maximumf %407, %408 : vector<1x128xf32>
    %c5_301 = arith.constant 5 : index
    %c0_302 = arith.constant 0 : index
    %c0_303 = arith.constant 0 : index
    %410 = vector.load %arg2[%c5_301, %c0_302, %c0_303] : memref<21x1x128xf32, #tpu.memory_space<vmem>>, vector<1x1x128xf32>
    %411 = vector.shape_cast %410 : vector<1x1x128xf32> to vector<1x128xf32>
    %cst_304 = arith.constant 9.99999974E-6 : f32
    %412 = vector.broadcast %cst_304 : f32 to vector<1x128xf32>
    %413 = arith.addf %409, %412 : vector<1x128xf32>
    %414 = math.rsqrt %413 : vector<1x128xf32>
    %415 = arith.mulf %411, %414 : vector<1x128xf32>
    %c5_305 = arith.constant 5 : index
    %c0_306 = arith.constant 0 : index
    %c0_307 = arith.constant 0 : index
    %416 = vector.load %arg3[%c5_305, %c0_306, %c0_307] : memref<21x1x128xf32, #tpu.memory_space<vmem>>, vector<1x1x128xf32>
    %417 = vector.shape_cast %416 : vector<1x1x128xf32> to vector<1x128xf32>
    %418 = arith.mulf %403, %415 : vector<1x128xf32>
    %419 = arith.subf %417, %418 : vector<1x128xf32>
    %420 = vector.broadcast %415 : vector<1x128xf32> to vector<32x128xf32>
    %421 = arith.mulf %396, %420 : vector<32x128xf32>
    %422 = vector.broadcast %419 : vector<1x128xf32> to vector<32x128xf32>
    %423 = arith.addf %421, %422 : vector<32x128xf32>
    %424 = arith.addf %423, %327 : vector<32x128xf32>
    %cst_308 = arith.constant 0.000000e+00 : f32
    %425 = vector.broadcast %cst_308 : f32 to vector<32x128xf32>
    %426 = arith.maximumf %424, %425 : vector<32x128xf32>
    %cst_309 = arith.constant 0.000000e+00 : f32
    %427 = vector.broadcast %cst_309 : f32 to vector<32x128xf32>
    %428 = arith.select %236, %426, %427 : vector<32x128xi1>, vector<32x128xf32>
    %429 = arith.truncf %428 : vector<32x128xf32> to vector<32x128xbf16>
    %c11 = arith.constant 11 : index
    %c0_310 = arith.constant 0 : index
    %c0_311 = arith.constant 0 : index
    %430 = vector.load %arg1[%c11, %c0_310, %c0_311] : memref<38x32x32xbf16, #tpu.memory_space<vmem>>, vector<1x32x32xbf16>
    %431 = vector.shape_cast %430 : vector<1x32x32xbf16> to vector<32x32xbf16>
    %cst_312 = arith.constant dense<0.000000e+00> : vector<32x128xf32>
    %432 = tpu.matmul %431, %429, %cst_312 {dimension_numbers = #tpu.dot_dimension_numbers<[1], [0], [0], [1], [0, 0, 1, 1], [], []>} : vector<32x32xbf16>, vector<32x128xbf16>, vector<32x128xf32> -> vector<32x128xf32>
    %433 = arith.truncf %432 : vector<32x128xf32> to vector<32x128xbf16>
    %c12 = arith.constant 12 : index
    %c0_313 = arith.constant 0 : index
    %c0_314 = arith.constant 0 : index
    %434 = vector.load %arg1[%c12, %c0_313, %c0_314] : memref<38x32x32xbf16, #tpu.memory_space<vmem>>, vector<1x32x32xbf16>
    %435 = vector.shape_cast %434 : vector<1x32x32xbf16> to vector<32x32xbf16>
    %cst_315 = arith.constant dense<0.000000e+00> : vector<32x128xf32>
    %436 = tpu.matmul %435, %429, %cst_315 {dimension_numbers = #tpu.dot_dimension_numbers<[1], [0], [0], [1], [0, 0, 1, 1], [], []>} : vector<32x32xbf16>, vector<32x128xbf16>, vector<32x128xf32> -> vector<32x128xf32>
    %437 = arith.truncf %436 : vector<32x128xf32> to vector<32x128xbf16>
    %c13 = arith.constant 13 : index
    %c0_316 = arith.constant 0 : index
    %c0_317 = arith.constant 0 : index
    %438 = vector.load %arg1[%c13, %c0_316, %c0_317] : memref<38x32x32xbf16, #tpu.memory_space<vmem>>, vector<1x32x32xbf16>
    %439 = vector.shape_cast %438 : vector<1x32x32xbf16> to vector<32x32xbf16>
    %cst_318 = arith.constant dense<0.000000e+00> : vector<32x128xf32>
    %440 = tpu.matmul %439, %429, %cst_318 {dimension_numbers = #tpu.dot_dimension_numbers<[1], [0], [0], [1], [0, 0, 1, 1], [], []>} : vector<32x32xbf16>, vector<32x128xbf16>, vector<32x128xf32> -> vector<32x128xf32>
    %441 = arith.truncf %440 : vector<32x128xf32> to vector<32x128xbf16>
    %442 = tpu.concatenate %433, %437, %441 in 1 : vector<32x128xbf16>, vector<32x128xbf16>, vector<32x128xbf16> -> vector<32x384xbf16>
    %c6_i32_319 = arith.constant 6 : i32
    %c6_i32_320 = arith.constant 6 : i32
    %c6_i32_321 = arith.constant 6 : i32
    %c0_i32_322 = arith.constant 0 : i32
    %c0_i32_323 = arith.constant 0 : i32
    %443 = tpu.memref_slice %arg6[%c6_i32_319, %c0_i32_322, %c0_i32_323] : memref<21x384x128xbf16, #tpu.memory_space<any>> -> memref<1x384x128xbf16, #tpu.memory_space<any>>
    %444 = tpu.memref_squeeze %443 : memref<1x384x128xbf16, #tpu.memory_space<any>> -> memref<384x128xbf16, #tpu.memory_space<any>>
    %c0_i32_324 = arith.constant 0 : i32
    %c0_i32_325 = arith.constant 0 : i32
    %445 = tpu.memref_slice %arg8[%c6_i32_320, %c0_i32_324, %c0_i32_325] : memref<21x384x128xbf16, #tpu.memory_space<vmem>> -> memref<1x384x128xbf16, #tpu.memory_space<vmem>>
    %446 = tpu.memref_squeeze %445 : memref<1x384x128xbf16, #tpu.memory_space<vmem>> -> memref<384x128xbf16, #tpu.memory_space<vmem>>
    %447 = tpu.memref_slice %arg9[%c6_i32_321] : memref<21x!tpu.dma_semaphore, #tpu.memory_space<semaphore_mem>> -> memref<1x!tpu.dma_semaphore, #tpu.memory_space<semaphore_mem>>
    %448 = tpu.memref_squeeze %447 : memref<1x!tpu.dma_semaphore, #tpu.memory_space<semaphore_mem>> -> memref<!tpu.dma_semaphore, #tpu.memory_space<semaphore_mem>>
    tpu.wait_dma2 semaphore(%448 : memref<!tpu.dma_semaphore, #tpu.memory_space<semaphore_mem>>) src(%444 : memref<384x128xbf16, #tpu.memory_space<any>>) dst(%446 : memref<384x128xbf16, #tpu.memory_space<vmem>>)
    %c6_326 = arith.constant 6 : index
    %c0_327 = arith.constant 0 : index
    %c0_328 = arith.constant 0 : index
    %449 = vector.load %arg8[%c6_326, %c0_327, %c0_328] : memref<21x384x128xbf16, #tpu.memory_space<vmem>>, vector<1x384x128xbf16>
    %450 = vector.shape_cast %449 : vector<1x384x128xbf16> to vector<384x128xbf16>
    %cst_329 = arith.constant dense<0.000000e+00> : vector<32x128xf32>
    %451 = tpu.matmul %442, %450, %cst_329 {dimension_numbers = #tpu.dot_dimension_numbers<[1], [0], [0], [1], [0, 0, 1, 1], [], []>} : vector<32x384xbf16>, vector<384x128xbf16>, vector<32x128xf32> -> vector<32x128xf32>
    %cst_330 = arith.constant dense<0.000000e+00> : vector<128xf32>
    %452 = vector.multi_reduction <add>, %451, %cst_330 [0] : vector<32x128xf32> to vector<128xf32>
    %453 = vector.shape_cast %452 : vector<128xf32> to vector<1x128xf32>
    %454 = arith.mulf %451, %451 : vector<32x128xf32>
    %cst_331 = arith.constant dense<0.000000e+00> : vector<128xf32>
    %455 = vector.multi_reduction <add>, %454, %cst_331 [0] : vector<32x128xf32> to vector<128xf32>
    %456 = vector.shape_cast %455 : vector<128xf32> to vector<1x128xf32>
    %cst_332 = arith.constant 1.250000e-01 : f32
    %457 = vector.broadcast %cst_332 : f32 to vector<1x128xf32>
    %458 = arith.mulf %453, %457 : vector<1x128xf32>
    %cst_333 = arith.constant 1.250000e-01 : f32
    %459 = vector.broadcast %cst_333 : f32 to vector<1x128xf32>
    %460 = arith.mulf %456, %459 : vector<1x128xf32>
    %461 = arith.mulf %458, %458 : vector<1x128xf32>
    %462 = arith.subf %460, %461 : vector<1x128xf32>
    %cst_334 = arith.constant 0.000000e+00 : f32
    %463 = vector.broadcast %cst_334 : f32 to vector<1x128xf32>
    %464 = arith.maximumf %462, %463 : vector<1x128xf32>
    %c6_335 = arith.constant 6 : index
    %c0_336 = arith.constant 0 : index
    %c0_337 = arith.constant 0 : index
    %465 = vector.load %arg2[%c6_335, %c0_336, %c0_337] : memref<21x1x128xf32, #tpu.memory_space<vmem>>, vector<1x1x128xf32>
    %466 = vector.shape_cast %465 : vector<1x1x128xf32> to vector<1x128xf32>
    %cst_338 = arith.constant 9.99999974E-6 : f32
    %467 = vector.broadcast %cst_338 : f32 to vector<1x128xf32>
    %468 = arith.addf %464, %467 : vector<1x128xf32>
    %469 = math.rsqrt %468 : vector<1x128xf32>
    %470 = arith.mulf %466, %469 : vector<1x128xf32>
    %c6_339 = arith.constant 6 : index
    %c0_340 = arith.constant 0 : index
    %c0_341 = arith.constant 0 : index
    %471 = vector.load %arg3[%c6_339, %c0_340, %c0_341] : memref<21x1x128xf32, #tpu.memory_space<vmem>>, vector<1x1x128xf32>
    %472 = vector.shape_cast %471 : vector<1x1x128xf32> to vector<1x128xf32>
    %473 = arith.mulf %458, %470 : vector<1x128xf32>
    %474 = arith.subf %472, %473 : vector<1x128xf32>
    %475 = vector.broadcast %470 : vector<1x128xf32> to vector<32x128xf32>
    %476 = arith.mulf %451, %475 : vector<32x128xf32>
    %477 = vector.broadcast %474 : vector<1x128xf32> to vector<32x128xf32>
    %478 = arith.addf %476, %477 : vector<32x128xf32>
    %cst_342 = arith.constant 0.000000e+00 : f32
    %479 = vector.broadcast %cst_342 : f32 to vector<32x128xf32>
    %480 = arith.maximumf %478, %479 : vector<32x128xf32>
    %481 = tpu.iota {dimensions = array<i32: 0>} : vector<32x128xi32>
    %c0_i32_343 = arith.constant 0 : i32
    %482 = vector.broadcast %c0_i32_343 : i32 to vector<32x128xi32>
    %483 = arith.cmpi sge, %481, %482 : vector<32x128xi32>
    %c4_i32_344 = arith.constant 4 : i32
    %484 = vector.broadcast %c4_i32_344 : i32 to vector<32x128xi32>
    %485 = arith.cmpi slt, %481, %484 : vector<32x128xi32>
    %486 = arith.andi %483, %485 : vector<32x128xi1>
    %c16_i32_345 = arith.constant 16 : i32
    %487 = vector.broadcast %c16_i32_345 : i32 to vector<32x128xi32>
    %488 = arith.cmpi sge, %481, %487 : vector<32x128xi32>
    %c20_i32_346 = arith.constant 20 : i32
    %489 = vector.broadcast %c20_i32_346 : i32 to vector<32x128xi32>
    %490 = arith.cmpi slt, %481, %489 : vector<32x128xi32>
    %491 = arith.andi %488, %490 : vector<32x128xi1>
    %492 = arith.ori %486, %491 : vector<32x128xi1>
    %cst_347 = arith.constant 0.000000e+00 : f32
    %493 = vector.broadcast %cst_347 : f32 to vector<32x128xf32>
    %494 = arith.select %492, %480, %493 : vector<32x128xi1>, vector<32x128xf32>
    %c7_i32_348 = arith.constant 7 : i32
    %c7_i32_349 = arith.constant 7 : i32
    %c7_i32_350 = arith.constant 7 : i32
    %c0_i32_351 = arith.constant 0 : i32
    %c0_i32_352 = arith.constant 0 : i32
    %495 = tpu.memref_slice %arg6[%c7_i32_348, %c0_i32_351, %c0_i32_352] : memref<21x384x128xbf16, #tpu.memory_space<any>> -> memref<1x384x128xbf16, #tpu.memory_space<any>>
    %496 = tpu.memref_squeeze %495 : memref<1x384x128xbf16, #tpu.memory_space<any>> -> memref<384x128xbf16, #tpu.memory_space<any>>
    %c0_i32_353 = arith.constant 0 : i32
    %c0_i32_354 = arith.constant 0 : i32
    %497 = tpu.memref_slice %arg8[%c7_i32_349, %c0_i32_353, %c0_i32_354] : memref<21x384x128xbf16, #tpu.memory_space<vmem>> -> memref<1x384x128xbf16, #tpu.memory_space<vmem>>
    %498 = tpu.memref_squeeze %497 : memref<1x384x128xbf16, #tpu.memory_space<vmem>> -> memref<384x128xbf16, #tpu.memory_space<vmem>>
    %499 = tpu.memref_slice %arg9[%c7_i32_350] : memref<21x!tpu.dma_semaphore, #tpu.memory_space<semaphore_mem>> -> memref<1x!tpu.dma_semaphore, #tpu.memory_space<semaphore_mem>>
    %500 = tpu.memref_squeeze %499 : memref<1x!tpu.dma_semaphore, #tpu.memory_space<semaphore_mem>> -> memref<!tpu.dma_semaphore, #tpu.memory_space<semaphore_mem>>
    tpu.wait_dma2 semaphore(%500 : memref<!tpu.dma_semaphore, #tpu.memory_space<semaphore_mem>>) src(%496 : memref<384x128xbf16, #tpu.memory_space<any>>) dst(%498 : memref<384x128xbf16, #tpu.memory_space<vmem>>)
    %c7_355 = arith.constant 7 : index
    %c0_356 = arith.constant 0 : index
    %c0_357 = arith.constant 0 : index
    %501 = vector.load %arg8[%c7_355, %c0_356, %c0_357] : memref<21x384x128xbf16, #tpu.memory_space<vmem>>, vector<1x384x128xbf16>
    %502 = vector.shape_cast %501 : vector<1x384x128xbf16> to vector<384x128xbf16>
    %cst_358 = arith.constant dense<0.000000e+00> : vector<32x128xf32>
    %503 = tpu.matmul %442, %502, %cst_358 {dimension_numbers = #tpu.dot_dimension_numbers<[1], [0], [0], [1], [0, 0, 1, 1], [], []>} : vector<32x384xbf16>, vector<384x128xbf16>, vector<32x128xf32> -> vector<32x128xf32>
    %cst_359 = arith.constant dense<0.000000e+00> : vector<128xf32>
    %504 = vector.multi_reduction <add>, %503, %cst_359 [0] : vector<32x128xf32> to vector<128xf32>
    %505 = vector.shape_cast %504 : vector<128xf32> to vector<1x128xf32>
    %506 = arith.mulf %503, %503 : vector<32x128xf32>
    %cst_360 = arith.constant dense<0.000000e+00> : vector<128xf32>
    %507 = vector.multi_reduction <add>, %506, %cst_360 [0] : vector<32x128xf32> to vector<128xf32>
    %508 = vector.shape_cast %507 : vector<128xf32> to vector<1x128xf32>
    %cst_361 = arith.constant 1.250000e-01 : f32
    %509 = vector.broadcast %cst_361 : f32 to vector<1x128xf32>
    %510 = arith.mulf %505, %509 : vector<1x128xf32>
    %cst_362 = arith.constant 1.250000e-01 : f32
    %511 = vector.broadcast %cst_362 : f32 to vector<1x128xf32>
    %512 = arith.mulf %508, %511 : vector<1x128xf32>
    %513 = arith.mulf %510, %510 : vector<1x128xf32>
    %514 = arith.subf %512, %513 : vector<1x128xf32>
    %cst_363 = arith.constant 0.000000e+00 : f32
    %515 = vector.broadcast %cst_363 : f32 to vector<1x128xf32>
    %516 = arith.maximumf %514, %515 : vector<1x128xf32>
    %c7_364 = arith.constant 7 : index
    %c0_365 = arith.constant 0 : index
    %c0_366 = arith.constant 0 : index
    %517 = vector.load %arg2[%c7_364, %c0_365, %c0_366] : memref<21x1x128xf32, #tpu.memory_space<vmem>>, vector<1x1x128xf32>
    %518 = vector.shape_cast %517 : vector<1x1x128xf32> to vector<1x128xf32>
    %cst_367 = arith.constant 9.99999974E-6 : f32
    %519 = vector.broadcast %cst_367 : f32 to vector<1x128xf32>
    %520 = arith.addf %516, %519 : vector<1x128xf32>
    %521 = math.rsqrt %520 : vector<1x128xf32>
    %522 = arith.mulf %518, %521 : vector<1x128xf32>
    %c7_368 = arith.constant 7 : index
    %c0_369 = arith.constant 0 : index
    %c0_370 = arith.constant 0 : index
    %523 = vector.load %arg3[%c7_368, %c0_369, %c0_370] : memref<21x1x128xf32, #tpu.memory_space<vmem>>, vector<1x1x128xf32>
    %524 = vector.shape_cast %523 : vector<1x1x128xf32> to vector<1x128xf32>
    %525 = arith.mulf %510, %522 : vector<1x128xf32>
    %526 = arith.subf %524, %525 : vector<1x128xf32>
    %527 = vector.broadcast %522 : vector<1x128xf32> to vector<32x128xf32>
    %528 = arith.mulf %503, %527 : vector<32x128xf32>
    %529 = vector.broadcast %526 : vector<1x128xf32> to vector<32x128xf32>
    %530 = arith.addf %528, %529 : vector<32x128xf32>
    %cst_371 = arith.constant 0.000000e+00 : f32
    %531 = vector.broadcast %cst_371 : f32 to vector<32x128xf32>
    %532 = arith.select %492, %530, %531 : vector<32x128xi1>, vector<32x128xf32>
    %533 = arith.truncf %494 : vector<32x128xf32> to vector<32x128xbf16>
    %c14 = arith.constant 14 : index
    %c0_372 = arith.constant 0 : index
    %c0_373 = arith.constant 0 : index
    %534 = vector.load %arg1[%c14, %c0_372, %c0_373] : memref<38x32x32xbf16, #tpu.memory_space<vmem>>, vector<1x32x32xbf16>
    %535 = vector.shape_cast %534 : vector<1x32x32xbf16> to vector<32x32xbf16>
    %cst_374 = arith.constant dense<0.000000e+00> : vector<32x128xf32>
    %536 = tpu.matmul %535, %533, %cst_374 {dimension_numbers = #tpu.dot_dimension_numbers<[1], [0], [0], [1], [0, 0, 1, 1], [], []>} : vector<32x32xbf16>, vector<32x128xbf16>, vector<32x128xf32> -> vector<32x128xf32>
    %537 = arith.truncf %536 : vector<32x128xf32> to vector<32x128xbf16>
    %c15 = arith.constant 15 : index
    %c0_375 = arith.constant 0 : index
    %c0_376 = arith.constant 0 : index
    %538 = vector.load %arg1[%c15, %c0_375, %c0_376] : memref<38x32x32xbf16, #tpu.memory_space<vmem>>, vector<1x32x32xbf16>
    %539 = vector.shape_cast %538 : vector<1x32x32xbf16> to vector<32x32xbf16>
    %cst_377 = arith.constant dense<0.000000e+00> : vector<32x128xf32>
    %540 = tpu.matmul %539, %533, %cst_377 {dimension_numbers = #tpu.dot_dimension_numbers<[1], [0], [0], [1], [0, 0, 1, 1], [], []>} : vector<32x32xbf16>, vector<32x128xbf16>, vector<32x128xf32> -> vector<32x128xf32>
    %541 = arith.truncf %540 : vector<32x128xf32> to vector<32x128xbf16>
    %542 = tpu.concatenate %537, %533, %541 in 1 : vector<32x128xbf16>, vector<32x128xbf16>, vector<32x128xbf16> -> vector<32x384xbf16>
    %c8_i32_378 = arith.constant 8 : i32
    %c8_i32_379 = arith.constant 8 : i32
    %c8_i32_380 = arith.constant 8 : i32
    %c0_i32_381 = arith.constant 0 : i32
    %c0_i32_382 = arith.constant 0 : i32
    %543 = tpu.memref_slice %arg6[%c8_i32_378, %c0_i32_381, %c0_i32_382] : memref<21x384x128xbf16, #tpu.memory_space<any>> -> memref<1x384x128xbf16, #tpu.memory_space<any>>
    %544 = tpu.memref_squeeze %543 : memref<1x384x128xbf16, #tpu.memory_space<any>> -> memref<384x128xbf16, #tpu.memory_space<any>>
    %c0_i32_383 = arith.constant 0 : i32
    %c0_i32_384 = arith.constant 0 : i32
    %545 = tpu.memref_slice %arg8[%c8_i32_379, %c0_i32_383, %c0_i32_384] : memref<21x384x128xbf16, #tpu.memory_space<vmem>> -> memref<1x384x128xbf16, #tpu.memory_space<vmem>>
    %546 = tpu.memref_squeeze %545 : memref<1x384x128xbf16, #tpu.memory_space<vmem>> -> memref<384x128xbf16, #tpu.memory_space<vmem>>
    %547 = tpu.memref_slice %arg9[%c8_i32_380] : memref<21x!tpu.dma_semaphore, #tpu.memory_space<semaphore_mem>> -> memref<1x!tpu.dma_semaphore, #tpu.memory_space<semaphore_mem>>
    %548 = tpu.memref_squeeze %547 : memref<1x!tpu.dma_semaphore, #tpu.memory_space<semaphore_mem>> -> memref<!tpu.dma_semaphore, #tpu.memory_space<semaphore_mem>>
    tpu.wait_dma2 semaphore(%548 : memref<!tpu.dma_semaphore, #tpu.memory_space<semaphore_mem>>) src(%544 : memref<384x128xbf16, #tpu.memory_space<any>>) dst(%546 : memref<384x128xbf16, #tpu.memory_space<vmem>>)
    %c8_385 = arith.constant 8 : index
    %c0_386 = arith.constant 0 : index
    %c0_387 = arith.constant 0 : index
    %549 = vector.load %arg8[%c8_385, %c0_386, %c0_387] : memref<21x384x128xbf16, #tpu.memory_space<vmem>>, vector<1x384x128xbf16>
    %550 = vector.shape_cast %549 : vector<1x384x128xbf16> to vector<384x128xbf16>
    %cst_388 = arith.constant dense<0.000000e+00> : vector<32x128xf32>
    %551 = tpu.matmul %542, %550, %cst_388 {dimension_numbers = #tpu.dot_dimension_numbers<[1], [0], [0], [1], [0, 0, 1, 1], [], []>} : vector<32x384xbf16>, vector<384x128xbf16>, vector<32x128xf32> -> vector<32x128xf32>
    %cst_389 = arith.constant dense<0.000000e+00> : vector<128xf32>
    %552 = vector.multi_reduction <add>, %551, %cst_389 [0] : vector<32x128xf32> to vector<128xf32>
    %553 = vector.shape_cast %552 : vector<128xf32> to vector<1x128xf32>
    %554 = arith.mulf %551, %551 : vector<32x128xf32>
    %cst_390 = arith.constant dense<0.000000e+00> : vector<128xf32>
    %555 = vector.multi_reduction <add>, %554, %cst_390 [0] : vector<32x128xf32> to vector<128xf32>
    %556 = vector.shape_cast %555 : vector<128xf32> to vector<1x128xf32>
    %cst_391 = arith.constant 1.250000e-01 : f32
    %557 = vector.broadcast %cst_391 : f32 to vector<1x128xf32>
    %558 = arith.mulf %553, %557 : vector<1x128xf32>
    %cst_392 = arith.constant 1.250000e-01 : f32
    %559 = vector.broadcast %cst_392 : f32 to vector<1x128xf32>
    %560 = arith.mulf %556, %559 : vector<1x128xf32>
    %561 = arith.mulf %558, %558 : vector<1x128xf32>
    %562 = arith.subf %560, %561 : vector<1x128xf32>
    %cst_393 = arith.constant 0.000000e+00 : f32
    %563 = vector.broadcast %cst_393 : f32 to vector<1x128xf32>
    %564 = arith.maximumf %562, %563 : vector<1x128xf32>
    %c8_394 = arith.constant 8 : index
    %c0_395 = arith.constant 0 : index
    %c0_396 = arith.constant 0 : index
    %565 = vector.load %arg2[%c8_394, %c0_395, %c0_396] : memref<21x1x128xf32, #tpu.memory_space<vmem>>, vector<1x1x128xf32>
    %566 = vector.shape_cast %565 : vector<1x1x128xf32> to vector<1x128xf32>
    %cst_397 = arith.constant 9.99999974E-6 : f32
    %567 = vector.broadcast %cst_397 : f32 to vector<1x128xf32>
    %568 = arith.addf %564, %567 : vector<1x128xf32>
    %569 = math.rsqrt %568 : vector<1x128xf32>
    %570 = arith.mulf %566, %569 : vector<1x128xf32>
    %c8_398 = arith.constant 8 : index
    %c0_399 = arith.constant 0 : index
    %c0_400 = arith.constant 0 : index
    %571 = vector.load %arg3[%c8_398, %c0_399, %c0_400] : memref<21x1x128xf32, #tpu.memory_space<vmem>>, vector<1x1x128xf32>
    %572 = vector.shape_cast %571 : vector<1x1x128xf32> to vector<1x128xf32>
    %573 = arith.mulf %558, %570 : vector<1x128xf32>
    %574 = arith.subf %572, %573 : vector<1x128xf32>
    %575 = vector.broadcast %570 : vector<1x128xf32> to vector<32x128xf32>
    %576 = arith.mulf %551, %575 : vector<32x128xf32>
    %577 = vector.broadcast %574 : vector<1x128xf32> to vector<32x128xf32>
    %578 = arith.addf %576, %577 : vector<32x128xf32>
    %579 = arith.addf %578, %532 : vector<32x128xf32>
    %cst_401 = arith.constant 0.000000e+00 : f32
    %580 = vector.broadcast %cst_401 : f32 to vector<32x128xf32>
    %581 = arith.maximumf %579, %580 : vector<32x128xf32>
    %cst_402 = arith.constant 0.000000e+00 : f32
    %582 = vector.broadcast %cst_402 : f32 to vector<32x128xf32>
    %583 = arith.select %492, %581, %582 : vector<32x128xi1>, vector<32x128xf32>
    %584 = arith.truncf %583 : vector<32x128xf32> to vector<32x128xbf16>
    %c16 = arith.constant 16 : index
    %c0_403 = arith.constant 0 : index
    %c0_404 = arith.constant 0 : index
    %585 = vector.load %arg1[%c16, %c0_403, %c0_404] : memref<38x32x32xbf16, #tpu.memory_space<vmem>>, vector<1x32x32xbf16>
    %586 = vector.shape_cast %585 : vector<1x32x32xbf16> to vector<32x32xbf16>
    %cst_405 = arith.constant dense<0.000000e+00> : vector<32x128xf32>
    %587 = tpu.matmul %586, %584, %cst_405 {dimension_numbers = #tpu.dot_dimension_numbers<[1], [0], [0], [1], [0, 0, 1, 1], [], []>} : vector<32x32xbf16>, vector<32x128xbf16>, vector<32x128xf32> -> vector<32x128xf32>
    %588 = arith.truncf %587 : vector<32x128xf32> to vector<32x128xbf16>
    %c17 = arith.constant 17 : index
    %c0_406 = arith.constant 0 : index
    %c0_407 = arith.constant 0 : index
    %589 = vector.load %arg1[%c17, %c0_406, %c0_407] : memref<38x32x32xbf16, #tpu.memory_space<vmem>>, vector<1x32x32xbf16>
    %590 = vector.shape_cast %589 : vector<1x32x32xbf16> to vector<32x32xbf16>
    %cst_408 = arith.constant dense<0.000000e+00> : vector<32x128xf32>
    %591 = tpu.matmul %590, %584, %cst_408 {dimension_numbers = #tpu.dot_dimension_numbers<[1], [0], [0], [1], [0, 0, 1, 1], [], []>} : vector<32x32xbf16>, vector<32x128xbf16>, vector<32x128xf32> -> vector<32x128xf32>
    %592 = arith.truncf %591 : vector<32x128xf32> to vector<32x128xbf16>
    %593 = tpu.concatenate %588, %584, %592 in 1 : vector<32x128xbf16>, vector<32x128xbf16>, vector<32x128xbf16> -> vector<32x384xbf16>
    %c9_i32_409 = arith.constant 9 : i32
    %c9_i32_410 = arith.constant 9 : i32
    %c9_i32_411 = arith.constant 9 : i32
    %c0_i32_412 = arith.constant 0 : i32
    %c0_i32_413 = arith.constant 0 : i32
    %594 = tpu.memref_slice %arg6[%c9_i32_409, %c0_i32_412, %c0_i32_413] : memref<21x384x128xbf16, #tpu.memory_space<any>> -> memref<1x384x128xbf16, #tpu.memory_space<any>>
    %595 = tpu.memref_squeeze %594 : memref<1x384x128xbf16, #tpu.memory_space<any>> -> memref<384x128xbf16, #tpu.memory_space<any>>
    %c0_i32_414 = arith.constant 0 : i32
    %c0_i32_415 = arith.constant 0 : i32
    %596 = tpu.memref_slice %arg8[%c9_i32_410, %c0_i32_414, %c0_i32_415] : memref<21x384x128xbf16, #tpu.memory_space<vmem>> -> memref<1x384x128xbf16, #tpu.memory_space<vmem>>
    %597 = tpu.memref_squeeze %596 : memref<1x384x128xbf16, #tpu.memory_space<vmem>> -> memref<384x128xbf16, #tpu.memory_space<vmem>>
    %598 = tpu.memref_slice %arg9[%c9_i32_411] : memref<21x!tpu.dma_semaphore, #tpu.memory_space<semaphore_mem>> -> memref<1x!tpu.dma_semaphore, #tpu.memory_space<semaphore_mem>>
    %599 = tpu.memref_squeeze %598 : memref<1x!tpu.dma_semaphore, #tpu.memory_space<semaphore_mem>> -> memref<!tpu.dma_semaphore, #tpu.memory_space<semaphore_mem>>
    tpu.wait_dma2 semaphore(%599 : memref<!tpu.dma_semaphore, #tpu.memory_space<semaphore_mem>>) src(%595 : memref<384x128xbf16, #tpu.memory_space<any>>) dst(%597 : memref<384x128xbf16, #tpu.memory_space<vmem>>)
    %c9_416 = arith.constant 9 : index
    %c0_417 = arith.constant 0 : index
    %c0_418 = arith.constant 0 : index
    %600 = vector.load %arg8[%c9_416, %c0_417, %c0_418] : memref<21x384x128xbf16, #tpu.memory_space<vmem>>, vector<1x384x128xbf16>
    %601 = vector.shape_cast %600 : vector<1x384x128xbf16> to vector<384x128xbf16>
    %cst_419 = arith.constant dense<0.000000e+00> : vector<32x128xf32>
    %602 = tpu.matmul %593, %601, %cst_419 {dimension_numbers = #tpu.dot_dimension_numbers<[1], [0], [0], [1], [0, 0, 1, 1], [], []>} : vector<32x384xbf16>, vector<384x128xbf16>, vector<32x128xf32> -> vector<32x128xf32>
    %cst_420 = arith.constant dense<0.000000e+00> : vector<128xf32>
    %603 = vector.multi_reduction <add>, %602, %cst_420 [0] : vector<32x128xf32> to vector<128xf32>
    %604 = vector.shape_cast %603 : vector<128xf32> to vector<1x128xf32>
    %605 = arith.mulf %602, %602 : vector<32x128xf32>
    %cst_421 = arith.constant dense<0.000000e+00> : vector<128xf32>
    %606 = vector.multi_reduction <add>, %605, %cst_421 [0] : vector<32x128xf32> to vector<128xf32>
    %607 = vector.shape_cast %606 : vector<128xf32> to vector<1x128xf32>
    %cst_422 = arith.constant 1.250000e-01 : f32
    %608 = vector.broadcast %cst_422 : f32 to vector<1x128xf32>
    %609 = arith.mulf %604, %608 : vector<1x128xf32>
    %cst_423 = arith.constant 1.250000e-01 : f32
    %610 = vector.broadcast %cst_423 : f32 to vector<1x128xf32>
    %611 = arith.mulf %607, %610 : vector<1x128xf32>
    %612 = arith.mulf %609, %609 : vector<1x128xf32>
    %613 = arith.subf %611, %612 : vector<1x128xf32>
    %cst_424 = arith.constant 0.000000e+00 : f32
    %614 = vector.broadcast %cst_424 : f32 to vector<1x128xf32>
    %615 = arith.maximumf %613, %614 : vector<1x128xf32>
    %c9_425 = arith.constant 9 : index
    %c0_426 = arith.constant 0 : index
    %c0_427 = arith.constant 0 : index
    %616 = vector.load %arg2[%c9_425, %c0_426, %c0_427] : memref<21x1x128xf32, #tpu.memory_space<vmem>>, vector<1x1x128xf32>
    %617 = vector.shape_cast %616 : vector<1x1x128xf32> to vector<1x128xf32>
    %cst_428 = arith.constant 9.99999974E-6 : f32
    %618 = vector.broadcast %cst_428 : f32 to vector<1x128xf32>
    %619 = arith.addf %615, %618 : vector<1x128xf32>
    %620 = math.rsqrt %619 : vector<1x128xf32>
    %621 = arith.mulf %617, %620 : vector<1x128xf32>
    %c9_429 = arith.constant 9 : index
    %c0_430 = arith.constant 0 : index
    %c0_431 = arith.constant 0 : index
    %622 = vector.load %arg3[%c9_429, %c0_430, %c0_431] : memref<21x1x128xf32, #tpu.memory_space<vmem>>, vector<1x1x128xf32>
    %623 = vector.shape_cast %622 : vector<1x1x128xf32> to vector<1x128xf32>
    %624 = arith.mulf %609, %621 : vector<1x128xf32>
    %625 = arith.subf %623, %624 : vector<1x128xf32>
    %626 = vector.broadcast %621 : vector<1x128xf32> to vector<32x128xf32>
    %627 = arith.mulf %602, %626 : vector<32x128xf32>
    %628 = vector.broadcast %625 : vector<1x128xf32> to vector<32x128xf32>
    %629 = arith.addf %627, %628 : vector<32x128xf32>
    %cst_432 = arith.constant 0.000000e+00 : f32
    %630 = vector.broadcast %cst_432 : f32 to vector<32x128xf32>
    %631 = arith.maximumf %629, %630 : vector<32x128xf32>
    %cst_433 = arith.constant 0.000000e+00 : f32
    %632 = vector.broadcast %cst_433 : f32 to vector<32x128xf32>
    %633 = arith.select %492, %631, %632 : vector<32x128xi1>, vector<32x128xf32>
    %634 = arith.truncf %633 : vector<32x128xf32> to vector<32x128xbf16>
    %c18 = arith.constant 18 : index
    %c0_434 = arith.constant 0 : index
    %c0_435 = arith.constant 0 : index
    %635 = vector.load %arg1[%c18, %c0_434, %c0_435] : memref<38x32x32xbf16, #tpu.memory_space<vmem>>, vector<1x32x32xbf16>
    %636 = vector.shape_cast %635 : vector<1x32x32xbf16> to vector<32x32xbf16>
    %cst_436 = arith.constant dense<0.000000e+00> : vector<32x128xf32>
    %637 = tpu.matmul %636, %634, %cst_436 {dimension_numbers = #tpu.dot_dimension_numbers<[1], [0], [0], [1], [0, 0, 1, 1], [], []>} : vector<32x32xbf16>, vector<32x128xbf16>, vector<32x128xf32> -> vector<32x128xf32>
    %638 = arith.truncf %637 : vector<32x128xf32> to vector<32x128xbf16>
    %c19 = arith.constant 19 : index
    %c0_437 = arith.constant 0 : index
    %c0_438 = arith.constant 0 : index
    %639 = vector.load %arg1[%c19, %c0_437, %c0_438] : memref<38x32x32xbf16, #tpu.memory_space<vmem>>, vector<1x32x32xbf16>
    %640 = vector.shape_cast %639 : vector<1x32x32xbf16> to vector<32x32xbf16>
    %cst_439 = arith.constant dense<0.000000e+00> : vector<32x128xf32>
    %641 = tpu.matmul %640, %634, %cst_439 {dimension_numbers = #tpu.dot_dimension_numbers<[1], [0], [0], [1], [0, 0, 1, 1], [], []>} : vector<32x32xbf16>, vector<32x128xbf16>, vector<32x128xf32> -> vector<32x128xf32>
    %642 = arith.truncf %641 : vector<32x128xf32> to vector<32x128xbf16>
    %643 = tpu.concatenate %638, %634, %642 in 1 : vector<32x128xbf16>, vector<32x128xbf16>, vector<32x128xbf16> -> vector<32x384xbf16>
    %c10_i32_440 = arith.constant 10 : i32
    %c10_i32_441 = arith.constant 10 : i32
    %c10_i32_442 = arith.constant 10 : i32
    %c0_i32_443 = arith.constant 0 : i32
    %c0_i32_444 = arith.constant 0 : i32
    %644 = tpu.memref_slice %arg6[%c10_i32_440, %c0_i32_443, %c0_i32_444] : memref<21x384x128xbf16, #tpu.memory_space<any>> -> memref<1x384x128xbf16, #tpu.memory_space<any>>
    %645 = tpu.memref_squeeze %644 : memref<1x384x128xbf16, #tpu.memory_space<any>> -> memref<384x128xbf16, #tpu.memory_space<any>>
    %c0_i32_445 = arith.constant 0 : i32
    %c0_i32_446 = arith.constant 0 : i32
    %646 = tpu.memref_slice %arg8[%c10_i32_441, %c0_i32_445, %c0_i32_446] : memref<21x384x128xbf16, #tpu.memory_space<vmem>> -> memref<1x384x128xbf16, #tpu.memory_space<vmem>>
    %647 = tpu.memref_squeeze %646 : memref<1x384x128xbf16, #tpu.memory_space<vmem>> -> memref<384x128xbf16, #tpu.memory_space<vmem>>
    %648 = tpu.memref_slice %arg9[%c10_i32_442] : memref<21x!tpu.dma_semaphore, #tpu.memory_space<semaphore_mem>> -> memref<1x!tpu.dma_semaphore, #tpu.memory_space<semaphore_mem>>
    %649 = tpu.memref_squeeze %648 : memref<1x!tpu.dma_semaphore, #tpu.memory_space<semaphore_mem>> -> memref<!tpu.dma_semaphore, #tpu.memory_space<semaphore_mem>>
    tpu.wait_dma2 semaphore(%649 : memref<!tpu.dma_semaphore, #tpu.memory_space<semaphore_mem>>) src(%645 : memref<384x128xbf16, #tpu.memory_space<any>>) dst(%647 : memref<384x128xbf16, #tpu.memory_space<vmem>>)
    %c10_447 = arith.constant 10 : index
    %c0_448 = arith.constant 0 : index
    %c0_449 = arith.constant 0 : index
    %650 = vector.load %arg8[%c10_447, %c0_448, %c0_449] : memref<21x384x128xbf16, #tpu.memory_space<vmem>>, vector<1x384x128xbf16>
    %651 = vector.shape_cast %650 : vector<1x384x128xbf16> to vector<384x128xbf16>
    %cst_450 = arith.constant dense<0.000000e+00> : vector<32x128xf32>
    %652 = tpu.matmul %643, %651, %cst_450 {dimension_numbers = #tpu.dot_dimension_numbers<[1], [0], [0], [1], [0, 0, 1, 1], [], []>} : vector<32x384xbf16>, vector<384x128xbf16>, vector<32x128xf32> -> vector<32x128xf32>
    %cst_451 = arith.constant dense<0.000000e+00> : vector<128xf32>
    %653 = vector.multi_reduction <add>, %652, %cst_451 [0] : vector<32x128xf32> to vector<128xf32>
    %654 = vector.shape_cast %653 : vector<128xf32> to vector<1x128xf32>
    %655 = arith.mulf %652, %652 : vector<32x128xf32>
    %cst_452 = arith.constant dense<0.000000e+00> : vector<128xf32>
    %656 = vector.multi_reduction <add>, %655, %cst_452 [0] : vector<32x128xf32> to vector<128xf32>
    %657 = vector.shape_cast %656 : vector<128xf32> to vector<1x128xf32>
    %cst_453 = arith.constant 1.250000e-01 : f32
    %658 = vector.broadcast %cst_453 : f32 to vector<1x128xf32>
    %659 = arith.mulf %654, %658 : vector<1x128xf32>
    %cst_454 = arith.constant 1.250000e-01 : f32
    %660 = vector.broadcast %cst_454 : f32 to vector<1x128xf32>
    %661 = arith.mulf %657, %660 : vector<1x128xf32>
    %662 = arith.mulf %659, %659 : vector<1x128xf32>
    %663 = arith.subf %661, %662 : vector<1x128xf32>
    %cst_455 = arith.constant 0.000000e+00 : f32
    %664 = vector.broadcast %cst_455 : f32 to vector<1x128xf32>
    %665 = arith.maximumf %663, %664 : vector<1x128xf32>
    %c10_456 = arith.constant 10 : index
    %c0_457 = arith.constant 0 : index
    %c0_458 = arith.constant 0 : index
    %666 = vector.load %arg2[%c10_456, %c0_457, %c0_458] : memref<21x1x128xf32, #tpu.memory_space<vmem>>, vector<1x1x128xf32>
    %667 = vector.shape_cast %666 : vector<1x1x128xf32> to vector<1x128xf32>
    %cst_459 = arith.constant 9.99999974E-6 : f32
    %668 = vector.broadcast %cst_459 : f32 to vector<1x128xf32>
    %669 = arith.addf %665, %668 : vector<1x128xf32>
    %670 = math.rsqrt %669 : vector<1x128xf32>
    %671 = arith.mulf %667, %670 : vector<1x128xf32>
    %c10_460 = arith.constant 10 : index
    %c0_461 = arith.constant 0 : index
    %c0_462 = arith.constant 0 : index
    %672 = vector.load %arg3[%c10_460, %c0_461, %c0_462] : memref<21x1x128xf32, #tpu.memory_space<vmem>>, vector<1x1x128xf32>
    %673 = vector.shape_cast %672 : vector<1x1x128xf32> to vector<1x128xf32>
    %674 = arith.mulf %659, %671 : vector<1x128xf32>
    %675 = arith.subf %673, %674 : vector<1x128xf32>
    %676 = vector.broadcast %671 : vector<1x128xf32> to vector<32x128xf32>
    %677 = arith.mulf %652, %676 : vector<32x128xf32>
    %678 = vector.broadcast %675 : vector<1x128xf32> to vector<32x128xf32>
    %679 = arith.addf %677, %678 : vector<32x128xf32>
    %680 = arith.addf %679, %583 : vector<32x128xf32>
    %cst_463 = arith.constant 0.000000e+00 : f32
    %681 = vector.broadcast %cst_463 : f32 to vector<32x128xf32>
    %682 = arith.maximumf %680, %681 : vector<32x128xf32>
    %cst_464 = arith.constant 0.000000e+00 : f32
    %683 = vector.broadcast %cst_464 : f32 to vector<32x128xf32>
    %684 = arith.select %492, %682, %683 : vector<32x128xi1>, vector<32x128xf32>
    %685 = arith.truncf %684 : vector<32x128xf32> to vector<32x128xbf16>
    %c20 = arith.constant 20 : index
    %c0_465 = arith.constant 0 : index
    %c0_466 = arith.constant 0 : index
    %686 = vector.load %arg1[%c20, %c0_465, %c0_466] : memref<38x32x32xbf16, #tpu.memory_space<vmem>>, vector<1x32x32xbf16>
    %687 = vector.shape_cast %686 : vector<1x32x32xbf16> to vector<32x32xbf16>
    %cst_467 = arith.constant dense<0.000000e+00> : vector<32x128xf32>
    %688 = tpu.matmul %687, %685, %cst_467 {dimension_numbers = #tpu.dot_dimension_numbers<[1], [0], [0], [1], [0, 0, 1, 1], [], []>} : vector<32x32xbf16>, vector<32x128xbf16>, vector<32x128xf32> -> vector<32x128xf32>
    %689 = arith.truncf %688 : vector<32x128xf32> to vector<32x128xbf16>
    %c21 = arith.constant 21 : index
    %c0_468 = arith.constant 0 : index
    %c0_469 = arith.constant 0 : index
    %690 = vector.load %arg1[%c21, %c0_468, %c0_469] : memref<38x32x32xbf16, #tpu.memory_space<vmem>>, vector<1x32x32xbf16>
    %691 = vector.shape_cast %690 : vector<1x32x32xbf16> to vector<32x32xbf16>
    %cst_470 = arith.constant dense<0.000000e+00> : vector<32x128xf32>
    %692 = tpu.matmul %691, %685, %cst_470 {dimension_numbers = #tpu.dot_dimension_numbers<[1], [0], [0], [1], [0, 0, 1, 1], [], []>} : vector<32x32xbf16>, vector<32x128xbf16>, vector<32x128xf32> -> vector<32x128xf32>
    %693 = arith.truncf %692 : vector<32x128xf32> to vector<32x128xbf16>
    %c22 = arith.constant 22 : index
    %c0_471 = arith.constant 0 : index
    %c0_472 = arith.constant 0 : index
    %694 = vector.load %arg1[%c22, %c0_471, %c0_472] : memref<38x32x32xbf16, #tpu.memory_space<vmem>>, vector<1x32x32xbf16>
    %695 = vector.shape_cast %694 : vector<1x32x32xbf16> to vector<32x32xbf16>
    %cst_473 = arith.constant dense<0.000000e+00> : vector<32x128xf32>
    %696 = tpu.matmul %695, %685, %cst_473 {dimension_numbers = #tpu.dot_dimension_numbers<[1], [0], [0], [1], [0, 0, 1, 1], [], []>} : vector<32x32xbf16>, vector<32x128xbf16>, vector<32x128xf32> -> vector<32x128xf32>
    %697 = arith.truncf %696 : vector<32x128xf32> to vector<32x128xbf16>
    %698 = tpu.concatenate %689, %693, %697 in 1 : vector<32x128xbf16>, vector<32x128xbf16>, vector<32x128xbf16> -> vector<32x384xbf16>
    %c11_i32_474 = arith.constant 11 : i32
    %c11_i32_475 = arith.constant 11 : i32
    %c11_i32_476 = arith.constant 11 : i32
    %c0_i32_477 = arith.constant 0 : i32
    %c0_i32_478 = arith.constant 0 : i32
    %699 = tpu.memref_slice %arg6[%c11_i32_474, %c0_i32_477, %c0_i32_478] : memref<21x384x128xbf16, #tpu.memory_space<any>> -> memref<1x384x128xbf16, #tpu.memory_space<any>>
    %700 = tpu.memref_squeeze %699 : memref<1x384x128xbf16, #tpu.memory_space<any>> -> memref<384x128xbf16, #tpu.memory_space<any>>
    %c0_i32_479 = arith.constant 0 : i32
    %c0_i32_480 = arith.constant 0 : i32
    %701 = tpu.memref_slice %arg8[%c11_i32_475, %c0_i32_479, %c0_i32_480] : memref<21x384x128xbf16, #tpu.memory_space<vmem>> -> memref<1x384x128xbf16, #tpu.memory_space<vmem>>
    %702 = tpu.memref_squeeze %701 : memref<1x384x128xbf16, #tpu.memory_space<vmem>> -> memref<384x128xbf16, #tpu.memory_space<vmem>>
    %703 = tpu.memref_slice %arg9[%c11_i32_476] : memref<21x!tpu.dma_semaphore, #tpu.memory_space<semaphore_mem>> -> memref<1x!tpu.dma_semaphore, #tpu.memory_space<semaphore_mem>>
    %704 = tpu.memref_squeeze %703 : memref<1x!tpu.dma_semaphore, #tpu.memory_space<semaphore_mem>> -> memref<!tpu.dma_semaphore, #tpu.memory_space<semaphore_mem>>
    tpu.wait_dma2 semaphore(%704 : memref<!tpu.dma_semaphore, #tpu.memory_space<semaphore_mem>>) src(%700 : memref<384x128xbf16, #tpu.memory_space<any>>) dst(%702 : memref<384x128xbf16, #tpu.memory_space<vmem>>)
    %c11_481 = arith.constant 11 : index
    %c0_482 = arith.constant 0 : index
    %c0_483 = arith.constant 0 : index
    %705 = vector.load %arg8[%c11_481, %c0_482, %c0_483] : memref<21x384x128xbf16, #tpu.memory_space<vmem>>, vector<1x384x128xbf16>
    %706 = vector.shape_cast %705 : vector<1x384x128xbf16> to vector<384x128xbf16>
    %cst_484 = arith.constant dense<0.000000e+00> : vector<32x128xf32>
    %707 = tpu.matmul %698, %706, %cst_484 {dimension_numbers = #tpu.dot_dimension_numbers<[1], [0], [0], [1], [0, 0, 1, 1], [], []>} : vector<32x384xbf16>, vector<384x128xbf16>, vector<32x128xf32> -> vector<32x128xf32>
    %cst_485 = arith.constant dense<0.000000e+00> : vector<128xf32>
    %708 = vector.multi_reduction <add>, %707, %cst_485 [0] : vector<32x128xf32> to vector<128xf32>
    %709 = vector.shape_cast %708 : vector<128xf32> to vector<1x128xf32>
    %710 = arith.mulf %707, %707 : vector<32x128xf32>
    %cst_486 = arith.constant dense<0.000000e+00> : vector<128xf32>
    %711 = vector.multi_reduction <add>, %710, %cst_486 [0] : vector<32x128xf32> to vector<128xf32>
    %712 = vector.shape_cast %711 : vector<128xf32> to vector<1x128xf32>
    %cst_487 = arith.constant 2.500000e-01 : f32
    %713 = vector.broadcast %cst_487 : f32 to vector<1x128xf32>
    %714 = arith.mulf %709, %713 : vector<1x128xf32>
    %cst_488 = arith.constant 2.500000e-01 : f32
    %715 = vector.broadcast %cst_488 : f32 to vector<1x128xf32>
    %716 = arith.mulf %712, %715 : vector<1x128xf32>
    %717 = arith.mulf %714, %714 : vector<1x128xf32>
    %718 = arith.subf %716, %717 : vector<1x128xf32>
    %cst_489 = arith.constant 0.000000e+00 : f32
    %719 = vector.broadcast %cst_489 : f32 to vector<1x128xf32>
    %720 = arith.maximumf %718, %719 : vector<1x128xf32>
    %c11_490 = arith.constant 11 : index
    %c0_491 = arith.constant 0 : index
    %c0_492 = arith.constant 0 : index
    %721 = vector.load %arg2[%c11_490, %c0_491, %c0_492] : memref<21x1x128xf32, #tpu.memory_space<vmem>>, vector<1x1x128xf32>
    %722 = vector.shape_cast %721 : vector<1x1x128xf32> to vector<1x128xf32>
    %cst_493 = arith.constant 9.99999974E-6 : f32
    %723 = vector.broadcast %cst_493 : f32 to vector<1x128xf32>
    %724 = arith.addf %720, %723 : vector<1x128xf32>
    %725 = math.rsqrt %724 : vector<1x128xf32>
    %726 = arith.mulf %722, %725 : vector<1x128xf32>
    %c11_494 = arith.constant 11 : index
    %c0_495 = arith.constant 0 : index
    %c0_496 = arith.constant 0 : index
    %727 = vector.load %arg3[%c11_494, %c0_495, %c0_496] : memref<21x1x128xf32, #tpu.memory_space<vmem>>, vector<1x1x128xf32>
    %728 = vector.shape_cast %727 : vector<1x1x128xf32> to vector<1x128xf32>
    %729 = arith.mulf %714, %726 : vector<1x128xf32>
    %730 = arith.subf %728, %729 : vector<1x128xf32>
    %731 = vector.broadcast %726 : vector<1x128xf32> to vector<32x128xf32>
    %732 = arith.mulf %707, %731 : vector<32x128xf32>
    %733 = vector.broadcast %730 : vector<1x128xf32> to vector<32x128xf32>
    %734 = arith.addf %732, %733 : vector<32x128xf32>
    %cst_497 = arith.constant 0.000000e+00 : f32
    %735 = vector.broadcast %cst_497 : f32 to vector<32x128xf32>
    %736 = arith.maximumf %734, %735 : vector<32x128xf32>
    %737 = tpu.iota {dimensions = array<i32: 0>} : vector<32x128xi32>
    %c0_i32_498 = arith.constant 0 : i32
    %738 = vector.broadcast %c0_i32_498 : i32 to vector<32x128xi32>
    %739 = arith.cmpi sge, %737, %738 : vector<32x128xi32>
    %c2_i32_499 = arith.constant 2 : i32
    %740 = vector.broadcast %c2_i32_499 : i32 to vector<32x128xi32>
    %741 = arith.cmpi slt, %737, %740 : vector<32x128xi32>
    %742 = arith.andi %739, %741 : vector<32x128xi1>
    %c16_i32_500 = arith.constant 16 : i32
    %743 = vector.broadcast %c16_i32_500 : i32 to vector<32x128xi32>
    %744 = arith.cmpi sge, %737, %743 : vector<32x128xi32>
    %c18_i32_501 = arith.constant 18 : i32
    %745 = vector.broadcast %c18_i32_501 : i32 to vector<32x128xi32>
    %746 = arith.cmpi slt, %737, %745 : vector<32x128xi32>
    %747 = arith.andi %744, %746 : vector<32x128xi1>
    %748 = arith.ori %742, %747 : vector<32x128xi1>
    %cst_502 = arith.constant 0.000000e+00 : f32
    %749 = vector.broadcast %cst_502 : f32 to vector<32x128xf32>
    %750 = arith.select %748, %736, %749 : vector<32x128xi1>, vector<32x128xf32>
    %c12_i32_503 = arith.constant 12 : i32
    %c12_i32_504 = arith.constant 12 : i32
    %c12_i32_505 = arith.constant 12 : i32
    %c0_i32_506 = arith.constant 0 : i32
    %c0_i32_507 = arith.constant 0 : i32
    %751 = tpu.memref_slice %arg6[%c12_i32_503, %c0_i32_506, %c0_i32_507] : memref<21x384x128xbf16, #tpu.memory_space<any>> -> memref<1x384x128xbf16, #tpu.memory_space<any>>
    %752 = tpu.memref_squeeze %751 : memref<1x384x128xbf16, #tpu.memory_space<any>> -> memref<384x128xbf16, #tpu.memory_space<any>>
    %c0_i32_508 = arith.constant 0 : i32
    %c0_i32_509 = arith.constant 0 : i32
    %753 = tpu.memref_slice %arg8[%c12_i32_504, %c0_i32_508, %c0_i32_509] : memref<21x384x128xbf16, #tpu.memory_space<vmem>> -> memref<1x384x128xbf16, #tpu.memory_space<vmem>>
    %754 = tpu.memref_squeeze %753 : memref<1x384x128xbf16, #tpu.memory_space<vmem>> -> memref<384x128xbf16, #tpu.memory_space<vmem>>
    %755 = tpu.memref_slice %arg9[%c12_i32_505] : memref<21x!tpu.dma_semaphore, #tpu.memory_space<semaphore_mem>> -> memref<1x!tpu.dma_semaphore, #tpu.memory_space<semaphore_mem>>
    %756 = tpu.memref_squeeze %755 : memref<1x!tpu.dma_semaphore, #tpu.memory_space<semaphore_mem>> -> memref<!tpu.dma_semaphore, #tpu.memory_space<semaphore_mem>>
    tpu.wait_dma2 semaphore(%756 : memref<!tpu.dma_semaphore, #tpu.memory_space<semaphore_mem>>) src(%752 : memref<384x128xbf16, #tpu.memory_space<any>>) dst(%754 : memref<384x128xbf16, #tpu.memory_space<vmem>>)
    %c12_510 = arith.constant 12 : index
    %c0_511 = arith.constant 0 : index
    %c0_512 = arith.constant 0 : index
    %757 = vector.load %arg8[%c12_510, %c0_511, %c0_512] : memref<21x384x128xbf16, #tpu.memory_space<vmem>>, vector<1x384x128xbf16>
    %758 = vector.shape_cast %757 : vector<1x384x128xbf16> to vector<384x128xbf16>
    %cst_513 = arith.constant dense<0.000000e+00> : vector<32x128xf32>
    %759 = tpu.matmul %698, %758, %cst_513 {dimension_numbers = #tpu.dot_dimension_numbers<[1], [0], [0], [1], [0, 0, 1, 1], [], []>} : vector<32x384xbf16>, vector<384x128xbf16>, vector<32x128xf32> -> vector<32x128xf32>
    %cst_514 = arith.constant dense<0.000000e+00> : vector<128xf32>
    %760 = vector.multi_reduction <add>, %759, %cst_514 [0] : vector<32x128xf32> to vector<128xf32>
    %761 = vector.shape_cast %760 : vector<128xf32> to vector<1x128xf32>
    %762 = arith.mulf %759, %759 : vector<32x128xf32>
    %cst_515 = arith.constant dense<0.000000e+00> : vector<128xf32>
    %763 = vector.multi_reduction <add>, %762, %cst_515 [0] : vector<32x128xf32> to vector<128xf32>
    %764 = vector.shape_cast %763 : vector<128xf32> to vector<1x128xf32>
    %cst_516 = arith.constant 2.500000e-01 : f32
    %765 = vector.broadcast %cst_516 : f32 to vector<1x128xf32>
    %766 = arith.mulf %761, %765 : vector<1x128xf32>
    %cst_517 = arith.constant 2.500000e-01 : f32
    %767 = vector.broadcast %cst_517 : f32 to vector<1x128xf32>
    %768 = arith.mulf %764, %767 : vector<1x128xf32>
    %769 = arith.mulf %766, %766 : vector<1x128xf32>
    %770 = arith.subf %768, %769 : vector<1x128xf32>
    %cst_518 = arith.constant 0.000000e+00 : f32
    %771 = vector.broadcast %cst_518 : f32 to vector<1x128xf32>
    %772 = arith.maximumf %770, %771 : vector<1x128xf32>
    %c12_519 = arith.constant 12 : index
    %c0_520 = arith.constant 0 : index
    %c0_521 = arith.constant 0 : index
    %773 = vector.load %arg2[%c12_519, %c0_520, %c0_521] : memref<21x1x128xf32, #tpu.memory_space<vmem>>, vector<1x1x128xf32>
    %774 = vector.shape_cast %773 : vector<1x1x128xf32> to vector<1x128xf32>
    %cst_522 = arith.constant 9.99999974E-6 : f32
    %775 = vector.broadcast %cst_522 : f32 to vector<1x128xf32>
    %776 = arith.addf %772, %775 : vector<1x128xf32>
    %777 = math.rsqrt %776 : vector<1x128xf32>
    %778 = arith.mulf %774, %777 : vector<1x128xf32>
    %c12_523 = arith.constant 12 : index
    %c0_524 = arith.constant 0 : index
    %c0_525 = arith.constant 0 : index
    %779 = vector.load %arg3[%c12_523, %c0_524, %c0_525] : memref<21x1x128xf32, #tpu.memory_space<vmem>>, vector<1x1x128xf32>
    %780 = vector.shape_cast %779 : vector<1x1x128xf32> to vector<1x128xf32>
    %781 = arith.mulf %766, %778 : vector<1x128xf32>
    %782 = arith.subf %780, %781 : vector<1x128xf32>
    %783 = vector.broadcast %778 : vector<1x128xf32> to vector<32x128xf32>
    %784 = arith.mulf %759, %783 : vector<32x128xf32>
    %785 = vector.broadcast %782 : vector<1x128xf32> to vector<32x128xf32>
    %786 = arith.addf %784, %785 : vector<32x128xf32>
    %cst_526 = arith.constant 0.000000e+00 : f32
    %787 = vector.broadcast %cst_526 : f32 to vector<32x128xf32>
    %788 = arith.select %748, %786, %787 : vector<32x128xi1>, vector<32x128xf32>
    %789 = arith.truncf %750 : vector<32x128xf32> to vector<32x128xbf16>
    %c23 = arith.constant 23 : index
    %c0_527 = arith.constant 0 : index
    %c0_528 = arith.constant 0 : index
    %790 = vector.load %arg1[%c23, %c0_527, %c0_528] : memref<38x32x32xbf16, #tpu.memory_space<vmem>>, vector<1x32x32xbf16>
    %791 = vector.shape_cast %790 : vector<1x32x32xbf16> to vector<32x32xbf16>
    %cst_529 = arith.constant dense<0.000000e+00> : vector<32x128xf32>
    %792 = tpu.matmul %791, %789, %cst_529 {dimension_numbers = #tpu.dot_dimension_numbers<[1], [0], [0], [1], [0, 0, 1, 1], [], []>} : vector<32x32xbf16>, vector<32x128xbf16>, vector<32x128xf32> -> vector<32x128xf32>
    %793 = arith.truncf %792 : vector<32x128xf32> to vector<32x128xbf16>
    %c24 = arith.constant 24 : index
    %c0_530 = arith.constant 0 : index
    %c0_531 = arith.constant 0 : index
    %794 = vector.load %arg1[%c24, %c0_530, %c0_531] : memref<38x32x32xbf16, #tpu.memory_space<vmem>>, vector<1x32x32xbf16>
    %795 = vector.shape_cast %794 : vector<1x32x32xbf16> to vector<32x32xbf16>
    %cst_532 = arith.constant dense<0.000000e+00> : vector<32x128xf32>
    %796 = tpu.matmul %795, %789, %cst_532 {dimension_numbers = #tpu.dot_dimension_numbers<[1], [0], [0], [1], [0, 0, 1, 1], [], []>} : vector<32x32xbf16>, vector<32x128xbf16>, vector<32x128xf32> -> vector<32x128xf32>
    %797 = arith.truncf %796 : vector<32x128xf32> to vector<32x128xbf16>
    %798 = tpu.concatenate %793, %789, %797 in 1 : vector<32x128xbf16>, vector<32x128xbf16>, vector<32x128xbf16> -> vector<32x384xbf16>
    %c13_i32_533 = arith.constant 13 : i32
    %c13_i32_534 = arith.constant 13 : i32
    %c13_i32_535 = arith.constant 13 : i32
    %c0_i32_536 = arith.constant 0 : i32
    %c0_i32_537 = arith.constant 0 : i32
    %799 = tpu.memref_slice %arg6[%c13_i32_533, %c0_i32_536, %c0_i32_537] : memref<21x384x128xbf16, #tpu.memory_space<any>> -> memref<1x384x128xbf16, #tpu.memory_space<any>>
    %800 = tpu.memref_squeeze %799 : memref<1x384x128xbf16, #tpu.memory_space<any>> -> memref<384x128xbf16, #tpu.memory_space<any>>
    %c0_i32_538 = arith.constant 0 : i32
    %c0_i32_539 = arith.constant 0 : i32
    %801 = tpu.memref_slice %arg8[%c13_i32_534, %c0_i32_538, %c0_i32_539] : memref<21x384x128xbf16, #tpu.memory_space<vmem>> -> memref<1x384x128xbf16, #tpu.memory_space<vmem>>
    %802 = tpu.memref_squeeze %801 : memref<1x384x128xbf16, #tpu.memory_space<vmem>> -> memref<384x128xbf16, #tpu.memory_space<vmem>>
    %803 = tpu.memref_slice %arg9[%c13_i32_535] : memref<21x!tpu.dma_semaphore, #tpu.memory_space<semaphore_mem>> -> memref<1x!tpu.dma_semaphore, #tpu.memory_space<semaphore_mem>>
    %804 = tpu.memref_squeeze %803 : memref<1x!tpu.dma_semaphore, #tpu.memory_space<semaphore_mem>> -> memref<!tpu.dma_semaphore, #tpu.memory_space<semaphore_mem>>
    tpu.wait_dma2 semaphore(%804 : memref<!tpu.dma_semaphore, #tpu.memory_space<semaphore_mem>>) src(%800 : memref<384x128xbf16, #tpu.memory_space<any>>) dst(%802 : memref<384x128xbf16, #tpu.memory_space<vmem>>)
    %c13_540 = arith.constant 13 : index
    %c0_541 = arith.constant 0 : index
    %c0_542 = arith.constant 0 : index
    %805 = vector.load %arg8[%c13_540, %c0_541, %c0_542] : memref<21x384x128xbf16, #tpu.memory_space<vmem>>, vector<1x384x128xbf16>
    %806 = vector.shape_cast %805 : vector<1x384x128xbf16> to vector<384x128xbf16>
    %cst_543 = arith.constant dense<0.000000e+00> : vector<32x128xf32>
    %807 = tpu.matmul %798, %806, %cst_543 {dimension_numbers = #tpu.dot_dimension_numbers<[1], [0], [0], [1], [0, 0, 1, 1], [], []>} : vector<32x384xbf16>, vector<384x128xbf16>, vector<32x128xf32> -> vector<32x128xf32>
    %cst_544 = arith.constant dense<0.000000e+00> : vector<128xf32>
    %808 = vector.multi_reduction <add>, %807, %cst_544 [0] : vector<32x128xf32> to vector<128xf32>
    %809 = vector.shape_cast %808 : vector<128xf32> to vector<1x128xf32>
    %810 = arith.mulf %807, %807 : vector<32x128xf32>
    %cst_545 = arith.constant dense<0.000000e+00> : vector<128xf32>
    %811 = vector.multi_reduction <add>, %810, %cst_545 [0] : vector<32x128xf32> to vector<128xf32>
    %812 = vector.shape_cast %811 : vector<128xf32> to vector<1x128xf32>
    %cst_546 = arith.constant 2.500000e-01 : f32
    %813 = vector.broadcast %cst_546 : f32 to vector<1x128xf32>
    %814 = arith.mulf %809, %813 : vector<1x128xf32>
    %cst_547 = arith.constant 2.500000e-01 : f32
    %815 = vector.broadcast %cst_547 : f32 to vector<1x128xf32>
    %816 = arith.mulf %812, %815 : vector<1x128xf32>
    %817 = arith.mulf %814, %814 : vector<1x128xf32>
    %818 = arith.subf %816, %817 : vector<1x128xf32>
    %cst_548 = arith.constant 0.000000e+00 : f32
    %819 = vector.broadcast %cst_548 : f32 to vector<1x128xf32>
    %820 = arith.maximumf %818, %819 : vector<1x128xf32>
    %c13_549 = arith.constant 13 : index
    %c0_550 = arith.constant 0 : index
    %c0_551 = arith.constant 0 : index
    %821 = vector.load %arg2[%c13_549, %c0_550, %c0_551] : memref<21x1x128xf32, #tpu.memory_space<vmem>>, vector<1x1x128xf32>
    %822 = vector.shape_cast %821 : vector<1x1x128xf32> to vector<1x128xf32>
    %cst_552 = arith.constant 9.99999974E-6 : f32
    %823 = vector.broadcast %cst_552 : f32 to vector<1x128xf32>
    %824 = arith.addf %820, %823 : vector<1x128xf32>
    %825 = math.rsqrt %824 : vector<1x128xf32>
    %826 = arith.mulf %822, %825 : vector<1x128xf32>
    %c13_553 = arith.constant 13 : index
    %c0_554 = arith.constant 0 : index
    %c0_555 = arith.constant 0 : index
    %827 = vector.load %arg3[%c13_553, %c0_554, %c0_555] : memref<21x1x128xf32, #tpu.memory_space<vmem>>, vector<1x1x128xf32>
    %828 = vector.shape_cast %827 : vector<1x1x128xf32> to vector<1x128xf32>
    %829 = arith.mulf %814, %826 : vector<1x128xf32>
    %830 = arith.subf %828, %829 : vector<1x128xf32>
    %831 = vector.broadcast %826 : vector<1x128xf32> to vector<32x128xf32>
    %832 = arith.mulf %807, %831 : vector<32x128xf32>
    %833 = vector.broadcast %830 : vector<1x128xf32> to vector<32x128xf32>
    %834 = arith.addf %832, %833 : vector<32x128xf32>
    %835 = arith.addf %834, %788 : vector<32x128xf32>
    %cst_556 = arith.constant 0.000000e+00 : f32
    %836 = vector.broadcast %cst_556 : f32 to vector<32x128xf32>
    %837 = arith.maximumf %835, %836 : vector<32x128xf32>
    %cst_557 = arith.constant 0.000000e+00 : f32
    %838 = vector.broadcast %cst_557 : f32 to vector<32x128xf32>
    %839 = arith.select %748, %837, %838 : vector<32x128xi1>, vector<32x128xf32>
    %840 = arith.truncf %839 : vector<32x128xf32> to vector<32x128xbf16>
    %c25 = arith.constant 25 : index
    %c0_558 = arith.constant 0 : index
    %c0_559 = arith.constant 0 : index
    %841 = vector.load %arg1[%c25, %c0_558, %c0_559] : memref<38x32x32xbf16, #tpu.memory_space<vmem>>, vector<1x32x32xbf16>
    %842 = vector.shape_cast %841 : vector<1x32x32xbf16> to vector<32x32xbf16>
    %cst_560 = arith.constant dense<0.000000e+00> : vector<32x128xf32>
    %843 = tpu.matmul %842, %840, %cst_560 {dimension_numbers = #tpu.dot_dimension_numbers<[1], [0], [0], [1], [0, 0, 1, 1], [], []>} : vector<32x32xbf16>, vector<32x128xbf16>, vector<32x128xf32> -> vector<32x128xf32>
    %844 = arith.truncf %843 : vector<32x128xf32> to vector<32x128xbf16>
    %c26 = arith.constant 26 : index
    %c0_561 = arith.constant 0 : index
    %c0_562 = arith.constant 0 : index
    %845 = vector.load %arg1[%c26, %c0_561, %c0_562] : memref<38x32x32xbf16, #tpu.memory_space<vmem>>, vector<1x32x32xbf16>
    %846 = vector.shape_cast %845 : vector<1x32x32xbf16> to vector<32x32xbf16>
    %cst_563 = arith.constant dense<0.000000e+00> : vector<32x128xf32>
    %847 = tpu.matmul %846, %840, %cst_563 {dimension_numbers = #tpu.dot_dimension_numbers<[1], [0], [0], [1], [0, 0, 1, 1], [], []>} : vector<32x32xbf16>, vector<32x128xbf16>, vector<32x128xf32> -> vector<32x128xf32>
    %848 = arith.truncf %847 : vector<32x128xf32> to vector<32x128xbf16>
    %849 = tpu.concatenate %844, %840, %848 in 1 : vector<32x128xbf16>, vector<32x128xbf16>, vector<32x128xbf16> -> vector<32x384xbf16>
    %c14_i32_564 = arith.constant 14 : i32
    %c14_i32_565 = arith.constant 14 : i32
    %c14_i32_566 = arith.constant 14 : i32
    %c0_i32_567 = arith.constant 0 : i32
    %c0_i32_568 = arith.constant 0 : i32
    %850 = tpu.memref_slice %arg6[%c14_i32_564, %c0_i32_567, %c0_i32_568] : memref<21x384x128xbf16, #tpu.memory_space<any>> -> memref<1x384x128xbf16, #tpu.memory_space<any>>
    %851 = tpu.memref_squeeze %850 : memref<1x384x128xbf16, #tpu.memory_space<any>> -> memref<384x128xbf16, #tpu.memory_space<any>>
    %c0_i32_569 = arith.constant 0 : i32
    %c0_i32_570 = arith.constant 0 : i32
    %852 = tpu.memref_slice %arg8[%c14_i32_565, %c0_i32_569, %c0_i32_570] : memref<21x384x128xbf16, #tpu.memory_space<vmem>> -> memref<1x384x128xbf16, #tpu.memory_space<vmem>>
    %853 = tpu.memref_squeeze %852 : memref<1x384x128xbf16, #tpu.memory_space<vmem>> -> memref<384x128xbf16, #tpu.memory_space<vmem>>
    %854 = tpu.memref_slice %arg9[%c14_i32_566] : memref<21x!tpu.dma_semaphore, #tpu.memory_space<semaphore_mem>> -> memref<1x!tpu.dma_semaphore, #tpu.memory_space<semaphore_mem>>
    %855 = tpu.memref_squeeze %854 : memref<1x!tpu.dma_semaphore, #tpu.memory_space<semaphore_mem>> -> memref<!tpu.dma_semaphore, #tpu.memory_space<semaphore_mem>>
    tpu.wait_dma2 semaphore(%855 : memref<!tpu.dma_semaphore, #tpu.memory_space<semaphore_mem>>) src(%851 : memref<384x128xbf16, #tpu.memory_space<any>>) dst(%853 : memref<384x128xbf16, #tpu.memory_space<vmem>>)
    %c14_571 = arith.constant 14 : index
    %c0_572 = arith.constant 0 : index
    %c0_573 = arith.constant 0 : index
    %856 = vector.load %arg8[%c14_571, %c0_572, %c0_573] : memref<21x384x128xbf16, #tpu.memory_space<vmem>>, vector<1x384x128xbf16>
    %857 = vector.shape_cast %856 : vector<1x384x128xbf16> to vector<384x128xbf16>
    %cst_574 = arith.constant dense<0.000000e+00> : vector<32x128xf32>
    %858 = tpu.matmul %849, %857, %cst_574 {dimension_numbers = #tpu.dot_dimension_numbers<[1], [0], [0], [1], [0, 0, 1, 1], [], []>} : vector<32x384xbf16>, vector<384x128xbf16>, vector<32x128xf32> -> vector<32x128xf32>
    %cst_575 = arith.constant dense<0.000000e+00> : vector<128xf32>
    %859 = vector.multi_reduction <add>, %858, %cst_575 [0] : vector<32x128xf32> to vector<128xf32>
    %860 = vector.shape_cast %859 : vector<128xf32> to vector<1x128xf32>
    %861 = arith.mulf %858, %858 : vector<32x128xf32>
    %cst_576 = arith.constant dense<0.000000e+00> : vector<128xf32>
    %862 = vector.multi_reduction <add>, %861, %cst_576 [0] : vector<32x128xf32> to vector<128xf32>
    %863 = vector.shape_cast %862 : vector<128xf32> to vector<1x128xf32>
    %cst_577 = arith.constant 2.500000e-01 : f32
    %864 = vector.broadcast %cst_577 : f32 to vector<1x128xf32>
    %865 = arith.mulf %860, %864 : vector<1x128xf32>
    %cst_578 = arith.constant 2.500000e-01 : f32
    %866 = vector.broadcast %cst_578 : f32 to vector<1x128xf32>
    %867 = arith.mulf %863, %866 : vector<1x128xf32>
    %868 = arith.mulf %865, %865 : vector<1x128xf32>
    %869 = arith.subf %867, %868 : vector<1x128xf32>
    %cst_579 = arith.constant 0.000000e+00 : f32
    %870 = vector.broadcast %cst_579 : f32 to vector<1x128xf32>
    %871 = arith.maximumf %869, %870 : vector<1x128xf32>
    %c14_580 = arith.constant 14 : index
    %c0_581 = arith.constant 0 : index
    %c0_582 = arith.constant 0 : index
    %872 = vector.load %arg2[%c14_580, %c0_581, %c0_582] : memref<21x1x128xf32, #tpu.memory_space<vmem>>, vector<1x1x128xf32>
    %873 = vector.shape_cast %872 : vector<1x1x128xf32> to vector<1x128xf32>
    %cst_583 = arith.constant 9.99999974E-6 : f32
    %874 = vector.broadcast %cst_583 : f32 to vector<1x128xf32>
    %875 = arith.addf %871, %874 : vector<1x128xf32>
    %876 = math.rsqrt %875 : vector<1x128xf32>
    %877 = arith.mulf %873, %876 : vector<1x128xf32>
    %c14_584 = arith.constant 14 : index
    %c0_585 = arith.constant 0 : index
    %c0_586 = arith.constant 0 : index
    %878 = vector.load %arg3[%c14_584, %c0_585, %c0_586] : memref<21x1x128xf32, #tpu.memory_space<vmem>>, vector<1x1x128xf32>
    %879 = vector.shape_cast %878 : vector<1x1x128xf32> to vector<1x128xf32>
    %880 = arith.mulf %865, %877 : vector<1x128xf32>
    %881 = arith.subf %879, %880 : vector<1x128xf32>
    %882 = vector.broadcast %877 : vector<1x128xf32> to vector<32x128xf32>
    %883 = arith.mulf %858, %882 : vector<32x128xf32>
    %884 = vector.broadcast %881 : vector<1x128xf32> to vector<32x128xf32>
    %885 = arith.addf %883, %884 : vector<32x128xf32>
    %cst_587 = arith.constant 0.000000e+00 : f32
    %886 = vector.broadcast %cst_587 : f32 to vector<32x128xf32>
    %887 = arith.maximumf %885, %886 : vector<32x128xf32>
    %cst_588 = arith.constant 0.000000e+00 : f32
    %888 = vector.broadcast %cst_588 : f32 to vector<32x128xf32>
    %889 = arith.select %748, %887, %888 : vector<32x128xi1>, vector<32x128xf32>
    %890 = arith.truncf %889 : vector<32x128xf32> to vector<32x128xbf16>
    %c27 = arith.constant 27 : index
    %c0_589 = arith.constant 0 : index
    %c0_590 = arith.constant 0 : index
    %891 = vector.load %arg1[%c27, %c0_589, %c0_590] : memref<38x32x32xbf16, #tpu.memory_space<vmem>>, vector<1x32x32xbf16>
    %892 = vector.shape_cast %891 : vector<1x32x32xbf16> to vector<32x32xbf16>
    %cst_591 = arith.constant dense<0.000000e+00> : vector<32x128xf32>
    %893 = tpu.matmul %892, %890, %cst_591 {dimension_numbers = #tpu.dot_dimension_numbers<[1], [0], [0], [1], [0, 0, 1, 1], [], []>} : vector<32x32xbf16>, vector<32x128xbf16>, vector<32x128xf32> -> vector<32x128xf32>
    %894 = arith.truncf %893 : vector<32x128xf32> to vector<32x128xbf16>
    %c28 = arith.constant 28 : index
    %c0_592 = arith.constant 0 : index
    %c0_593 = arith.constant 0 : index
    %895 = vector.load %arg1[%c28, %c0_592, %c0_593] : memref<38x32x32xbf16, #tpu.memory_space<vmem>>, vector<1x32x32xbf16>
    %896 = vector.shape_cast %895 : vector<1x32x32xbf16> to vector<32x32xbf16>
    %cst_594 = arith.constant dense<0.000000e+00> : vector<32x128xf32>
    %897 = tpu.matmul %896, %890, %cst_594 {dimension_numbers = #tpu.dot_dimension_numbers<[1], [0], [0], [1], [0, 0, 1, 1], [], []>} : vector<32x32xbf16>, vector<32x128xbf16>, vector<32x128xf32> -> vector<32x128xf32>
    %898 = arith.truncf %897 : vector<32x128xf32> to vector<32x128xbf16>
    %899 = tpu.concatenate %894, %890, %898 in 1 : vector<32x128xbf16>, vector<32x128xbf16>, vector<32x128xbf16> -> vector<32x384xbf16>
    %c15_i32_595 = arith.constant 15 : i32
    %c15_i32_596 = arith.constant 15 : i32
    %c15_i32_597 = arith.constant 15 : i32
    %c0_i32_598 = arith.constant 0 : i32
    %c0_i32_599 = arith.constant 0 : i32
    %900 = tpu.memref_slice %arg6[%c15_i32_595, %c0_i32_598, %c0_i32_599] : memref<21x384x128xbf16, #tpu.memory_space<any>> -> memref<1x384x128xbf16, #tpu.memory_space<any>>
    %901 = tpu.memref_squeeze %900 : memref<1x384x128xbf16, #tpu.memory_space<any>> -> memref<384x128xbf16, #tpu.memory_space<any>>
    %c0_i32_600 = arith.constant 0 : i32
    %c0_i32_601 = arith.constant 0 : i32
    %902 = tpu.memref_slice %arg8[%c15_i32_596, %c0_i32_600, %c0_i32_601] : memref<21x384x128xbf16, #tpu.memory_space<vmem>> -> memref<1x384x128xbf16, #tpu.memory_space<vmem>>
    %903 = tpu.memref_squeeze %902 : memref<1x384x128xbf16, #tpu.memory_space<vmem>> -> memref<384x128xbf16, #tpu.memory_space<vmem>>
    %904 = tpu.memref_slice %arg9[%c15_i32_597] : memref<21x!tpu.dma_semaphore, #tpu.memory_space<semaphore_mem>> -> memref<1x!tpu.dma_semaphore, #tpu.memory_space<semaphore_mem>>
    %905 = tpu.memref_squeeze %904 : memref<1x!tpu.dma_semaphore, #tpu.memory_space<semaphore_mem>> -> memref<!tpu.dma_semaphore, #tpu.memory_space<semaphore_mem>>
    tpu.wait_dma2 semaphore(%905 : memref<!tpu.dma_semaphore, #tpu.memory_space<semaphore_mem>>) src(%901 : memref<384x128xbf16, #tpu.memory_space<any>>) dst(%903 : memref<384x128xbf16, #tpu.memory_space<vmem>>)
    %c15_602 = arith.constant 15 : index
    %c0_603 = arith.constant 0 : index
    %c0_604 = arith.constant 0 : index
    %906 = vector.load %arg8[%c15_602, %c0_603, %c0_604] : memref<21x384x128xbf16, #tpu.memory_space<vmem>>, vector<1x384x128xbf16>
    %907 = vector.shape_cast %906 : vector<1x384x128xbf16> to vector<384x128xbf16>
    %cst_605 = arith.constant dense<0.000000e+00> : vector<32x128xf32>
    %908 = tpu.matmul %899, %907, %cst_605 {dimension_numbers = #tpu.dot_dimension_numbers<[1], [0], [0], [1], [0, 0, 1, 1], [], []>} : vector<32x384xbf16>, vector<384x128xbf16>, vector<32x128xf32> -> vector<32x128xf32>
    %cst_606 = arith.constant dense<0.000000e+00> : vector<128xf32>
    %909 = vector.multi_reduction <add>, %908, %cst_606 [0] : vector<32x128xf32> to vector<128xf32>
    %910 = vector.shape_cast %909 : vector<128xf32> to vector<1x128xf32>
    %911 = arith.mulf %908, %908 : vector<32x128xf32>
    %cst_607 = arith.constant dense<0.000000e+00> : vector<128xf32>
    %912 = vector.multi_reduction <add>, %911, %cst_607 [0] : vector<32x128xf32> to vector<128xf32>
    %913 = vector.shape_cast %912 : vector<128xf32> to vector<1x128xf32>
    %cst_608 = arith.constant 2.500000e-01 : f32
    %914 = vector.broadcast %cst_608 : f32 to vector<1x128xf32>
    %915 = arith.mulf %910, %914 : vector<1x128xf32>
    %cst_609 = arith.constant 2.500000e-01 : f32
    %916 = vector.broadcast %cst_609 : f32 to vector<1x128xf32>
    %917 = arith.mulf %913, %916 : vector<1x128xf32>
    %918 = arith.mulf %915, %915 : vector<1x128xf32>
    %919 = arith.subf %917, %918 : vector<1x128xf32>
    %cst_610 = arith.constant 0.000000e+00 : f32
    %920 = vector.broadcast %cst_610 : f32 to vector<1x128xf32>
    %921 = arith.maximumf %919, %920 : vector<1x128xf32>
    %c15_611 = arith.constant 15 : index
    %c0_612 = arith.constant 0 : index
    %c0_613 = arith.constant 0 : index
    %922 = vector.load %arg2[%c15_611, %c0_612, %c0_613] : memref<21x1x128xf32, #tpu.memory_space<vmem>>, vector<1x1x128xf32>
    %923 = vector.shape_cast %922 : vector<1x1x128xf32> to vector<1x128xf32>
    %cst_614 = arith.constant 9.99999974E-6 : f32
    %924 = vector.broadcast %cst_614 : f32 to vector<1x128xf32>
    %925 = arith.addf %921, %924 : vector<1x128xf32>
    %926 = math.rsqrt %925 : vector<1x128xf32>
    %927 = arith.mulf %923, %926 : vector<1x128xf32>
    %c15_615 = arith.constant 15 : index
    %c0_616 = arith.constant 0 : index
    %c0_617 = arith.constant 0 : index
    %928 = vector.load %arg3[%c15_615, %c0_616, %c0_617] : memref<21x1x128xf32, #tpu.memory_space<vmem>>, vector<1x1x128xf32>
    %929 = vector.shape_cast %928 : vector<1x1x128xf32> to vector<1x128xf32>
    %930 = arith.mulf %915, %927 : vector<1x128xf32>
    %931 = arith.subf %929, %930 : vector<1x128xf32>
    %932 = vector.broadcast %927 : vector<1x128xf32> to vector<32x128xf32>
    %933 = arith.mulf %908, %932 : vector<32x128xf32>
    %934 = vector.broadcast %931 : vector<1x128xf32> to vector<32x128xf32>
    %935 = arith.addf %933, %934 : vector<32x128xf32>
    %936 = arith.addf %935, %839 : vector<32x128xf32>
    %cst_618 = arith.constant 0.000000e+00 : f32
    %937 = vector.broadcast %cst_618 : f32 to vector<32x128xf32>
    %938 = arith.maximumf %936, %937 : vector<32x128xf32>
    %cst_619 = arith.constant 0.000000e+00 : f32
    %939 = vector.broadcast %cst_619 : f32 to vector<32x128xf32>
    %940 = arith.select %748, %938, %939 : vector<32x128xi1>, vector<32x128xf32>
    %941 = arith.truncf %940 : vector<32x128xf32> to vector<32x128xbf16>
    %cst_620 = arith.constant 0.000000e+00 : bf16
    %942 = vector.broadcast %cst_620 : bf16 to vector<32x128xbf16>
    %c30 = arith.constant 30 : index
    %c0_621 = arith.constant 0 : index
    %c0_622 = arith.constant 0 : index
    %943 = vector.load %arg1[%c30, %c0_621, %c0_622] : memref<38x32x32xbf16, #tpu.memory_space<vmem>>, vector<1x32x32xbf16>
    %944 = vector.shape_cast %943 : vector<1x32x32xbf16> to vector<32x32xbf16>
    %cst_623 = arith.constant dense<0.000000e+00> : vector<32x128xf32>
    %945 = tpu.matmul %944, %941, %cst_623 {dimension_numbers = #tpu.dot_dimension_numbers<[1], [0], [0], [1], [0, 0, 1, 1], [], []>} : vector<32x32xbf16>, vector<32x128xbf16>, vector<32x128xf32> -> vector<32x128xf32>
    %946 = arith.truncf %945 : vector<32x128xf32> to vector<32x128xbf16>
    %c31 = arith.constant 31 : index
    %c0_624 = arith.constant 0 : index
    %c0_625 = arith.constant 0 : index
    %947 = vector.load %arg1[%c31, %c0_624, %c0_625] : memref<38x32x32xbf16, #tpu.memory_space<vmem>>, vector<1x32x32xbf16>
    %948 = vector.shape_cast %947 : vector<1x32x32xbf16> to vector<32x32xbf16>
    %cst_626 = arith.constant dense<0.000000e+00> : vector<32x128xf32>
    %949 = tpu.matmul %948, %941, %cst_626 {dimension_numbers = #tpu.dot_dimension_numbers<[1], [0], [0], [1], [0, 0, 1, 1], [], []>} : vector<32x32xbf16>, vector<32x128xbf16>, vector<32x128xf32> -> vector<32x128xf32>
    %950 = arith.truncf %949 : vector<32x128xf32> to vector<32x128xbf16>
    %951 = tpu.concatenate %942, %946, %950 in 1 : vector<32x128xbf16>, vector<32x128xbf16>, vector<32x128xbf16> -> vector<32x384xbf16>
    %c16_i32_627 = arith.constant 16 : i32
    %c16_i32_628 = arith.constant 16 : i32
    %c16_i32_629 = arith.constant 16 : i32
    %c0_i32_630 = arith.constant 0 : i32
    %c0_i32_631 = arith.constant 0 : i32
    %952 = tpu.memref_slice %arg6[%c16_i32_627, %c0_i32_630, %c0_i32_631] : memref<21x384x128xbf16, #tpu.memory_space<any>> -> memref<1x384x128xbf16, #tpu.memory_space<any>>
    %953 = tpu.memref_squeeze %952 : memref<1x384x128xbf16, #tpu.memory_space<any>> -> memref<384x128xbf16, #tpu.memory_space<any>>
    %c0_i32_632 = arith.constant 0 : i32
    %c0_i32_633 = arith.constant 0 : i32
    %954 = tpu.memref_slice %arg8[%c16_i32_628, %c0_i32_632, %c0_i32_633] : memref<21x384x128xbf16, #tpu.memory_space<vmem>> -> memref<1x384x128xbf16, #tpu.memory_space<vmem>>
    %955 = tpu.memref_squeeze %954 : memref<1x384x128xbf16, #tpu.memory_space<vmem>> -> memref<384x128xbf16, #tpu.memory_space<vmem>>
    %956 = tpu.memref_slice %arg9[%c16_i32_629] : memref<21x!tpu.dma_semaphore, #tpu.memory_space<semaphore_mem>> -> memref<1x!tpu.dma_semaphore, #tpu.memory_space<semaphore_mem>>
    %957 = tpu.memref_squeeze %956 : memref<1x!tpu.dma_semaphore, #tpu.memory_space<semaphore_mem>> -> memref<!tpu.dma_semaphore, #tpu.memory_space<semaphore_mem>>
    tpu.wait_dma2 semaphore(%957 : memref<!tpu.dma_semaphore, #tpu.memory_space<semaphore_mem>>) src(%953 : memref<384x128xbf16, #tpu.memory_space<any>>) dst(%955 : memref<384x128xbf16, #tpu.memory_space<vmem>>)
    %c16_634 = arith.constant 16 : index
    %c0_635 = arith.constant 0 : index
    %c0_636 = arith.constant 0 : index
    %958 = vector.load %arg8[%c16_634, %c0_635, %c0_636] : memref<21x384x128xbf16, #tpu.memory_space<vmem>>, vector<1x384x128xbf16>
    %959 = vector.shape_cast %958 : vector<1x384x128xbf16> to vector<384x128xbf16>
    %cst_637 = arith.constant dense<0.000000e+00> : vector<32x128xf32>
    %960 = tpu.matmul %951, %959, %cst_637 {dimension_numbers = #tpu.dot_dimension_numbers<[1], [0], [0], [1], [0, 0, 1, 1], [], []>} : vector<32x384xbf16>, vector<384x128xbf16>, vector<32x128xf32> -> vector<32x128xf32>
    %cst_638 = arith.constant dense<0.000000e+00> : vector<128xf32>
    %961 = vector.multi_reduction <add>, %960, %cst_638 [0] : vector<32x128xf32> to vector<128xf32>
    %962 = vector.shape_cast %961 : vector<128xf32> to vector<1x128xf32>
    %963 = arith.mulf %960, %960 : vector<32x128xf32>
    %cst_639 = arith.constant dense<0.000000e+00> : vector<128xf32>
    %964 = vector.multi_reduction <add>, %963, %cst_639 [0] : vector<32x128xf32> to vector<128xf32>
    %965 = vector.shape_cast %964 : vector<128xf32> to vector<1x128xf32>
    %cst_640 = arith.constant 5.000000e-01 : f32
    %966 = vector.broadcast %cst_640 : f32 to vector<1x128xf32>
    %967 = arith.mulf %962, %966 : vector<1x128xf32>
    %cst_641 = arith.constant 5.000000e-01 : f32
    %968 = vector.broadcast %cst_641 : f32 to vector<1x128xf32>
    %969 = arith.mulf %965, %968 : vector<1x128xf32>
    %970 = arith.mulf %967, %967 : vector<1x128xf32>
    %971 = arith.subf %969, %970 : vector<1x128xf32>
    %cst_642 = arith.constant 0.000000e+00 : f32
    %972 = vector.broadcast %cst_642 : f32 to vector<1x128xf32>
    %973 = arith.maximumf %971, %972 : vector<1x128xf32>
    %c16_643 = arith.constant 16 : index
    %c0_644 = arith.constant 0 : index
    %c0_645 = arith.constant 0 : index
    %974 = vector.load %arg2[%c16_643, %c0_644, %c0_645] : memref<21x1x128xf32, #tpu.memory_space<vmem>>, vector<1x1x128xf32>
    %975 = vector.shape_cast %974 : vector<1x1x128xf32> to vector<1x128xf32>
    %cst_646 = arith.constant 9.99999974E-6 : f32
    %976 = vector.broadcast %cst_646 : f32 to vector<1x128xf32>
    %977 = arith.addf %973, %976 : vector<1x128xf32>
    %978 = math.rsqrt %977 : vector<1x128xf32>
    %979 = arith.mulf %975, %978 : vector<1x128xf32>
    %c16_647 = arith.constant 16 : index
    %c0_648 = arith.constant 0 : index
    %c0_649 = arith.constant 0 : index
    %980 = vector.load %arg3[%c16_647, %c0_648, %c0_649] : memref<21x1x128xf32, #tpu.memory_space<vmem>>, vector<1x1x128xf32>
    %981 = vector.shape_cast %980 : vector<1x1x128xf32> to vector<1x128xf32>
    %982 = arith.mulf %967, %979 : vector<1x128xf32>
    %983 = arith.subf %981, %982 : vector<1x128xf32>
    %984 = vector.broadcast %979 : vector<1x128xf32> to vector<32x128xf32>
    %985 = arith.mulf %960, %984 : vector<32x128xf32>
    %986 = vector.broadcast %983 : vector<1x128xf32> to vector<32x128xf32>
    %987 = arith.addf %985, %986 : vector<32x128xf32>
    %cst_650 = arith.constant 0.000000e+00 : f32
    %988 = vector.broadcast %cst_650 : f32 to vector<32x128xf32>
    %989 = arith.maximumf %987, %988 : vector<32x128xf32>
    %990 = tpu.iota {dimensions = array<i32: 0>} : vector<32x128xi32>
    %c0_i32_651 = arith.constant 0 : i32
    %991 = vector.broadcast %c0_i32_651 : i32 to vector<32x128xi32>
    %992 = arith.cmpi sge, %990, %991 : vector<32x128xi32>
    %c1_i32_652 = arith.constant 1 : i32
    %993 = vector.broadcast %c1_i32_652 : i32 to vector<32x128xi32>
    %994 = arith.cmpi slt, %990, %993 : vector<32x128xi32>
    %995 = arith.andi %992, %994 : vector<32x128xi1>
    %c16_i32_653 = arith.constant 16 : i32
    %996 = vector.broadcast %c16_i32_653 : i32 to vector<32x128xi32>
    %997 = arith.cmpi sge, %990, %996 : vector<32x128xi32>
    %c17_i32_654 = arith.constant 17 : i32
    %998 = vector.broadcast %c17_i32_654 : i32 to vector<32x128xi32>
    %999 = arith.cmpi slt, %990, %998 : vector<32x128xi32>
    %1000 = arith.andi %997, %999 : vector<32x128xi1>
    %1001 = arith.ori %995, %1000 : vector<32x128xi1>
    %cst_655 = arith.constant 0.000000e+00 : f32
    %1002 = vector.broadcast %cst_655 : f32 to vector<32x128xf32>
    %1003 = arith.select %1001, %989, %1002 : vector<32x128xi1>, vector<32x128xf32>
    %c17_i32_656 = arith.constant 17 : i32
    %c17_i32_657 = arith.constant 17 : i32
    %c17_i32_658 = arith.constant 17 : i32
    %c0_i32_659 = arith.constant 0 : i32
    %c0_i32_660 = arith.constant 0 : i32
    %1004 = tpu.memref_slice %arg6[%c17_i32_656, %c0_i32_659, %c0_i32_660] : memref<21x384x128xbf16, #tpu.memory_space<any>> -> memref<1x384x128xbf16, #tpu.memory_space<any>>
    %1005 = tpu.memref_squeeze %1004 : memref<1x384x128xbf16, #tpu.memory_space<any>> -> memref<384x128xbf16, #tpu.memory_space<any>>
    %c0_i32_661 = arith.constant 0 : i32
    %c0_i32_662 = arith.constant 0 : i32
    %1006 = tpu.memref_slice %arg8[%c17_i32_657, %c0_i32_661, %c0_i32_662] : memref<21x384x128xbf16, #tpu.memory_space<vmem>> -> memref<1x384x128xbf16, #tpu.memory_space<vmem>>
    %1007 = tpu.memref_squeeze %1006 : memref<1x384x128xbf16, #tpu.memory_space<vmem>> -> memref<384x128xbf16, #tpu.memory_space<vmem>>
    %1008 = tpu.memref_slice %arg9[%c17_i32_658] : memref<21x!tpu.dma_semaphore, #tpu.memory_space<semaphore_mem>> -> memref<1x!tpu.dma_semaphore, #tpu.memory_space<semaphore_mem>>
    %1009 = tpu.memref_squeeze %1008 : memref<1x!tpu.dma_semaphore, #tpu.memory_space<semaphore_mem>> -> memref<!tpu.dma_semaphore, #tpu.memory_space<semaphore_mem>>
    tpu.wait_dma2 semaphore(%1009 : memref<!tpu.dma_semaphore, #tpu.memory_space<semaphore_mem>>) src(%1005 : memref<384x128xbf16, #tpu.memory_space<any>>) dst(%1007 : memref<384x128xbf16, #tpu.memory_space<vmem>>)
    %c17_663 = arith.constant 17 : index
    %c0_664 = arith.constant 0 : index
    %c0_665 = arith.constant 0 : index
    %1010 = vector.load %arg8[%c17_663, %c0_664, %c0_665] : memref<21x384x128xbf16, #tpu.memory_space<vmem>>, vector<1x384x128xbf16>
    %1011 = vector.shape_cast %1010 : vector<1x384x128xbf16> to vector<384x128xbf16>
    %cst_666 = arith.constant dense<0.000000e+00> : vector<32x128xf32>
    %1012 = tpu.matmul %951, %1011, %cst_666 {dimension_numbers = #tpu.dot_dimension_numbers<[1], [0], [0], [1], [0, 0, 1, 1], [], []>} : vector<32x384xbf16>, vector<384x128xbf16>, vector<32x128xf32> -> vector<32x128xf32>
    %cst_667 = arith.constant dense<0.000000e+00> : vector<128xf32>
    %1013 = vector.multi_reduction <add>, %1012, %cst_667 [0] : vector<32x128xf32> to vector<128xf32>
    %1014 = vector.shape_cast %1013 : vector<128xf32> to vector<1x128xf32>
    %1015 = arith.mulf %1012, %1012 : vector<32x128xf32>
    %cst_668 = arith.constant dense<0.000000e+00> : vector<128xf32>
    %1016 = vector.multi_reduction <add>, %1015, %cst_668 [0] : vector<32x128xf32> to vector<128xf32>
    %1017 = vector.shape_cast %1016 : vector<128xf32> to vector<1x128xf32>
    %cst_669 = arith.constant 5.000000e-01 : f32
    %1018 = vector.broadcast %cst_669 : f32 to vector<1x128xf32>
    %1019 = arith.mulf %1014, %1018 : vector<1x128xf32>
    %cst_670 = arith.constant 5.000000e-01 : f32
    %1020 = vector.broadcast %cst_670 : f32 to vector<1x128xf32>
    %1021 = arith.mulf %1017, %1020 : vector<1x128xf32>
    %1022 = arith.mulf %1019, %1019 : vector<1x128xf32>
    %1023 = arith.subf %1021, %1022 : vector<1x128xf32>
    %cst_671 = arith.constant 0.000000e+00 : f32
    %1024 = vector.broadcast %cst_671 : f32 to vector<1x128xf32>
    %1025 = arith.maximumf %1023, %1024 : vector<1x128xf32>
    %c17_672 = arith.constant 17 : index
    %c0_673 = arith.constant 0 : index
    %c0_674 = arith.constant 0 : index
    %1026 = vector.load %arg2[%c17_672, %c0_673, %c0_674] : memref<21x1x128xf32, #tpu.memory_space<vmem>>, vector<1x1x128xf32>
    %1027 = vector.shape_cast %1026 : vector<1x1x128xf32> to vector<1x128xf32>
    %cst_675 = arith.constant 9.99999974E-6 : f32
    %1028 = vector.broadcast %cst_675 : f32 to vector<1x128xf32>
    %1029 = arith.addf %1025, %1028 : vector<1x128xf32>
    %1030 = math.rsqrt %1029 : vector<1x128xf32>
    %1031 = arith.mulf %1027, %1030 : vector<1x128xf32>
    %c17_676 = arith.constant 17 : index
    %c0_677 = arith.constant 0 : index
    %c0_678 = arith.constant 0 : index
    %1032 = vector.load %arg3[%c17_676, %c0_677, %c0_678] : memref<21x1x128xf32, #tpu.memory_space<vmem>>, vector<1x1x128xf32>
    %1033 = vector.shape_cast %1032 : vector<1x1x128xf32> to vector<1x128xf32>
    %1034 = arith.mulf %1019, %1031 : vector<1x128xf32>
    %1035 = arith.subf %1033, %1034 : vector<1x128xf32>
    %1036 = vector.broadcast %1031 : vector<1x128xf32> to vector<32x128xf32>
    %1037 = arith.mulf %1012, %1036 : vector<32x128xf32>
    %1038 = vector.broadcast %1035 : vector<1x128xf32> to vector<32x128xf32>
    %1039 = arith.addf %1037, %1038 : vector<32x128xf32>
    %cst_679 = arith.constant 0.000000e+00 : f32
    %1040 = vector.broadcast %cst_679 : f32 to vector<32x128xf32>
    %1041 = arith.select %1001, %1039, %1040 : vector<32x128xi1>, vector<32x128xf32>
    %1042 = arith.truncf %1003 : vector<32x128xf32> to vector<32x128xbf16>
    %cst_680 = arith.constant 0.000000e+00 : bf16
    %1043 = vector.broadcast %cst_680 : bf16 to vector<32x128xbf16>
    %cst_681 = arith.constant 0.000000e+00 : bf16
    %1044 = vector.broadcast %cst_681 : bf16 to vector<32x128xbf16>
    %1045 = tpu.concatenate %1043, %1042, %1044 in 1 : vector<32x128xbf16>, vector<32x128xbf16>, vector<32x128xbf16> -> vector<32x384xbf16>
    %c18_i32_682 = arith.constant 18 : i32
    %c18_i32_683 = arith.constant 18 : i32
    %c18_i32_684 = arith.constant 18 : i32
    %c0_i32_685 = arith.constant 0 : i32
    %c0_i32_686 = arith.constant 0 : i32
    %1046 = tpu.memref_slice %arg6[%c18_i32_682, %c0_i32_685, %c0_i32_686] : memref<21x384x128xbf16, #tpu.memory_space<any>> -> memref<1x384x128xbf16, #tpu.memory_space<any>>
    %1047 = tpu.memref_squeeze %1046 : memref<1x384x128xbf16, #tpu.memory_space<any>> -> memref<384x128xbf16, #tpu.memory_space<any>>
    %c0_i32_687 = arith.constant 0 : i32
    %c0_i32_688 = arith.constant 0 : i32
    %1048 = tpu.memref_slice %arg8[%c18_i32_683, %c0_i32_687, %c0_i32_688] : memref<21x384x128xbf16, #tpu.memory_space<vmem>> -> memref<1x384x128xbf16, #tpu.memory_space<vmem>>
    %1049 = tpu.memref_squeeze %1048 : memref<1x384x128xbf16, #tpu.memory_space<vmem>> -> memref<384x128xbf16, #tpu.memory_space<vmem>>
    %1050 = tpu.memref_slice %arg9[%c18_i32_684] : memref<21x!tpu.dma_semaphore, #tpu.memory_space<semaphore_mem>> -> memref<1x!tpu.dma_semaphore, #tpu.memory_space<semaphore_mem>>
    %1051 = tpu.memref_squeeze %1050 : memref<1x!tpu.dma_semaphore, #tpu.memory_space<semaphore_mem>> -> memref<!tpu.dma_semaphore, #tpu.memory_space<semaphore_mem>>
    tpu.wait_dma2 semaphore(%1051 : memref<!tpu.dma_semaphore, #tpu.memory_space<semaphore_mem>>) src(%1047 : memref<384x128xbf16, #tpu.memory_space<any>>) dst(%1049 : memref<384x128xbf16, #tpu.memory_space<vmem>>)
    %c18_689 = arith.constant 18 : index
    %c0_690 = arith.constant 0 : index
    %c0_691 = arith.constant 0 : index
    %1052 = vector.load %arg8[%c18_689, %c0_690, %c0_691] : memref<21x384x128xbf16, #tpu.memory_space<vmem>>, vector<1x384x128xbf16>
    %1053 = vector.shape_cast %1052 : vector<1x384x128xbf16> to vector<384x128xbf16>
    %cst_692 = arith.constant dense<0.000000e+00> : vector<32x128xf32>
    %1054 = tpu.matmul %1045, %1053, %cst_692 {dimension_numbers = #tpu.dot_dimension_numbers<[1], [0], [0], [1], [0, 0, 1, 1], [], []>} : vector<32x384xbf16>, vector<384x128xbf16>, vector<32x128xf32> -> vector<32x128xf32>
    %cst_693 = arith.constant dense<0.000000e+00> : vector<128xf32>
    %1055 = vector.multi_reduction <add>, %1054, %cst_693 [0] : vector<32x128xf32> to vector<128xf32>
    %1056 = vector.shape_cast %1055 : vector<128xf32> to vector<1x128xf32>
    %1057 = arith.mulf %1054, %1054 : vector<32x128xf32>
    %cst_694 = arith.constant dense<0.000000e+00> : vector<128xf32>
    %1058 = vector.multi_reduction <add>, %1057, %cst_694 [0] : vector<32x128xf32> to vector<128xf32>
    %1059 = vector.shape_cast %1058 : vector<128xf32> to vector<1x128xf32>
    %cst_695 = arith.constant 5.000000e-01 : f32
    %1060 = vector.broadcast %cst_695 : f32 to vector<1x128xf32>
    %1061 = arith.mulf %1056, %1060 : vector<1x128xf32>
    %cst_696 = arith.constant 5.000000e-01 : f32
    %1062 = vector.broadcast %cst_696 : f32 to vector<1x128xf32>
    %1063 = arith.mulf %1059, %1062 : vector<1x128xf32>
    %1064 = arith.mulf %1061, %1061 : vector<1x128xf32>
    %1065 = arith.subf %1063, %1064 : vector<1x128xf32>
    %cst_697 = arith.constant 0.000000e+00 : f32
    %1066 = vector.broadcast %cst_697 : f32 to vector<1x128xf32>
    %1067 = arith.maximumf %1065, %1066 : vector<1x128xf32>
    %c18_698 = arith.constant 18 : index
    %c0_699 = arith.constant 0 : index
    %c0_700 = arith.constant 0 : index
    %1068 = vector.load %arg2[%c18_698, %c0_699, %c0_700] : memref<21x1x128xf32, #tpu.memory_space<vmem>>, vector<1x1x128xf32>
    %1069 = vector.shape_cast %1068 : vector<1x1x128xf32> to vector<1x128xf32>
    %cst_701 = arith.constant 9.99999974E-6 : f32
    %1070 = vector.broadcast %cst_701 : f32 to vector<1x128xf32>
    %1071 = arith.addf %1067, %1070 : vector<1x128xf32>
    %1072 = math.rsqrt %1071 : vector<1x128xf32>
    %1073 = arith.mulf %1069, %1072 : vector<1x128xf32>
    %c18_702 = arith.constant 18 : index
    %c0_703 = arith.constant 0 : index
    %c0_704 = arith.constant 0 : index
    %1074 = vector.load %arg3[%c18_702, %c0_703, %c0_704] : memref<21x1x128xf32, #tpu.memory_space<vmem>>, vector<1x1x128xf32>
    %1075 = vector.shape_cast %1074 : vector<1x1x128xf32> to vector<1x128xf32>
    %1076 = arith.mulf %1061, %1073 : vector<1x128xf32>
    %1077 = arith.subf %1075, %1076 : vector<1x128xf32>
    %1078 = vector.broadcast %1073 : vector<1x128xf32> to vector<32x128xf32>
    %1079 = arith.mulf %1054, %1078 : vector<32x128xf32>
    %1080 = vector.broadcast %1077 : vector<1x128xf32> to vector<32x128xf32>
    %1081 = arith.addf %1079, %1080 : vector<32x128xf32>
    %1082 = arith.addf %1081, %1041 : vector<32x128xf32>
    %cst_705 = arith.constant 0.000000e+00 : f32
    %1083 = vector.broadcast %cst_705 : f32 to vector<32x128xf32>
    %1084 = arith.maximumf %1082, %1083 : vector<32x128xf32>
    %cst_706 = arith.constant 0.000000e+00 : f32
    %1085 = vector.broadcast %cst_706 : f32 to vector<32x128xf32>
    %1086 = arith.select %1001, %1084, %1085 : vector<32x128xi1>, vector<32x128xf32>
    %1087 = arith.truncf %1086 : vector<32x128xf32> to vector<32x128xbf16>
    %cst_707 = arith.constant 0.000000e+00 : bf16
    %1088 = vector.broadcast %cst_707 : bf16 to vector<32x128xbf16>
    %cst_708 = arith.constant 0.000000e+00 : bf16
    %1089 = vector.broadcast %cst_708 : bf16 to vector<32x128xbf16>
    %1090 = tpu.concatenate %1088, %1087, %1089 in 1 : vector<32x128xbf16>, vector<32x128xbf16>, vector<32x128xbf16> -> vector<32x384xbf16>
    %c19_i32_709 = arith.constant 19 : i32
    %c19_i32_710 = arith.constant 19 : i32
    %c19_i32_711 = arith.constant 19 : i32
    %c0_i32_712 = arith.constant 0 : i32
    %c0_i32_713 = arith.constant 0 : i32
    %1091 = tpu.memref_slice %arg6[%c19_i32_709, %c0_i32_712, %c0_i32_713] : memref<21x384x128xbf16, #tpu.memory_space<any>> -> memref<1x384x128xbf16, #tpu.memory_space<any>>
    %1092 = tpu.memref_squeeze %1091 : memref<1x384x128xbf16, #tpu.memory_space<any>> -> memref<384x128xbf16, #tpu.memory_space<any>>
    %c0_i32_714 = arith.constant 0 : i32
    %c0_i32_715 = arith.constant 0 : i32
    %1093 = tpu.memref_slice %arg8[%c19_i32_710, %c0_i32_714, %c0_i32_715] : memref<21x384x128xbf16, #tpu.memory_space<vmem>> -> memref<1x384x128xbf16, #tpu.memory_space<vmem>>
    %1094 = tpu.memref_squeeze %1093 : memref<1x384x128xbf16, #tpu.memory_space<vmem>> -> memref<384x128xbf16, #tpu.memory_space<vmem>>
    %1095 = tpu.memref_slice %arg9[%c19_i32_711] : memref<21x!tpu.dma_semaphore, #tpu.memory_space<semaphore_mem>> -> memref<1x!tpu.dma_semaphore, #tpu.memory_space<semaphore_mem>>
    %1096 = tpu.memref_squeeze %1095 : memref<1x!tpu.dma_semaphore, #tpu.memory_space<semaphore_mem>> -> memref<!tpu.dma_semaphore, #tpu.memory_space<semaphore_mem>>
    tpu.wait_dma2 semaphore(%1096 : memref<!tpu.dma_semaphore, #tpu.memory_space<semaphore_mem>>) src(%1092 : memref<384x128xbf16, #tpu.memory_space<any>>) dst(%1094 : memref<384x128xbf16, #tpu.memory_space<vmem>>)
    %c19_716 = arith.constant 19 : index
    %c0_717 = arith.constant 0 : index
    %c0_718 = arith.constant 0 : index
    %1097 = vector.load %arg8[%c19_716, %c0_717, %c0_718] : memref<21x384x128xbf16, #tpu.memory_space<vmem>>, vector<1x384x128xbf16>
    %1098 = vector.shape_cast %1097 : vector<1x384x128xbf16> to vector<384x128xbf16>
    %cst_719 = arith.constant dense<0.000000e+00> : vector<32x128xf32>
    %1099 = tpu.matmul %1090, %1098, %cst_719 {dimension_numbers = #tpu.dot_dimension_numbers<[1], [0], [0], [1], [0, 0, 1, 1], [], []>} : vector<32x384xbf16>, vector<384x128xbf16>, vector<32x128xf32> -> vector<32x128xf32>
    %cst_720 = arith.constant dense<0.000000e+00> : vector<128xf32>
    %1100 = vector.multi_reduction <add>, %1099, %cst_720 [0] : vector<32x128xf32> to vector<128xf32>
    %1101 = vector.shape_cast %1100 : vector<128xf32> to vector<1x128xf32>
    %1102 = arith.mulf %1099, %1099 : vector<32x128xf32>
    %cst_721 = arith.constant dense<0.000000e+00> : vector<128xf32>
    %1103 = vector.multi_reduction <add>, %1102, %cst_721 [0] : vector<32x128xf32> to vector<128xf32>
    %1104 = vector.shape_cast %1103 : vector<128xf32> to vector<1x128xf32>
    %cst_722 = arith.constant 5.000000e-01 : f32
    %1105 = vector.broadcast %cst_722 : f32 to vector<1x128xf32>
    %1106 = arith.mulf %1101, %1105 : vector<1x128xf32>
    %cst_723 = arith.constant 5.000000e-01 : f32
    %1107 = vector.broadcast %cst_723 : f32 to vector<1x128xf32>
    %1108 = arith.mulf %1104, %1107 : vector<1x128xf32>
    %1109 = arith.mulf %1106, %1106 : vector<1x128xf32>
    %1110 = arith.subf %1108, %1109 : vector<1x128xf32>
    %cst_724 = arith.constant 0.000000e+00 : f32
    %1111 = vector.broadcast %cst_724 : f32 to vector<1x128xf32>
    %1112 = arith.maximumf %1110, %1111 : vector<1x128xf32>
    %c19_725 = arith.constant 19 : index
    %c0_726 = arith.constant 0 : index
    %c0_727 = arith.constant 0 : index
    %1113 = vector.load %arg2[%c19_725, %c0_726, %c0_727] : memref<21x1x128xf32, #tpu.memory_space<vmem>>, vector<1x1x128xf32>
    %1114 = vector.shape_cast %1113 : vector<1x1x128xf32> to vector<1x128xf32>
    %cst_728 = arith.constant 9.99999974E-6 : f32
    %1115 = vector.broadcast %cst_728 : f32 to vector<1x128xf32>
    %1116 = arith.addf %1112, %1115 : vector<1x128xf32>
    %1117 = math.rsqrt %1116 : vector<1x128xf32>
    %1118 = arith.mulf %1114, %1117 : vector<1x128xf32>
    %c19_729 = arith.constant 19 : index
    %c0_730 = arith.constant 0 : index
    %c0_731 = arith.constant 0 : index
    %1119 = vector.load %arg3[%c19_729, %c0_730, %c0_731] : memref<21x1x128xf32, #tpu.memory_space<vmem>>, vector<1x1x128xf32>
    %1120 = vector.shape_cast %1119 : vector<1x1x128xf32> to vector<1x128xf32>
    %1121 = arith.mulf %1106, %1118 : vector<1x128xf32>
    %1122 = arith.subf %1120, %1121 : vector<1x128xf32>
    %1123 = vector.broadcast %1118 : vector<1x128xf32> to vector<32x128xf32>
    %1124 = arith.mulf %1099, %1123 : vector<32x128xf32>
    %1125 = vector.broadcast %1122 : vector<1x128xf32> to vector<32x128xf32>
    %1126 = arith.addf %1124, %1125 : vector<32x128xf32>
    %cst_732 = arith.constant 0.000000e+00 : f32
    %1127 = vector.broadcast %cst_732 : f32 to vector<32x128xf32>
    %1128 = arith.maximumf %1126, %1127 : vector<32x128xf32>
    %cst_733 = arith.constant 0.000000e+00 : f32
    %1129 = vector.broadcast %cst_733 : f32 to vector<32x128xf32>
    %1130 = arith.select %1001, %1128, %1129 : vector<32x128xi1>, vector<32x128xf32>
    %1131 = arith.truncf %1130 : vector<32x128xf32> to vector<32x128xbf16>
    %cst_734 = arith.constant 0.000000e+00 : bf16
    %1132 = vector.broadcast %cst_734 : bf16 to vector<32x128xbf16>
    %cst_735 = arith.constant 0.000000e+00 : bf16
    %1133 = vector.broadcast %cst_735 : bf16 to vector<32x128xbf16>
    %1134 = tpu.concatenate %1132, %1131, %1133 in 1 : vector<32x128xbf16>, vector<32x128xbf16>, vector<32x128xbf16> -> vector<32x384xbf16>
    %c20_i32_736 = arith.constant 20 : i32
    %c20_i32_737 = arith.constant 20 : i32
    %c20_i32_738 = arith.constant 20 : i32
    %c0_i32_739 = arith.constant 0 : i32
    %c0_i32_740 = arith.constant 0 : i32
    %1135 = tpu.memref_slice %arg6[%c20_i32_736, %c0_i32_739, %c0_i32_740] : memref<21x384x128xbf16, #tpu.memory_space<any>> -> memref<1x384x128xbf16, #tpu.memory_space<any>>
    %1136 = tpu.memref_squeeze %1135 : memref<1x384x128xbf16, #tpu.memory_space<any>> -> memref<384x128xbf16, #tpu.memory_space<any>>
    %c0_i32_741 = arith.constant 0 : i32
    %c0_i32_742 = arith.constant 0 : i32
    %1137 = tpu.memref_slice %arg8[%c20_i32_737, %c0_i32_741, %c0_i32_742] : memref<21x384x128xbf16, #tpu.memory_space<vmem>> -> memref<1x384x128xbf16, #tpu.memory_space<vmem>>
    %1138 = tpu.memref_squeeze %1137 : memref<1x384x128xbf16, #tpu.memory_space<vmem>> -> memref<384x128xbf16, #tpu.memory_space<vmem>>
    %1139 = tpu.memref_slice %arg9[%c20_i32_738] : memref<21x!tpu.dma_semaphore, #tpu.memory_space<semaphore_mem>> -> memref<1x!tpu.dma_semaphore, #tpu.memory_space<semaphore_mem>>
    %1140 = tpu.memref_squeeze %1139 : memref<1x!tpu.dma_semaphore, #tpu.memory_space<semaphore_mem>> -> memref<!tpu.dma_semaphore, #tpu.memory_space<semaphore_mem>>
    tpu.wait_dma2 semaphore(%1140 : memref<!tpu.dma_semaphore, #tpu.memory_space<semaphore_mem>>) src(%1136 : memref<384x128xbf16, #tpu.memory_space<any>>) dst(%1138 : memref<384x128xbf16, #tpu.memory_space<vmem>>)
    %c20_743 = arith.constant 20 : index
    %c0_744 = arith.constant 0 : index
    %c0_745 = arith.constant 0 : index
    %1141 = vector.load %arg8[%c20_743, %c0_744, %c0_745] : memref<21x384x128xbf16, #tpu.memory_space<vmem>>, vector<1x384x128xbf16>
    %1142 = vector.shape_cast %1141 : vector<1x384x128xbf16> to vector<384x128xbf16>
    %cst_746 = arith.constant dense<0.000000e+00> : vector<32x128xf32>
    %1143 = tpu.matmul %1134, %1142, %cst_746 {dimension_numbers = #tpu.dot_dimension_numbers<[1], [0], [0], [1], [0, 0, 1, 1], [], []>} : vector<32x384xbf16>, vector<384x128xbf16>, vector<32x128xf32> -> vector<32x128xf32>
    %cst_747 = arith.constant dense<0.000000e+00> : vector<128xf32>
    %1144 = vector.multi_reduction <add>, %1143, %cst_747 [0] : vector<32x128xf32> to vector<128xf32>
    %1145 = vector.shape_cast %1144 : vector<128xf32> to vector<1x128xf32>
    %1146 = arith.mulf %1143, %1143 : vector<32x128xf32>
    %cst_748 = arith.constant dense<0.000000e+00> : vector<128xf32>
    %1147 = vector.multi_reduction <add>, %1146, %cst_748 [0] : vector<32x128xf32> to vector<128xf32>
    %1148 = vector.shape_cast %1147 : vector<128xf32> to vector<1x128xf32>
    %cst_749 = arith.constant 5.000000e-01 : f32
    %1149 = vector.broadcast %cst_749 : f32 to vector<1x128xf32>
    %1150 = arith.mulf %1145, %1149 : vector<1x128xf32>
    %cst_750 = arith.constant 5.000000e-01 : f32
    %1151 = vector.broadcast %cst_750 : f32 to vector<1x128xf32>
    %1152 = arith.mulf %1148, %1151 : vector<1x128xf32>
    %1153 = arith.mulf %1150, %1150 : vector<1x128xf32>
    %1154 = arith.subf %1152, %1153 : vector<1x128xf32>
    %cst_751 = arith.constant 0.000000e+00 : f32
    %1155 = vector.broadcast %cst_751 : f32 to vector<1x128xf32>
    %1156 = arith.maximumf %1154, %1155 : vector<1x128xf32>
    %c20_752 = arith.constant 20 : index
    %c0_753 = arith.constant 0 : index
    %c0_754 = arith.constant 0 : index
    %1157 = vector.load %arg2[%c20_752, %c0_753, %c0_754] : memref<21x1x128xf32, #tpu.memory_space<vmem>>, vector<1x1x128xf32>
    %1158 = vector.shape_cast %1157 : vector<1x1x128xf32> to vector<1x128xf32>
    %cst_755 = arith.constant 9.99999974E-6 : f32
    %1159 = vector.broadcast %cst_755 : f32 to vector<1x128xf32>
    %1160 = arith.addf %1156, %1159 : vector<1x128xf32>
    %1161 = math.rsqrt %1160 : vector<1x128xf32>
    %1162 = arith.mulf %1158, %1161 : vector<1x128xf32>
    %c20_756 = arith.constant 20 : index
    %c0_757 = arith.constant 0 : index
    %c0_758 = arith.constant 0 : index
    %1163 = vector.load %arg3[%c20_756, %c0_757, %c0_758] : memref<21x1x128xf32, #tpu.memory_space<vmem>>, vector<1x1x128xf32>
    %1164 = vector.shape_cast %1163 : vector<1x1x128xf32> to vector<1x128xf32>
    %1165 = arith.mulf %1150, %1162 : vector<1x128xf32>
    %1166 = arith.subf %1164, %1165 : vector<1x128xf32>
    %1167 = vector.broadcast %1162 : vector<1x128xf32> to vector<32x128xf32>
    %1168 = arith.mulf %1143, %1167 : vector<32x128xf32>
    %1169 = vector.broadcast %1166 : vector<1x128xf32> to vector<32x128xf32>
    %1170 = arith.addf %1168, %1169 : vector<32x128xf32>
    %1171 = arith.addf %1170, %1086 : vector<32x128xf32>
    %cst_759 = arith.constant 0.000000e+00 : f32
    %1172 = vector.broadcast %cst_759 : f32 to vector<32x128xf32>
    %1173 = arith.maximumf %1171, %1172 : vector<32x128xf32>
    %cst_760 = arith.constant 0.000000e+00 : f32
    %1174 = vector.broadcast %cst_760 : f32 to vector<32x128xf32>
    %1175 = arith.select %1001, %1173, %1174 : vector<32x128xi1>, vector<32x128xf32>
    %1176 = arith.truncf %1175 : vector<32x128xf32> to vector<32x128xbf16>
    %c0_761 = arith.constant 0 : index
    %c0_762 = arith.constant 0 : index
    %1177 = vector.load %arg4[%c0_761, %c0_762] : memref<128x128xbf16, #tpu.memory_space<vmem>>, vector<128x128xbf16>
    %cst_763 = arith.constant dense<0.000000e+00> : vector<32x128xf32>
    %1178 = tpu.matmul %1176, %1177, %cst_763 {dimension_numbers = #tpu.dot_dimension_numbers<[1], [0], [0], [1], [0, 0, 1, 1], [], []>} : vector<32x128xbf16>, vector<128x128xbf16>, vector<32x128xf32> -> vector<32x128xf32>
    %c0_764 = arith.constant 0 : index
    %c0_765 = arith.constant 0 : index
    %1179 = vector.load %arg5[%c0_764, %c0_765] : memref<1x128xf32, #tpu.memory_space<vmem>>, vector<1x128xf32>
    %1180 = vector.broadcast %1179 : vector<1x128xf32> to vector<32x128xf32>
    %1181 = arith.addf %1178, %1180 : vector<32x128xf32>
    %1182 = tpu.iota {dimensions = array<i32: 1>} : vector<32x128xi32>
    %c3_i32_766 = arith.constant 3 : i32
    %1183 = vector.broadcast %c3_i32_766 : i32 to vector<32x128xi32>
    %1184 = arith.cmpi sge, %1182, %1183 : vector<32x128xi32>
    %cst_767 = arith.constant 0.000000e+00 : f32
    %1185 = vector.broadcast %cst_767 : f32 to vector<32x128xf32>
    %1186 = arith.maximumf %1181, %1185 : vector<32x128xf32>
    %1187 = arith.select %1184, %1186, %1181 : vector<32x128xi1>, vector<32x128xf32>
    %c0_768 = arith.constant 0 : index
    %c0_769 = arith.constant 0 : index
    %1188 = vector.load %arg7[%c0_768, %c0_769] : memref<32x128xf32, #tpu.memory_space<vmem>>, vector<32x128xf32>
    tpu.vector_store %arg7[%c0_768, %c0_769], %1187 {strides = array<i32>} : memref<32x128xf32, #tpu.memory_space<vmem>>, vector<32x128xf32>,
    return
  }
}

</mosaic_0001>

<llo_original>
// kernel: tpu_custom_call.1
$region0: #{tpu_custom_call.1}
  #allocation0 [shape = 'u32[]', space=smem, size = 0x4, offset = 0x4, fixed_abs, tag = 'smem constant byte address 0x4 - core index']
  #allocation1 [shape = 'u32[144,128]{1,0:T(1,128)}', space=vmem, size = 0x12000, scoped, tag = 'internal scratch']
  #allocation2 [shape = 'bf16[21,384,128]{2,1,0:T(16,128)(2,1)}', space=vmem, size = 0x1f8000, scoped, tag = 'scratch operand']
  #allocation3 [shape = 's32[21]{0}', space=sflag, size = 0x54, scoped, tag = 'scratch operand']
  #allocation14 [shape = 's32[]', space=sflag, size = 0x4, offset = 0, fixed_abs, tag = 'sflag constant byte address 0x0 - dummy sync flag']
  #allocation15 [shape = 's32[]', space=sflag, size = 0x4, offset = 0, fixed_abs, tag = 'sflag constant byte address 0x0 - dummy sync flag']
  #allocation16 [shape = 'u32[]', space=smem, size = 0x4, offset = 0x44, fixed_abs, tag = 'smem constant byte address 0x44 - assertion arg 0']
  #allocation17 [shape = 'u32[]', space=smem, size = 0x4, offset = 0x48, fixed_abs, tag = 'smem constant byte address 0x48 - assertion arg 1']
  #allocation18 [shape = 's32[]', space=sflag, size = 0x4, offset = 0, fixed_abs, tag = 'sflag constant byte address 0x0 - dummy sync flag']
  #allocation19 [shape = 's32[]', space=sflag, size = 0x4, offset = 0, fixed_abs, tag = 'sflag constant byte address 0x0 - dummy sync flag']
  #allocation20 [shape = 's32[]', space=sflag, size = 0x4, offset = 0, fixed_abs, tag = 'sflag constant byte address 0x0 - dummy sync flag']
  #allocation21 [shape = 's32[]', space=sflag, size = 0x4, offset = 0, fixed_abs, tag = 'sflag constant byte address 0x0 - dummy sync flag']
  #allocation22 [shape = 's32[]', space=sflag, size = 0x4, offset = 0, fixed_abs, tag = 'sflag constant byte address 0x0 - dummy sync flag']
  #allocation23 [shape = 's32[]', space=sflag, size = 0x4, offset = 0, fixed_abs, tag = 'sflag constant byte address 0x0 - dummy sync flag']
  #allocation24 [shape = 's32[]', space=sflag, size = 0x4, offset = 0, fixed_abs, tag = 'sflag constant byte address 0x0 - dummy sync flag']
  #allocation25 [shape = 's32[]', space=sflag, size = 0x4, offset = 0, fixed_abs, tag = 'sflag constant byte address 0x0 - dummy sync flag']
  #allocation26 [shape = 's32[]', space=sflag, size = 0x4, offset = 0, fixed_abs, tag = 'sflag constant byte address 0x0 - dummy sync flag']
  #allocation27 [shape = 's32[]', space=sflag, size = 0x4, offset = 0, fixed_abs, tag = 'sflag constant byte address 0x0 - dummy sync flag']
  #allocation28 [shape = 's32[]', space=sflag, size = 0x4, offset = 0, fixed_abs, tag = 'sflag constant byte address 0x0 - dummy sync flag']
  #allocation29 [shape = 's32[]', space=sflag, size = 0x4, offset = 0, fixed_abs, tag = 'sflag constant byte address 0x0 - dummy sync flag']
  #allocation30 [shape = 's32[]', space=sflag, size = 0x4, offset = 0, fixed_abs, tag = 'sflag constant byte address 0x0 - dummy sync flag']
  #allocation31 [shape = 's32[]', space=sflag, size = 0x4, offset = 0, fixed_abs, tag = 'sflag constant byte address 0x0 - dummy sync flag']
  #allocation32 [shape = 's32[]', space=sflag, size = 0x4, offset = 0, fixed_abs, tag = 'sflag constant byte address 0x0 - dummy sync flag']
  #allocation33 [shape = 's32[]', space=sflag, size = 0x4, offset = 0, fixed_abs, tag = 'sflag constant byte address 0x0 - dummy sync flag']
  #allocation34 [shape = 's32[]', space=sflag, size = 0x4, offset = 0, fixed_abs, tag = 'sflag constant byte address 0x0 - dummy sync flag']
  #allocation35 [shape = 's32[]', space=sflag, size = 0x4, offset = 0, fixed_abs, tag = 'sflag constant byte address 0x0 - dummy sync flag']
  #allocation36 [shape = 's32[]', space=sflag, size = 0x4, offset = 0, fixed_abs, tag = 'sflag constant byte address 0x0 - dummy sync flag']
  #allocation37 [shape = 's32[]', space=sflag, size = 0x4, offset = 0, fixed_abs, tag = 'sflag constant byte address 0x0 - dummy sync flag']
  #allocation38 [shape = 's32[]', space=sflag, size = 0x4, offset = 0, fixed_abs, tag = 'sflag constant byte address 0x0 - dummy sync flag']
  #allocation39 [shape = 's32[]', space=sflag, size = 0x4, offset = 0, fixed_abs, tag = 'sflag constant byte address 0x0 - dummy sync flag']
  #allocation40 [shape = 's32[]', space=sflag, size = 0x4, offset = 0, fixed_abs, tag = 'sflag constant byte address 0x0 - dummy sync flag']
  #allocation41 [shape = 's32[]', space=sflag, size = 0x4, offset = 0, fixed_abs, tag = 'sflag constant byte address 0x0 - dummy sync flag']
  #allocation42 [shape = 's32[]', space=sflag, size = 0x4, offset = 0, fixed_abs, tag = 'sflag constant byte address 0x0 - dummy sync flag']
  #allocation43 [shape = 's32[]', space=sflag, size = 0x4, offset = 0, fixed_abs, tag = 'sflag constant byte address 0x0 - dummy sync flag']
  #allocation44 [shape = 's32[]', space=sflag, size = 0x4, offset = 0, fixed_abs, tag = 'sflag constant byte address 0x0 - dummy sync flag']
  #allocation45 [shape = 's32[]', space=sflag, size = 0x4, offset = 0, fixed_abs, tag = 'sflag constant byte address 0x0 - dummy sync flag']
  #allocation46 [shape = 's32[]', space=sflag, size = 0x4, offset = 0, fixed_abs, tag = 'sflag constant byte address 0x0 - dummy sync flag']
  #allocation47 [shape = 's32[]', space=sflag, size = 0x4, offset = 0, fixed_abs, tag = 'sflag constant byte address 0x0 - dummy sync flag']
  #allocation48 [shape = 's32[]', space=sflag, size = 0x4, offset = 0, fixed_abs, tag = 'sflag constant byte address 0x0 - dummy sync flag']
  #allocation49 [shape = 's32[]', space=sflag, size = 0x4, offset = 0, fixed_abs, tag = 'sflag constant byte address 0x0 - dummy sync flag']
  #allocation50 [shape = 's32[]', space=sflag, size = 0x4, offset = 0, fixed_abs, tag = 'sflag constant byte address 0x0 - dummy sync flag']
  #allocation51 [shape = 's32[]', space=sflag, size = 0x4, offset = 0, fixed_abs, tag = 'sflag constant byte address 0x0 - dummy sync flag']
  #allocation52 [shape = 's32[]', space=sflag, size = 0x4, offset = 0, fixed_abs, tag = 'sflag constant byte address 0x0 - dummy sync flag']
  #allocation53 [shape = 's32[]', space=sflag, size = 0x4, offset = 0, fixed_abs, tag = 'sflag constant byte address 0x0 - dummy sync flag']
  #allocation54 [shape = 's32[]', space=sflag, size = 0x4, offset = 0, fixed_abs, tag = 'sflag constant byte address 0x0 - dummy sync flag']
  #allocation55 [shape = 's32[]', space=sflag, size = 0x4, offset = 0, fixed_abs, tag = 'sflag constant byte address 0x0 - dummy sync flag']
  #allocation56 [shape = 's32[]', space=sflag, size = 0x4, offset = 0, fixed_abs, tag = 'sflag constant byte address 0x0 - dummy sync flag']
  #allocation57 [shape = 's32[]', space=sflag, size = 0x4, offset = 0, fixed_abs, tag = 'sflag constant byte address 0x0 - dummy sync flag']
  %s0 = inlined_call_operand.hbm [shape: f32[32,128], index: 0, kind: input, shape index: {}]
  %s1 = inlined_call_operand.vmem [shape: bf16[38,32,32], index: 1, kind: input, shape index: {}]
  %s2 = inlined_call_operand.hbm [shape: f32[21,1,128], index: 2, kind: input, shape index: {}]
  %s3 = inlined_call_operand.hbm [shape: f32[21,1,128], index: 3, kind: input, shape index: {}]
  %s4 = inlined_call_operand.hbm [shape: bf16[128,128], index: 4, kind: input, shape index: {}]
  %s5 = inlined_call_operand.hbm [shape: f32[1,128], index: 5, kind: input, shape index: {}]
  %s6 = inlined_call_operand.hbm [shape: bf16[21,384,128], index: 6, kind: input, shape index: {}]
  %s7 = inlined_call_operand.hbm [shape: f32[32,128], index: 7, kind: output, shape index: {}]
  %s8 = sld [smem:[#allocation0]]
  $region138: #{tpu_custom_call.1} parent=0
    _
  %s10 = ssub.s32 1, %s8
  %s11 = scalar_select 0, %s10, %s8
  $region1: #{tpu_custom_call.1} parent=0
    #allocation4 [shape = 'u8[16384]{0}', space=vmem, size = 0x4000, scoped, tag = 'input window, operand 0, single buffered']
    #allocation5 [shape = 's32[1]{0}', space=sflag, size = 0x4, scoped, tag = 'scoped memory for tpu_custom_call.1']
    #allocation6 [shape = 's32[1]{0}', space=sflag, size = 0x4, scoped, tag = 'scoped memory for tpu_custom_call.1']
    #allocation7 [shape = 'u8[10752]{0}', space=vmem, size = 0x2c00, scoped, tag = 'input window, operand 2, single buffered']
    #allocation8 [shape = 's32[1]{0}', space=sflag, size = 0x4, scoped, tag = 'scoped memory for tpu_custom_call.1']
    #allocation9 [shape = 'u8[10752]{0}', space=vmem, size = 0x2c00, scoped, tag = 'input window, operand 3, single buffered']
    #allocation10 [shape = 'u8[32768]{0}', space=vmem, size = 0x8000, scoped, tag = 'input window, operand 4, single buffered']
    #allocation11 [shape = 's32[1]{0}', space=sflag, size = 0x4, scoped, tag = 'scoped memory for tpu_custom_call.1']
    #allocation12 [shape = 'u8[512]{0}', space=vmem, size = 0x400, scoped, tag = 'input window, operand 5, single buffered']
    #allocation13 [shape = 'u8[16384]{0}', space=vmem, size = 0x4000, scoped, tag = 'output window, operand 0, single buffered']
    %12 = vsyncpa [#allocation5], 0
    %13 = vsyncpa [#allocation8], 0
    %14 = vsyncpa [#allocation11], 0
    %15 = vsyncpa [#allocation6], 0
    // Predicated region
    $region2: #{tpu_custom_call.1} parent=1 // pred_check
      _
    $region3: #{tpu_custom_call.1} parent=1 // pred_check_branch
      %17 = sbr.rel (0) target = $region5
    $region4: #{tpu_custom_call.1} parent=1 // pred_region
      %s19 = ssub.s32 512, 512
      %20 = vsyncadd [#allocation5], %s19
      %s21 = sshll.u32 [#allocation4], 4
      %s22 = int_to_ptr.vmem [resolvable:$true] %s21
      %27 = dma.hbm_to_vmem [thread:$0]  %s0, 512, %s22, [#allocation5], 128, 128, 8
    $region5: #{tpu_custom_call.1} parent=1 // pred_fallthru
      _
    // Predicated region
    $region6: #{tpu_custom_call.1} parent=1 // pred_check
      _
    $region7: #{tpu_custom_call.1} parent=1 // pred_check_branch
      %29 = sbr.rel (0) target = $region9
    $region8: #{tpu_custom_call.1} parent=1 // pred_region
      _
    $region9: #{tpu_custom_call.1} parent=1 // pred_fallthru
      _
    // Predicated region
    $region10: #{tpu_custom_call.1} parent=1 // pred_check
      _
    $region11: #{tpu_custom_call.1} parent=1 // pred_check_branch
      %31 = sbr.rel (0) target = $region13
    $region12: #{tpu_custom_call.1} parent=1 // pred_region
      %s33 = ssub.s32 336, 336
      %34 = vsyncadd [#allocation8], %s33
      %s35 = sshll.u32 [#allocation7], 4
      %s36 = int_to_ptr.vmem [resolvable:$true] %s35
      %41 = dma.hbm_to_vmem [thread:$0]  %s2, 336, %s36, [#allocation8], 16, 16, 1
    $region13: #{tpu_custom_call.1} parent=1 // pred_fallthru
      _
    // Predicated region
    $region14: #{tpu_custom_call.1} parent=1 // pred_check
      _
    $region15: #{tpu_custom_call.1} parent=1 // pred_check_branch
      %43 = sbr.rel (0) target = $region17
    $region16: #{tpu_custom_call.1} parent=1 // pred_region
      %s45 = ssub.s32 336, 336
      %46 = vsyncadd [#allocation8], %s45
      %s47 = sshll.u32 [#allocation9], 4
      %s48 = int_to_ptr.vmem [resolvable:$true] %s47
      %53 = dma.hbm_to_vmem [thread:$0]  %s3, 336, %s48, [#allocation8], 16, 16, 1
    $region17: #{tpu_custom_call.1} parent=1 // pred_fallthru
      _
    // Predicated region
    $region18: #{tpu_custom_call.1} parent=1 // pred_check
      _
    $region19: #{tpu_custom_call.1} parent=1 // pred_check_branch
      %55 = sbr.rel (0) target = $region21
    $region20: #{tpu_custom_call.1} parent=1 // pred_region
      %s57 = ssub.s32 1024, 1024
      %58 = vsyncadd [#allocation11], %s57
      %s59 = sshll.u32 [#allocation10], 4
      %s60 = int_to_ptr.vmem [resolvable:$true] %s59
      %65 = dma.hbm_to_vmem [thread:$0]  %s4, 1024, %s60, [#allocation11], 64, 64, 4
    $region21: #{tpu_custom_call.1} parent=1 // pred_fallthru
      _
    // Predicated region
    $region22: #{tpu_custom_call.1} parent=1 // pred_check
      _
    $region23: #{tpu_custom_call.1} parent=1 // pred_check_branch
      %67 = sbr.rel (0) target = $region25
    $region24: #{tpu_custom_call.1} parent=1 // pred_region
      %s69 = ssub.s32 16, 16
      %70 = vsyncadd [#allocation11], %s69
      %s72 = sshll.u32 [#allocation12], 4
      %s73 = int_to_ptr.vmem [resolvable:$true] %s72
      %75 = dma.hbm_to_vmem [thread:$0]  %s5, 16, %s73, [#allocation11]
    $region25: #{tpu_custom_call.1} parent=1 // pred_fallthru
      _
    // Predicated region
    $region26: #{tpu_custom_call.1} parent=1 // pred_check
      _
    $region27: #{tpu_custom_call.1} parent=1 // pred_check_branch
      %77 = sbr.rel (0) target = $region29
    $region28: #{tpu_custom_call.1} parent=1 // pred_region
      %78 = dma.done [#allocation5], 512
    $region29: #{tpu_custom_call.1} parent=1 // pred_fallthru
      _
    // Predicated region
    $region30: #{tpu_custom_call.1} parent=1 // pred_check
      _
    $region31: #{tpu_custom_call.1} parent=1 // pred_check_branch
      %80 = sbr.rel (0) target = $region33
    $region32: #{tpu_custom_call.1} parent=1 // pred_region
      %81 = dma.done [#allocation8], 336
    $region33: #{tpu_custom_call.1} parent=1 // pred_fallthru
      _
    // Predicated region
    $region34: #{tpu_custom_call.1} parent=1 // pred_check
      _
    $region35: #{tpu_custom_call.1} parent=1 // pred_check_branch
      %83 = sbr.rel (0) target = $region37
    $region36: #{tpu_custom_call.1} parent=1 // pred_region
      %84 = dma.done [#allocation8], 336
    $region37: #{tpu_custom_call.1} parent=1 // pred_fallthru
      _
    // Predicated region
    $region38: #{tpu_custom_call.1} parent=1 // pred_check
      _
    $region39: #{tpu_custom_call.1} parent=1 // pred_check_branch
      %86 = sbr.rel (0) target = $region41
    $region40: #{tpu_custom_call.1} parent=1 // pred_region
      %87 = dma.done [#allocation11], 1024
    $region41: #{tpu_custom_call.1} parent=1 // pred_fallthru
      _
    // Predicated region
    $region42: #{tpu_custom_call.1} parent=1 // pred_check
      _
    $region43: #{tpu_custom_call.1} parent=1 // pred_check_branch
      %89 = sbr.rel (0) target = $region45
    $region44: #{tpu_custom_call.1} parent=1 // pred_region
      %90 = dma.done [#allocation11], 16
    $region45: #{tpu_custom_call.1} parent=1 // pred_fallthru
      _
    // Predicated region
    $region46: #{tpu_custom_call.1} parent=1 // pred_check
      _
    $region47: #{tpu_custom_call.1} parent=1 // pred_check_branch
      %93 = sbr.rel target = $region49
    $region48: #{tpu_custom_call.1} parent=1 // pred_region
      %94 = sst [smem:[#allocation16]] [#allocation15]
      %95 = sst [smem:[#allocation17]] [#allocation14]
    $region49: #{tpu_custom_call.1} parent=1 // pred_fallthru
      _
    %97 = shalt.err (0)
    %s99 = sshll.u32 [#allocation2], 4
    %s100 = int_to_ptr.vmem [resolvable:$true] %s99
    %102 = dma.hbm_to_vmem [thread:$0]  %s6, 3072, %s100, [#allocation3]
    %s103 = scalar_lea.hbm %s6, 3072
    %s104 = scalar_lea.vmem [#allocation2], 192
    %s105 = scalar_lea.sflag [#allocation3], 1
    // Predicated region
    $region50: #{tpu_custom_call.1} parent=1 // pred_check
      _
    $region51: #{tpu_custom_call.1} parent=1 // pred_check_branch
      %107 = sbr.rel target = $region53
    $region52: #{tpu_custom_call.1} parent=1 // pred_region
      %108 = sst [smem:[#allocation16]] [#allocation19]
      %109 = sst [smem:[#allocation17]] [#allocation18]
    $region53: #{tpu_custom_call.1} parent=1 // pred_fallthru
      _
    %111 = shalt.err (0)
    %s113 = sshll.u32 %s104, 4
    %s114 = int_to_ptr.vmem [resolvable:$true] %s113
    %116 = dma.hbm_to_vmem [thread:$0]  %s103, 3072, %s114, %s105
    %s117 = scalar_lea.hbm %s6, 6144
    %s118 = scalar_lea.vmem [#allocation2], 384
    %s119 = scalar_lea.sflag [#allocation3], 2
    // Predicated region
    $region54: #{tpu_custom_call.1} parent=1 // pred_check
      _
    $region55: #{tpu_custom_call.1} parent=1 // pred_check_branch
      %121 = sbr.rel target = $region57
    $region56: #{tpu_custom_call.1} parent=1 // pred_region
      %122 = sst [smem:[#allocation16]] [#allocation21]
      %123 = sst [smem:[#allocation17]] [#allocation20]
    $region57: #{tpu_custom_call.1} parent=1 // pred_fallthru
      _
    %125 = shalt.err (0)
    %s127 = sshll.u32 %s118, 4
    %s128 = int_to_ptr.vmem [resolvable:$true] %s127
    %130 = dma.hbm_to_vmem [thread:$0]  %s117, 3072, %s128, %s119
    %s131 = scalar_lea.hbm %s6, 9216
    %s132 = scalar_lea.vmem [#allocation2], 576
    %s133 = scalar_lea.sflag [#allocation3], 3
    // Predicated region
    $region58: #{tpu_custom_call.1} parent=1 // pred_check
      _
    $region59: #{tpu_custom_call.1} parent=1 // pred_check_branch
      %135 = sbr.rel target = $region61
    $region60: #{tpu_custom_call.1} parent=1 // pred_region
      %136 = sst [smem:[#allocation16]] [#allocation23]
      %137 = sst [smem:[#allocation17]] [#allocation22]
    $region61: #{tpu_custom_call.1} parent=1 // pred_fallthru
      _
    %139 = shalt.err (0)
    %s141 = sshll.u32 %s132, 4
    %s142 = int_to_ptr.vmem [resolvable:$true] %s141
    %144 = dma.hbm_to_vmem [thread:$0]  %s131, 3072, %s142, %s133
    %s145 = scalar_lea.hbm %s6, 12288
    %s146 = scalar_lea.vmem [#allocation2], 768
    %s147 = scalar_lea.sflag [#allocation3], 4
    // Predicated region
    $region62: #{tpu_custom_call.1} parent=1 // pred_check
      _
    $region63: #{tpu_custom_call.1} parent=1 // pred_check_branch
      %149 = sbr.rel target = $region65
    $region64: #{tpu_custom_call.1} parent=1 // pred_region
      %150 = sst [smem:[#allocation16]] [#allocation25]
      %151 = sst [smem:[#allocation17]] [#allocation24]
    $region65: #{tpu_custom_call.1} parent=1 // pred_fallthru
      _
    %153 = shalt.err (0)
    %s155 = sshll.u32 %s146, 4
    %s156 = int_to_ptr.vmem [resolvable:$true] %s155
    %158 = dma.hbm_to_vmem [thread:$0]  %s145, 3072, %s156, %s147
    %s159 = scalar_lea.hbm %s6, 15360
    %s160 = scalar_lea.vmem [#allocation2], 960
    %s161 = scalar_lea.sflag [#allocation3], 5
    // Predicated region
    $region66: #{tpu_custom_call.1} parent=1 // pred_check
      _
    $region67: #{tpu_custom_call.1} parent=1 // pred_check_branch
      %163 = sbr.rel target = $region69
    $region68: #{tpu_custom_call.1} parent=1 // pred_region
      %164 = sst [smem:[#allocation16]] [#allocation27]
      %165 = sst [smem:[#allocation17]] [#allocation26]
    $region69: #{tpu_custom_call.1} parent=1 // pred_fallthru
      _
    %167 = shalt.err (0)
    %s169 = sshll.u32 %s160, 4
    %s170 = int_to_ptr.vmem [resolvable:$true] %s169
    %172 = dma.hbm_to_vmem [thread:$0]  %s159, 3072, %s170, %s161
    %s173 = scalar_lea.hbm %s6, 18432
    %s174 = scalar_lea.vmem [#allocation2], 1152
    %s175 = scalar_lea.sflag [#allocation3], 6
    // Predicated region
    $region70: #{tpu_custom_call.1} parent=1 // pred_check
      _
    $region71: #{tpu_custom_call.1} parent=1 // pred_check_branch
      %177 = sbr.rel target = $region73
    $region72: #{tpu_custom_call.1} parent=1 // pred_region
      %178 = sst [smem:[#allocation16]] [#allocation29]
      %179 = sst [smem:[#allocation17]] [#allocation28]
    $region73: #{tpu_custom_call.1} parent=1 // pred_fallthru
      _
    %181 = shalt.err (0)
    %s183 = sshll.u32 %s174, 4
    %s184 = int_to_ptr.vmem [resolvable:$true] %s183
    %186 = dma.hbm_to_vmem [thread:$0]  %s173, 3072, %s184, %s175
    %s187 = scalar_lea.hbm %s6, 21504
    %s188 = scalar_lea.vmem [#allocation2], 1344
    %s189 = scalar_lea.sflag [#allocation3], 7
    // Predicated region
    $region74: #{tpu_custom_call.1} parent=1 // pred_check
      _
    $region75: #{tpu_custom_call.1} parent=1 // pred_check_branch
      %191 = sbr.rel target = $region77
    $region76: #{tpu_custom_call.1} parent=1 // pred_region
      %192 = sst [smem:[#allocation16]] [#allocation31]
      %193 = sst [smem:[#allocation17]] [#allocation30]
    $region77: #{tpu_custom_call.1} parent=1 // pred_fallthru
      _
    %195 = shalt.err (0)
    %s197 = sshll.u32 %s188, 4
    %s198 = int_to_ptr.vmem [resolvable:$true] %s197
    %200 = dma.hbm_to_vmem [thread:$0]  %s187, 3072, %s198, %s189
    %s201 = scalar_lea.hbm %s6, 24576
    %s202 = scalar_lea.vmem [#allocation2], 1536
    %s203 = scalar_lea.sflag [#allocation3], 8
    // Predicated region
    $region78: #{tpu_custom_call.1} parent=1 // pred_check
      _
    $region79: #{tpu_custom_call.1} parent=1 // pred_check_branch
      %205 = sbr.rel target = $region81
    $region80: #{tpu_custom_call.1} parent=1 // pred_region
      %206 = sst [smem:[#allocation16]] [#allocation33]
      %207 = sst [smem:[#allocation17]] [#allocation32]
    $region81: #{tpu_custom_call.1} parent=1 // pred_fallthru
      _
    %209 = shalt.err (0)
    %s211 = sshll.u32 %s202, 4
    %s212 = int_to_ptr.vmem [resolvable:$true] %s211
    %214 = dma.hbm_to_vmem [thread:$0]  %s201, 3072, %s212, %s203
    %s215 = scalar_lea.hbm %s6, 27648
    %s216 = scalar_lea.vmem [#allocation2], 1728
    %s217 = scalar_lea.sflag [#allocation3], 9
    // Predicated region
    $region82: #{tpu_custom_call.1} parent=1 // pred_check
      _
    $region83: #{tpu_custom_call.1} parent=1 // pred_check_branch
      %219 = sbr.rel target = $region85
    $region84: #{tpu_custom_call.1} parent=1 // pred_region
      %220 = sst [smem:[#allocation16]] [#allocation35]
      %221 = sst [smem:[#allocation17]] [#allocation34]
    $region85: #{tpu_custom_call.1} parent=1 // pred_fallthru
      _
    %223 = shalt.err (0)
    %s225 = sshll.u32 %s216, 4
    %s226 = int_to_ptr.vmem [resolvable:$true] %s225
    %228 = dma.hbm_to_vmem [thread:$0]  %s215, 3072, %s226, %s217
    %s229 = scalar_lea.hbm %s6, 30720
    %s230 = scalar_lea.vmem [#allocation2], 1920
    %s231 = scalar_lea.sflag [#allocation3], 10
    // Predicated region
    $region86: #{tpu_custom_call.1} parent=1 // pred_check
      _
    $region87: #{tpu_custom_call.1} parent=1 // pred_check_branch
      %233 = sbr.rel target = $region89
    $region88: #{tpu_custom_call.1} parent=1 // pred_region
      %234 = sst [smem:[#allocation16]] [#allocation37]
      %235 = sst [smem:[#allocation17]] [#allocation36]
    $region89: #{tpu_custom_call.1} parent=1 // pred_fallthru
      _
    %237 = shalt.err (0)
    %s239 = sshll.u32 %s230, 4
    %s240 = int_to_ptr.vmem [resolvable:$true] %s239
    %242 = dma.hbm_to_vmem [thread:$0]  %s229, 3072, %s240, %s231
    %s243 = scalar_lea.hbm %s6, 33792
    %s244 = scalar_lea.vmem [#allocation2], 2112
    %s245 = scalar_lea.sflag [#allocation3], 11
    // Predicated region
    $region90: #{tpu_custom_call.1} parent=1 // pred_check
      _
    $region91: #{tpu_custom_call.1} parent=1 // pred_check_branch
      %247 = sbr.rel target = $region93
    $region92: #{tpu_custom_call.1} parent=1 // pred_region
      %248 = sst [smem:[#allocation16]] [#allocation39]
      %249 = sst [smem:[#allocation17]] [#allocation38]
    $region93: #{tpu_custom_call.1} parent=1 // pred_fallthru
      _
    %251 = shalt.err (0)
    %s253 = sshll.u32 %s244, 4
    %s254 = int_to_ptr.vmem [resolvable:$true] %s253
    %256 = dma.hbm_to_vmem [thread:$0]  %s243, 3072, %s254, %s245
    %s257 = scalar_lea.hbm %s6, 36864
    %s258 = scalar_lea.vmem [#allocation2], 2304
    %s259 = scalar_lea.sflag [#allocation3], 12
    // Predicated region
    $region94: #{tpu_custom_call.1} parent=1 // pred_check
      _
    $region95: #{tpu_custom_call.1} parent=1 // pred_check_branch
      %261 = sbr.rel target = $region97
    $region96: #{tpu_custom_call.1} parent=1 // pred_region
      %262 = sst [smem:[#allocation16]] [#allocation41]
      %263 = sst [smem:[#allocation17]] [#allocation40]
    $region97: #{tpu_custom_call.1} parent=1 // pred_fallthru
      _
    %265 = shalt.err (0)
    %s267 = sshll.u32 %s258, 4
    %s268 = int_to_ptr.vmem [resolvable:$true] %s267
    %270 = dma.hbm_to_vmem [thread:$0]  %s257, 3072, %s268, %s259
    %s271 = scalar_lea.hbm %s6, 39936
    %s272 = scalar_lea.vmem [#allocation2], 2496
    %s273 = scalar_lea.sflag [#allocation3], 13
    // Predicated region
    $region98: #{tpu_custom_call.1} parent=1 // pred_check
      _
    $region99: #{tpu_custom_call.1} parent=1 // pred_check_branch
      %275 = sbr.rel target = $region101
    $region100: #{tpu_custom_call.1} parent=1 // pred_region
      %276 = sst [smem:[#allocation16]] [#allocation43]
      %277 = sst [smem:[#allocation17]] [#allocation42]
    $region101: #{tpu_custom_call.1} parent=1 // pred_fallthru
      _
    %279 = shalt.err (0)
    %s281 = sshll.u32 %s272, 4
    %s282 = int_to_ptr.vmem [resolvable:$true] %s281
    %284 = dma.hbm_to_vmem [thread:$0]  %s271, 3072, %s282, %s273
    %s285 = scalar_lea.hbm %s6, 43008
    %s286 = scalar_lea.vmem [#allocation2], 2688
    %s287 = scalar_lea.sflag [#allocation3], 14
    // Predicated region
    $region102: #{tpu_custom_call.1} parent=1 // pred_check
      _
    $region103: #{tpu_custom_call.1} parent=1 // pred_check_branch
      %289 = sbr.rel target = $region105
    $region104: #{tpu_custom_call.1} parent=1 // pred_region
      %290 = sst [smem:[#allocation16]] [#allocation45]
      %291 = sst [smem:[#allocation17]] [#allocation44]
    $region105: #{tpu_custom_call.1} parent=1 // pred_fallthru
      _
    %293 = shalt.err (0)
    %s295 = sshll.u32 %s286, 4
    %s296 = int_to_ptr.vmem [resolvable:$true] %s295
    %298 = dma.hbm_to_vmem [thread:$0]  %s285, 3072, %s296, %s287
    %s299 = scalar_lea.hbm %s6, 46080
    %s300 = scalar_lea.vmem [#allocation2], 2880
    %s301 = scalar_lea.sflag [#allocation3], 15
    // Predicated region
    $region106: #{tpu_custom_call.1} parent=1 // pred_check
      _
    $region107: #{tpu_custom_call.1} parent=1 // pred_check_branch
      %303 = sbr.rel target = $region109
    $region108: #{tpu_custom_call.1} parent=1 // pred_region
      %304 = sst [smem:[#allocation16]] [#allocation47]
      %305 = sst [smem:[#allocation17]] [#allocation46]
    $region109: #{tpu_custom_call.1} parent=1 // pred_fallthru
      _
    %307 = shalt.err (0)
    %s309 = sshll.u32 %s300, 4
    %s310 = int_to_ptr.vmem [resolvable:$true] %s309
    %312 = dma.hbm_to_vmem [thread:$0]  %s299, 3072, %s310, %s301
    %s313 = scalar_lea.hbm %s6, 49152
    %s314 = scalar_lea.vmem [#allocation2], 3072
    %s315 = scalar_lea.sflag [#allocation3], 16
    // Predicated region
    $region110: #{tpu_custom_call.1} parent=1 // pred_check
      _
    $region111: #{tpu_custom_call.1} parent=1 // pred_check_branch
      %317 = sbr.rel target = $region113
    $region112: #{tpu_custom_call.1} parent=1 // pred_region
      %318 = sst [smem:[#allocation16]] [#allocation49]
      %319 = sst [smem:[#allocation17]] [#allocation48]
    $region113: #{tpu_custom_call.1} parent=1 // pred_fallthru
      _
    %321 = shalt.err (0)
    %s323 = sshll.u32 %s314, 4
    %s324 = int_to_ptr.vmem [resolvable:$true] %s323
    %326 = dma.hbm_to_vmem [thread:$0]  %s313, 3072, %s324, %s315
    %s327 = scalar_lea.hbm %s6, 52224
    %s328 = scalar_lea.vmem [#allocation2], 3264
    %s329 = scalar_lea.sflag [#allocation3], 17
    // Predicated region
    $region114: #{tpu_custom_call.1} parent=1 // pred_check
      _
    $region115: #{tpu_custom_call.1} parent=1 // pred_check_branch
      %331 = sbr.rel target = $region117
    $region116: #{tpu_custom_call.1} parent=1 // pred_region
      %332 = sst [smem:[#allocation16]] [#allocation51]
      %333 = sst [smem:[#allocation17]] [#allocation50]
    $region117: #{tpu_custom_call.1} parent=1 // pred_fallthru
      _
    %335 = shalt.err (0)
    %s337 = sshll.u32 %s328, 4
    %s338 = int_to_ptr.vmem [resolvable:$true] %s337
    %340 = dma.hbm_to_vmem [thread:$0]  %s327, 3072, %s338, %s329
    %s341 = scalar_lea.hbm %s6, 55296
    %s342 = scalar_lea.vmem [#allocation2], 3456
    %s343 = scalar_lea.sflag [#allocation3], 18
    // Predicated region
    $region118: #{tpu_custom_call.1} parent=1 // pred_check
      _
    $region119: #{tpu_custom_call.1} parent=1 // pred_check_branch
      %345 = sbr.rel target = $region121
    $region120: #{tpu_custom_call.1} parent=1 // pred_region
      %346 = sst [smem:[#allocation16]] [#allocation53]
      %347 = sst [smem:[#allocation17]] [#allocation52]
    $region121: #{tpu_custom_call.1} parent=1 // pred_fallthru
      _
    %349 = shalt.err (0)
    %s351 = sshll.u32 %s342, 4
    %s352 = int_to_ptr.vmem [resolvable:$true] %s351
    %354 = dma.hbm_to_vmem [thread:$0]  %s341, 3072, %s352, %s343
    %s355 = scalar_lea.hbm %s6, 58368
    %s356 = scalar_lea.vmem [#allocation2], 3648
    %s357 = scalar_lea.sflag [#allocation3], 19
    // Predicated region
    $region122: #{tpu_custom_call.1} parent=1 // pred_check
      _
    $region123: #{tpu_custom_call.1} parent=1 // pred_check_branch
      %359 = sbr.rel target = $region125
    $region124: #{tpu_custom_call.1} parent=1 // pred_region
      %360 = sst [smem:[#allocation16]] [#allocation55]
      %361 = sst [smem:[#allocation17]] [#allocation54]
    $region125: #{tpu_custom_call.1} parent=1 // pred_fallthru
      _
    %363 = shalt.err (0)
    %s365 = sshll.u32 %s356, 4
    %s366 = int_to_ptr.vmem [resolvable:$true] %s365
    %368 = dma.hbm_to_vmem [thread:$0]  %s355, 3072, %s366, %s357
    %s369 = scalar_lea.hbm %s6, 61440
    %s370 = scalar_lea.vmem [#allocation2], 3840
    %s371 = scalar_lea.sflag [#allocation3], 20
    // Predicated region
    $region126: #{tpu_custom_call.1} parent=1 // pred_check
      _
    $region127: #{tpu_custom_call.1} parent=1 // pred_check_branch
      %373 = sbr.rel target = $region129
    $region128: #{tpu_custom_call.1} parent=1 // pred_region
      %374 = sst [smem:[#allocation16]] [#allocation57]
      %375 = sst [smem:[#allocation17]] [#allocation56]
    $region129: #{tpu_custom_call.1} parent=1 // pred_fallthru
      _
    %377 = shalt.err (0)
    %s379 = sshll.u32 %s370, 4
    %s380 = int_to_ptr.vmem [resolvable:$true] %s379
    %382 = dma.hbm_to_vmem [thread:$0]  %s369, 3072, %s380, %s371
    %v383 = vld [vmem:[#allocation4] sm:$0xff]
    %v384 = vld [vmem:[#allocation4 + $0x8] sm:$0xff]
    %v385 = vld [vmem:[#allocation4 + $0x10] sm:$0xff]
    %v386 = vld [vmem:[#allocation4 + $0x18] sm:$0xff]
    %v387 = vpack.c.bf16 %v384, %v383
    %v388 = vpack.c.bf16 %v386, %v385
    %v389 = vld [vmem:[%s1] sm:$0xf]
    %v390 = vld [vmem:[%s1 + $0x4] sm:$0xf]
    %v391 = vld [vmem:[%s1 + $0x8] sm:$0xf]
    %v392 = vld [vmem:[%s1 + $0xc] sm:$0xf]
    %v397 = vunpack.c.l.b16 %v389
    %v398 = vunpack.c.l.b16 %v390
    %v399 = vunpack.c.l.b16 %v391
    %v400 = vunpack.c.l.b16 %v392
    %v401 = vpack.c.b16 %v398, %v397
    %v402 = vpack.c.b16 %v400, %v399
    %vm403 = vcmask 261120
    %v405 = vsel %vm403, %v401, 0
    %v408 = vsel %vm403, %v402, 0
    %410 = vmatprep.subr.bf16.mxu0 0
    %411 = vmatpush1.bf16.msra.mxu0 %v387
    %412 = vmatprep.subr.bf16.mxu0 0
    %413 = vmatpush1.bf16.msra.mxu0 %v388
    %414 = vmatprep.subr.bf16.mxu0 0
    %415 = vmatpush1.bf16.msra.mxu0 0
    %416 = vmatprep.subr.bf16.mxu0 0
    %417 = vmatpush1.bf16.msra.mxu0 0
    %418 = vmatprep.subr.bf16.mxu0 0
    %419 = vmatpush1.bf16.msra.mxu0 0
    %420 = vmatprep.subr.bf16.mxu0 0
    %421 = vmatpush1.bf16.msra.mxu0 0
    %422 = vmatprep.subr.bf16.mxu0 0
    %423 = vmatpush1.bf16.msra.mxu0 0
    %424 = vmatprep.subr.bf16.mxu0 0
    %425 = vmatpush1.bf16.msra.mxu0 0
    %426 = vmatprep.subr.bf16.mxu0 0
    %427 = vmatpush1.bf16.msra.mxu0 0
    %428 = vmatprep.subr.bf16.mxu0 0
    %429 = vmatpush1.bf16.msra.mxu0 0
    %430 = vmatprep.subr.bf16.mxu0 0
    %431 = vmatpush1.bf16.msra.mxu0 0
    %432 = vmatprep.subr.bf16.mxu0 0
    %433 = vmatpush1.bf16.msra.mxu0 0
    %434 = vmatprep.subr.bf16.mxu0 0
    %435 = vmatpush1.bf16.msra.mxu0 0
    %436 = vmatprep.subr.bf16.mxu0 0
    %437 = vmatpush1.bf16.msra.mxu0 0
    %438 = vmatprep.subr.bf16.mxu0 0
    %439 = vmatpush1.bf16.msra.mxu0 0
    %440 = vmatprep.subr.bf16.mxu0 0
    %441 = vmatpush1.bf16.msra.mxu0 0
    %442 = vmatprep.mubr.bf16.mxu0 0
    %443 = vmatmul.mubr.bf16.gmra.mrb[0].mxu0 %v405
    %v444 = vpop.f32.mrb[0].mxu0
    %v445 = vadd.f32 0.0, %v444
    %v446 = vpop.f32.mrb[0].mxu0
    %v447 = vpop.f32.mrb[0].mxu0
    %v448 = vadd.f32 0.0, %v447
    %v449 = vpop.f32.mrb[0].mxu0
    %450 = vmatprep.mubr.bf16.mxu0 0
    %451 = vmatmul.mubr.bf16.gmra.mrb[0].mxu0 %v408
    %v452 = vpop.f32.mrb[0].mxu0
    %v453 = vadd.f32 0.0, %v452
    %v454 = vpop.f32.mrb[0].mxu0
    %v455 = vpop.f32.mrb[0].mxu0
    %v456 = vadd.f32 0.0, %v455
    %v457 = vpop.f32.mrb[0].mxu0
    %458 = vdwg.mxu0
    %v459 = vpack.c.bf16 %v448, %v445
    %v460 = vpack.c.bf16 %v456, %v453
    %s461 = scalar_lea.vmem %s1, 16
    %v462 = vld [vmem:[%s461] sm:$0xf]
    %v463 = vld [vmem:[%s461 + $0x4] sm:$0xf]
    %v464 = vld [vmem:[%s461 + $0x8] sm:$0xf]
    %v465 = vld [vmem:[%s461 + $0xc] sm:$0xf]
    %v470 = vunpack.c.l.b16 %v462
    %v471 = vunpack.c.l.b16 %v463
    %v472 = vunpack.c.l.b16 %v464
    %v473 = vunpack.c.l.b16 %v465
    %v474 = vpack.c.b16 %v471, %v470
    %v475 = vpack.c.b16 %v473, %v472
    %v477 = vsel %vm403, %v474, 0
    %v480 = vsel %vm403, %v475, 0
    %482 = vmatprep.subr.bf16.mxu0 0
    %483 = vmatpush1.bf16.msra.mxu0 %v387
    %484 = vmatprep.subr.bf16.mxu0 0
    %485 = vmatpush1.bf16.msra.mxu0 %v388
    %486 = vmatprep.subr.bf16.mxu0 0
    %487 = vmatpush1.bf16.msra.mxu0 0
    %488 = vmatprep.subr.bf16.mxu0 0
    %489 = vmatpush1.bf16.msra.mxu0 0
    %490 = vmatprep.subr.bf16.mxu0 0
    %491 = vmatpush1.bf16.msra.mxu0 0
    %492 = vmatprep.subr.bf16.mxu0 0
    %493 = vmatpush1.bf16.msra.mxu0 0
    %494 = vmatprep.subr.bf16.mxu0 0
    %495 = vmatpush1.bf16.msra.mxu0 0
    %496 = vmatprep.subr.bf16.mxu0 0
    %497 = vmatpush1.bf16.msra.mxu0 0
    %498 = vmatprep.subr.bf16.mxu0 0
    %499 = vmatpush1.bf16.msra.mxu0 0
    %500 = vmatprep.subr.bf16.mxu0 0
    %501 = vmatpush1.bf16.msra.mxu0 0
    %502 = vmatprep.subr.bf16.mxu0 0
    %503 = vmatpush1.bf16.msra.mxu0 0
    %504 = vmatprep.subr.bf16.mxu0 0
    %505 = vmatpush1.bf16.msra.mxu0 0
    %506 = vmatprep.subr.bf16.mxu0 0
    %507 = vmatpush1.bf16.msra.mxu0 0
    %508 = vmatprep.subr.bf16.mxu0 0
    %509 = vmatpush1.bf16.msra.mxu0 0
    %510 = vmatprep.subr.bf16.mxu0 0
    %511 = vmatpush1.bf16.msra.mxu0 0
    %512 = vmatprep.subr.bf16.mxu0 0
    %513 = vmatpush1.bf16.msra.mxu0 0
    %514 = vmatprep.mubr.bf16.mxu0 0
    %515 = vmatmul.mubr.bf16.gmra.mrb[0].mxu0 %v477
    %v516 = vpop.f32.mrb[0].mxu0
    %v517 = vadd.f32 0.0, %v516
    %v518 = vpop.f32.mrb[0].mxu0
    %v519 = vpop.f32.mrb[0].mxu0
    %v520 = vadd.f32 0.0, %v519
    %v521 = vpop.f32.mrb[0].mxu0
    %522 = vmatprep.mubr.bf16.mxu0 0
    %523 = vmatmul.mubr.bf16.gmra.mrb[0].mxu0 %v480
    %v524 = vpop.f32.mrb[0].mxu0
    %v525 = vadd.f32 0.0, %v524
    %v526 = vpop.f32.mrb[0].mxu0
    %v527 = vpop.f32.mrb[0].mxu0
    %v528 = vadd.f32 0.0, %v527
    %v529 = vpop.f32.mrb[0].mxu0
    %530 = vdwg.mxu0
    %v531 = vpack.c.bf16 %v520, %v517
    %v532 = vpack.c.bf16 %v528, %v525
    %s533 = smul.u32 4, 48
    %s534 = smul.u32 %s533, 1
    %s535 = sshll.u32 %s534, 4
    %536 = dma.done [#allocation3], %s535
    %v537 = vld [vmem:[#allocation2] sm:$0xff]
    %v538 = vld [vmem:[#allocation2 + $0x8] sm:$0xff]
    %v539 = vld [vmem:[#allocation2 + $0x10] sm:$0xff]
    %v540 = vld [vmem:[#allocation2 + $0x18] sm:$0xff]
    %v541 = vld [vmem:[#allocation2 + $0x20] sm:$0xff]
    %v542 = vld [vmem:[#allocation2 + $0x28] sm:$0xff]
    %v543 = vld [vmem:[#allocation2 + $0x30] sm:$0xff]
    %v544 = vld [vmem:[#allocation2 + $0x38] sm:$0xff]
    %v545 = vld [vmem:[#allocation2 + $0x40] sm:$0xff]
    %v546 = vld [vmem:[#allocation2 + $0x48] sm:$0xff]
    %v547 = vld [vmem:[#allocation2 + $0x50] sm:$0xff]
    %v548 = vld [vmem:[#allocation2 + $0x58] sm:$0xff]
    %v549 = vld [vmem:[#allocation2 + $0x60] sm:$0xff]
    %v550 = vld [vmem:[#allocation2 + $0x68] sm:$0xff]
    %v551 = vld [vmem:[#allocation2 + $0x70] sm:$0xff]
    %v552 = vld [vmem:[#allocation2 + $0x78] sm:$0xff]
    %v553 = vld [vmem:[#allocation2 + $0x80] sm:$0xff]
    %v554 = vld [vmem:[#allocation2 + $0x88] sm:$0xff]
    %v555 = vld [vmem:[#allocation2 + $0x90] sm:$0xff]
    %v556 = vld [vmem:[#allocation2 + $0x98] sm:$0xff]
    %v557 = vld [vmem:[#allocation2 + $0xa0] sm:$0xff]
    %v558 = vld [vmem:[#allocation2 + $0xa8] sm:$0xff]
    %v559 = vld [vmem:[#allocation2 + $0xb0] sm:$0xff]
    %v560 = vld [vmem:[#allocation2 + $0xb8] sm:$0xff]
    %561 = vmatprep.subr.bf16.mxu0 0
    %562 = vmatpush1.bf16.msra.mxu0 %v537
    %563 = vmatprep.subr.bf16.mxu0 0
    %564 = vmatpush1.bf16.msra.mxu0 %v538
    %565 = vmatprep.subr.bf16.mxu0 0
    %566 = vmatpush1.bf16.msra.mxu0 %v539
    %567 = vmatprep.subr.bf16.mxu0 0
    %568 = vmatpush1.bf16.msra.mxu0 %v540
    %569 = vmatprep.subr.bf16.mxu0 0
    %570 = vmatpush1.bf16.msra.mxu0 %v541
    %571 = vmatprep.subr.bf16.mxu0 0
    %572 = vmatpush1.bf16.msra.mxu0 %v542
    %573 = vmatprep.subr.bf16.mxu0 0
    %574 = vmatpush1.bf16.msra.mxu0 %v543
    %575 = vmatprep.subr.bf16.mxu0 0
    %576 = vmatpush1.bf16.msra.mxu0 %v544
    %577 = vmatprep.subr.bf16.mxu0 0
    %578 = vmatpush1.bf16.msra.mxu0 %v545
    %579 = vmatprep.subr.bf16.mxu0 0
    %580 = vmatpush1.bf16.msra.mxu0 %v546
    %581 = vmatprep.subr.bf16.mxu0 0
    %582 = vmatpush1.bf16.msra.mxu0 %v547
    %583 = vmatprep.subr.bf16.mxu0 0
    %584 = vmatpush1.bf16.msra.mxu0 %v548
    %585 = vmatprep.subr.bf16.mxu0 0
    %586 = vmatpush1.bf16.msra.mxu0 %v549
    %587 = vmatprep.subr.bf16.mxu0 0
    %588 = vmatpush1.bf16.msra.mxu0 %v550
    %589 = vmatprep.subr.bf16.mxu0 0
    %590 = vmatpush1.bf16.msra.mxu0 %v551
    %591 = vmatprep.subr.bf16.mxu0 0
    %592 = vmatpush1.bf16.msra.mxu0 %v552
    %593 = vmatprep.mubr.bf16.mxu0 %v387
    %594 = vmatmul.mubr.bf16.gmra.mrb[0].mxu0 %v459
    %v595 = vpop.f32.mrb[0].mxu0
    %v596 = vadd.f32 0.0, %v595
    %v597 = vpop.f32.mrb[0].mxu0
    %v598 = vpop.f32.mrb[0].mxu0
    %v599 = vadd.f32 0.0, %v598
    %v600 = vpop.f32.mrb[0].mxu0
    %601 = vmatprep.mubr.bf16.mxu0 %v388
    %602 = vmatmul.mubr.bf16.gmra.mrb[0].mxu0 %v460
    %v603 = vpop.f32.mrb[0].mxu0
    %v604 = vadd.f32 0.0, %v603
    %v605 = vpop.f32.mrb[0].mxu0
    %v606 = vpop.f32.mrb[0].mxu0
    %v607 = vadd.f32 0.0, %v606
    %v608 = vpop.f32.mrb[0].mxu0
    %609 = vdwg.mxu0
    %610 = vmatprep.subr.bf16.mxu0 0
    %611 = vmatpush1.bf16.msra.mxu0 %v553
    %612 = vmatprep.subr.bf16.mxu0 0
    %613 = vmatpush1.bf16.msra.mxu0 %v554
    %614 = vmatprep.subr.bf16.mxu0 0
    %615 = vmatpush1.bf16.msra.mxu0 %v555
    %616 = vmatprep.subr.bf16.mxu0 0
    %617 = vmatpush1.bf16.msra.mxu0 %v556
    %618 = vmatprep.subr.bf16.mxu0 0
    %619 = vmatpush1.bf16.msra.mxu0 %v557
    %620 = vmatprep.subr.bf16.mxu0 0
    %621 = vmatpush1.bf16.msra.mxu0 %v558
    %622 = vmatprep.subr.bf16.mxu0 0
    %623 = vmatpush1.bf16.msra.mxu0 %v559
    %624 = vmatprep.subr.bf16.mxu0 0
    %625 = vmatpush1.bf16.msra.mxu0 %v560
    %626 = vmatprep.subr.bf16.mxu0 0
    %627 = vmatpush1.bf16.msra.mxu0 0
    %628 = vmatprep.subr.bf16.mxu0 0
    %629 = vmatpush1.bf16.msra.mxu0 0
    %630 = vmatprep.subr.bf16.mxu0 0
    %631 = vmatpush1.bf16.msra.mxu0 0
    %632 = vmatprep.subr.bf16.mxu0 0
    %633 = vmatpush1.bf16.msra.mxu0 0
    %634 = vmatprep.subr.bf16.mxu0 0
    %635 = vmatpush1.bf16.msra.mxu0 0
    %636 = vmatprep.subr.bf16.mxu0 0
    %637 = vmatpush1.bf16.msra.mxu0 0
    %638 = vmatprep.subr.bf16.mxu0 0
    %639 = vmatpush1.bf16.msra.mxu0 0
    %640 = vmatprep.subr.bf16.mxu0 0
    %641 = vmatpush1.bf16.msra.mxu0 0
    %642 = vmatprep.mubr.bf16.mxu0 0
    %643 = vmatmul.mubr.bf16.gmra.mrb[0].mxu0 %v531
    %v644 = vpop.f32.mrb[0].mxu0
    %v645 = vadd.f32 %v596, %v644
    %v646 = vpop.f32.mrb[0].mxu0
    %v647 = vpop.f32.mrb[0].mxu0
    %v648 = vadd.f32 %v599, %v647
    %v649 = vpop.f32.mrb[0].mxu0
    %650 = vmatprep.mubr.bf16.mxu0 0
    %651 = vmatmul.mubr.bf16.gmra.mrb[0].mxu0 %v532
    %v652 = vpop.f32.mrb[0].mxu0
    %v653 = vadd.f32 %v604, %v652
    %v654 = vpop.f32.mrb[0].mxu0
    %v655 = vpop.f32.mrb[0].mxu0
    %v656 = vadd.f32 %v607, %v655
    %v657 = vpop.f32.mrb[0].mxu0
    %658 = vdwg.mxu0
    %v659 = vadd.f32 %v645, %v648
    %v660 = vadd.f32 %v659, %v653
    %v661 = vadd.f32 %v660, %v656
    %v662 = vrot.slane %v661, 4
    %v663 = vadd.f32 %v661, %v662
    %v664 = vrot.slane %v663, 2
    %v665 = vadd.f32 %v663, %v664
    %v666 = vrot.slane %v665, 1
    %v667 = vadd.f32 %v665, %v666
    %v668 = vmul.f32 %v645, %v645
    %v669 = vmul.f32 %v648, %v648
    %v670 = vmul.f32 %v653, %v653
    %v671 = vmul.f32 %v656, %v656
    %v672 = vadd.f32 %v668, %v669
    %v673 = vadd.f32 %v672, %v670
    %v674 = vadd.f32 %v673, %v671
    %v675 = vrot.slane %v674, 4
    %v676 = vadd.f32 %v674, %v675
    %v677 = vrot.slane %v676, 2
    %v678 = vadd.f32 %v676, %v677
    %v679 = vrot.slane %v678, 1
    %v680 = vadd.f32 %v678, %v679
    %v681 = vmul.f32 %v667, 0.03125
    %v682 = vmul.f32 %v680, 0.03125
    %v683 = vmul.f32 %v681, %v681
    %v684 = vsub.f32 %v682, %v683
    %v685 = vmax.f32 %v684, 0.0
    %v686 = vld [vmem:[#allocation7] sm:$0x1]
    %v687 = vadd.f32 %v685, 1e-05
    %v688 = vrsqrt.pop %v687
    %v689 = vmul.f32 %v686, %v688
    %v690 = vld [vmem:[#allocation9] sm:$0x1]
    %v691 = vmul.f32 %v681, %v689
    %v692 = vsub.f32 %v690, %v691
    %v694 = vlaneseq
    %v695 = vshrl.u32 %v694, 7
    %v696 = vsub.s32 0, %v695
    %v697 = vrot.slane %v689, %v696
    %v699 = vmul.f32 %v645, %v697
    %v700 = vmul.f32 %v648, %v697
    %v701 = vmul.f32 %v653, %v697
    %v702 = vmul.f32 %v656, %v697
    %v704 = vlaneseq
    %v705 = vshrl.u32 %v704, 7
    %v706 = vsub.s32 0, %v705
    %v707 = vrot.slane %v692, %v706
    %v709 = vadd.f32 %v699, %v707
    %v710 = vadd.f32 %v700, %v707
    %v711 = vadd.f32 %v701, %v707
    %v712 = vadd.f32 %v702, %v707
    %v713 = vpack.c.bf16 %v710, %v709
    %v714 = vpack.c.bf16 %v712, %v711
    %s715 = scalar_lea.vmem %s1, 32
    %v716 = vld [vmem:[%s715] sm:$0xf]
    %v717 = vld [vmem:[%s715 + $0x4] sm:$0xf]
    %v718 = vld [vmem:[%s715 + $0x8] sm:$0xf]
    %v719 = vld [vmem:[%s715 + $0xc] sm:$0xf]
    %v724 = vunpack.c.l.b16 %v716
    %v725 = vunpack.c.l.b16 %v717
    %v726 = vunpack.c.l.b16 %v718
    %v727 = vunpack.c.l.b16 %v719
    %v728 = vpack.c.b16 %v725, %v724
    %v729 = vpack.c.b16 %v727, %v726
    %v731 = vsel %vm403, %v728, 0
    %v734 = vsel %vm403, %v729, 0
    %736 = vmatprep.subr.bf16.mxu0 0
    %737 = vmatpush1.bf16.msra.mxu0 %v713
    %738 = vmatprep.subr.bf16.mxu0 0
    %739 = vmatpush1.bf16.msra.mxu0 %v714
    %740 = vmatprep.subr.bf16.mxu0 0
    %741 = vmatpush1.bf16.msra.mxu0 0
    %742 = vmatprep.subr.bf16.mxu0 0
    %743 = vmatpush1.bf16.msra.mxu0 0
    %744 = vmatprep.subr.bf16.mxu0 0
    %745 = vmatpush1.bf16.msra.mxu0 0
    %746 = vmatprep.subr.bf16.mxu0 0
    %747 = vmatpush1.bf16.msra.mxu0 0
    %748 = vmatprep.subr.bf16.mxu0 0
    %749 = vmatpush1.bf16.msra.mxu0 0
    %750 = vmatprep.subr.bf16.mxu0 0
    %751 = vmatpush1.bf16.msra.mxu0 0
    %752 = vmatprep.subr.bf16.mxu0 0
    %753 = vmatpush1.bf16.msra.mxu0 0
    %754 = vmatprep.subr.bf16.mxu0 0
    %755 = vmatpush1.bf16.msra.mxu0 0
    %756 = vmatprep.subr.bf16.mxu0 0
    %757 = vmatpush1.bf16.msra.mxu0 0
    %758 = vmatprep.subr.bf16.mxu0 0
    %759 = vmatpush1.bf16.msra.mxu0 0
    %760 = vmatprep.subr.bf16.mxu0 0
    %761 = vmatpush1.bf16.msra.mxu0 0
    %762 = vmatprep.subr.bf16.mxu0 0
    %763 = vmatpush1.bf16.msra.mxu0 0
    %764 = vmatprep.subr.bf16.mxu0 0
    %765 = vmatpush1.bf16.msra.mxu0 0
    %766 = vmatprep.subr.bf16.mxu0 0
    %767 = vmatpush1.bf16.msra.mxu0 0
    %768 = vmatprep.mubr.bf16.mxu0 0
    %769 = vmatmul.mubr.bf16.gmra.mrb[0].mxu0 %v731
    %v770 = vpop.f32.mrb[0].mxu0
    %v771 = vadd.f32 0.0, %v770
    %v772 = vpop.f32.mrb[0].mxu0
    %v773 = vpop.f32.mrb[0].mxu0
    %v774 = vadd.f32 0.0, %v773
    %v775 = vpop.f32.mrb[0].mxu0
    %776 = vmatprep.mubr.bf16.mxu0 0
    %777 = vmatmul.mubr.bf16.gmra.mrb[0].mxu0 %v734
    %v778 = vpop.f32.mrb[0].mxu0
    %v779 = vadd.f32 0.0, %v778
    %v780 = vpop.f32.mrb[0].mxu0
    %v781 = vpop.f32.mrb[0].mxu0
    %v782 = vadd.f32 0.0, %v781
    %v783 = vpop.f32.mrb[0].mxu0
    %784 = vdwg.mxu0
    %v785 = vpack.c.bf16 %v774, %v771
    %v786 = vpack.c.bf16 %v782, %v779
    %s787 = scalar_lea.vmem %s1, 48
    %v788 = vld [vmem:[%s787] sm:$0xf]
    %v789 = vld [vmem:[%s787 + $0x4] sm:$0xf]
    %v790 = vld [vmem:[%s787 + $0x8] sm:$0xf]
    %v791 = vld [vmem:[%s787 + $0xc] sm:$0xf]
    %v796 = vunpack.c.l.b16 %v788
    %v797 = vunpack.c.l.b16 %v789
    %v798 = vunpack.c.l.b16 %v790
    %v799 = vunpack.c.l.b16 %v791
    %v800 = vpack.c.b16 %v797, %v796
    %v801 = vpack.c.b16 %v799, %v798
    %v803 = vsel %vm403, %v800, 0
    %v806 = vsel %vm403, %v801, 0
    %808 = vmatprep.subr.bf16.mxu0 0
    %809 = vmatpush1.bf16.msra.mxu0 %v713
    %810 = vmatprep.subr.bf16.mxu0 0
    %811 = vmatpush1.bf16.msra.mxu0 %v714
    %812 = vmatprep.subr.bf16.mxu0 0
    %813 = vmatpush1.bf16.msra.mxu0 0
    %814 = vmatprep.subr.bf16.mxu0 0
    %815 = vmatpush1.bf16.msra.mxu0 0
    %816 = vmatprep.subr.bf16.mxu0 0
    %817 = vmatpush1.bf16.msra.mxu0 0
    %818 = vmatprep.subr.bf16.mxu0 0
    %819 = vmatpush1.bf16.msra.mxu0 0
    %820 = vmatprep.subr.bf16.mxu0 0
    %821 = vmatpush1.bf16.msra.mxu0 0
    %822 = vmatprep.subr.bf16.mxu0 0
    %823 = vmatpush1.bf16.msra.mxu0 0
    %824 = vmatprep.subr.bf16.mxu0 0
    %825 = vmatpush1.bf16.msra.mxu0 0
    %826 = vmatprep.subr.bf16.mxu0 0
    %827 = vmatpush1.bf16.msra.mxu0 0
    %828 = vmatprep.subr.bf16.mxu0 0
    %829 = vmatpush1.bf16.msra.mxu0 0
    %830 = vmatprep.subr.bf16.mxu0 0
    %831 = vmatpush1.bf16.msra.mxu0 0
    %832 = vmatprep.subr.bf16.mxu0 0
    %833 = vmatpush1.bf16.msra.mxu0 0
    %834 = vmatprep.subr.bf16.mxu0 0
    %835 = vmatpush1.bf16.msra.mxu0 0
    %836 = vmatprep.subr.bf16.mxu0 0
    %837 = vmatpush1.bf16.msra.mxu0 0
    %838 = vmatprep.subr.bf16.mxu0 0
    %839 = vmatpush1.bf16.msra.mxu0 0
    %840 = vmatprep.mubr.bf16.mxu0 0
    %841 = vmatmul.mubr.bf16.gmra.mrb[0].mxu0 %v803
    %v842 = vpop.f32.mrb[0].mxu0
    %v843 = vadd.f32 0.0, %v842
    %v844 = vpop.f32.mrb[0].mxu0
    %v845 = vpop.f32.mrb[0].mxu0
    %v846 = vadd.f32 0.0, %v845
    %v847 = vpop.f32.mrb[0].mxu0
    %848 = vmatprep.mubr.bf16.mxu0 0
    %849 = vmatmul.mubr.bf16.gmra.mrb[0].mxu0 %v806
    %v850 = vpop.f32.mrb[0].mxu0
    %v851 = vadd.f32 0.0, %v850
    %v852 = vpop.f32.mrb[0].mxu0
    %v853 = vpop.f32.mrb[0].mxu0
    %v854 = vadd.f32 0.0, %v853
    %v855 = vpop.f32.mrb[0].mxu0
    %856 = vdwg.mxu0
    %v857 = vpack.c.bf16 %v846, %v843
    %v858 = vpack.c.bf16 %v854, %v851
    %s859 = scalar_lea.vmem %s1, 64
    %v860 = vld [vmem:[%s859] sm:$0xf]
    %v861 = vld [vmem:[%s859 + $0x4] sm:$0xf]
    %v862 = vld [vmem:[%s859 + $0x8] sm:$0xf]
    %v863 = vld [vmem:[%s859 + $0xc] sm:$0xf]
    %v868 = vunpack.c.l.b16 %v860
    %v869 = vunpack.c.l.b16 %v861
    %v870 = vunpack.c.l.b16 %v862
    %v871 = vunpack.c.l.b16 %v863
    %v872 = vpack.c.b16 %v869, %v868
    %v873 = vpack.c.b16 %v871, %v870
    %v875 = vsel %vm403, %v872, 0
    %v878 = vsel %vm403, %v873, 0
    %880 = vmatprep.subr.bf16.mxu0 0
    %881 = vmatpush1.bf16.msra.mxu0 %v713
    %882 = vmatprep.subr.bf16.mxu0 0
    %883 = vmatpush1.bf16.msra.mxu0 %v714
    %884 = vmatprep.subr.bf16.mxu0 0
    %885 = vmatpush1.bf16.msra.mxu0 0
    %886 = vmatprep.subr.bf16.mxu0 0
    %887 = vmatpush1.bf16.msra.mxu0 0
    %888 = vmatprep.subr.bf16.mxu0 0
    %889 = vmatpush1.bf16.msra.mxu0 0
    %890 = vmatprep.subr.bf16.mxu0 0
    %891 = vmatpush1.bf16.msra.mxu0 0
    %892 = vmatprep.subr.bf16.mxu0 0
    %893 = vmatpush1.bf16.msra.mxu0 0
    %894 = vmatprep.subr.bf16.mxu0 0
    %895 = vmatpush1.bf16.msra.mxu0 0
    %896 = vmatprep.subr.bf16.mxu0 0
    %897 = vmatpush1.bf16.msra.mxu0 0
    %898 = vmatprep.subr.bf16.mxu0 0
    %899 = vmatpush1.bf16.msra.mxu0 0
    %900 = vmatprep.subr.bf16.mxu0 0
    %901 = vmatpush1.bf16.msra.mxu0 0
    %902 = vmatprep.subr.bf16.mxu0 0
    %903 = vmatpush1.bf16.msra.mxu0 0
    %904 = vmatprep.subr.bf16.mxu0 0
    %905 = vmatpush1.bf16.msra.mxu0 0
    %906 = vmatprep.subr.bf16.mxu0 0
    %907 = vmatpush1.bf16.msra.mxu0 0
    %908 = vmatprep.subr.bf16.mxu0 0
    %909 = vmatpush1.bf16.msra.mxu0 0
    %910 = vmatprep.subr.bf16.mxu0 0
    %911 = vmatpush1.bf16.msra.mxu0 0
    %912 = vmatprep.mubr.bf16.mxu0 0
    %913 = vmatmul.mubr.bf16.gmra.mrb[0].mxu0 %v875
    %v914 = vpop.f32.mrb[0].mxu0
    %v915 = vadd.f32 0.0, %v914
    %v916 = vpop.f32.mrb[0].mxu0
    %v917 = vpop.f32.mrb[0].mxu0
    %v918 = vadd.f32 0.0, %v917
    %v919 = vpop.f32.mrb[0].mxu0
    %920 = vmatprep.mubr.bf16.mxu0 0
    %921 = vmatmul.mubr.bf16.gmra.mrb[0].mxu0 %v878
    %v922 = vpop.f32.mrb[0].mxu0
    %v923 = vadd.f32 0.0, %v922
    %v924 = vpop.f32.mrb[0].mxu0
    %v925 = vpop.f32.mrb[0].mxu0
    %v926 = vadd.f32 0.0, %v925
    %v927 = vpop.f32.mrb[0].mxu0
    %928 = vdwg.mxu0
    %v929 = vpack.c.bf16 %v918, %v915
    %v930 = vpack.c.bf16 %v926, %v923
    %s931 = sshll.u32 %s534, 4
    %932 = dma.done %s105, %s931
    %v933 = vld [vmem:[%s104] sm:$0xff]
    %v934 = vld [vmem:[%s104 + $0x8] sm:$0xff]
    %v935 = vld [vmem:[%s104 + $0x10] sm:$0xff]
    %v936 = vld [vmem:[%s104 + $0x18] sm:$0xff]
    %v937 = vld [vmem:[%s104 + $0x20] sm:$0xff]
    %v938 = vld [vmem:[%s104 + $0x28] sm:$0xff]
    %v939 = vld [vmem:[%s104 + $0x30] sm:$0xff]
    %v940 = vld [vmem:[%s104 + $0x38] sm:$0xff]
    %v941 = vld [vmem:[%s104 + $0x40] sm:$0xff]
    %v942 = vld [vmem:[%s104 + $0x48] sm:$0xff]
    %v943 = vld [vmem:[%s104 + $0x50] sm:$0xff]
    %v944 = vld [vmem:[%s104 + $0x58] sm:$0xff]
    %v945 = vld [vmem:[%s104 + $0x60] sm:$0xff]
    %v946 = vld [vmem:[%s104 + $0x68] sm:$0xff]
    %v947 = vld [vmem:[%s104 + $0x70] sm:$0xff]
    %v948 = vld [vmem:[%s104 + $0x78] sm:$0xff]
    %v949 = vld [vmem:[%s104 + $0x80] sm:$0xff]
    %v950 = vld [vmem:[%s104 + $0x88] sm:$0xff]
    %v951 = vld [vmem:[%s104 + $0x90] sm:$0xff]
    %v952 = vld [vmem:[%s104 + $0x98] sm:$0xff]
    %v953 = vld [vmem:[%s104 + $0xa0] sm:$0xff]
    %v954 = vld [vmem:[%s104 + $0xa8] sm:$0xff]
    %v955 = vld [vmem:[%s104 + $0xb0] sm:$0xff]
    %v956 = vld [vmem:[%s104 + $0xb8] sm:$0xff]
    %957 = vmatprep.subr.bf16.mxu0 0
    %958 = vmatpush1.bf16.msra.mxu0 %v933
    %959 = vmatprep.subr.bf16.mxu0 0
    %960 = vmatpush1.bf16.msra.mxu0 %v934
    %961 = vmatprep.subr.bf16.mxu0 0
    %962 = vmatpush1.bf16.msra.mxu0 %v935
    %963 = vmatprep.subr.bf16.mxu0 0
    %964 = vmatpush1.bf16.msra.mxu0 %v936
    %965 = vmatprep.subr.bf16.mxu0 0
    %966 = vmatpush1.bf16.msra.mxu0 %v937
    %967 = vmatprep.subr.bf16.mxu0 0
    %968 = vmatpush1.bf16.msra.mxu0 %v938
    %969 = vmatprep.subr.bf16.mxu0 0
    %970 = vmatpush1.bf16.msra.mxu0 %v939
    %971 = vmatprep.subr.bf16.mxu0 0
    %972 = vmatpush1.bf16.msra.mxu0 %v940
    %973 = vmatprep.subr.bf16.mxu0 0
    %974 = vmatpush1.bf16.msra.mxu0 %v941
    %975 = vmatprep.subr.bf16.mxu0 0
    %976 = vmatpush1.bf16.msra.mxu0 %v942
    %977 = vmatprep.subr.bf16.mxu0 0
    %978 = vmatpush1.bf16.msra.mxu0 %v943
    %979 = vmatprep.subr.bf16.mxu0 0
    %980 = vmatpush1.bf16.msra.mxu0 %v944
    %981 = vmatprep.subr.bf16.mxu0 0
    %982 = vmatpush1.bf16.msra.mxu0 %v945
    %983 = vmatprep.subr.bf16.mxu0 0
    %984 = vmatpush1.bf16.msra.mxu0 %v946
    %985 = vmatprep.subr.bf16.mxu0 0
    %986 = vmatpush1.bf16.msra.mxu0 %v947
    %987 = vmatprep.subr.bf16.mxu0 0
    %988 = vmatpush1.bf16.msra.mxu0 %v948
    %989 = vmatprep.mubr.bf16.mxu0 %v857
    %990 = vmatmul.mubr.bf16.gmra.mrb[0].mxu0 %v785
    %v991 = vpop.f32.mrb[0].mxu0
    %v992 = vadd.f32 0.0, %v991
    %v993 = vpop.f32.mrb[0].mxu0
    %v994 = vpop.f32.mrb[0].mxu0
    %v995 = vadd.f32 0.0, %v994
    %v996 = vpop.f32.mrb[0].mxu0
    %997 = vmatprep.mubr.bf16.mxu0 %v858
    %998 = vmatmul.mubr.bf16.gmra.mrb[0].mxu0 %v786
    %v999 = vpop.f32.mrb[0].mxu0
    %v1000 = vadd.f32 0.0, %v999
    %v1001 = vpop.f32.mrb[0].mxu0
    %v1002 = vpop.f32.mrb[0].mxu0
    %v1003 = vadd.f32 0.0, %v1002
    %v1004 = vpop.f32.mrb[0].mxu0
    %1005 = vdwg.mxu0
    %1006 = vmatprep.subr.bf16.mxu0 0
    %1007 = vmatpush1.bf16.msra.mxu0 %v949
    %1008 = vmatprep.subr.bf16.mxu0 0
    %1009 = vmatpush1.bf16.msra.mxu0 %v950
    %1010 = vmatprep.subr.bf16.mxu0 0
    %1011 = vmatpush1.bf16.msra.mxu0 %v951
    %1012 = vmatprep.subr.bf16.mxu0 0
    %1013 = vmatpush1.bf16.msra.mxu0 %v952
    %1014 = vmatprep.subr.bf16.mxu0 0
    %1015 = vmatpush1.bf16.msra.mxu0 %v953
    %1016 = vmatprep.subr.bf16.mxu0 0
    %1017 = vmatpush1.bf16.msra.mxu0 %v954
    %1018 = vmatprep.subr.bf16.mxu0 0
    %1019 = vmatpush1.bf16.msra.mxu0 %v955
    %1020 = vmatprep.subr.bf16.mxu0 0
    %1021 = vmatpush1.bf16.msra.mxu0 %v956
    %1022 = vmatprep.subr.bf16.mxu0 0
    %1023 = vmatpush1.bf16.msra.mxu0 0
    %1024 = vmatprep.subr.bf16.mxu0 0
    %1025 = vmatpush1.bf16.msra.mxu0 0
    %1026 = vmatprep.subr.bf16.mxu0 0
    %1027 = vmatpush1.bf16.msra.mxu0 0
    %1028 = vmatprep.subr.bf16.mxu0 0
    %1029 = vmatpush1.bf16.msra.mxu0 0
    %1030 = vmatprep.subr.bf16.mxu0 0
    %1031 = vmatpush1.bf16.msra.mxu0 0
    %1032 = vmatprep.subr.bf16.mxu0 0
    %1033 = vmatpush1.bf16.msra.mxu0 0
    %1034 = vmatprep.subr.bf16.mxu0 0
    %1035 = vmatpush1.bf16.msra.mxu0 0
    %1036 = vmatprep.subr.bf16.mxu0 0
    %1037 = vmatpush1.bf16.msra.mxu0 0
    %1038 = vmatprep.mubr.bf16.mxu0 0
    %1039 = vmatmul.mubr.bf16.gmra.mrb[0].mxu0 %v929
    %v1040 = vpop.f32.mrb[0].mxu0
    %v1041 = vadd.f32 %v992, %v1040
    %v1042 = vpop.f32.mrb[0].mxu0
    %v1043 = vpop.f32.mrb[0].mxu0
    %v1044 = vadd.f32 %v995, %v1043
    %v1045 = vpop.f32.mrb[0].mxu0
    %1046 = vmatprep.mubr.bf16.mxu0 0
    %1047 = vmatmul.mubr.bf16.gmra.mrb[0].mxu0 %v930
    %v1048 = vpop.f32.mrb[0].mxu0
    %v1049 = vadd.f32 %v1000, %v1048
    %v1050 = vpop.f32.mrb[0].mxu0
    %v1051 = vpop.f32.mrb[0].mxu0
    %v1052 = vadd.f32 %v1003, %v1051
    %v1053 = vpop.f32.mrb[0].mxu0
    %1054 = vdwg.mxu0
    %v1055 = vadd.f32 %v1041, %v1044
    %v1056 = vadd.f32 %v1055, %v1049
    %v1057 = vadd.f32 %v1056, %v1052
    %v1058 = vrot.slane %v1057, 4
    %v1059 = vadd.f32 %v1057, %v1058
    %v1060 = vrot.slane %v1059, 2
    %v1061 = vadd.f32 %v1059, %v1060
    %v1062 = vrot.slane %v1061, 1
    %v1063 = vadd.f32 %v1061, %v1062
    %v1064 = vmul.f32 %v1041, %v1041
    %v1065 = vmul.f32 %v1044, %v1044
    %v1066 = vmul.f32 %v1049, %v1049
    %v1067 = vmul.f32 %v1052, %v1052
    %v1068 = vadd.f32 %v1064, %v1065
    %v1069 = vadd.f32 %v1068, %v1066
    %v1070 = vadd.f32 %v1069, %v1067
    %v1071 = vrot.slane %v1070, 4
    %v1072 = vadd.f32 %v1070, %v1071
    %v1073 = vrot.slane %v1072, 2
    %v1074 = vadd.f32 %v1072, %v1073
    %v1075 = vrot.slane %v1074, 1
    %v1076 = vadd.f32 %v1074, %v1075
    %v1077 = vmul.f32 %v1063, 0.0625
    %v1078 = vmul.f32 %v1076, 0.0625
    %v1079 = vmul.f32 %v1077, %v1077
    %v1080 = vsub.f32 %v1078, %v1079
    %v1081 = vmax.f32 %v1080, 0.0
    %s1082 = scalar_lea.vmem [#allocation7], 1
    %v1083 = vld [vmem:[%s1082] sm:$0x1]
    %v1084 = vadd.f32 %v1081, 1e-05
    %v1085 = vrsqrt.pop %v1084
    %v1086 = vmul.f32 %v1083, %v1085
    %s1087 = scalar_lea.vmem [#allocation9], 1
    %v1088 = vld [vmem:[%s1087] sm:$0x1]
    %v1089 = vmul.f32 %v1077, %v1086
    %v1090 = vsub.f32 %v1088, %v1089
    %v1092 = vlaneseq
    %v1093 = vshrl.u32 %v1092, 7
    %v1094 = vsub.s32 0, %v1093
    %v1095 = vrot.slane %v1086, %v1094
    %v1097 = vmul.f32 %v1041, %v1095
    %v1098 = vmul.f32 %v1044, %v1095
    %v1099 = vmul.f32 %v1049, %v1095
    %v1100 = vmul.f32 %v1052, %v1095
    %v1102 = vlaneseq
    %v1103 = vshrl.u32 %v1102, 7
    %v1104 = vsub.s32 0, %v1103
    %v1105 = vrot.slane %v1090, %v1104
    %v1107 = vadd.f32 %v1097, %v1105
    %v1108 = vadd.f32 %v1098, %v1105
    %v1109 = vadd.f32 %v1099, %v1105
    %v1110 = vadd.f32 %v1100, %v1105
    %v1111 = vmax.f32 %v1107, 0.0
    %v1112 = vmax.f32 %v1108, 0.0
    %v1113 = vmax.f32 %v1109, 0.0
    %v1114 = vmax.f32 %v1110, 0.0
    %v1115 = vlaneseq
    %v1116 = vshrl.u32 %v1115, 7
    %v1117 = vadd.s32 %v1116, 8
    %v1118 = vadd.s32 %v1116, 16
    %v1119 = vadd.s32 %v1116, 24
    %vm1120 = vcmp.ge.s32.totalorder %v1116, 0
    %vm1121 = vcmp.ge.s32.totalorder %v1117, 0
    %vm1122 = vcmp.ge.s32.totalorder %v1118, 0
    %vm1123 = vcmp.ge.s32.totalorder %v1119, 0
    %vm1124 = vcmp.lt.s32.totalorder %v1116, 8
    %vm1125 = vcmp.lt.s32.totalorder %v1117, 8
    %vm1126 = vcmp.lt.s32.totalorder %v1118, 8
    %vm1127 = vcmp.lt.s32.totalorder %v1119, 8
    %vm1128 = vmand %vm1120, %vm1124
    %vm1129 = vmand %vm1121, %vm1125
    %vm1130 = vmand %vm1122, %vm1126
    %vm1131 = vmand %vm1123, %vm1127
    %vm1132 = vcmp.ge.s32.totalorder %v1116, 16
    %vm1133 = vcmp.ge.s32.totalorder %v1117, 16
    %vm1134 = vcmp.ge.s32.totalorder %v1118, 16
    %vm1135 = vcmp.ge.s32.totalorder %v1119, 16
    %vm1136 = vcmp.lt.s32.totalorder %v1116, 24
    %vm1137 = vcmp.lt.s32.totalorder %v1117, 24
    %vm1138 = vcmp.lt.s32.totalorder %v1118, 24
    %vm1139 = vcmp.lt.s32.totalorder %v1119, 24
    %vm1140 = vmand %vm1132, %vm1136
    %vm1141 = vmand %vm1133, %vm1137
    %vm1142 = vmand %vm1134, %vm1138
    %vm1143 = vmand %vm1135, %vm1139
    %vm1144 = vmor %vm1128, %vm1140
    %vm1145 = vmor %vm1129, %vm1141
    %vm1146 = vmor %vm1130, %vm1142
    %vm1147 = vmor %vm1131, %vm1143
    %v1148 = vsel %vm1144, %v1111, 0.0
    %v1149 = vsel %vm1145, %v1112, 0.0
    %v1150 = vsel %vm1146, %v1113, 0.0
    %v1151 = vsel %vm1147, %v1114, 0.0
    %s1152 = sshll.u32 %s534, 4
    %1153 = dma.done %s119, %s1152
    %v1154 = vld [vmem:[%s118] sm:$0xff]
    %v1155 = vld [vmem:[%s118 + $0x8] sm:$0xff]
    %v1156 = vld [vmem:[%s118 + $0x10] sm:$0xff]
    %v1157 = vld [vmem:[%s118 + $0x18] sm:$0xff]
    %v1158 = vld [vmem:[%s118 + $0x20] sm:$0xff]
    %v1159 = vld [vmem:[%s118 + $0x28] sm:$0xff]
    %v1160 = vld [vmem:[%s118 + $0x30] sm:$0xff]
    %v1161 = vld [vmem:[%s118 + $0x38] sm:$0xff]
    %v1162 = vld [vmem:[%s118 + $0x40] sm:$0xff]
    %v1163 = vld [vmem:[%s118 + $0x48] sm:$0xff]
    %v1164 = vld [vmem:[%s118 + $0x50] sm:$0xff]
    %v1165 = vld [vmem:[%s118 + $0x58] sm:$0xff]
    %v1166 = vld [vmem:[%s118 + $0x60] sm:$0xff]
    %v1167 = vld [vmem:[%s118 + $0x68] sm:$0xff]
    %v1168 = vld [vmem:[%s118 + $0x70] sm:$0xff]
    %v1169 = vld [vmem:[%s118 + $0x78] sm:$0xff]
    %v1170 = vld [vmem:[%s118 + $0x80] sm:$0xff]
    %v1171 = vld [vmem:[%s118 + $0x88] sm:$0xff]
    %v1172 = vld [vmem:[%s118 + $0x90] sm:$0xff]
    %v1173 = vld [vmem:[%s118 + $0x98] sm:$0xff]
    %v1174 = vld [vmem:[%s118 + $0xa0] sm:$0xff]
    %v1175 = vld [vmem:[%s118 + $0xa8] sm:$0xff]
    %v1176 = vld [vmem:[%s118 + $0xb0] sm:$0xff]
    %v1177 = vld [vmem:[%s118 + $0xb8] sm:$0xff]
    %1178 = vmatprep.subr.bf16.mxu0 0
    %1179 = vmatpush1.bf16.msra.mxu0 %v1154
    %1180 = vmatprep.subr.bf16.mxu0 0
    %1181 = vmatpush1.bf16.msra.mxu0 %v1155
    %1182 = vmatprep.subr.bf16.mxu0 0
    %1183 = vmatpush1.bf16.msra.mxu0 %v1156
    %1184 = vmatprep.subr.bf16.mxu0 0
    %1185 = vmatpush1.bf16.msra.mxu0 %v1157
    %1186 = vmatprep.subr.bf16.mxu0 0
    %1187 = vmatpush1.bf16.msra.mxu0 %v1158
    %1188 = vmatprep.subr.bf16.mxu0 0
    %1189 = vmatpush1.bf16.msra.mxu0 %v1159
    %1190 = vmatprep.subr.bf16.mxu0 0
    %1191 = vmatpush1.bf16.msra.mxu0 %v1160
    %1192 = vmatprep.subr.bf16.mxu0 0
    %1193 = vmatpush1.bf16.msra.mxu0 %v1161
    %1194 = vmatprep.subr.bf16.mxu0 0
    %1195 = vmatpush1.bf16.msra.mxu0 %v1162
    %1196 = vmatprep.subr.bf16.mxu0 0
    %1197 = vmatpush1.bf16.msra.mxu0 %v1163
    %1198 = vmatprep.subr.bf16.mxu0 0
    %1199 = vmatpush1.bf16.msra.mxu0 %v1164
    %1200 = vmatprep.subr.bf16.mxu0 0
    %1201 = vmatpush1.bf16.msra.mxu0 %v1165
    %1202 = vmatprep.subr.bf16.mxu0 0
    %1203 = vmatpush1.bf16.msra.mxu0 %v1166
    %1204 = vmatprep.subr.bf16.mxu0 0
    %1205 = vmatpush1.bf16.msra.mxu0 %v1167
    %1206 = vmatprep.subr.bf16.mxu0 0
    %1207 = vmatpush1.bf16.msra.mxu0 %v1168
    %1208 = vmatprep.subr.bf16.mxu0 0
    %1209 = vmatpush1.bf16.msra.mxu0 %v1169
    %1210 = vmatprep.mubr.bf16.mxu0 %v857
    %1211 = vmatmul.mubr.bf16.gmra.mrb[0].mxu0 %v785
    %v1212 = vpop.f32.mrb[0].mxu0
    %v1213 = vadd.f32 0.0, %v1212
    %v1214 = vpop.f32.mrb[0].mxu0
    %v1215 = vpop.f32.mrb[0].mxu0
    %v1216 = vadd.f32 0.0, %v1215
    %v1217 = vpop.f32.mrb[0].mxu0
    %1218 = vmatprep.mubr.bf16.mxu0 %v858
    %1219 = vmatmul.mubr.bf16.gmra.mrb[0].mxu0 %v786
    %v1220 = vpop.f32.mrb[0].mxu0
    %v1221 = vadd.f32 0.0, %v1220
    %v1222 = vpop.f32.mrb[0].mxu0
    %v1223 = vpop.f32.mrb[0].mxu0
    %v1224 = vadd.f32 0.0, %v1223
    %v1225 = vpop.f32.mrb[0].mxu0
    %1226 = vdwg.mxu0
    %1227 = vmatprep.subr.bf16.mxu0 0
    %1228 = vmatpush1.bf16.msra.mxu0 %v1170
    %1229 = vmatprep.subr.bf16.mxu0 0
    %1230 = vmatpush1.bf16.msra.mxu0 %v1171
    %1231 = vmatprep.subr.bf16.mxu0 0
    %1232 = vmatpush1.bf16.msra.mxu0 %v1172
    %1233 = vmatprep.subr.bf16.mxu0 0
    %1234 = vmatpush1.bf16.msra.mxu0 %v1173
    %1235 = vmatprep.subr.bf16.mxu0 0
    %1236 = vmatpush1.bf16.msra.mxu0 %v1174
    %1237 = vmatprep.subr.bf16.mxu0 0
    %1238 = vmatpush1.bf16.msra.mxu0 %v1175
    %1239 = vmatprep.subr.bf16.mxu0 0
    %1240 = vmatpush1.bf16.msra.mxu0 %v1176
    %1241 = vmatprep.subr.bf16.mxu0 0
    %1242 = vmatpush1.bf16.msra.mxu0 %v1177
    %1243 = vmatprep.subr.bf16.mxu0 0
    %1244 = vmatpush1.bf16.msra.mxu0 0
    %1245 = vmatprep.subr.bf16.mxu0 0
    %1246 = vmatpush1.bf16.msra.mxu0 0
    %1247 = vmatprep.subr.bf16.mxu0 0
    %1248 = vmatpush1.bf16.msra.mxu0 0
    %1249 = vmatprep.subr.bf16.mxu0 0
    %1250 = vmatpush1.bf16.msra.mxu0 0
    %1251 = vmatprep.subr.bf16.mxu0 0
    %1252 = vmatpush1.bf16.msra.mxu0 0
    %1253 = vmatprep.subr.bf16.mxu0 0
    %1254 = vmatpush1.bf16.msra.mxu0 0
    %1255 = vmatprep.subr.bf16.mxu0 0
    %1256 = vmatpush1.bf16.msra.mxu0 0
    %1257 = vmatprep.subr.bf16.mxu0 0
    %1258 = vmatpush1.bf16.msra.mxu0 0
    %1259 = vmatprep.mubr.bf16.mxu0 0
    %1260 = vmatmul.mubr.bf16.gmra.mrb[0].mxu0 %v929
    %v1261 = vpop.f32.mrb[0].mxu0
    %v1262 = vadd.f32 %v1213, %v1261
    %v1263 = vpop.f32.mrb[0].mxu0
    %v1264 = vpop.f32.mrb[0].mxu0
    %v1265 = vadd.f32 %v1216, %v1264
    %v1266 = vpop.f32.mrb[0].mxu0
    %1267 = vmatprep.mubr.bf16.mxu0 0
    %1268 = vmatmul.mubr.bf16.gmra.mrb[0].mxu0 %v930
    %v1269 = vpop.f32.mrb[0].mxu0
    %v1270 = vadd.f32 %v1221, %v1269
    %v1271 = vpop.f32.mrb[0].mxu0
    %v1272 = vpop.f32.mrb[0].mxu0
    %v1273 = vadd.f32 %v1224, %v1272
    %v1274 = vpop.f32.mrb[0].mxu0
    %1275 = vdwg.mxu0
    %v1276 = vadd.f32 %v1262, %v1265
    %v1277 = vadd.f32 %v1276, %v1270
    %v1278 = vadd.f32 %v1277, %v1273
    %v1279 = vrot.slane %v1278, 4
    %v1280 = vadd.f32 %v1278, %v1279
    %v1281 = vrot.slane %v1280, 2
    %v1282 = vadd.f32 %v1280, %v1281
    %v1283 = vrot.slane %v1282, 1
    %v1284 = vadd.f32 %v1282, %v1283
    %v1285 = vmul.f32 %v1262, %v1262
    %v1286 = vmul.f32 %v1265, %v1265
    %v1287 = vmul.f32 %v1270, %v1270
    %v1288 = vmul.f32 %v1273, %v1273
    %v1289 = vadd.f32 %v1285, %v1286
    %v1290 = vadd.f32 %v1289, %v1287
    %v1291 = vadd.f32 %v1290, %v1288
    %v1292 = vrot.slane %v1291, 4
    %v1293 = vadd.f32 %v1291, %v1292
    %v1294 = vrot.slane %v1293, 2
    %v1295 = vadd.f32 %v1293, %v1294
    %v1296 = vrot.slane %v1295, 1
    %v1297 = vadd.f32 %v1295, %v1296
    %v1298 = vmul.f32 %v1284, 0.0625
    %v1299 = vmul.f32 %v1297, 0.0625
    %v1300 = vmul.f32 %v1298, %v1298
    %v1301 = vsub.f32 %v1299, %v1300
    %v1302 = vmax.f32 %v1301, 0.0
    %s1303 = scalar_lea.vmem [#allocation7], 2
    %v1304 = vld [vmem:[%s1303] sm:$0x1]
    %v1305 = vadd.f32 %v1302, 1e-05
    %v1306 = vrsqrt.pop %v1305
    %v1307 = vmul.f32 %v1304, %v1306
    %s1308 = scalar_lea.vmem [#allocation9], 2
    %v1309 = vld [vmem:[%s1308] sm:$0x1]
    %v1310 = vmul.f32 %v1298, %v1307
    %v1311 = vsub.f32 %v1309, %v1310
    %v1313 = vlaneseq
    %v1314 = vshrl.u32 %v1313, 7
    %v1315 = vsub.s32 0, %v1314
    %v1316 = vrot.slane %v1307, %v1315
    %v1318 = vmul.f32 %v1262, %v1316
    %v1319 = vmul.f32 %v1265, %v1316
    %v1320 = vmul.f32 %v1270, %v1316
    %v1321 = vmul.f32 %v1273, %v1316
    %v1323 = vlaneseq
    %v1324 = vshrl.u32 %v1323, 7
    %v1325 = vsub.s32 0, %v1324
    %v1326 = vrot.slane %v1311, %v1325
    %v1328 = vadd.f32 %v1318, %v1326
    %v1329 = vadd.f32 %v1319, %v1326
    %v1330 = vadd.f32 %v1320, %v1326
    %v1331 = vadd.f32 %v1321, %v1326
    %v1332 = vsel %vm1144, %v1328, 0.0
    %v1333 = vsel %vm1145, %v1329, 0.0
    %v1334 = vsel %vm1146, %v1330, 0.0
    %v1335 = vsel %vm1147, %v1331, 0.0
    %v1336 = vpack.c.bf16 %v1149, %v1148
    %v1337 = vpack.c.bf16 %v1151, %v1150
    %s1338 = scalar_lea.vmem %s1, 80
    %v1339 = vld [vmem:[%s1338] sm:$0xf]
    %v1340 = vld [vmem:[%s1338 + $0x4] sm:$0xf]
    %v1341 = vld [vmem:[%s1338 + $0x8] sm:$0xf]
    %v1342 = vld [vmem:[%s1338 + $0xc] sm:$0xf]
    %v1347 = vunpack.c.l.b16 %v1339
    %v1348 = vunpack.c.l.b16 %v1340
    %v1349 = vunpack.c.l.b16 %v1341
    %v1350 = vunpack.c.l.b16 %v1342
    %v1351 = vpack.c.b16 %v1348, %v1347
    %v1352 = vpack.c.b16 %v1350, %v1349
    %v1354 = vsel %vm403, %v1351, 0
    %v1357 = vsel %vm403, %v1352, 0
    %1359 = vmatprep.subr.bf16.mxu0 0
    %1360 = vmatpush1.bf16.msra.mxu0 %v1336
    %1361 = vmatprep.subr.bf16.mxu0 0
    %1362 = vmatpush1.bf16.msra.mxu0 %v1337
    %1363 = vmatprep.subr.bf16.mxu0 0
    %1364 = vmatpush1.bf16.msra.mxu0 0
    %1365 = vmatprep.subr.bf16.mxu0 0
    %1366 = vmatpush1.bf16.msra.mxu0 0
    %1367 = vmatprep.subr.bf16.mxu0 0
    %1368 = vmatpush1.bf16.msra.mxu0 0
    %1369 = vmatprep.subr.bf16.mxu0 0
    %1370 = vmatpush1.bf16.msra.mxu0 0
    %1371 = vmatprep.subr.bf16.mxu0 0
    %1372 = vmatpush1.bf16.msra.mxu0 0
    %1373 = vmatprep.subr.bf16.mxu0 0
    %1374 = vmatpush1.bf16.msra.mxu0 0
    %1375 = vmatprep.subr.bf16.mxu0 0
    %1376 = vmatpush1.bf16.msra.mxu0 0
    %1377 = vmatprep.subr.bf16.mxu0 0
    %1378 = vmatpush1.bf16.msra.mxu0 0
    %1379 = vmatprep.subr.bf16.mxu0 0
    %1380 = vmatpush1.bf16.msra.mxu0 0
    %1381 = vmatprep.subr.bf16.mxu0 0
    %1382 = vmatpush1.bf16.msra.mxu0 0
    %1383 = vmatprep.subr.bf16.mxu0 0
    %1384 = vmatpush1.bf16.msra.mxu0 0
    %1385 = vmatprep.subr.bf16.mxu0 0
    %1386 = vmatpush1.bf16.msra.mxu0 0
    %1387 = vmatprep.subr.bf16.mxu0 0
    %1388 = vmatpush1.bf16.msra.mxu0 0
    %1389 = vmatprep.subr.bf16.mxu0 0
    %1390 = vmatpush1.bf16.msra.mxu0 0
    %1391 = vmatprep.mubr.bf16.mxu0 0
    %1392 = vmatmul.mubr.bf16.gmra.mrb[0].mxu0 %v1354
    %v1393 = vpop.f32.mrb[0].mxu0
    %v1394 = vadd.f32 0.0, %v1393
    %v1395 = vpop.f32.mrb[0].mxu0
    %v1396 = vpop.f32.mrb[0].mxu0
    %v1397 = vadd.f32 0.0, %v1396
    %v1398 = vpop.f32.mrb[0].mxu0
    %1399 = vmatprep.mubr.bf16.mxu0 0
    %1400 = vmatmul.mubr.bf16.gmra.mrb[0].mxu0 %v1357
    %v1401 = vpop.f32.mrb[0].mxu0
    %v1402 = vadd.f32 0.0, %v1401
    %v1403 = vpop.f32.mrb[0].mxu0
    %v1404 = vpop.f32.mrb[0].mxu0
    %v1405 = vadd.f32 0.0, %v1404
    %v1406 = vpop.f32.mrb[0].mxu0
    %1407 = vdwg.mxu0
    %v1408 = vpack.c.bf16 %v1397, %v1394
    %v1409 = vpack.c.bf16 %v1405, %v1402
    %s1410 = scalar_lea.vmem %s1, 96
    %v1411 = vld [vmem:[%s1410] sm:$0xf]
    %v1412 = vld [vmem:[%s1410 + $0x4] sm:$0xf]
    %v1413 = vld [vmem:[%s1410 + $0x8] sm:$0xf]
    %v1414 = vld [vmem:[%s1410 + $0xc] sm:$0xf]
    %v1419 = vunpack.c.l.b16 %v1411
    %v1420 = vunpack.c.l.b16 %v1412
    %v1421 = vunpack.c.l.b16 %v1413
    %v1422 = vunpack.c.l.b16 %v1414
    %v1423 = vpack.c.b16 %v1420, %v1419
    %v1424 = vpack.c.b16 %v1422, %v1421
    %v1426 = vsel %vm403, %v1423, 0
    %v1429 = vsel %vm403, %v1424, 0
    %1431 = vmatprep.subr.bf16.mxu0 0
    %1432 = vmatpush1.bf16.msra.mxu0 %v1336
    %1433 = vmatprep.subr.bf16.mxu0 0
    %1434 = vmatpush1.bf16.msra.mxu0 %v1337
    %1435 = vmatprep.subr.bf16.mxu0 0
    %1436 = vmatpush1.bf16.msra.mxu0 0
    %1437 = vmatprep.subr.bf16.mxu0 0
    %1438 = vmatpush1.bf16.msra.mxu0 0
    %1439 = vmatprep.subr.bf16.mxu0 0
    %1440 = vmatpush1.bf16.msra.mxu0 0
    %1441 = vmatprep.subr.bf16.mxu0 0
    %1442 = vmatpush1.bf16.msra.mxu0 0
    %1443 = vmatprep.subr.bf16.mxu0 0
    %1444 = vmatpush1.bf16.msra.mxu0 0
    %1445 = vmatprep.subr.bf16.mxu0 0
    %1446 = vmatpush1.bf16.msra.mxu0 0
    %1447 = vmatprep.subr.bf16.mxu0 0
    %1448 = vmatpush1.bf16.msra.mxu0 0
    %1449 = vmatprep.subr.bf16.mxu0 0
    %1450 = vmatpush1.bf16.msra.mxu0 0
    %1451 = vmatprep.subr.bf16.mxu0 0
    %1452 = vmatpush1.bf16.msra.mxu0 0
    %1453 = vmatprep.subr.bf16.mxu0 0
    %1454 = vmatpush1.bf16.msra.mxu0 0
    %1455 = vmatprep.subr.bf16.mxu0 0
    %1456 = vmatpush1.bf16.msra.mxu0 0
    %1457 = vmatprep.subr.bf16.mxu0 0
    %1458 = vmatpush1.bf16.msra.mxu0 0
    %1459 = vmatprep.subr.bf16.mxu0 0
    %1460 = vmatpush1.bf16.msra.mxu0 0
    %1461 = vmatprep.subr.bf16.mxu0 0
    %1462 = vmatpush1.bf16.msra.mxu0 0
    %1463 = vmatprep.mubr.bf16.mxu0 0
    %1464 = vmatmul.mubr.bf16.gmra.mrb[0].mxu0 %v1426
    %v1465 = vpop.f32.mrb[0].mxu0
    %v1466 = vadd.f32 0.0, %v1465
    %v1467 = vpop.f32.mrb[0].mxu0
    %v1468 = vpop.f32.mrb[0].mxu0
    %v1469 = vadd.f32 0.0, %v1468
    %v1470 = vpop.f32.mrb[0].mxu0
    %1471 = vmatprep.mubr.bf16.mxu0 0
    %1472 = vmatmul.mubr.bf16.gmra.mrb[0].mxu0 %v1429
    %v1473 = vpop.f32.mrb[0].mxu0
    %v1474 = vadd.f32 0.0, %v1473
    %v1475 = vpop.f32.mrb[0].mxu0
    %v1476 = vpop.f32.mrb[0].mxu0
    %v1477 = vadd.f32 0.0, %v1476
    %v1478 = vpop.f32.mrb[0].mxu0
    %1479 = vdwg.mxu0
    %v1480 = vpack.c.bf16 %v1469, %v1466
    %v1481 = vpack.c.bf16 %v1477, %v1474
    %s1482 = sshll.u32 %s534, 4
    %1483 = dma.done %s133, %s1482
    %v1484 = vld [vmem:[%s132] sm:$0xff]
    %v1485 = vld [vmem:[%s132 + $0x8] sm:$0xff]
    %v1486 = vld [vmem:[%s132 + $0x10] sm:$0xff]
    %v1487 = vld [vmem:[%s132 + $0x18] sm:$0xff]
    %v1488 = vld [vmem:[%s132 + $0x20] sm:$0xff]
    %v1489 = vld [vmem:[%s132 + $0x28] sm:$0xff]
    %v1490 = vld [vmem:[%s132 + $0x30] sm:$0xff]
    %v1491 = vld [vmem:[%s132 + $0x38] sm:$0xff]
    %v1492 = vld [vmem:[%s132 + $0x40] sm:$0xff]
    %v1493 = vld [vmem:[%s132 + $0x48] sm:$0xff]
    %v1494 = vld [vmem:[%s132 + $0x50] sm:$0xff]
    %v1495 = vld [vmem:[%s132 + $0x58] sm:$0xff]
    %v1496 = vld [vmem:[%s132 + $0x60] sm:$0xff]
    %v1497 = vld [vmem:[%s132 + $0x68] sm:$0xff]
    %v1498 = vld [vmem:[%s132 + $0x70] sm:$0xff]
    %v1499 = vld [vmem:[%s132 + $0x78] sm:$0xff]
    %v1500 = vld [vmem:[%s132 + $0x80] sm:$0xff]
    %v1501 = vld [vmem:[%s132 + $0x88] sm:$0xff]
    %v1502 = vld [vmem:[%s132 + $0x90] sm:$0xff]
    %v1503 = vld [vmem:[%s132 + $0x98] sm:$0xff]
    %v1504 = vld [vmem:[%s132 + $0xa0] sm:$0xff]
    %v1505 = vld [vmem:[%s132 + $0xa8] sm:$0xff]
    %v1506 = vld [vmem:[%s132 + $0xb0] sm:$0xff]
    %v1507 = vld [vmem:[%s132 + $0xb8] sm:$0xff]
    %1508 = vmatprep.subr.bf16.mxu0 0
    %1509 = vmatpush1.bf16.msra.mxu0 %v1484
    %1510 = vmatprep.subr.bf16.mxu0 0
    %1511 = vmatpush1.bf16.msra.mxu0 %v1485
    %1512 = vmatprep.subr.bf16.mxu0 0
    %1513 = vmatpush1.bf16.msra.mxu0 %v1486
    %1514 = vmatprep.subr.bf16.mxu0 0
    %1515 = vmatpush1.bf16.msra.mxu0 %v1487
    %1516 = vmatprep.subr.bf16.mxu0 0
    %1517 = vmatpush1.bf16.msra.mxu0 %v1488
    %1518 = vmatprep.subr.bf16.mxu0 0
    %1519 = vmatpush1.bf16.msra.mxu0 %v1489
    %1520 = vmatprep.subr.bf16.mxu0 0
    %1521 = vmatpush1.bf16.msra.mxu0 %v1490
    %1522 = vmatprep.subr.bf16.mxu0 0
    %1523 = vmatpush1.bf16.msra.mxu0 %v1491
    %1524 = vmatprep.subr.bf16.mxu0 0
    %1525 = vmatpush1.bf16.msra.mxu0 %v1492
    %1526 = vmatprep.subr.bf16.mxu0 0
    %1527 = vmatpush1.bf16.msra.mxu0 %v1493
    %1528 = vmatprep.subr.bf16.mxu0 0
    %1529 = vmatpush1.bf16.msra.mxu0 %v1494
    %1530 = vmatprep.subr.bf16.mxu0 0
    %1531 = vmatpush1.bf16.msra.mxu0 %v1495
    %1532 = vmatprep.subr.bf16.mxu0 0
    %1533 = vmatpush1.bf16.msra.mxu0 %v1496
    %1534 = vmatprep.subr.bf16.mxu0 0
    %1535 = vmatpush1.bf16.msra.mxu0 %v1497
    %1536 = vmatprep.subr.bf16.mxu0 0
    %1537 = vmatpush1.bf16.msra.mxu0 %v1498
    %1538 = vmatprep.subr.bf16.mxu0 0
    %1539 = vmatpush1.bf16.msra.mxu0 %v1499
    %1540 = vmatprep.mubr.bf16.mxu0 %v1336
    %1541 = vmatmul.mubr.bf16.gmra.mrb[0].mxu0 %v1408
    %v1542 = vpop.f32.mrb[0].mxu0
    %v1543 = vadd.f32 0.0, %v1542
    %v1544 = vpop.f32.mrb[0].mxu0
    %v1545 = vpop.f32.mrb[0].mxu0
    %v1546 = vadd.f32 0.0, %v1545
    %v1547 = vpop.f32.mrb[0].mxu0
    %1548 = vmatprep.mubr.bf16.mxu0 %v1337
    %1549 = vmatmul.mubr.bf16.gmra.mrb[0].mxu0 %v1409
    %v1550 = vpop.f32.mrb[0].mxu0
    %v1551 = vadd.f32 0.0, %v1550
    %v1552 = vpop.f32.mrb[0].mxu0
    %v1553 = vpop.f32.mrb[0].mxu0
    %v1554 = vadd.f32 0.0, %v1553
    %v1555 = vpop.f32.mrb[0].mxu0
    %1556 = vdwg.mxu0
    %1557 = vmatprep.subr.bf16.mxu0 0
    %1558 = vmatpush1.bf16.msra.mxu0 %v1500
    %1559 = vmatprep.subr.bf16.mxu0 0
    %1560 = vmatpush1.bf16.msra.mxu0 %v1501
    %1561 = vmatprep.subr.bf16.mxu0 0
    %1562 = vmatpush1.bf16.msra.mxu0 %v1502
    %1563 = vmatprep.subr.bf16.mxu0 0
    %1564 = vmatpush1.bf16.msra.mxu0 %v1503
    %1565 = vmatprep.subr.bf16.mxu0 0
    %1566 = vmatpush1.bf16.msra.mxu0 %v1504
    %1567 = vmatprep.subr.bf16.mxu0 0
    %1568 = vmatpush1.bf16.msra.mxu0 %v1505
    %1569 = vmatprep.subr.bf16.mxu0 0
    %1570 = vmatpush1.bf16.msra.mxu0 %v1506
    %1571 = vmatprep.subr.bf16.mxu0 0
    %1572 = vmatpush1.bf16.msra.mxu0 %v1507
    %1573 = vmatprep.subr.bf16.mxu0 0
    %1574 = vmatpush1.bf16.msra.mxu0 0
    %1575 = vmatprep.subr.bf16.mxu0 0
    %1576 = vmatpush1.bf16.msra.mxu0 0
    %1577 = vmatprep.subr.bf16.mxu0 0
    %1578 = vmatpush1.bf16.msra.mxu0 0
    %1579 = vmatprep.subr.bf16.mxu0 0
    %1580 = vmatpush1.bf16.msra.mxu0 0
    %1581 = vmatprep.subr.bf16.mxu0 0
    %1582 = vmatpush1.bf16.msra.mxu0 0
    %1583 = vmatprep.subr.bf16.mxu0 0
    %1584 = vmatpush1.bf16.msra.mxu0 0
    %1585 = vmatprep.subr.bf16.mxu0 0
    %1586 = vmatpush1.bf16.msra.mxu0 0
    %1587 = vmatprep.subr.bf16.mxu0 0
    %1588 = vmatpush1.bf16.msra.mxu0 0
    %1589 = vmatprep.mubr.bf16.mxu0 0
    %1590 = vmatmul.mubr.bf16.gmra.mrb[0].mxu0 %v1480
    %v1591 = vpop.f32.mrb[0].mxu0
    %v1592 = vadd.f32 %v1543, %v1591
    %v1593 = vpop.f32.mrb[0].mxu0
    %v1594 = vpop.f32.mrb[0].mxu0
    %v1595 = vadd.f32 %v1546, %v1594
    %v1596 = vpop.f32.mrb[0].mxu0
    %1597 = vmatprep.mubr.bf16.mxu0 0
    %1598 = vmatmul.mubr.bf16.gmra.mrb[0].mxu0 %v1481
    %v1599 = vpop.f32.mrb[0].mxu0
    %v1600 = vadd.f32 %v1551, %v1599
    %v1601 = vpop.f32.mrb[0].mxu0
    %v1602 = vpop.f32.mrb[0].mxu0
    %v1603 = vadd.f32 %v1554, %v1602
    %v1604 = vpop.f32.mrb[0].mxu0
    %1605 = vdwg.mxu0
    %v1606 = vadd.f32 %v1592, %v1595
    %v1607 = vadd.f32 %v1606, %v1600
    %v1608 = vadd.f32 %v1607, %v1603
    %v1609 = vrot.slane %v1608, 4
    %v1610 = vadd.f32 %v1608, %v1609
    %v1611 = vrot.slane %v1610, 2
    %v1612 = vadd.f32 %v1610, %v1611
    %v1613 = vrot.slane %v1612, 1
    %v1614 = vadd.f32 %v1612, %v1613
    %v1615 = vmul.f32 %v1592, %v1592
    %v1616 = vmul.f32 %v1595, %v1595
    %v1617 = vmul.f32 %v1600, %v1600
    %v1618 = vmul.f32 %v1603, %v1603
    %v1619 = vadd.f32 %v1615, %v1616
    %v1620 = vadd.f32 %v1619, %v1617
    %v1621 = vadd.f32 %v1620, %v1618
    %v1622 = vrot.slane %v1621, 4
    %v1623 = vadd.f32 %v1621, %v1622
    %v1624 = vrot.slane %v1623, 2
    %v1625 = vadd.f32 %v1623, %v1624
    %v1626 = vrot.slane %v1625, 1
    %v1627 = vadd.f32 %v1625, %v1626
    %v1628 = vmul.f32 %v1614, 0.0625
    %v1629 = vmul.f32 %v1627, 0.0625
    %v1630 = vmul.f32 %v1628, %v1628
    %v1631 = vsub.f32 %v1629, %v1630
    %v1632 = vmax.f32 %v1631, 0.0
    %s1633 = scalar_lea.vmem [#allocation7], 3
    %v1634 = vld [vmem:[%s1633] sm:$0x1]
    %v1635 = vadd.f32 %v1632, 1e-05
    %v1636 = vrsqrt.pop %v1635
    %v1637 = vmul.f32 %v1634, %v1636
    %s1638 = scalar_lea.vmem [#allocation9], 3
    %v1639 = vld [vmem:[%s1638] sm:$0x1]
    %v1640 = vmul.f32 %v1628, %v1637
    %v1641 = vsub.f32 %v1639, %v1640
    %v1643 = vlaneseq
    %v1644 = vshrl.u32 %v1643, 7
    %v1645 = vsub.s32 0, %v1644
    %v1646 = vrot.slane %v1637, %v1645
    %v1648 = vmul.f32 %v1592, %v1646
    %v1649 = vmul.f32 %v1595, %v1646
    %v1650 = vmul.f32 %v1600, %v1646
    %v1651 = vmul.f32 %v1603, %v1646
    %v1653 = vlaneseq
    %v1654 = vshrl.u32 %v1653, 7
    %v1655 = vsub.s32 0, %v1654
    %v1656 = vrot.slane %v1641, %v1655
    %v1658 = vadd.f32 %v1648, %v1656
    %v1659 = vadd.f32 %v1649, %v1656
    %v1660 = vadd.f32 %v1650, %v1656
    %v1661 = vadd.f32 %v1651, %v1656
    %v1662 = vadd.f32 %v1658, %v1332
    %v1663 = vadd.f32 %v1659, %v1333
    %v1664 = vadd.f32 %v1660, %v1334
    %v1665 = vadd.f32 %v1661, %v1335
    %v1666 = vmax.f32 %v1662, 0.0
    %v1667 = vmax.f32 %v1663, 0.0
    %v1668 = vmax.f32 %v1664, 0.0
    %v1669 = vmax.f32 %v1665, 0.0
    %v1670 = vsel %vm1144, %v1666, 0.0
    %v1671 = vsel %vm1145, %v1667, 0.0
    %v1672 = vsel %vm1146, %v1668, 0.0
    %v1673 = vsel %vm1147, %v1669, 0.0
    %v1674 = vpack.c.bf16 %v1671, %v1670
    %v1675 = vpack.c.bf16 %v1673, %v1672
    %s1676 = scalar_lea.vmem %s1, 112
    %v1677 = vld [vmem:[%s1676] sm:$0xf]
    %v1678 = vld [vmem:[%s1676 + $0x4] sm:$0xf]
    %v1679 = vld [vmem:[%s1676 + $0x8] sm:$0xf]
    %v1680 = vld [vmem:[%s1676 + $0xc] sm:$0xf]
    %v1685 = vunpack.c.l.b16 %v1677
    %v1686 = vunpack.c.l.b16 %v1678
    %v1687 = vunpack.c.l.b16 %v1679
    %v1688 = vunpack.c.l.b16 %v1680
    %v1689 = vpack.c.b16 %v1686, %v1685
    %v1690 = vpack.c.b16 %v1688, %v1687
    %v1692 = vsel %vm403, %v1689, 0
    %v1695 = vsel %vm403, %v1690, 0
    %1697 = vmatprep.subr.bf16.mxu0 0
    %1698 = vmatpush1.bf16.msra.mxu0 %v1674
    %1699 = vmatprep.subr.bf16.mxu0 0
    %1700 = vmatpush1.bf16.msra.mxu0 %v1675
    %1701 = vmatprep.subr.bf16.mxu0 0
    %1702 = vmatpush1.bf16.msra.mxu0 0
    %1703 = vmatprep.subr.bf16.mxu0 0
    %1704 = vmatpush1.bf16.msra.mxu0 0
    %1705 = vmatprep.subr.bf16.mxu0 0
    %1706 = vmatpush1.bf16.msra.mxu0 0
    %1707 = vmatprep.subr.bf16.mxu0 0
    %1708 = vmatpush1.bf16.msra.mxu0 0
    %1709 = vmatprep.subr.bf16.mxu0 0
    %1710 = vmatpush1.bf16.msra.mxu0 0
    %1711 = vmatprep.subr.bf16.mxu0 0
    %1712 = vmatpush1.bf16.msra.mxu0 0
    %1713 = vmatprep.subr.bf16.mxu0 0
    %1714 = vmatpush1.bf16.msra.mxu0 0
    %1715 = vmatprep.subr.bf16.mxu0 0
    %1716 = vmatpush1.bf16.msra.mxu0 0
    %1717 = vmatprep.subr.bf16.mxu0 0
    %1718 = vmatpush1.bf16.msra.mxu0 0
    %1719 = vmatprep.subr.bf16.mxu0 0
    %1720 = vmatpush1.bf16.msra.mxu0 0
    %1721 = vmatprep.subr.bf16.mxu0 0
    %1722 = vmatpush1.bf16.msra.mxu0 0
    %1723 = vmatprep.subr.bf16.mxu0 0
    %1724 = vmatpush1.bf16.msra.mxu0 0
    %1725 = vmatprep.subr.bf16.mxu0 0
    %1726 = vmatpush1.bf16.msra.mxu0 0
    %1727 = vmatprep.subr.bf16.mxu0 0
    %1728 = vmatpush1.bf16.msra.mxu0 0
    %1729 = vmatprep.mubr.bf16.mxu0 0
    %1730 = vmatmul.mubr.bf16.gmra.mrb[0].mxu0 %v1692
    %v1731 = vpop.f32.mrb[0].mxu0
    %v1732 = vadd.f32 0.0, %v1731
    %v1733 = vpop.f32.mrb[0].mxu0
    %v1734 = vpop.f32.mrb[0].mxu0
    %v1735 = vadd.f32 0.0, %v1734
    %v1736 = vpop.f32.mrb[0].mxu0
    %1737 = vmatprep.mubr.bf16.mxu0 0
    %1738 = vmatmul.mubr.bf16.gmra.mrb[0].mxu0 %v1695
    %v1739 = vpop.f32.mrb[0].mxu0
    %v1740 = vadd.f32 0.0, %v1739
    %v1741 = vpop.f32.mrb[0].mxu0
    %v1742 = vpop.f32.mrb[0].mxu0
    %v1743 = vadd.f32 0.0, %v1742
    %v1744 = vpop.f32.mrb[0].mxu0
    %1745 = vdwg.mxu0
    %v1746 = vpack.c.bf16 %v1735, %v1732
    %v1747 = vpack.c.bf16 %v1743, %v1740
    %s1748 = scalar_lea.vmem %s1, 128
    %v1749 = vld [vmem:[%s1748] sm:$0xf]
    %v1750 = vld [vmem:[%s1748 + $0x4] sm:$0xf]
    %v1751 = vld [vmem:[%s1748 + $0x8] sm:$0xf]
    %v1752 = vld [vmem:[%s1748 + $0xc] sm:$0xf]
    %v1757 = vunpack.c.l.b16 %v1749
    %v1758 = vunpack.c.l.b16 %v1750
    %v1759 = vunpack.c.l.b16 %v1751
    %v1760 = vunpack.c.l.b16 %v1752
    %v1761 = vpack.c.b16 %v1758, %v1757
    %v1762 = vpack.c.b16 %v1760, %v1759
    %v1764 = vsel %vm403, %v1761, 0
    %v1767 = vsel %vm403, %v1762, 0
    %1769 = vmatprep.subr.bf16.mxu0 0
    %1770 = vmatpush1.bf16.msra.mxu0 %v1674
    %1771 = vmatprep.subr.bf16.mxu0 0
    %1772 = vmatpush1.bf16.msra.mxu0 %v1675
    %1773 = vmatprep.subr.bf16.mxu0 0
    %1774 = vmatpush1.bf16.msra.mxu0 0
    %1775 = vmatprep.subr.bf16.mxu0 0
    %1776 = vmatpush1.bf16.msra.mxu0 0
    %1777 = vmatprep.subr.bf16.mxu0 0
    %1778 = vmatpush1.bf16.msra.mxu0 0
    %1779 = vmatprep.subr.bf16.mxu0 0
    %1780 = vmatpush1.bf16.msra.mxu0 0
    %1781 = vmatprep.subr.bf16.mxu0 0
    %1782 = vmatpush1.bf16.msra.mxu0 0
    %1783 = vmatprep.subr.bf16.mxu0 0
    %1784 = vmatpush1.bf16.msra.mxu0 0
    %1785 = vmatprep.subr.bf16.mxu0 0
    %1786 = vmatpush1.bf16.msra.mxu0 0
    %1787 = vmatprep.subr.bf16.mxu0 0
    %1788 = vmatpush1.bf16.msra.mxu0 0
    %1789 = vmatprep.subr.bf16.mxu0 0
    %1790 = vmatpush1.bf16.msra.mxu0 0
    %1791 = vmatprep.subr.bf16.mxu0 0
    %1792 = vmatpush1.bf16.msra.mxu0 0
    %1793 = vmatprep.subr.bf16.mxu0 0
    %1794 = vmatpush1.bf16.msra.mxu0 0
    %1795 = vmatprep.subr.bf16.mxu0 0
    %1796 = vmatpush1.bf16.msra.mxu0 0
    %1797 = vmatprep.subr.bf16.mxu0 0
    %1798 = vmatpush1.bf16.msra.mxu0 0
    %1799 = vmatprep.subr.bf16.mxu0 0
    %1800 = vmatpush1.bf16.msra.mxu0 0
    %1801 = vmatprep.mubr.bf16.mxu0 0
    %1802 = vmatmul.mubr.bf16.gmra.mrb[0].mxu0 %v1764
    %v1803 = vpop.f32.mrb[0].mxu0
    %v1804 = vadd.f32 0.0, %v1803
    %v1805 = vpop.f32.mrb[0].mxu0
    %v1806 = vpop.f32.mrb[0].mxu0
    %v1807 = vadd.f32 0.0, %v1806
    %v1808 = vpop.f32.mrb[0].mxu0
    %1809 = vmatprep.mubr.bf16.mxu0 0
    %1810 = vmatmul.mubr.bf16.gmra.mrb[0].mxu0 %v1767
    %v1811 = vpop.f32.mrb[0].mxu0
    %v1812 = vadd.f32 0.0, %v1811
    %v1813 = vpop.f32.mrb[0].mxu0
    %v1814 = vpop.f32.mrb[0].mxu0
    %v1815 = vadd.f32 0.0, %v1814
    %v1816 = vpop.f32.mrb[0].mxu0
    %1817 = vdwg.mxu0
    %v1818 = vpack.c.bf16 %v1807, %v1804
    %v1819 = vpack.c.bf16 %v1815, %v1812
    %s1820 = sshll.u32 %s534, 4
    %1821 = dma.done %s147, %s1820
    %v1822 = vld [vmem:[%s146] sm:$0xff]
    %v1823 = vld [vmem:[%s146 + $0x8] sm:$0xff]
    %v1824 = vld [vmem:[%s146 + $0x10] sm:$0xff]
    %v1825 = vld [vmem:[%s146 + $0x18] sm:$0xff]
    %v1826 = vld [vmem:[%s146 + $0x20] sm:$0xff]
    %v1827 = vld [vmem:[%s146 + $0x28] sm:$0xff]
    %v1828 = vld [vmem:[%s146 + $0x30] sm:$0xff]
    %v1829 = vld [vmem:[%s146 + $0x38] sm:$0xff]
    %v1830 = vld [vmem:[%s146 + $0x40] sm:$0xff]
    %v1831 = vld [vmem:[%s146 + $0x48] sm:$0xff]
    %v1832 = vld [vmem:[%s146 + $0x50] sm:$0xff]
    %v1833 = vld [vmem:[%s146 + $0x58] sm:$0xff]
    %v1834 = vld [vmem:[%s146 + $0x60] sm:$0xff]
    %v1835 = vld [vmem:[%s146 + $0x68] sm:$0xff]
    %v1836 = vld [vmem:[%s146 + $0x70] sm:$0xff]
    %v1837 = vld [vmem:[%s146 + $0x78] sm:$0xff]
    %v1838 = vld [vmem:[%s146 + $0x80] sm:$0xff]
    %v1839 = vld [vmem:[%s146 + $0x88] sm:$0xff]
    %v1840 = vld [vmem:[%s146 + $0x90] sm:$0xff]
    %v1841 = vld [vmem:[%s146 + $0x98] sm:$0xff]
    %v1842 = vld [vmem:[%s146 + $0xa0] sm:$0xff]
    %v1843 = vld [vmem:[%s146 + $0xa8] sm:$0xff]
    %v1844 = vld [vmem:[%s146 + $0xb0] sm:$0xff]
    %v1845 = vld [vmem:[%s146 + $0xb8] sm:$0xff]
    %1846 = vmatprep.subr.bf16.mxu0 0
    %1847 = vmatpush1.bf16.msra.mxu0 %v1822
    %1848 = vmatprep.subr.bf16.mxu0 0
    %1849 = vmatpush1.bf16.msra.mxu0 %v1823
    %1850 = vmatprep.subr.bf16.mxu0 0
    %1851 = vmatpush1.bf16.msra.mxu0 %v1824
    %1852 = vmatprep.subr.bf16.mxu0 0
    %1853 = vmatpush1.bf16.msra.mxu0 %v1825
    %1854 = vmatprep.subr.bf16.mxu0 0
    %1855 = vmatpush1.bf16.msra.mxu0 %v1826
    %1856 = vmatprep.subr.bf16.mxu0 0
    %1857 = vmatpush1.bf16.msra.mxu0 %v1827
    %1858 = vmatprep.subr.bf16.mxu0 0
    %1859 = vmatpush1.bf16.msra.mxu0 %v1828
    %1860 = vmatprep.subr.bf16.mxu0 0
    %1861 = vmatpush1.bf16.msra.mxu0 %v1829
    %1862 = vmatprep.subr.bf16.mxu0 0
    %1863 = vmatpush1.bf16.msra.mxu0 %v1830
    %1864 = vmatprep.subr.bf16.mxu0 0
    %1865 = vmatpush1.bf16.msra.mxu0 %v1831
    %1866 = vmatprep.subr.bf16.mxu0 0
    %1867 = vmatpush1.bf16.msra.mxu0 %v1832
    %1868 = vmatprep.subr.bf16.mxu0 0
    %1869 = vmatpush1.bf16.msra.mxu0 %v1833
    %1870 = vmatprep.subr.bf16.mxu0 0
    %1871 = vmatpush1.bf16.msra.mxu0 %v1834
    %1872 = vmatprep.subr.bf16.mxu0 0
    %1873 = vmatpush1.bf16.msra.mxu0 %v1835
    %1874 = vmatprep.subr.bf16.mxu0 0
    %1875 = vmatpush1.bf16.msra.mxu0 %v1836
    %1876 = vmatprep.subr.bf16.mxu0 0
    %1877 = vmatpush1.bf16.msra.mxu0 %v1837
    %1878 = vmatprep.mubr.bf16.mxu0 %v1674
    %1879 = vmatmul.mubr.bf16.gmra.mrb[0].mxu0 %v1746
    %v1880 = vpop.f32.mrb[0].mxu0
    %v1881 = vadd.f32 0.0, %v1880
    %v1882 = vpop.f32.mrb[0].mxu0
    %v1883 = vpop.f32.mrb[0].mxu0
    %v1884 = vadd.f32 0.0, %v1883
    %v1885 = vpop.f32.mrb[0].mxu0
    %1886 = vmatprep.mubr.bf16.mxu0 %v1675
    %1887 = vmatmul.mubr.bf16.gmra.mrb[0].mxu0 %v1747
    %v1888 = vpop.f32.mrb[0].mxu0
    %v1889 = vadd.f32 0.0, %v1888
    %v1890 = vpop.f32.mrb[0].mxu0
    %v1891 = vpop.f32.mrb[0].mxu0
    %v1892 = vadd.f32 0.0, %v1891
    %v1893 = vpop.f32.mrb[0].mxu0
    %1894 = vdwg.mxu0
    %1895 = vmatprep.subr.bf16.mxu0 0
    %1896 = vmatpush1.bf16.msra.mxu0 %v1838
    %1897 = vmatprep.subr.bf16.mxu0 0
    %1898 = vmatpush1.bf16.msra.mxu0 %v1839
    %1899 = vmatprep.subr.bf16.mxu0 0
    %1900 = vmatpush1.bf16.msra.mxu0 %v1840
    %1901 = vmatprep.subr.bf16.mxu0 0
    %1902 = vmatpush1.bf16.msra.mxu0 %v1841
    %1903 = vmatprep.subr.bf16.mxu0 0
    %1904 = vmatpush1.bf16.msra.mxu0 %v1842
    %1905 = vmatprep.subr.bf16.mxu0 0
    %1906 = vmatpush1.bf16.msra.mxu0 %v1843
    %1907 = vmatprep.subr.bf16.mxu0 0
    %1908 = vmatpush1.bf16.msra.mxu0 %v1844
    %1909 = vmatprep.subr.bf16.mxu0 0
    %1910 = vmatpush1.bf16.msra.mxu0 %v1845
    %1911 = vmatprep.subr.bf16.mxu0 0
    %1912 = vmatpush1.bf16.msra.mxu0 0
    %1913 = vmatprep.subr.bf16.mxu0 0
    %1914 = vmatpush1.bf16.msra.mxu0 0
    %1915 = vmatprep.subr.bf16.mxu0 0
    %1916 = vmatpush1.bf16.msra.mxu0 0
    %1917 = vmatprep.subr.bf16.mxu0 0
    %1918 = vmatpush1.bf16.msra.mxu0 0
    %1919 = vmatprep.subr.bf16.mxu0 0
    %1920 = vmatpush1.bf16.msra.mxu0 0
    %1921 = vmatprep.subr.bf16.mxu0 0
    %1922 = vmatpush1.bf16.msra.mxu0 0
    %1923 = vmatprep.subr.bf16.mxu0 0
    %1924 = vmatpush1.bf16.msra.mxu0 0
    %1925 = vmatprep.subr.bf16.mxu0 0
    %1926 = vmatpush1.bf16.msra.mxu0 0
    %1927 = vmatprep.mubr.bf16.mxu0 0
    %1928 = vmatmul.mubr.bf16.gmra.mrb[0].mxu0 %v1818
    %v1929 = vpop.f32.mrb[0].mxu0
    %v1930 = vadd.f32 %v1881, %v1929
    %v1931 = vpop.f32.mrb[0].mxu0
    %v1932 = vpop.f32.mrb[0].mxu0
    %v1933 = vadd.f32 %v1884, %v1932
    %v1934 = vpop.f32.mrb[0].mxu0
    %1935 = vmatprep.mubr.bf16.mxu0 0
    %1936 = vmatmul.mubr.bf16.gmra.mrb[0].mxu0 %v1819
    %v1937 = vpop.f32.mrb[0].mxu0
    %v1938 = vadd.f32 %v1889, %v1937
    %v1939 = vpop.f32.mrb[0].mxu0
    %v1940 = vpop.f32.mrb[0].mxu0
    %v1941 = vadd.f32 %v1892, %v1940
    %v1942 = vpop.f32.mrb[0].mxu0
    %1943 = vdwg.mxu0
    %v1944 = vadd.f32 %v1930, %v1933
    %v1945 = vadd.f32 %v1944, %v1938
    %v1946 = vadd.f32 %v1945, %v1941
    %v1947 = vrot.slane %v1946, 4
    %v1948 = vadd.f32 %v1946, %v1947
    %v1949 = vrot.slane %v1948, 2
    %v1950 = vadd.f32 %v1948, %v1949
    %v1951 = vrot.slane %v1950, 1
    %v1952 = vadd.f32 %v1950, %v1951
    %v1953 = vmul.f32 %v1930, %v1930
    %v1954 = vmul.f32 %v1933, %v1933
    %v1955 = vmul.f32 %v1938, %v1938
    %v1956 = vmul.f32 %v1941, %v1941
    %v1957 = vadd.f32 %v1953, %v1954
    %v1958 = vadd.f32 %v1957, %v1955
    %v1959 = vadd.f32 %v1958, %v1956
    %v1960 = vrot.slane %v1959, 4
    %v1961 = vadd.f32 %v1959, %v1960
    %v1962 = vrot.slane %v1961, 2
    %v1963 = vadd.f32 %v1961, %v1962
    %v1964 = vrot.slane %v1963, 1
    %v1965 = vadd.f32 %v1963, %v1964
    %v1966 = vmul.f32 %v1952, 0.0625
    %v1967 = vmul.f32 %v1965, 0.0625
    %v1968 = vmul.f32 %v1966, %v1966
    %v1969 = vsub.f32 %v1967, %v1968
    %v1970 = vmax.f32 %v1969, 0.0
    %s1971 = scalar_lea.vmem [#allocation7], 4
    %v1972 = vld [vmem:[%s1971] sm:$0x1]
    %v1973 = vadd.f32 %v1970, 1e-05
    %v1974 = vrsqrt.pop %v1973
    %v1975 = vmul.f32 %v1972, %v1974
    %s1976 = scalar_lea.vmem [#allocation9], 4
    %v1977 = vld [vmem:[%s1976] sm:$0x1]
    %v1978 = vmul.f32 %v1966, %v1975
    %v1979 = vsub.f32 %v1977, %v1978
    %v1981 = vlaneseq
    %v1982 = vshrl.u32 %v1981, 7
    %v1983 = vsub.s32 0, %v1982
    %v1984 = vrot.slane %v1975, %v1983
    %v1986 = vmul.f32 %v1930, %v1984
    %v1987 = vmul.f32 %v1933, %v1984
    %v1988 = vmul.f32 %v1938, %v1984
    %v1989 = vmul.f32 %v1941, %v1984
    %v1991 = vlaneseq
    %v1992 = vshrl.u32 %v1991, 7
    %v1993 = vsub.s32 0, %v1992
    %v1994 = vrot.slane %v1979, %v1993
    %v1996 = vadd.f32 %v1986, %v1994
    %v1997 = vadd.f32 %v1987, %v1994
    %v1998 = vadd.f32 %v1988, %v1994
    %v1999 = vadd.f32 %v1989, %v1994
    %v2000 = vmax.f32 %v1996, 0.0
    %v2001 = vmax.f32 %v1997, 0.0
    %v2002 = vmax.f32 %v1998, 0.0
    %v2003 = vmax.f32 %v1999, 0.0
    %v2004 = vsel %vm1144, %v2000, 0.0
    %v2005 = vsel %vm1145, %v2001, 0.0
    %v2006 = vsel %vm1146, %v2002, 0.0
    %v2007 = vsel %vm1147, %v2003, 0.0
    %v2008 = vpack.c.bf16 %v2005, %v2004
    %v2009 = vpack.c.bf16 %v2007, %v2006
    %s2010 = scalar_lea.vmem %s1, 144
    %v2011 = vld [vmem:[%s2010] sm:$0xf]
    %v2012 = vld [vmem:[%s2010 + $0x4] sm:$0xf]
    %v2013 = vld [vmem:[%s2010 + $0x8] sm:$0xf]
    %v2014 = vld [vmem:[%s2010 + $0xc] sm:$0xf]
    %v2019 = vunpack.c.l.b16 %v2011
    %v2020 = vunpack.c.l.b16 %v2012
    %v2021 = vunpack.c.l.b16 %v2013
    %v2022 = vunpack.c.l.b16 %v2014
    %v2023 = vpack.c.b16 %v2020, %v2019
    %v2024 = vpack.c.b16 %v2022, %v2021
    %v2026 = vsel %vm403, %v2023, 0
    %v2029 = vsel %vm403, %v2024, 0
    %2031 = vmatprep.subr.bf16.mxu0 0
    %2032 = vmatpush1.bf16.msra.mxu0 %v2008
    %2033 = vmatprep.subr.bf16.mxu0 0
    %2034 = vmatpush1.bf16.msra.mxu0 %v2009
    %2035 = vmatprep.subr.bf16.mxu0 0
    %2036 = vmatpush1.bf16.msra.mxu0 0
    %2037 = vmatprep.subr.bf16.mxu0 0
    %2038 = vmatpush1.bf16.msra.mxu0 0
    %2039 = vmatprep.subr.bf16.mxu0 0
    %2040 = vmatpush1.bf16.msra.mxu0 0
    %2041 = vmatprep.subr.bf16.mxu0 0
    %2042 = vmatpush1.bf16.msra.mxu0 0
    %2043 = vmatprep.subr.bf16.mxu0 0
    %2044 = vmatpush1.bf16.msra.mxu0 0
    %2045 = vmatprep.subr.bf16.mxu0 0
    %2046 = vmatpush1.bf16.msra.mxu0 0
    %2047 = vmatprep.subr.bf16.mxu0 0
    %2048 = vmatpush1.bf16.msra.mxu0 0
    %2049 = vmatprep.subr.bf16.mxu0 0
    %2050 = vmatpush1.bf16.msra.mxu0 0
    %2051 = vmatprep.subr.bf16.mxu0 0
    %2052 = vmatpush1.bf16.msra.mxu0 0
    %2053 = vmatprep.subr.bf16.mxu0 0
    %2054 = vmatpush1.bf16.msra.mxu0 0
    %2055 = vmatprep.subr.bf16.mxu0 0
    %2056 = vmatpush1.bf16.msra.mxu0 0
    %2057 = vmatprep.subr.bf16.mxu0 0
    %2058 = vmatpush1.bf16.msra.mxu0 0
    %2059 = vmatprep.subr.bf16.mxu0 0
    %2060 = vmatpush1.bf16.msra.mxu0 0
    %2061 = vmatprep.subr.bf16.mxu0 0
    %2062 = vmatpush1.bf16.msra.mxu0 0
    %2063 = vmatprep.mubr.bf16.mxu0 0
    %2064 = vmatmul.mubr.bf16.gmra.mrb[0].mxu0 %v2026
    %v2065 = vpop.f32.mrb[0].mxu0
    %v2066 = vadd.f32 0.0, %v2065
    %v2067 = vpop.f32.mrb[0].mxu0
    %v2068 = vpop.f32.mrb[0].mxu0
    %v2069 = vadd.f32 0.0, %v2068
    %v2070 = vpop.f32.mrb[0].mxu0
    %2071 = vmatprep.mubr.bf16.mxu0 0
    %2072 = vmatmul.mubr.bf16.gmra.mrb[0].mxu0 %v2029
    %v2073 = vpop.f32.mrb[0].mxu0
    %v2074 = vadd.f32 0.0, %v2073
    %v2075 = vpop.f32.mrb[0].mxu0
    %v2076 = vpop.f32.mrb[0].mxu0
    %v2077 = vadd.f32 0.0, %v2076
    %v2078 = vpop.f32.mrb[0].mxu0
    %2079 = vdwg.mxu0
    %v2080 = vpack.c.bf16 %v2069, %v2066
    %v2081 = vpack.c.bf16 %v2077, %v2074
    %s2082 = scalar_lea.vmem %s1, 160
    %v2083 = vld [vmem:[%s2082] sm:$0xf]
    %v2084 = vld [vmem:[%s2082 + $0x4] sm:$0xf]
    %v2085 = vld [vmem:[%s2082 + $0x8] sm:$0xf]
    %v2086 = vld [vmem:[%s2082 + $0xc] sm:$0xf]
    %v2091 = vunpack.c.l.b16 %v2083
    %v2092 = vunpack.c.l.b16 %v2084
    %v2093 = vunpack.c.l.b16 %v2085
    %v2094 = vunpack.c.l.b16 %v2086
    %v2095 = vpack.c.b16 %v2092, %v2091
    %v2096 = vpack.c.b16 %v2094, %v2093
    %v2098 = vsel %vm403, %v2095, 0
    %v2101 = vsel %vm403, %v2096, 0
    %2103 = vmatprep.subr.bf16.mxu0 0
    %2104 = vmatpush1.bf16.msra.mxu0 %v2008
    %2105 = vmatprep.subr.bf16.mxu0 0
    %2106 = vmatpush1.bf16.msra.mxu0 %v2009
    %2107 = vmatprep.subr.bf16.mxu0 0
    %2108 = vmatpush1.bf16.msra.mxu0 0
    %2109 = vmatprep.subr.bf16.mxu0 0
    %2110 = vmatpush1.bf16.msra.mxu0 0
    %2111 = vmatprep.subr.bf16.mxu0 0
    %2112 = vmatpush1.bf16.msra.mxu0 0
    %2113 = vmatprep.subr.bf16.mxu0 0
    %2114 = vmatpush1.bf16.msra.mxu0 0
    %2115 = vmatprep.subr.bf16.mxu0 0
    %2116 = vmatpush1.bf16.msra.mxu0 0
    %2117 = vmatprep.subr.bf16.mxu0 0
    %2118 = vmatpush1.bf16.msra.mxu0 0
    %2119 = vmatprep.subr.bf16.mxu0 0
    %2120 = vmatpush1.bf16.msra.mxu0 0
    %2121 = vmatprep.subr.bf16.mxu0 0
    %2122 = vmatpush1.bf16.msra.mxu0 0
    %2123 = vmatprep.subr.bf16.mxu0 0
    %2124 = vmatpush1.bf16.msra.mxu0 0
    %2125 = vmatprep.subr.bf16.mxu0 0
    %2126 = vmatpush1.bf16.msra.mxu0 0
    %2127 = vmatprep.subr.bf16.mxu0 0
    %2128 = vmatpush1.bf16.msra.mxu0 0
    %2129 = vmatprep.subr.bf16.mxu0 0
    %2130 = vmatpush1.bf16.msra.mxu0 0
    %2131 = vmatprep.subr.bf16.mxu0 0
    %2132 = vmatpush1.bf16.msra.mxu0 0
    %2133 = vmatprep.subr.bf16.mxu0 0
    %2134 = vmatpush1.bf16.msra.mxu0 0
    %2135 = vmatprep.mubr.bf16.mxu0 0
    %2136 = vmatmul.mubr.bf16.gmra.mrb[0].mxu0 %v2098
    %v2137 = vpop.f32.mrb[0].mxu0
    %v2138 = vadd.f32 0.0, %v2137
    %v2139 = vpop.f32.mrb[0].mxu0
    %v2140 = vpop.f32.mrb[0].mxu0
    %v2141 = vadd.f32 0.0, %v2140
    %v2142 = vpop.f32.mrb[0].mxu0
    %2143 = vmatprep.mubr.bf16.mxu0 0
    %2144 = vmatmul.mubr.bf16.gmra.mrb[0].mxu0 %v2101
    %v2145 = vpop.f32.mrb[0].mxu0
    %v2146 = vadd.f32 0.0, %v2145
    %v2147 = vpop.f32.mrb[0].mxu0
    %v2148 = vpop.f32.mrb[0].mxu0
    %v2149 = vadd.f32 0.0, %v2148
    %v2150 = vpop.f32.mrb[0].mxu0
    %2151 = vdwg.mxu0
    %v2152 = vpack.c.bf16 %v2141, %v2138
    %v2153 = vpack.c.bf16 %v2149, %v2146
    %s2154 = sshll.u32 %s534, 4
    %2155 = dma.done %s161, %s2154
    %v2156 = vld [vmem:[%s160] sm:$0xff]
    %v2157 = vld [vmem:[%s160 + $0x8] sm:$0xff]
    %v2158 = vld [vmem:[%s160 + $0x10] sm:$0xff]
    %v2159 = vld [vmem:[%s160 + $0x18] sm:$0xff]
    %v2160 = vld [vmem:[%s160 + $0x20] sm:$0xff]
    %v2161 = vld [vmem:[%s160 + $0x28] sm:$0xff]
    %v2162 = vld [vmem:[%s160 + $0x30] sm:$0xff]
    %v2163 = vld [vmem:[%s160 + $0x38] sm:$0xff]
    %v2164 = vld [vmem:[%s160 + $0x40] sm:$0xff]
    %v2165 = vld [vmem:[%s160 + $0x48] sm:$0xff]
    %v2166 = vld [vmem:[%s160 + $0x50] sm:$0xff]
    %v2167 = vld [vmem:[%s160 + $0x58] sm:$0xff]
    %v2168 = vld [vmem:[%s160 + $0x60] sm:$0xff]
    %v2169 = vld [vmem:[%s160 + $0x68] sm:$0xff]
    %v2170 = vld [vmem:[%s160 + $0x70] sm:$0xff]
    %v2171 = vld [vmem:[%s160 + $0x78] sm:$0xff]
    %v2172 = vld [vmem:[%s160 + $0x80] sm:$0xff]
    %v2173 = vld [vmem:[%s160 + $0x88] sm:$0xff]
    %v2174 = vld [vmem:[%s160 + $0x90] sm:$0xff]
    %v2175 = vld [vmem:[%s160 + $0x98] sm:$0xff]
    %v2176 = vld [vmem:[%s160 + $0xa0] sm:$0xff]
    %v2177 = vld [vmem:[%s160 + $0xa8] sm:$0xff]
    %v2178 = vld [vmem:[%s160 + $0xb0] sm:$0xff]
    %v2179 = vld [vmem:[%s160 + $0xb8] sm:$0xff]
    %2180 = vmatprep.subr.bf16.mxu0 0
    %2181 = vmatpush1.bf16.msra.mxu0 %v2156
    %2182 = vmatprep.subr.bf16.mxu0 0
    %2183 = vmatpush1.bf16.msra.mxu0 %v2157
    %2184 = vmatprep.subr.bf16.mxu0 0
    %2185 = vmatpush1.bf16.msra.mxu0 %v2158
    %2186 = vmatprep.subr.bf16.mxu0 0
    %2187 = vmatpush1.bf16.msra.mxu0 %v2159
    %2188 = vmatprep.subr.bf16.mxu0 0
    %2189 = vmatpush1.bf16.msra.mxu0 %v2160
    %2190 = vmatprep.subr.bf16.mxu0 0
    %2191 = vmatpush1.bf16.msra.mxu0 %v2161
    %2192 = vmatprep.subr.bf16.mxu0 0
    %2193 = vmatpush1.bf16.msra.mxu0 %v2162
    %2194 = vmatprep.subr.bf16.mxu0 0
    %2195 = vmatpush1.bf16.msra.mxu0 %v2163
    %2196 = vmatprep.subr.bf16.mxu0 0
    %2197 = vmatpush1.bf16.msra.mxu0 %v2164
    %2198 = vmatprep.subr.bf16.mxu0 0
    %2199 = vmatpush1.bf16.msra.mxu0 %v2165
    %2200 = vmatprep.subr.bf16.mxu0 0
    %2201 = vmatpush1.bf16.msra.mxu0 %v2166
    %2202 = vmatprep.subr.bf16.mxu0 0
    %2203 = vmatpush1.bf16.msra.mxu0 %v2167
    %2204 = vmatprep.subr.bf16.mxu0 0
    %2205 = vmatpush1.bf16.msra.mxu0 %v2168
    %2206 = vmatprep.subr.bf16.mxu0 0
    %2207 = vmatpush1.bf16.msra.mxu0 %v2169
    %2208 = vmatprep.subr.bf16.mxu0 0
    %2209 = vmatpush1.bf16.msra.mxu0 %v2170
    %2210 = vmatprep.subr.bf16.mxu0 0
    %2211 = vmatpush1.bf16.msra.mxu0 %v2171
    %2212 = vmatprep.mubr.bf16.mxu0 %v2008
    %2213 = vmatmul.mubr.bf16.gmra.mrb[0].mxu0 %v2080
    %v2214 = vpop.f32.mrb[0].mxu0
    %v2215 = vadd.f32 0.0, %v2214
    %v2216 = vpop.f32.mrb[0].mxu0
    %v2217 = vpop.f32.mrb[0].mxu0
    %v2218 = vadd.f32 0.0, %v2217
    %v2219 = vpop.f32.mrb[0].mxu0
    %2220 = vmatprep.mubr.bf16.mxu0 %v2009
    %2221 = vmatmul.mubr.bf16.gmra.mrb[0].mxu0 %v2081
    %v2222 = vpop.f32.mrb[0].mxu0
    %v2223 = vadd.f32 0.0, %v2222
    %v2224 = vpop.f32.mrb[0].mxu0
    %v2225 = vpop.f32.mrb[0].mxu0
    %v2226 = vadd.f32 0.0, %v2225
    %v2227 = vpop.f32.mrb[0].mxu0
    %2228 = vdwg.mxu0
    %2229 = vmatprep.subr.bf16.mxu0 0
    %2230 = vmatpush1.bf16.msra.mxu0 %v2172
    %2231 = vmatprep.subr.bf16.mxu0 0
    %2232 = vmatpush1.bf16.msra.mxu0 %v2173
    %2233 = vmatprep.subr.bf16.mxu0 0
    %2234 = vmatpush1.bf16.msra.mxu0 %v2174
    %2235 = vmatprep.subr.bf16.mxu0 0
    %2236 = vmatpush1.bf16.msra.mxu0 %v2175
    %2237 = vmatprep.subr.bf16.mxu0 0
    %2238 = vmatpush1.bf16.msra.mxu0 %v2176
    %2239 = vmatprep.subr.bf16.mxu0 0
    %2240 = vmatpush1.bf16.msra.mxu0 %v2177
    %2241 = vmatprep.subr.bf16.mxu0 0
    %2242 = vmatpush1.bf16.msra.mxu0 %v2178
    %2243 = vmatprep.subr.bf16.mxu0 0
    %2244 = vmatpush1.bf16.msra.mxu0 %v2179
    %2245 = vmatprep.subr.bf16.mxu0 0
    %2246 = vmatpush1.bf16.msra.mxu0 0
    %2247 = vmatprep.subr.bf16.mxu0 0
    %2248 = vmatpush1.bf16.msra.mxu0 0
    %2249 = vmatprep.subr.bf16.mxu0 0
    %2250 = vmatpush1.bf16.msra.mxu0 0
    %2251 = vmatprep.subr.bf16.mxu0 0
    %2252 = vmatpush1.bf16.msra.mxu0 0
    %2253 = vmatprep.subr.bf16.mxu0 0
    %2254 = vmatpush1.bf16.msra.mxu0 0
    %2255 = vmatprep.subr.bf16.mxu0 0
    %2256 = vmatpush1.bf16.msra.mxu0 0
    %2257 = vmatprep.subr.bf16.mxu0 0
    %2258 = vmatpush1.bf16.msra.mxu0 0
    %2259 = vmatprep.subr.bf16.mxu0 0
    %2260 = vmatpush1.bf16.msra.mxu0 0
    %2261 = vmatprep.mubr.bf16.mxu0 0
    %2262 = vmatmul.mubr.bf16.gmra.mrb[0].mxu0 %v2152
    %v2263 = vpop.f32.mrb[0].mxu0
    %v2264 = vadd.f32 %v2215, %v2263
    %v2265 = vpop.f32.mrb[0].mxu0
    %v2266 = vpop.f32.mrb[0].mxu0
    %v2267 = vadd.f32 %v2218, %v2266
    %v2268 = vpop.f32.mrb[0].mxu0
    %2269 = vmatprep.mubr.bf16.mxu0 0
    %2270 = vmatmul.mubr.bf16.gmra.mrb[0].mxu0 %v2153
    %v2271 = vpop.f32.mrb[0].mxu0
    %v2272 = vadd.f32 %v2223, %v2271
    %v2273 = vpop.f32.mrb[0].mxu0
    %v2274 = vpop.f32.mrb[0].mxu0
    %v2275 = vadd.f32 %v2226, %v2274
    %v2276 = vpop.f32.mrb[0].mxu0
    %2277 = vdwg.mxu0
    %v2278 = vadd.f32 %v2264, %v2267
    %v2279 = vadd.f32 %v2278, %v2272
    %v2280 = vadd.f32 %v2279, %v2275
    %v2281 = vrot.slane %v2280, 4
    %v2282 = vadd.f32 %v2280, %v2281
    %v2283 = vrot.slane %v2282, 2
    %v2284 = vadd.f32 %v2282, %v2283
    %v2285 = vrot.slane %v2284, 1
    %v2286 = vadd.f32 %v2284, %v2285
    %v2287 = vmul.f32 %v2264, %v2264
    %v2288 = vmul.f32 %v2267, %v2267
    %v2289 = vmul.f32 %v2272, %v2272
    %v2290 = vmul.f32 %v2275, %v2275
    %v2291 = vadd.f32 %v2287, %v2288
    %v2292 = vadd.f32 %v2291, %v2289
    %v2293 = vadd.f32 %v2292, %v2290
    %v2294 = vrot.slane %v2293, 4
    %v2295 = vadd.f32 %v2293, %v2294
    %v2296 = vrot.slane %v2295, 2
    %v2297 = vadd.f32 %v2295, %v2296
    %v2298 = vrot.slane %v2297, 1
    %v2299 = vadd.f32 %v2297, %v2298
    %v2300 = vmul.f32 %v2286, 0.0625
    %v2301 = vmul.f32 %v2299, 0.0625
    %v2302 = vmul.f32 %v2300, %v2300
    %v2303 = vsub.f32 %v2301, %v2302
    %v2304 = vmax.f32 %v2303, 0.0
    %s2305 = scalar_lea.vmem [#allocation7], 5
    %v2306 = vld [vmem:[%s2305] sm:$0x1]
    %v2307 = vadd.f32 %v2304, 1e-05
    %v2308 = vrsqrt.pop %v2307
    %v2309 = vmul.f32 %v2306, %v2308
    %s2310 = scalar_lea.vmem [#allocation9], 5
    %v2311 = vld [vmem:[%s2310] sm:$0x1]
    %v2312 = vmul.f32 %v2300, %v2309
    %v2313 = vsub.f32 %v2311, %v2312
    %v2315 = vlaneseq
    %v2316 = vshrl.u32 %v2315, 7
    %v2317 = vsub.s32 0, %v2316
    %v2318 = vrot.slane %v2309, %v2317
    %v2320 = vmul.f32 %v2264, %v2318
    %v2321 = vmul.f32 %v2267, %v2318
    %v2322 = vmul.f32 %v2272, %v2318
    %v2323 = vmul.f32 %v2275, %v2318
    %v2325 = vlaneseq
    %v2326 = vshrl.u32 %v2325, 7
    %v2327 = vsub.s32 0, %v2326
    %v2328 = vrot.slane %v2313, %v2327
    %v2330 = vadd.f32 %v2320, %v2328
    %v2331 = vadd.f32 %v2321, %v2328
    %v2332 = vadd.f32 %v2322, %v2328
    %v2333 = vadd.f32 %v2323, %v2328
    %v2334 = vadd.f32 %v2330, %v1670
    %v2335 = vadd.f32 %v2331, %v1671
    %v2336 = vadd.f32 %v2332, %v1672
    %v2337 = vadd.f32 %v2333, %v1673
    %v2338 = vmax.f32 %v2334, 0.0
    %v2339 = vmax.f32 %v2335, 0.0
    %v2340 = vmax.f32 %v2336, 0.0
    %v2341 = vmax.f32 %v2337, 0.0
    %v2342 = vsel %vm1144, %v2338, 0.0
    %v2343 = vsel %vm1145, %v2339, 0.0
    %v2344 = vsel %vm1146, %v2340, 0.0
    %v2345 = vsel %vm1147, %v2341, 0.0
    %v2346 = vpack.c.bf16 %v2343, %v2342
    %v2347 = vpack.c.bf16 %v2345, %v2344
    %s2348 = scalar_lea.vmem %s1, 176
    %v2349 = vld [vmem:[%s2348] sm:$0xf]
    %v2350 = vld [vmem:[%s2348 + $0x4] sm:$0xf]
    %v2351 = vld [vmem:[%s2348 + $0x8] sm:$0xf]
    %v2352 = vld [vmem:[%s2348 + $0xc] sm:$0xf]
    %v2357 = vunpack.c.l.b16 %v2349
    %v2358 = vunpack.c.l.b16 %v2350
    %v2359 = vunpack.c.l.b16 %v2351
    %v2360 = vunpack.c.l.b16 %v2352
    %v2361 = vpack.c.b16 %v2358, %v2357
    %v2362 = vpack.c.b16 %v2360, %v2359
    %v2364 = vsel %vm403, %v2361, 0
    %v2367 = vsel %vm403, %v2362, 0
    %2369 = vmatprep.subr.bf16.mxu0 0
    %2370 = vmatpush1.bf16.msra.mxu0 %v2346
    %2371 = vmatprep.subr.bf16.mxu0 0
    %2372 = vmatpush1.bf16.msra.mxu0 %v2347
    %2373 = vmatprep.subr.bf16.mxu0 0
    %2374 = vmatpush1.bf16.msra.mxu0 0
    %2375 = vmatprep.subr.bf16.mxu0 0
    %2376 = vmatpush1.bf16.msra.mxu0 0
    %2377 = vmatprep.subr.bf16.mxu0 0
    %2378 = vmatpush1.bf16.msra.mxu0 0
    %2379 = vmatprep.subr.bf16.mxu0 0
    %2380 = vmatpush1.bf16.msra.mxu0 0
    %2381 = vmatprep.subr.bf16.mxu0 0
    %2382 = vmatpush1.bf16.msra.mxu0 0
    %2383 = vmatprep.subr.bf16.mxu0 0
    %2384 = vmatpush1.bf16.msra.mxu0 0
    %2385 = vmatprep.subr.bf16.mxu0 0
    %2386 = vmatpush1.bf16.msra.mxu0 0
    %2387 = vmatprep.subr.bf16.mxu0 0
    %2388 = vmatpush1.bf16.msra.mxu0 0
    %2389 = vmatprep.subr.bf16.mxu0 0
    %2390 = vmatpush1.bf16.msra.mxu0 0
    %2391 = vmatprep.subr.bf16.mxu0 0
    %2392 = vmatpush1.bf16.msra.mxu0 0
    %2393 = vmatprep.subr.bf16.mxu0 0
    %2394 = vmatpush1.bf16.msra.mxu0 0
    %2395 = vmatprep.subr.bf16.mxu0 0
    %2396 = vmatpush1.bf16.msra.mxu0 0
    %2397 = vmatprep.subr.bf16.mxu0 0
    %2398 = vmatpush1.bf16.msra.mxu0 0
    %2399 = vmatprep.subr.bf16.mxu0 0
    %2400 = vmatpush1.bf16.msra.mxu0 0
    %2401 = vmatprep.mubr.bf16.mxu0 0
    %2402 = vmatmul.mubr.bf16.gmra.mrb[0].mxu0 %v2364
    %v2403 = vpop.f32.mrb[0].mxu0
    %v2404 = vadd.f32 0.0, %v2403
    %v2405 = vpop.f32.mrb[0].mxu0
    %v2406 = vpop.f32.mrb[0].mxu0
    %v2407 = vadd.f32 0.0, %v2406
    %v2408 = vpop.f32.mrb[0].mxu0
    %2409 = vmatprep.mubr.bf16.mxu0 0
    %2410 = vmatmul.mubr.bf16.gmra.mrb[0].mxu0 %v2367
    %v2411 = vpop.f32.mrb[0].mxu0
    %v2412 = vadd.f32 0.0, %v2411
    %v2413 = vpop.f32.mrb[0].mxu0
    %v2414 = vpop.f32.mrb[0].mxu0
    %v2415 = vadd.f32 0.0, %v2414
    %v2416 = vpop.f32.mrb[0].mxu0
    %2417 = vdwg.mxu0
    %v2418 = vpack.c.bf16 %v2407, %v2404
    %v2419 = vpack.c.bf16 %v2415, %v2412
    %s2420 = scalar_lea.vmem %s1, 192
    %v2421 = vld [vmem:[%s2420] sm:$0xf]
    %v2422 = vld [vmem:[%s2420 + $0x4] sm:$0xf]
    %v2423 = vld [vmem:[%s2420 + $0x8] sm:$0xf]
    %v2424 = vld [vmem:[%s2420 + $0xc] sm:$0xf]
    %v2429 = vunpack.c.l.b16 %v2421
    %v2430 = vunpack.c.l.b16 %v2422
    %v2431 = vunpack.c.l.b16 %v2423
    %v2432 = vunpack.c.l.b16 %v2424
    %v2433 = vpack.c.b16 %v2430, %v2429
    %v2434 = vpack.c.b16 %v2432, %v2431
    %v2436 = vsel %vm403, %v2433, 0
    %v2439 = vsel %vm403, %v2434, 0
    %2441 = vmatprep.subr.bf16.mxu0 0
    %2442 = vmatpush1.bf16.msra.mxu0 %v2346
    %2443 = vmatprep.subr.bf16.mxu0 0
    %2444 = vmatpush1.bf16.msra.mxu0 %v2347
    %2445 = vmatprep.subr.bf16.mxu0 0
    %2446 = vmatpush1.bf16.msra.mxu0 0
    %2447 = vmatprep.subr.bf16.mxu0 0
    %2448 = vmatpush1.bf16.msra.mxu0 0
    %2449 = vmatprep.subr.bf16.mxu0 0
    %2450 = vmatpush1.bf16.msra.mxu0 0
    %2451 = vmatprep.subr.bf16.mxu0 0
    %2452 = vmatpush1.bf16.msra.mxu0 0
    %2453 = vmatprep.subr.bf16.mxu0 0
    %2454 = vmatpush1.bf16.msra.mxu0 0
    %2455 = vmatprep.subr.bf16.mxu0 0
    %2456 = vmatpush1.bf16.msra.mxu0 0
    %2457 = vmatprep.subr.bf16.mxu0 0
    %2458 = vmatpush1.bf16.msra.mxu0 0
    %2459 = vmatprep.subr.bf16.mxu0 0
    %2460 = vmatpush1.bf16.msra.mxu0 0
    %2461 = vmatprep.subr.bf16.mxu0 0
    %2462 = vmatpush1.bf16.msra.mxu0 0
    %2463 = vmatprep.subr.bf16.mxu0 0
    %2464 = vmatpush1.bf16.msra.mxu0 0
    %2465 = vmatprep.subr.bf16.mxu0 0
    %2466 = vmatpush1.bf16.msra.mxu0 0
    %2467 = vmatprep.subr.bf16.mxu0 0
    %2468 = vmatpush1.bf16.msra.mxu0 0
    %2469 = vmatprep.subr.bf16.mxu0 0
    %2470 = vmatpush1.bf16.msra.mxu0 0
    %2471 = vmatprep.subr.bf16.mxu0 0
    %2472 = vmatpush1.bf16.msra.mxu0 0
    %2473 = vmatprep.mubr.bf16.mxu0 0
    %2474 = vmatmul.mubr.bf16.gmra.mrb[0].mxu0 %v2436
    %v2475 = vpop.f32.mrb[0].mxu0
    %v2476 = vadd.f32 0.0, %v2475
    %v2477 = vpop.f32.mrb[0].mxu0
    %v2478 = vpop.f32.mrb[0].mxu0
    %v2479 = vadd.f32 0.0, %v2478
    %v2480 = vpop.f32.mrb[0].mxu0
    %2481 = vmatprep.mubr.bf16.mxu0 0
    %2482 = vmatmul.mubr.bf16.gmra.mrb[0].mxu0 %v2439
    %v2483 = vpop.f32.mrb[0].mxu0
    %v2484 = vadd.f32 0.0, %v2483
    %v2485 = vpop.f32.mrb[0].mxu0
    %v2486 = vpop.f32.mrb[0].mxu0
    %v2487 = vadd.f32 0.0, %v2486
    %v2488 = vpop.f32.mrb[0].mxu0
    %2489 = vdwg.mxu0
    %v2490 = vpack.c.bf16 %v2479, %v2476
    %v2491 = vpack.c.bf16 %v2487, %v2484
    %s2492 = scalar_lea.vmem %s1, 208
    %v2493 = vld [vmem:[%s2492] sm:$0xf]
    %v2494 = vld [vmem:[%s2492 + $0x4] sm:$0xf]
    %v2495 = vld [vmem:[%s2492 + $0x8] sm:$0xf]
    %v2496 = vld [vmem:[%s2492 + $0xc] sm:$0xf]
    %v2501 = vunpack.c.l.b16 %v2493
    %v2502 = vunpack.c.l.b16 %v2494
    %v2503 = vunpack.c.l.b16 %v2495
    %v2504 = vunpack.c.l.b16 %v2496
    %v2505 = vpack.c.b16 %v2502, %v2501
    %v2506 = vpack.c.b16 %v2504, %v2503
    %v2508 = vsel %vm403, %v2505, 0
    %v2511 = vsel %vm403, %v2506, 0
    %2513 = vmatprep.subr.bf16.mxu0 0
    %2514 = vmatpush1.bf16.msra.mxu0 %v2346
    %2515 = vmatprep.subr.bf16.mxu0 0
    %2516 = vmatpush1.bf16.msra.mxu0 %v2347
    %2517 = vmatprep.subr.bf16.mxu0 0
    %2518 = vmatpush1.bf16.msra.mxu0 0
    %2519 = vmatprep.subr.bf16.mxu0 0
    %2520 = vmatpush1.bf16.msra.mxu0 0
    %2521 = vmatprep.subr.bf16.mxu0 0
    %2522 = vmatpush1.bf16.msra.mxu0 0
    %2523 = vmatprep.subr.bf16.mxu0 0
    %2524 = vmatpush1.bf16.msra.mxu0 0
    %2525 = vmatprep.subr.bf16.mxu0 0
    %2526 = vmatpush1.bf16.msra.mxu0 0
    %2527 = vmatprep.subr.bf16.mxu0 0
    %2528 = vmatpush1.bf16.msra.mxu0 0
    %2529 = vmatprep.subr.bf16.mxu0 0
    %2530 = vmatpush1.bf16.msra.mxu0 0
    %2531 = vmatprep.subr.bf16.mxu0 0
    %2532 = vmatpush1.bf16.msra.mxu0 0
    %2533 = vmatprep.subr.bf16.mxu0 0
    %2534 = vmatpush1.bf16.msra.mxu0 0
    %2535 = vmatprep.subr.bf16.mxu0 0
    %2536 = vmatpush1.bf16.msra.mxu0 0
    %2537 = vmatprep.subr.bf16.mxu0 0
    %2538 = vmatpush1.bf16.msra.mxu0 0
    %2539 = vmatprep.subr.bf16.mxu0 0
    %2540 = vmatpush1.bf16.msra.mxu0 0
    %2541 = vmatprep.subr.bf16.mxu0 0
    %2542 = vmatpush1.bf16.msra.mxu0 0
    %2543 = vmatprep.subr.bf16.mxu0 0
    %2544 = vmatpush1.bf16.msra.mxu0 0
    %2545 = vmatprep.mubr.bf16.mxu0 0
    %2546 = vmatmul.mubr.bf16.gmra.mrb[0].mxu0 %v2508
    %v2547 = vpop.f32.mrb[0].mxu0
    %v2548 = vadd.f32 0.0, %v2547
    %v2549 = vpop.f32.mrb[0].mxu0
    %v2550 = vpop.f32.mrb[0].mxu0
    %v2551 = vadd.f32 0.0, %v2550
    %v2552 = vpop.f32.mrb[0].mxu0
    %2553 = vmatprep.mubr.bf16.mxu0 0
    %2554 = vmatmul.mubr.bf16.gmra.mrb[0].mxu0 %v2511
    %v2555 = vpop.f32.mrb[0].mxu0
    %v2556 = vadd.f32 0.0, %v2555
    %v2557 = vpop.f32.mrb[0].mxu0
    %v2558 = vpop.f32.mrb[0].mxu0
    %v2559 = vadd.f32 0.0, %v2558
    %v2560 = vpop.f32.mrb[0].mxu0
    %2561 = vdwg.mxu0
    %v2562 = vpack.c.bf16 %v2551, %v2548
    %v2563 = vpack.c.bf16 %v2559, %v2556
    %s2564 = sshll.u32 %s534, 4
    %2565 = dma.done %s175, %s2564
    %v2566 = vld [vmem:[%s174] sm:$0xff]
    %v2567 = vld [vmem:[%s174 + $0x8] sm:$0xff]
    %v2568 = vld [vmem:[%s174 + $0x10] sm:$0xff]
    %v2569 = vld [vmem:[%s174 + $0x18] sm:$0xff]
    %v2570 = vld [vmem:[%s174 + $0x20] sm:$0xff]
    %v2571 = vld [vmem:[%s174 + $0x28] sm:$0xff]
    %v2572 = vld [vmem:[%s174 + $0x30] sm:$0xff]
    %v2573 = vld [vmem:[%s174 + $0x38] sm:$0xff]
    %v2574 = vld [vmem:[%s174 + $0x40] sm:$0xff]
    %v2575 = vld [vmem:[%s174 + $0x48] sm:$0xff]
    %v2576 = vld [vmem:[%s174 + $0x50] sm:$0xff]
    %v2577 = vld [vmem:[%s174 + $0x58] sm:$0xff]
    %v2578 = vld [vmem:[%s174 + $0x60] sm:$0xff]
    %v2579 = vld [vmem:[%s174 + $0x68] sm:$0xff]
    %v2580 = vld [vmem:[%s174 + $0x70] sm:$0xff]
    %v2581 = vld [vmem:[%s174 + $0x78] sm:$0xff]
    %v2582 = vld [vmem:[%s174 + $0x80] sm:$0xff]
    %v2583 = vld [vmem:[%s174 + $0x88] sm:$0xff]
    %v2584 = vld [vmem:[%s174 + $0x90] sm:$0xff]
    %v2585 = vld [vmem:[%s174 + $0x98] sm:$0xff]
    %v2586 = vld [vmem:[%s174 + $0xa0] sm:$0xff]
    %v2587 = vld [vmem:[%s174 + $0xa8] sm:$0xff]
    %v2588 = vld [vmem:[%s174 + $0xb0] sm:$0xff]
    %v2589 = vld [vmem:[%s174 + $0xb8] sm:$0xff]
    %2590 = vmatprep.subr.bf16.mxu0 0
    %2591 = vmatpush1.bf16.msra.mxu0 %v2566
    %2592 = vmatprep.subr.bf16.mxu0 0
    %2593 = vmatpush1.bf16.msra.mxu0 %v2567
    %2594 = vmatprep.subr.bf16.mxu0 0
    %2595 = vmatpush1.bf16.msra.mxu0 %v2568
    %2596 = vmatprep.subr.bf16.mxu0 0
    %2597 = vmatpush1.bf16.msra.mxu0 %v2569
    %2598 = vmatprep.subr.bf16.mxu0 0
    %2599 = vmatpush1.bf16.msra.mxu0 %v2570
    %2600 = vmatprep.subr.bf16.mxu0 0
    %2601 = vmatpush1.bf16.msra.mxu0 %v2571
    %2602 = vmatprep.subr.bf16.mxu0 0
    %2603 = vmatpush1.bf16.msra.mxu0 %v2572
    %2604 = vmatprep.subr.bf16.mxu0 0
    %2605 = vmatpush1.bf16.msra.mxu0 %v2573
    %2606 = vmatprep.subr.bf16.mxu0 0
    %2607 = vmatpush1.bf16.msra.mxu0 %v2574
    %2608 = vmatprep.subr.bf16.mxu0 0
    %2609 = vmatpush1.bf16.msra.mxu0 %v2575
    %2610 = vmatprep.subr.bf16.mxu0 0
    %2611 = vmatpush1.bf16.msra.mxu0 %v2576
    %2612 = vmatprep.subr.bf16.mxu0 0
    %2613 = vmatpush1.bf16.msra.mxu0 %v2577
    %2614 = vmatprep.subr.bf16.mxu0 0
    %2615 = vmatpush1.bf16.msra.mxu0 %v2578
    %2616 = vmatprep.subr.bf16.mxu0 0
    %2617 = vmatpush1.bf16.msra.mxu0 %v2579
    %2618 = vmatprep.subr.bf16.mxu0 0
    %2619 = vmatpush1.bf16.msra.mxu0 %v2580
    %2620 = vmatprep.subr.bf16.mxu0 0
    %2621 = vmatpush1.bf16.msra.mxu0 %v2581
    %2622 = vmatprep.mubr.bf16.mxu0 %v2490
    %2623 = vmatmul.mubr.bf16.gmra.mrb[0].mxu0 %v2418
    %v2624 = vpop.f32.mrb[0].mxu0
    %v2625 = vadd.f32 0.0, %v2624
    %v2626 = vpop.f32.mrb[0].mxu0
    %v2627 = vpop.f32.mrb[0].mxu0
    %v2628 = vadd.f32 0.0, %v2627
    %v2629 = vpop.f32.mrb[0].mxu0
    %2630 = vmatprep.mubr.bf16.mxu0 %v2491
    %2631 = vmatmul.mubr.bf16.gmra.mrb[0].mxu0 %v2419
    %v2632 = vpop.f32.mrb[0].mxu0
    %v2633 = vadd.f32 0.0, %v2632
    %v2634 = vpop.f32.mrb[0].mxu0
    %v2635 = vpop.f32.mrb[0].mxu0
    %v2636 = vadd.f32 0.0, %v2635
    %v2637 = vpop.f32.mrb[0].mxu0
    %2638 = vdwg.mxu0
    %2639 = vmatprep.subr.bf16.mxu0 0
    %2640 = vmatpush1.bf16.msra.mxu0 %v2582
    %2641 = vmatprep.subr.bf16.mxu0 0
    %2642 = vmatpush1.bf16.msra.mxu0 %v2583
    %2643 = vmatprep.subr.bf16.mxu0 0
    %2644 = vmatpush1.bf16.msra.mxu0 %v2584
    %2645 = vmatprep.subr.bf16.mxu0 0
    %2646 = vmatpush1.bf16.msra.mxu0 %v2585
    %2647 = vmatprep.subr.bf16.mxu0 0
    %2648 = vmatpush1.bf16.msra.mxu0 %v2586
    %2649 = vmatprep.subr.bf16.mxu0 0
    %2650 = vmatpush1.bf16.msra.mxu0 %v2587
    %2651 = vmatprep.subr.bf16.mxu0 0
    %2652 = vmatpush1.bf16.msra.mxu0 %v2588
    %2653 = vmatprep.subr.bf16.mxu0 0
    %2654 = vmatpush1.bf16.msra.mxu0 %v2589
    %2655 = vmatprep.subr.bf16.mxu0 0
    %2656 = vmatpush1.bf16.msra.mxu0 0
    %2657 = vmatprep.subr.bf16.mxu0 0
    %2658 = vmatpush1.bf16.msra.mxu0 0
    %2659 = vmatprep.subr.bf16.mxu0 0
    %2660 = vmatpush1.bf16.msra.mxu0 0
    %2661 = vmatprep.subr.bf16.mxu0 0
    %2662 = vmatpush1.bf16.msra.mxu0 0
    %2663 = vmatprep.subr.bf16.mxu0 0
    %2664 = vmatpush1.bf16.msra.mxu0 0
    %2665 = vmatprep.subr.bf16.mxu0 0
    %2666 = vmatpush1.bf16.msra.mxu0 0
    %2667 = vmatprep.subr.bf16.mxu0 0
    %2668 = vmatpush1.bf16.msra.mxu0 0
    %2669 = vmatprep.subr.bf16.mxu0 0
    %2670 = vmatpush1.bf16.msra.mxu0 0
    %2671 = vmatprep.mubr.bf16.mxu0 0
    %2672 = vmatmul.mubr.bf16.gmra.mrb[0].mxu0 %v2562
    %v2673 = vpop.f32.mrb[0].mxu0
    %v2674 = vadd.f32 %v2625, %v2673
    %v2675 = vpop.f32.mrb[0].mxu0
    %v2676 = vpop.f32.mrb[0].mxu0
    %v2677 = vadd.f32 %v2628, %v2676
    %v2678 = vpop.f32.mrb[0].mxu0
    %2679 = vmatprep.mubr.bf16.mxu0 0
    %2680 = vmatmul.mubr.bf16.gmra.mrb[0].mxu0 %v2563
    %v2681 = vpop.f32.mrb[0].mxu0
    %v2682 = vadd.f32 %v2633, %v2681
    %v2683 = vpop.f32.mrb[0].mxu0
    %v2684 = vpop.f32.mrb[0].mxu0
    %v2685 = vadd.f32 %v2636, %v2684
    %v2686 = vpop.f32.mrb[0].mxu0
    %2687 = vdwg.mxu0
    %v2688 = vadd.f32 %v2674, %v2677
    %v2689 = vadd.f32 %v2688, %v2682
    %v2690 = vadd.f32 %v2689, %v2685
    %v2691 = vrot.slane %v2690, 4
    %v2692 = vadd.f32 %v2690, %v2691
    %v2693 = vrot.slane %v2692, 2
    %v2694 = vadd.f32 %v2692, %v2693
    %v2695 = vrot.slane %v2694, 1
    %v2696 = vadd.f32 %v2694, %v2695
    %v2697 = vmul.f32 %v2674, %v2674
    %v2698 = vmul.f32 %v2677, %v2677
    %v2699 = vmul.f32 %v2682, %v2682
    %v2700 = vmul.f32 %v2685, %v2685
    %v2701 = vadd.f32 %v2697, %v2698
    %v2702 = vadd.f32 %v2701, %v2699
    %v2703 = vadd.f32 %v2702, %v2700
    %v2704 = vrot.slane %v2703, 4
    %v2705 = vadd.f32 %v2703, %v2704
    %v2706 = vrot.slane %v2705, 2
    %v2707 = vadd.f32 %v2705, %v2706
    %v2708 = vrot.slane %v2707, 1
    %v2709 = vadd.f32 %v2707, %v2708
    %v2710 = vmul.f32 %v2696, 0.125
    %v2711 = vmul.f32 %v2709, 0.125
    %v2712 = vmul.f32 %v2710, %v2710
    %v2713 = vsub.f32 %v2711, %v2712
    %v2714 = vmax.f32 %v2713, 0.0
    %s2715 = scalar_lea.vmem [#allocation7], 6
    %v2716 = vld [vmem:[%s2715] sm:$0x1]
    %v2717 = vadd.f32 %v2714, 1e-05
    %v2718 = vrsqrt.pop %v2717
    %v2719 = vmul.f32 %v2716, %v2718
    %s2720 = scalar_lea.vmem [#allocation9], 6
    %v2721 = vld [vmem:[%s2720] sm:$0x1]
    %v2722 = vmul.f32 %v2710, %v2719
    %v2723 = vsub.f32 %v2721, %v2722
    %v2725 = vlaneseq
    %v2726 = vshrl.u32 %v2725, 7
    %v2727 = vsub.s32 0, %v2726
    %v2728 = vrot.slane %v2719, %v2727
    %v2730 = vmul.f32 %v2674, %v2728
    %v2731 = vmul.f32 %v2677, %v2728
    %v2732 = vmul.f32 %v2682, %v2728
    %v2733 = vmul.f32 %v2685, %v2728
    %v2735 = vlaneseq
    %v2736 = vshrl.u32 %v2735, 7
    %v2737 = vsub.s32 0, %v2736
    %v2738 = vrot.slane %v2723, %v2737
    %v2740 = vadd.f32 %v2730, %v2738
    %v2741 = vadd.f32 %v2731, %v2738
    %v2742 = vadd.f32 %v2732, %v2738
    %v2743 = vadd.f32 %v2733, %v2738
    %v2744 = vmax.f32 %v2740, 0.0
    %v2745 = vmax.f32 %v2741, 0.0
    %v2746 = vmax.f32 %v2742, 0.0
    %v2747 = vmax.f32 %v2743, 0.0
    %vm2748 = vcmp.lt.s32.totalorder %v1116, 4
    %vm2749 = vcmp.lt.s32.totalorder %v1117, 4
    %vm2750 = vcmp.lt.s32.totalorder %v1118, 4
    %vm2751 = vcmp.lt.s32.totalorder %v1119, 4
    %vm2752 = vmand %vm1120, %vm2748
    %vm2753 = vmand %vm1121, %vm2749
    %vm2754 = vmand %vm1122, %vm2750
    %vm2755 = vmand %vm1123, %vm2751
    %vm2756 = vcmp.lt.s32.totalorder %v1116, 20
    %vm2757 = vcmp.lt.s32.totalorder %v1117, 20
    %vm2758 = vcmp.lt.s32.totalorder %v1118, 20
    %vm2759 = vcmp.lt.s32.totalorder %v1119, 20
    %vm2760 = vmand %vm1132, %vm2756
    %vm2761 = vmand %vm1133, %vm2757
    %vm2762 = vmand %vm1134, %vm2758
    %vm2763 = vmand %vm1135, %vm2759
    %vm2764 = vmor %vm2752, %vm2760
    %vm2765 = vmor %vm2753, %vm2761
    %vm2766 = vmor %vm2754, %vm2762
    %vm2767 = vmor %vm2755, %vm2763
    %v2768 = vsel %vm2764, %v2744, 0.0
    %v2769 = vsel %vm2765, %v2745, 0.0
    %v2770 = vsel %vm2766, %v2746, 0.0
    %v2771 = vsel %vm2767, %v2747, 0.0
    %s2772 = sshll.u32 %s534, 4
    %2773 = dma.done %s189, %s2772
    %v2774 = vld [vmem:[%s188] sm:$0xff]
    %v2775 = vld [vmem:[%s188 + $0x8] sm:$0xff]
    %v2776 = vld [vmem:[%s188 + $0x10] sm:$0xff]
    %v2777 = vld [vmem:[%s188 + $0x18] sm:$0xff]
    %v2778 = vld [vmem:[%s188 + $0x20] sm:$0xff]
    %v2779 = vld [vmem:[%s188 + $0x28] sm:$0xff]
    %v2780 = vld [vmem:[%s188 + $0x30] sm:$0xff]
    %v2781 = vld [vmem:[%s188 + $0x38] sm:$0xff]
    %v2782 = vld [vmem:[%s188 + $0x40] sm:$0xff]
    %v2783 = vld [vmem:[%s188 + $0x48] sm:$0xff]
    %v2784 = vld [vmem:[%s188 + $0x50] sm:$0xff]
    %v2785 = vld [vmem:[%s188 + $0x58] sm:$0xff]
    %v2786 = vld [vmem:[%s188 + $0x60] sm:$0xff]
    %v2787 = vld [vmem:[%s188 + $0x68] sm:$0xff]
    %v2788 = vld [vmem:[%s188 + $0x70] sm:$0xff]
    %v2789 = vld [vmem:[%s188 + $0x78] sm:$0xff]
    %v2790 = vld [vmem:[%s188 + $0x80] sm:$0xff]
    %v2791 = vld [vmem:[%s188 + $0x88] sm:$0xff]
    %v2792 = vld [vmem:[%s188 + $0x90] sm:$0xff]
    %v2793 = vld [vmem:[%s188 + $0x98] sm:$0xff]
    %v2794 = vld [vmem:[%s188 + $0xa0] sm:$0xff]
    %v2795 = vld [vmem:[%s188 + $0xa8] sm:$0xff]
    %v2796 = vld [vmem:[%s188 + $0xb0] sm:$0xff]
    %v2797 = vld [vmem:[%s188 + $0xb8] sm:$0xff]
    %2798 = vmatprep.subr.bf16.mxu0 0
    %2799 = vmatpush1.bf16.msra.mxu0 %v2774
    %2800 = vmatprep.subr.bf16.mxu0 0
    %2801 = vmatpush1.bf16.msra.mxu0 %v2775
    %2802 = vmatprep.subr.bf16.mxu0 0
    %2803 = vmatpush1.bf16.msra.mxu0 %v2776
    %2804 = vmatprep.subr.bf16.mxu0 0
    %2805 = vmatpush1.bf16.msra.mxu0 %v2777
    %2806 = vmatprep.subr.bf16.mxu0 0
    %2807 = vmatpush1.bf16.msra.mxu0 %v2778
    %2808 = vmatprep.subr.bf16.mxu0 0
    %2809 = vmatpush1.bf16.msra.mxu0 %v2779
    %2810 = vmatprep.subr.bf16.mxu0 0
    %2811 = vmatpush1.bf16.msra.mxu0 %v2780
    %2812 = vmatprep.subr.bf16.mxu0 0
    %2813 = vmatpush1.bf16.msra.mxu0 %v2781
    %2814 = vmatprep.subr.bf16.mxu0 0
    %2815 = vmatpush1.bf16.msra.mxu0 %v2782
    %2816 = vmatprep.subr.bf16.mxu0 0
    %2817 = vmatpush1.bf16.msra.mxu0 %v2783
    %2818 = vmatprep.subr.bf16.mxu0 0
    %2819 = vmatpush1.bf16.msra.mxu0 %v2784
    %2820 = vmatprep.subr.bf16.mxu0 0
    %2821 = vmatpush1.bf16.msra.mxu0 %v2785
    %2822 = vmatprep.subr.bf16.mxu0 0
    %2823 = vmatpush1.bf16.msra.mxu0 %v2786
    %2824 = vmatprep.subr.bf16.mxu0 0
    %2825 = vmatpush1.bf16.msra.mxu0 %v2787
    %2826 = vmatprep.subr.bf16.mxu0 0
    %2827 = vmatpush1.bf16.msra.mxu0 %v2788
    %2828 = vmatprep.subr.bf16.mxu0 0
    %2829 = vmatpush1.bf16.msra.mxu0 %v2789
    %2830 = vmatprep.mubr.bf16.mxu0 %v2490
    %2831 = vmatmul.mubr.bf16.gmra.mrb[0].mxu0 %v2418
    %v2832 = vpop.f32.mrb[0].mxu0
    %v2833 = vadd.f32 0.0, %v2832
    %v2834 = vpop.f32.mrb[0].mxu0
    %v2835 = vpop.f32.mrb[0].mxu0
    %v2836 = vadd.f32 0.0, %v2835
    %v2837 = vpop.f32.mrb[0].mxu0
    %2838 = vmatprep.mubr.bf16.mxu0 %v2491
    %2839 = vmatmul.mubr.bf16.gmra.mrb[0].mxu0 %v2419
    %v2840 = vpop.f32.mrb[0].mxu0
    %v2841 = vadd.f32 0.0, %v2840
    %v2842 = vpop.f32.mrb[0].mxu0
    %v2843 = vpop.f32.mrb[0].mxu0
    %v2844 = vadd.f32 0.0, %v2843
    %v2845 = vpop.f32.mrb[0].mxu0
    %2846 = vdwg.mxu0
    %2847 = vmatprep.subr.bf16.mxu0 0
    %2848 = vmatpush1.bf16.msra.mxu0 %v2790
    %2849 = vmatprep.subr.bf16.mxu0 0
    %2850 = vmatpush1.bf16.msra.mxu0 %v2791
    %2851 = vmatprep.subr.bf16.mxu0 0
    %2852 = vmatpush1.bf16.msra.mxu0 %v2792
    %2853 = vmatprep.subr.bf16.mxu0 0
    %2854 = vmatpush1.bf16.msra.mxu0 %v2793
    %2855 = vmatprep.subr.bf16.mxu0 0
    %2856 = vmatpush1.bf16.msra.mxu0 %v2794
    %2857 = vmatprep.subr.bf16.mxu0 0
    %2858 = vmatpush1.bf16.msra.mxu0 %v2795
    %2859 = vmatprep.subr.bf16.mxu0 0
    %2860 = vmatpush1.bf16.msra.mxu0 %v2796
    %2861 = vmatprep.subr.bf16.mxu0 0
    %2862 = vmatpush1.bf16.msra.mxu0 %v2797
    %2863 = vmatprep.subr.bf16.mxu0 0
    %2864 = vmatpush1.bf16.msra.mxu0 0
    %2865 = vmatprep.subr.bf16.mxu0 0
    %2866 = vmatpush1.bf16.msra.mxu0 0
    %2867 = vmatprep.subr.bf16.mxu0 0
    %2868 = vmatpush1.bf16.msra.mxu0 0
    %2869 = vmatprep.subr.bf16.mxu0 0
    %2870 = vmatpush1.bf16.msra.mxu0 0
    %2871 = vmatprep.subr.bf16.mxu0 0
    %2872 = vmatpush1.bf16.msra.mxu0 0
    %2873 = vmatprep.subr.bf16.mxu0 0
    %2874 = vmatpush1.bf16.msra.mxu0 0
    %2875 = vmatprep.subr.bf16.mxu0 0
    %2876 = vmatpush1.bf16.msra.mxu0 0
    %2877 = vmatprep.subr.bf16.mxu0 0
    %2878 = vmatpush1.bf16.msra.mxu0 0
    %2879 = vmatprep.mubr.bf16.mxu0 0
    %2880 = vmatmul.mubr.bf16.gmra.mrb[0].mxu0 %v2562
    %v2881 = vpop.f32.mrb[0].mxu0
    %v2882 = vadd.f32 %v2833, %v2881
    %v2883 = vpop.f32.mrb[0].mxu0
    %v2884 = vpop.f32.mrb[0].mxu0
    %v2885 = vadd.f32 %v2836, %v2884
    %v2886 = vpop.f32.mrb[0].mxu0
    %2887 = vmatprep.mubr.bf16.mxu0 0
    %2888 = vmatmul.mubr.bf16.gmra.mrb[0].mxu0 %v2563
    %v2889 = vpop.f32.mrb[0].mxu0
    %v2890 = vadd.f32 %v2841, %v2889
    %v2891 = vpop.f32.mrb[0].mxu0
    %v2892 = vpop.f32.mrb[0].mxu0
    %v2893 = vadd.f32 %v2844, %v2892
    %v2894 = vpop.f32.mrb[0].mxu0
    %2895 = vdwg.mxu0
    %v2896 = vadd.f32 %v2882, %v2885
    %v2897 = vadd.f32 %v2896, %v2890
    %v2898 = vadd.f32 %v2897, %v2893
    %v2899 = vrot.slane %v2898, 4
    %v2900 = vadd.f32 %v2898, %v2899
    %v2901 = vrot.slane %v2900, 2
    %v2902 = vadd.f32 %v2900, %v2901
    %v2903 = vrot.slane %v2902, 1
    %v2904 = vadd.f32 %v2902, %v2903
    %v2905 = vmul.f32 %v2882, %v2882
    %v2906 = vmul.f32 %v2885, %v2885
    %v2907 = vmul.f32 %v2890, %v2890
    %v2908 = vmul.f32 %v2893, %v2893
    %v2909 = vadd.f32 %v2905, %v2906
    %v2910 = vadd.f32 %v2909, %v2907
    %v2911 = vadd.f32 %v2910, %v2908
    %v2912 = vrot.slane %v2911, 4
    %v2913 = vadd.f32 %v2911, %v2912
    %v2914 = vrot.slane %v2913, 2
    %v2915 = vadd.f32 %v2913, %v2914
    %v2916 = vrot.slane %v2915, 1
    %v2917 = vadd.f32 %v2915, %v2916
    %v2918 = vmul.f32 %v2904, 0.125
    %v2919 = vmul.f32 %v2917, 0.125
    %v2920 = vmul.f32 %v2918, %v2918
    %v2921 = vsub.f32 %v2919, %v2920
    %v2922 = vmax.f32 %v2921, 0.0
    %s2923 = scalar_lea.vmem [#allocation7], 7
    %v2924 = vld [vmem:[%s2923] sm:$0x1]
    %v2925 = vadd.f32 %v2922, 1e-05
    %v2926 = vrsqrt.pop %v2925
    %v2927 = vmul.f32 %v2924, %v2926
    %s2928 = scalar_lea.vmem [#allocation9], 7
    %v2929 = vld [vmem:[%s2928] sm:$0x1]
    %v2930 = vmul.f32 %v2918, %v2927
    %v2931 = vsub.f32 %v2929, %v2930
    %v2933 = vlaneseq
    %v2934 = vshrl.u32 %v2933, 7
    %v2935 = vsub.s32 0, %v2934
    %v2936 = vrot.slane %v2927, %v2935
    %v2938 = vmul.f32 %v2882, %v2936
    %v2939 = vmul.f32 %v2885, %v2936
    %v2940 = vmul.f32 %v2890, %v2936
    %v2941 = vmul.f32 %v2893, %v2936
    %v2943 = vlaneseq
    %v2944 = vshrl.u32 %v2943, 7
    %v2945 = vsub.s32 0, %v2944
    %v2946 = vrot.slane %v2931, %v2945
    %v2948 = vadd.f32 %v2938, %v2946
    %v2949 = vadd.f32 %v2939, %v2946
    %v2950 = vadd.f32 %v2940, %v2946
    %v2951 = vadd.f32 %v2941, %v2946
    %v2952 = vsel %vm2764, %v2948, 0.0
    %v2953 = vsel %vm2765, %v2949, 0.0
    %v2954 = vsel %vm2766, %v2950, 0.0
    %v2955 = vsel %vm2767, %v2951, 0.0
    %v2956 = vpack.c.bf16 %v2769, %v2768
    %v2957 = vpack.c.bf16 %v2771, %v2770
    %s2958 = scalar_lea.vmem %s1, 224
    %v2959 = vld [vmem:[%s2958] sm:$0xf]
    %v2960 = vld [vmem:[%s2958 + $0x4] sm:$0xf]
    %v2961 = vld [vmem:[%s2958 + $0x8] sm:$0xf]
    %v2962 = vld [vmem:[%s2958 + $0xc] sm:$0xf]
    %v2967 = vunpack.c.l.b16 %v2959
    %v2968 = vunpack.c.l.b16 %v2960
    %v2969 = vunpack.c.l.b16 %v2961
    %v2970 = vunpack.c.l.b16 %v2962
    %v2971 = vpack.c.b16 %v2968, %v2967
    %v2972 = vpack.c.b16 %v2970, %v2969
    %v2974 = vsel %vm403, %v2971, 0
    %v2977 = vsel %vm403, %v2972, 0
    %2979 = vmatprep.subr.bf16.mxu0 0
    %2980 = vmatpush1.bf16.msra.mxu0 %v2956
    %2981 = vmatprep.subr.bf16.mxu0 0
    %2982 = vmatpush1.bf16.msra.mxu0 %v2957
    %2983 = vmatprep.subr.bf16.mxu0 0
    %2984 = vmatpush1.bf16.msra.mxu0 0
    %2985 = vmatprep.subr.bf16.mxu0 0
    %2986 = vmatpush1.bf16.msra.mxu0 0
    %2987 = vmatprep.subr.bf16.mxu0 0
    %2988 = vmatpush1.bf16.msra.mxu0 0
    %2989 = vmatprep.subr.bf16.mxu0 0
    %2990 = vmatpush1.bf16.msra.mxu0 0
    %2991 = vmatprep.subr.bf16.mxu0 0
    %2992 = vmatpush1.bf16.msra.mxu0 0
    %2993 = vmatprep.subr.bf16.mxu0 0
    %2994 = vmatpush1.bf16.msra.mxu0 0
    %2995 = vmatprep.subr.bf16.mxu0 0
    %2996 = vmatpush1.bf16.msra.mxu0 0
    %2997 = vmatprep.subr.bf16.mxu0 0
    %2998 = vmatpush1.bf16.msra.mxu0 0
    %2999 = vmatprep.subr.bf16.mxu0 0
    %3000 = vmatpush1.bf16.msra.mxu0 0
    %3001 = vmatprep.subr.bf16.mxu0 0
    %3002 = vmatpush1.bf16.msra.mxu0 0
    %3003 = vmatprep.subr.bf16.mxu0 0
    %3004 = vmatpush1.bf16.msra.mxu0 0
    %3005 = vmatprep.subr.bf16.mxu0 0
    %3006 = vmatpush1.bf16.msra.mxu0 0
    %3007 = vmatprep.subr.bf16.mxu0 0
    %3008 = vmatpush1.bf16.msra.mxu0 0
    %3009 = vmatprep.subr.bf16.mxu0 0
    %3010 = vmatpush1.bf16.msra.mxu0 0
    %3011 = vmatprep.mubr.bf16.mxu0 0
    %3012 = vmatmul.mubr.bf16.gmra.mrb[0].mxu0 %v2974
    %v3013 = vpop.f32.mrb[0].mxu0
    %v3014 = vadd.f32 0.0, %v3013
    %v3015 = vpop.f32.mrb[0].mxu0
    %v3016 = vpop.f32.mrb[0].mxu0
    %v3017 = vadd.f32 0.0, %v3016
    %v3018 = vpop.f32.mrb[0].mxu0
    %3019 = vmatprep.mubr.bf16.mxu0 0
    %3020 = vmatmul.mubr.bf16.gmra.mrb[0].mxu0 %v2977
    %v3021 = vpop.f32.mrb[0].mxu0
    %v3022 = vadd.f32 0.0, %v3021
    %v3023 = vpop.f32.mrb[0].mxu0
    %v3024 = vpop.f32.mrb[0].mxu0
    %v3025 = vadd.f32 0.0, %v3024
    %v3026 = vpop.f32.mrb[0].mxu0
    %3027 = vdwg.mxu0
    %v3028 = vpack.c.bf16 %v3017, %v3014
    %v3029 = vpack.c.bf16 %v3025, %v3022
    %s3030 = scalar_lea.vmem %s1, 240
    %v3031 = vld [vmem:[%s3030] sm:$0xf]
    %v3032 = vld [vmem:[%s3030 + $0x4] sm:$0xf]
    %v3033 = vld [vmem:[%s3030 + $0x8] sm:$0xf]
    %v3034 = vld [vmem:[%s3030 + $0xc] sm:$0xf]
    %v3039 = vunpack.c.l.b16 %v3031
    %v3040 = vunpack.c.l.b16 %v3032
    %v3041 = vunpack.c.l.b16 %v3033
    %v3042 = vunpack.c.l.b16 %v3034
    %v3043 = vpack.c.b16 %v3040, %v3039
    %v3044 = vpack.c.b16 %v3042, %v3041
    %v3046 = vsel %vm403, %v3043, 0
    %v3049 = vsel %vm403, %v3044, 0
    %3051 = vmatprep.subr.bf16.mxu0 0
    %3052 = vmatpush1.bf16.msra.mxu0 %v2956
    %3053 = vmatprep.subr.bf16.mxu0 0
    %3054 = vmatpush1.bf16.msra.mxu0 %v2957
    %3055 = vmatprep.subr.bf16.mxu0 0
    %3056 = vmatpush1.bf16.msra.mxu0 0
    %3057 = vmatprep.subr.bf16.mxu0 0
    %3058 = vmatpush1.bf16.msra.mxu0 0
    %3059 = vmatprep.subr.bf16.mxu0 0
    %3060 = vmatpush1.bf16.msra.mxu0 0
    %3061 = vmatprep.subr.bf16.mxu0 0
    %3062 = vmatpush1.bf16.msra.mxu0 0
    %3063 = vmatprep.subr.bf16.mxu0 0
    %3064 = vmatpush1.bf16.msra.mxu0 0
    %3065 = vmatprep.subr.bf16.mxu0 0
    %3066 = vmatpush1.bf16.msra.mxu0 0
    %3067 = vmatprep.subr.bf16.mxu0 0
    %3068 = vmatpush1.bf16.msra.mxu0 0
    %3069 = vmatprep.subr.bf16.mxu0 0
    %3070 = vmatpush1.bf16.msra.mxu0 0
    %3071 = vmatprep.subr.bf16.mxu0 0
    %3072 = vmatpush1.bf16.msra.mxu0 0
    %3073 = vmatprep.subr.bf16.mxu0 0
    %3074 = vmatpush1.bf16.msra.mxu0 0
    %3075 = vmatprep.subr.bf16.mxu0 0
    %3076 = vmatpush1.bf16.msra.mxu0 0
    %3077 = vmatprep.subr.bf16.mxu0 0
    %3078 = vmatpush1.bf16.msra.mxu0 0
    %3079 = vmatprep.subr.bf16.mxu0 0
    %3080 = vmatpush1.bf16.msra.mxu0 0
    %3081 = vmatprep.subr.bf16.mxu0 0
    %3082 = vmatpush1.bf16.msra.mxu0 0
    %3083 = vmatprep.mubr.bf16.mxu0 0
    %3084 = vmatmul.mubr.bf16.gmra.mrb[0].mxu0 %v3046
    %v3085 = vpop.f32.mrb[0].mxu0
    %v3086 = vadd.f32 0.0, %v3085
    %v3087 = vpop.f32.mrb[0].mxu0
    %v3088 = vpop.f32.mrb[0].mxu0
    %v3089 = vadd.f32 0.0, %v3088
    %v3090 = vpop.f32.mrb[0].mxu0
    %3091 = vmatprep.mubr.bf16.mxu0 0
    %3092 = vmatmul.mubr.bf16.gmra.mrb[0].mxu0 %v3049
    %v3093 = vpop.f32.mrb[0].mxu0
    %v3094 = vadd.f32 0.0, %v3093
    %v3095 = vpop.f32.mrb[0].mxu0
    %v3096 = vpop.f32.mrb[0].mxu0
    %v3097 = vadd.f32 0.0, %v3096
    %v3098 = vpop.f32.mrb[0].mxu0
    %3099 = vdwg.mxu0
    %v3100 = vpack.c.bf16 %v3089, %v3086
    %v3101 = vpack.c.bf16 %v3097, %v3094
    %s3102 = sshll.u32 %s534, 4
    %3103 = dma.done %s203, %s3102
    %v3104 = vld [vmem:[%s202] sm:$0xff]
    %v3105 = vld [vmem:[%s202 + $0x8] sm:$0xff]
    %v3106 = vld [vmem:[%s202 + $0x10] sm:$0xff]
    %v3107 = vld [vmem:[%s202 + $0x18] sm:$0xff]
    %v3108 = vld [vmem:[%s202 + $0x20] sm:$0xff]
    %v3109 = vld [vmem:[%s202 + $0x28] sm:$0xff]
    %v3110 = vld [vmem:[%s202 + $0x30] sm:$0xff]
    %v3111 = vld [vmem:[%s202 + $0x38] sm:$0xff]
    %v3112 = vld [vmem:[%s202 + $0x40] sm:$0xff]
    %v3113 = vld [vmem:[%s202 + $0x48] sm:$0xff]
    %v3114 = vld [vmem:[%s202 + $0x50] sm:$0xff]
    %v3115 = vld [vmem:[%s202 + $0x58] sm:$0xff]
    %v3116 = vld [vmem:[%s202 + $0x60] sm:$0xff]
    %v3117 = vld [vmem:[%s202 + $0x68] sm:$0xff]
    %v3118 = vld [vmem:[%s202 + $0x70] sm:$0xff]
    %v3119 = vld [vmem:[%s202 + $0x78] sm:$0xff]
    %v3120 = vld [vmem:[%s202 + $0x80] sm:$0xff]
    %v3121 = vld [vmem:[%s202 + $0x88] sm:$0xff]
    %v3122 = vld [vmem:[%s202 + $0x90] sm:$0xff]
    %v3123 = vld [vmem:[%s202 + $0x98] sm:$0xff]
    %v3124 = vld [vmem:[%s202 + $0xa0] sm:$0xff]
    %v3125 = vld [vmem:[%s202 + $0xa8] sm:$0xff]
    %v3126 = vld [vmem:[%s202 + $0xb0] sm:$0xff]
    %v3127 = vld [vmem:[%s202 + $0xb8] sm:$0xff]
    %3128 = vmatprep.subr.bf16.mxu0 0
    %3129 = vmatpush1.bf16.msra.mxu0 %v3104
    %3130 = vmatprep.subr.bf16.mxu0 0
    %3131 = vmatpush1.bf16.msra.mxu0 %v3105
    %3132 = vmatprep.subr.bf16.mxu0 0
    %3133 = vmatpush1.bf16.msra.mxu0 %v3106
    %3134 = vmatprep.subr.bf16.mxu0 0
    %3135 = vmatpush1.bf16.msra.mxu0 %v3107
    %3136 = vmatprep.subr.bf16.mxu0 0
    %3137 = vmatpush1.bf16.msra.mxu0 %v3108
    %3138 = vmatprep.subr.bf16.mxu0 0
    %3139 = vmatpush1.bf16.msra.mxu0 %v3109
    %3140 = vmatprep.subr.bf16.mxu0 0
    %3141 = vmatpush1.bf16.msra.mxu0 %v3110
    %3142 = vmatprep.subr.bf16.mxu0 0
    %3143 = vmatpush1.bf16.msra.mxu0 %v3111
    %3144 = vmatprep.subr.bf16.mxu0 0
    %3145 = vmatpush1.bf16.msra.mxu0 %v3112
    %3146 = vmatprep.subr.bf16.mxu0 0
    %3147 = vmatpush1.bf16.msra.mxu0 %v3113
    %3148 = vmatprep.subr.bf16.mxu0 0
    %3149 = vmatpush1.bf16.msra.mxu0 %v3114
    %3150 = vmatprep.subr.bf16.mxu0 0
    %3151 = vmatpush1.bf16.msra.mxu0 %v3115
    %3152 = vmatprep.subr.bf16.mxu0 0
    %3153 = vmatpush1.bf16.msra.mxu0 %v3116
    %3154 = vmatprep.subr.bf16.mxu0 0
    %3155 = vmatpush1.bf16.msra.mxu0 %v3117
    %3156 = vmatprep.subr.bf16.mxu0 0
    %3157 = vmatpush1.bf16.msra.mxu0 %v3118
    %3158 = vmatprep.subr.bf16.mxu0 0
    %3159 = vmatpush1.bf16.msra.mxu0 %v3119
    %3160 = vmatprep.mubr.bf16.mxu0 %v2956
    %3161 = vmatmul.mubr.bf16.gmra.mrb[0].mxu0 %v3028
    %v3162 = vpop.f32.mrb[0].mxu0
    %v3163 = vadd.f32 0.0, %v3162
    %v3164 = vpop.f32.mrb[0].mxu0
    %v3165 = vpop.f32.mrb[0].mxu0
    %v3166 = vadd.f32 0.0, %v3165
    %v3167 = vpop.f32.mrb[0].mxu0
    %3168 = vmatprep.mubr.bf16.mxu0 %v2957
    %3169 = vmatmul.mubr.bf16.gmra.mrb[0].mxu0 %v3029
    %v3170 = vpop.f32.mrb[0].mxu0
    %v3171 = vadd.f32 0.0, %v3170
    %v3172 = vpop.f32.mrb[0].mxu0
    %v3173 = vpop.f32.mrb[0].mxu0
    %v3174 = vadd.f32 0.0, %v3173
    %v3175 = vpop.f32.mrb[0].mxu0
    %3176 = vdwg.mxu0
    %3177 = vmatprep.subr.bf16.mxu0 0
    %3178 = vmatpush1.bf16.msra.mxu0 %v3120
    %3179 = vmatprep.subr.bf16.mxu0 0
    %3180 = vmatpush1.bf16.msra.mxu0 %v3121
    %3181 = vmatprep.subr.bf16.mxu0 0
    %3182 = vmatpush1.bf16.msra.mxu0 %v3122
    %3183 = vmatprep.subr.bf16.mxu0 0
    %3184 = vmatpush1.bf16.msra.mxu0 %v3123
    %3185 = vmatprep.subr.bf16.mxu0 0
    %3186 = vmatpush1.bf16.msra.mxu0 %v3124
    %3187 = vmatprep.subr.bf16.mxu0 0
    %3188 = vmatpush1.bf16.msra.mxu0 %v3125
    %3189 = vmatprep.subr.bf16.mxu0 0
    %3190 = vmatpush1.bf16.msra.mxu0 %v3126
    %3191 = vmatprep.subr.bf16.mxu0 0
    %3192 = vmatpush1.bf16.msra.mxu0 %v3127
    %3193 = vmatprep.subr.bf16.mxu0 0
    %3194 = vmatpush1.bf16.msra.mxu0 0
    %3195 = vmatprep.subr.bf16.mxu0 0
    %3196 = vmatpush1.bf16.msra.mxu0 0
    %3197 = vmatprep.subr.bf16.mxu0 0
    %3198 = vmatpush1.bf16.msra.mxu0 0
    %3199 = vmatprep.subr.bf16.mxu0 0
    %3200 = vmatpush1.bf16.msra.mxu0 0
    %3201 = vmatprep.subr.bf16.mxu0 0
    %3202 = vmatpush1.bf16.msra.mxu0 0
    %3203 = vmatprep.subr.bf16.mxu0 0
    %3204 = vmatpush1.bf16.msra.mxu0 0
    %3205 = vmatprep.subr.bf16.mxu0 0
    %3206 = vmatpush1.bf16.msra.mxu0 0
    %3207 = vmatprep.subr.bf16.mxu0 0
    %3208 = vmatpush1.bf16.msra.mxu0 0
    %3209 = vmatprep.mubr.bf16.mxu0 0
    %3210 = vmatmul.mubr.bf16.gmra.mrb[0].mxu0 %v3100
    %v3211 = vpop.f32.mrb[0].mxu0
    %v3212 = vadd.f32 %v3163, %v3211
    %v3213 = vpop.f32.mrb[0].mxu0
    %v3214 = vpop.f32.mrb[0].mxu0
    %v3215 = vadd.f32 %v3166, %v3214
    %v3216 = vpop.f32.mrb[0].mxu0
    %3217 = vmatprep.mubr.bf16.mxu0 0
    %3218 = vmatmul.mubr.bf16.gmra.mrb[0].mxu0 %v3101
    %v3219 = vpop.f32.mrb[0].mxu0
    %v3220 = vadd.f32 %v3171, %v3219
    %v3221 = vpop.f32.mrb[0].mxu0
    %v3222 = vpop.f32.mrb[0].mxu0
    %v3223 = vadd.f32 %v3174, %v3222
    %v3224 = vpop.f32.mrb[0].mxu0
    %3225 = vdwg.mxu0
    %v3226 = vadd.f32 %v3212, %v3215
    %v3227 = vadd.f32 %v3226, %v3220
    %v3228 = vadd.f32 %v3227, %v3223
    %v3229 = vrot.slane %v3228, 4
    %v3230 = vadd.f32 %v3228, %v3229
    %v3231 = vrot.slane %v3230, 2
    %v3232 = vadd.f32 %v3230, %v3231
    %v3233 = vrot.slane %v3232, 1
    %v3234 = vadd.f32 %v3232, %v3233
    %v3235 = vmul.f32 %v3212, %v3212
    %v3236 = vmul.f32 %v3215, %v3215
    %v3237 = vmul.f32 %v3220, %v3220
    %v3238 = vmul.f32 %v3223, %v3223
    %v3239 = vadd.f32 %v3235, %v3236
    %v3240 = vadd.f32 %v3239, %v3237
    %v3241 = vadd.f32 %v3240, %v3238
    %v3242 = vrot.slane %v3241, 4
    %v3243 = vadd.f32 %v3241, %v3242
    %v3244 = vrot.slane %v3243, 2
    %v3245 = vadd.f32 %v3243, %v3244
    %v3246 = vrot.slane %v3245, 1
    %v3247 = vadd.f32 %v3245, %v3246
    %v3248 = vmul.f32 %v3234, 0.125
    %v3249 = vmul.f32 %v3247, 0.125
    %v3250 = vmul.f32 %v3248, %v3248
    %v3251 = vsub.f32 %v3249, %v3250
    %v3252 = vmax.f32 %v3251, 0.0
    %s3253 = scalar_lea.vmem [#allocation7], 8
    %v3254 = vld [vmem:[%s3253] sm:$0x1]
    %v3255 = vadd.f32 %v3252, 1e-05
    %v3256 = vrsqrt.pop %v3255
    %v3257 = vmul.f32 %v3254, %v3256
    %s3258 = scalar_lea.vmem [#allocation9], 8
    %v3259 = vld [vmem:[%s3258] sm:$0x1]
    %v3260 = vmul.f32 %v3248, %v3257
    %v3261 = vsub.f32 %v3259, %v3260
    %v3263 = vlaneseq
    %v3264 = vshrl.u32 %v3263, 7
    %v3265 = vsub.s32 0, %v3264
    %v3266 = vrot.slane %v3257, %v3265
    %v3268 = vmul.f32 %v3212, %v3266
    %v3269 = vmul.f32 %v3215, %v3266
    %v3270 = vmul.f32 %v3220, %v3266
    %v3271 = vmul.f32 %v3223, %v3266
    %v3273 = vlaneseq
    %v3274 = vshrl.u32 %v3273, 7
    %v3275 = vsub.s32 0, %v3274
    %v3276 = vrot.slane %v3261, %v3275
    %v3278 = vadd.f32 %v3268, %v3276
    %v3279 = vadd.f32 %v3269, %v3276
    %v3280 = vadd.f32 %v3270, %v3276
    %v3281 = vadd.f32 %v3271, %v3276
    %v3282 = vadd.f32 %v3278, %v2952
    %v3283 = vadd.f32 %v3279, %v2953
    %v3284 = vadd.f32 %v3280, %v2954
    %v3285 = vadd.f32 %v3281, %v2955
    %v3286 = vmax.f32 %v3282, 0.0
    %v3287 = vmax.f32 %v3283, 0.0
    %v3288 = vmax.f32 %v3284, 0.0
    %v3289 = vmax.f32 %v3285, 0.0
    %v3290 = vsel %vm2764, %v3286, 0.0
    %v3291 = vsel %vm2765, %v3287, 0.0
    %v3292 = vsel %vm2766, %v3288, 0.0
    %v3293 = vsel %vm2767, %v3289, 0.0
    %v3294 = vpack.c.bf16 %v3291, %v3290
    %v3295 = vpack.c.bf16 %v3293, %v3292
    %s3296 = scalar_lea.vmem %s1, 256
    %v3297 = vld [vmem:[%s3296] sm:$0xf]
    %v3298 = vld [vmem:[%s3296 + $0x4] sm:$0xf]
    %v3299 = vld [vmem:[%s3296 + $0x8] sm:$0xf]
    %v3300 = vld [vmem:[%s3296 + $0xc] sm:$0xf]
    %v3305 = vunpack.c.l.b16 %v3297
    %v3306 = vunpack.c.l.b16 %v3298
    %v3307 = vunpack.c.l.b16 %v3299
    %v3308 = vunpack.c.l.b16 %v3300
    %v3309 = vpack.c.b16 %v3306, %v3305
    %v3310 = vpack.c.b16 %v3308, %v3307
    %v3312 = vsel %vm403, %v3309, 0
    %v3315 = vsel %vm403, %v3310, 0
    %3317 = vmatprep.subr.bf16.mxu0 0
    %3318 = vmatpush1.bf16.msra.mxu0 %v3294
    %3319 = vmatprep.subr.bf16.mxu0 0
    %3320 = vmatpush1.bf16.msra.mxu0 %v3295
    %3321 = vmatprep.subr.bf16.mxu0 0
    %3322 = vmatpush1.bf16.msra.mxu0 0
    %3323 = vmatprep.subr.bf16.mxu0 0
    %3324 = vmatpush1.bf16.msra.mxu0 0
    %3325 = vmatprep.subr.bf16.mxu0 0
    %3326 = vmatpush1.bf16.msra.mxu0 0
    %3327 = vmatprep.subr.bf16.mxu0 0
    %3328 = vmatpush1.bf16.msra.mxu0 0
    %3329 = vmatprep.subr.bf16.mxu0 0
    %3330 = vmatpush1.bf16.msra.mxu0 0
    %3331 = vmatprep.subr.bf16.mxu0 0
    %3332 = vmatpush1.bf16.msra.mxu0 0
    %3333 = vmatprep.subr.bf16.mxu0 0
    %3334 = vmatpush1.bf16.msra.mxu0 0
    %3335 = vmatprep.subr.bf16.mxu0 0
    %3336 = vmatpush1.bf16.msra.mxu0 0
    %3337 = vmatprep.subr.bf16.mxu0 0
    %3338 = vmatpush1.bf16.msra.mxu0 0
    %3339 = vmatprep.subr.bf16.mxu0 0
    %3340 = vmatpush1.bf16.msra.mxu0 0
    %3341 = vmatprep.subr.bf16.mxu0 0
    %3342 = vmatpush1.bf16.msra.mxu0 0
    %3343 = vmatprep.subr.bf16.mxu0 0
    %3344 = vmatpush1.bf16.msra.mxu0 0
    %3345 = vmatprep.subr.bf16.mxu0 0
    %3346 = vmatpush1.bf16.msra.mxu0 0
    %3347 = vmatprep.subr.bf16.mxu0 0
    %3348 = vmatpush1.bf16.msra.mxu0 0
    %3349 = vmatprep.mubr.bf16.mxu0 0
    %3350 = vmatmul.mubr.bf16.gmra.mrb[0].mxu0 %v3312
    %v3351 = vpop.f32.mrb[0].mxu0
    %v3352 = vadd.f32 0.0, %v3351
    %v3353 = vpop.f32.mrb[0].mxu0
    %v3354 = vpop.f32.mrb[0].mxu0
    %v3355 = vadd.f32 0.0, %v3354
    %v3356 = vpop.f32.mrb[0].mxu0
    %3357 = vmatprep.mubr.bf16.mxu0 0
    %3358 = vmatmul.mubr.bf16.gmra.mrb[0].mxu0 %v3315
    %v3359 = vpop.f32.mrb[0].mxu0
    %v3360 = vadd.f32 0.0, %v3359
    %v3361 = vpop.f32.mrb[0].mxu0
    %v3362 = vpop.f32.mrb[0].mxu0
    %v3363 = vadd.f32 0.0, %v3362
    %v3364 = vpop.f32.mrb[0].mxu0
    %3365 = vdwg.mxu0
    %v3366 = vpack.c.bf16 %v3355, %v3352
    %v3367 = vpack.c.bf16 %v3363, %v3360
    %s3368 = scalar_lea.vmem %s1, 272
    %v3369 = vld [vmem:[%s3368] sm:$0xf]
    %v3370 = vld [vmem:[%s3368 + $0x4] sm:$0xf]
    %v3371 = vld [vmem:[%s3368 + $0x8] sm:$0xf]
    %v3372 = vld [vmem:[%s3368 + $0xc] sm:$0xf]
    %v3377 = vunpack.c.l.b16 %v3369
    %v3378 = vunpack.c.l.b16 %v3370
    %v3379 = vunpack.c.l.b16 %v3371
    %v3380 = vunpack.c.l.b16 %v3372
    %v3381 = vpack.c.b16 %v3378, %v3377
    %v3382 = vpack.c.b16 %v3380, %v3379
    %v3384 = vsel %vm403, %v3381, 0
    %v3387 = vsel %vm403, %v3382, 0
    %3389 = vmatprep.subr.bf16.mxu0 0
    %3390 = vmatpush1.bf16.msra.mxu0 %v3294
    %3391 = vmatprep.subr.bf16.mxu0 0
    %3392 = vmatpush1.bf16.msra.mxu0 %v3295
    %3393 = vmatprep.subr.bf16.mxu0 0
    %3394 = vmatpush1.bf16.msra.mxu0 0
    %3395 = vmatprep.subr.bf16.mxu0 0
    %3396 = vmatpush1.bf16.msra.mxu0 0
    %3397 = vmatprep.subr.bf16.mxu0 0
    %3398 = vmatpush1.bf16.msra.mxu0 0
    %3399 = vmatprep.subr.bf16.mxu0 0
    %3400 = vmatpush1.bf16.msra.mxu0 0
    %3401 = vmatprep.subr.bf16.mxu0 0
    %3402 = vmatpush1.bf16.msra.mxu0 0
    %3403 = vmatprep.subr.bf16.mxu0 0
    %3404 = vmatpush1.bf16.msra.mxu0 0
    %3405 = vmatprep.subr.bf16.mxu0 0
    %3406 = vmatpush1.bf16.msra.mxu0 0
    %3407 = vmatprep.subr.bf16.mxu0 0
    %3408 = vmatpush1.bf16.msra.mxu0 0
    %3409 = vmatprep.subr.bf16.mxu0 0
    %3410 = vmatpush1.bf16.msra.mxu0 0
    %3411 = vmatprep.subr.bf16.mxu0 0
    %3412 = vmatpush1.bf16.msra.mxu0 0
    %3413 = vmatprep.subr.bf16.mxu0 0
    %3414 = vmatpush1.bf16.msra.mxu0 0
    %3415 = vmatprep.subr.bf16.mxu0 0
    %3416 = vmatpush1.bf16.msra.mxu0 0
    %3417 = vmatprep.subr.bf16.mxu0 0
    %3418 = vmatpush1.bf16.msra.mxu0 0
    %3419 = vmatprep.subr.bf16.mxu0 0
    %3420 = vmatpush1.bf16.msra.mxu0 0
    %3421 = vmatprep.mubr.bf16.mxu0 0
    %3422 = vmatmul.mubr.bf16.gmra.mrb[0].mxu0 %v3384
    %v3423 = vpop.f32.mrb[0].mxu0
    %v3424 = vadd.f32 0.0, %v3423
    %v3425 = vpop.f32.mrb[0].mxu0
    %v3426 = vpop.f32.mrb[0].mxu0
    %v3427 = vadd.f32 0.0, %v3426
    %v3428 = vpop.f32.mrb[0].mxu0
    %3429 = vmatprep.mubr.bf16.mxu0 0
    %3430 = vmatmul.mubr.bf16.gmra.mrb[0].mxu0 %v3387
    %v3431 = vpop.f32.mrb[0].mxu0
    %v3432 = vadd.f32 0.0, %v3431
    %v3433 = vpop.f32.mrb[0].mxu0
    %v3434 = vpop.f32.mrb[0].mxu0
    %v3435 = vadd.f32 0.0, %v3434
    %v3436 = vpop.f32.mrb[0].mxu0
    %3437 = vdwg.mxu0
    %v3438 = vpack.c.bf16 %v3427, %v3424
    %v3439 = vpack.c.bf16 %v3435, %v3432
    %s3440 = sshll.u32 %s534, 4
    %3441 = dma.done %s217, %s3440
    %v3442 = vld [vmem:[%s216] sm:$0xff]
    %v3443 = vld [vmem:[%s216 + $0x8] sm:$0xff]
    %v3444 = vld [vmem:[%s216 + $0x10] sm:$0xff]
    %v3445 = vld [vmem:[%s216 + $0x18] sm:$0xff]
    %v3446 = vld [vmem:[%s216 + $0x20] sm:$0xff]
    %v3447 = vld [vmem:[%s216 + $0x28] sm:$0xff]
    %v3448 = vld [vmem:[%s216 + $0x30] sm:$0xff]
    %v3449 = vld [vmem:[%s216 + $0x38] sm:$0xff]
    %v3450 = vld [vmem:[%s216 + $0x40] sm:$0xff]
    %v3451 = vld [vmem:[%s216 + $0x48] sm:$0xff]
    %v3452 = vld [vmem:[%s216 + $0x50] sm:$0xff]
    %v3453 = vld [vmem:[%s216 + $0x58] sm:$0xff]
    %v3454 = vld [vmem:[%s216 + $0x60] sm:$0xff]
    %v3455 = vld [vmem:[%s216 + $0x68] sm:$0xff]
    %v3456 = vld [vmem:[%s216 + $0x70] sm:$0xff]
    %v3457 = vld [vmem:[%s216 + $0x78] sm:$0xff]
    %v3458 = vld [vmem:[%s216 + $0x80] sm:$0xff]
    %v3459 = vld [vmem:[%s216 + $0x88] sm:$0xff]
    %v3460 = vld [vmem:[%s216 + $0x90] sm:$0xff]
    %v3461 = vld [vmem:[%s216 + $0x98] sm:$0xff]
    %v3462 = vld [vmem:[%s216 + $0xa0] sm:$0xff]
    %v3463 = vld [vmem:[%s216 + $0xa8] sm:$0xff]
    %v3464 = vld [vmem:[%s216 + $0xb0] sm:$0xff]
    %v3465 = vld [vmem:[%s216 + $0xb8] sm:$0xff]
    %3466 = vmatprep.subr.bf16.mxu0 0
    %3467 = vmatpush1.bf16.msra.mxu0 %v3442
    %3468 = vmatprep.subr.bf16.mxu0 0
    %3469 = vmatpush1.bf16.msra.mxu0 %v3443
    %3470 = vmatprep.subr.bf16.mxu0 0
    %3471 = vmatpush1.bf16.msra.mxu0 %v3444
    %3472 = vmatprep.subr.bf16.mxu0 0
    %3473 = vmatpush1.bf16.msra.mxu0 %v3445
    %3474 = vmatprep.subr.bf16.mxu0 0
    %3475 = vmatpush1.bf16.msra.mxu0 %v3446
    %3476 = vmatprep.subr.bf16.mxu0 0
    %3477 = vmatpush1.bf16.msra.mxu0 %v3447
    %3478 = vmatprep.subr.bf16.mxu0 0
    %3479 = vmatpush1.bf16.msra.mxu0 %v3448
    %3480 = vmatprep.subr.bf16.mxu0 0
    %3481 = vmatpush1.bf16.msra.mxu0 %v3449
    %3482 = vmatprep.subr.bf16.mxu0 0
    %3483 = vmatpush1.bf16.msra.mxu0 %v3450
    %3484 = vmatprep.subr.bf16.mxu0 0
    %3485 = vmatpush1.bf16.msra.mxu0 %v3451
    %3486 = vmatprep.subr.bf16.mxu0 0
    %3487 = vmatpush1.bf16.msra.mxu0 %v3452
    %3488 = vmatprep.subr.bf16.mxu0 0
    %3489 = vmatpush1.bf16.msra.mxu0 %v3453
    %3490 = vmatprep.subr.bf16.mxu0 0
    %3491 = vmatpush1.bf16.msra.mxu0 %v3454
    %3492 = vmatprep.subr.bf16.mxu0 0
    %3493 = vmatpush1.bf16.msra.mxu0 %v3455
    %3494 = vmatprep.subr.bf16.mxu0 0
    %3495 = vmatpush1.bf16.msra.mxu0 %v3456
    %3496 = vmatprep.subr.bf16.mxu0 0
    %3497 = vmatpush1.bf16.msra.mxu0 %v3457
    %3498 = vmatprep.mubr.bf16.mxu0 %v3294
    %3499 = vmatmul.mubr.bf16.gmra.mrb[0].mxu0 %v3366
    %v3500 = vpop.f32.mrb[0].mxu0
    %v3501 = vadd.f32 0.0, %v3500
    %v3502 = vpop.f32.mrb[0].mxu0
    %v3503 = vpop.f32.mrb[0].mxu0
    %v3504 = vadd.f32 0.0, %v3503
    %v3505 = vpop.f32.mrb[0].mxu0
    %3506 = vmatprep.mubr.bf16.mxu0 %v3295
    %3507 = vmatmul.mubr.bf16.gmra.mrb[0].mxu0 %v3367
    %v3508 = vpop.f32.mrb[0].mxu0
    %v3509 = vadd.f32 0.0, %v3508
    %v3510 = vpop.f32.mrb[0].mxu0
    %v3511 = vpop.f32.mrb[0].mxu0
    %v3512 = vadd.f32 0.0, %v3511
    %v3513 = vpop.f32.mrb[0].mxu0
    %3514 = vdwg.mxu0
    %3515 = vmatprep.subr.bf16.mxu0 0
    %3516 = vmatpush1.bf16.msra.mxu0 %v3458
    %3517 = vmatprep.subr.bf16.mxu0 0
    %3518 = vmatpush1.bf16.msra.mxu0 %v3459
    %3519 = vmatprep.subr.bf16.mxu0 0
    %3520 = vmatpush1.bf16.msra.mxu0 %v3460
    %3521 = vmatprep.subr.bf16.mxu0 0
    %3522 = vmatpush1.bf16.msra.mxu0 %v3461
    %3523 = vmatprep.subr.bf16.mxu0 0
    %3524 = vmatpush1.bf16.msra.mxu0 %v3462
    %3525 = vmatprep.subr.bf16.mxu0 0
    %3526 = vmatpush1.bf16.msra.mxu0 %v3463
    %3527 = vmatprep.subr.bf16.mxu0 0
    %3528 = vmatpush1.bf16.msra.mxu0 %v3464
    %3529 = vmatprep.subr.bf16.mxu0 0
    %3530 = vmatpush1.bf16.msra.mxu0 %v3465
    %3531 = vmatprep.subr.bf16.mxu0 0
    %3532 = vmatpush1.bf16.msra.mxu0 0
    %3533 = vmatprep.subr.bf16.mxu0 0
    %3534 = vmatpush1.bf16.msra.mxu0 0
    %3535 = vmatprep.subr.bf16.mxu0 0
    %3536 = vmatpush1.bf16.msra.mxu0 0
    %3537 = vmatprep.subr.bf16.mxu0 0
    %3538 = vmatpush1.bf16.msra.mxu0 0
    %3539 = vmatprep.subr.bf16.mxu0 0
    %3540 = vmatpush1.bf16.msra.mxu0 0
    %3541 = vmatprep.subr.bf16.mxu0 0
    %3542 = vmatpush1.bf16.msra.mxu0 0
    %3543 = vmatprep.subr.bf16.mxu0 0
    %3544 = vmatpush1.bf16.msra.mxu0 0
    %3545 = vmatprep.subr.bf16.mxu0 0
    %3546 = vmatpush1.bf16.msra.mxu0 0
    %3547 = vmatprep.mubr.bf16.mxu0 0
    %3548 = vmatmul.mubr.bf16.gmra.mrb[0].mxu0 %v3438
    %v3549 = vpop.f32.mrb[0].mxu0
    %v3550 = vadd.f32 %v3501, %v3549
    %v3551 = vpop.f32.mrb[0].mxu0
    %v3552 = vpop.f32.mrb[0].mxu0
    %v3553 = vadd.f32 %v3504, %v3552
    %v3554 = vpop.f32.mrb[0].mxu0
    %3555 = vmatprep.mubr.bf16.mxu0 0
    %3556 = vmatmul.mubr.bf16.gmra.mrb[0].mxu0 %v3439
    %v3557 = vpop.f32.mrb[0].mxu0
    %v3558 = vadd.f32 %v3509, %v3557
    %v3559 = vpop.f32.mrb[0].mxu0
    %v3560 = vpop.f32.mrb[0].mxu0
    %v3561 = vadd.f32 %v3512, %v3560
    %v3562 = vpop.f32.mrb[0].mxu0
    %3563 = vdwg.mxu0
    %v3564 = vadd.f32 %v3550, %v3553
    %v3565 = vadd.f32 %v3564, %v3558
    %v3566 = vadd.f32 %v3565, %v3561
    %v3567 = vrot.slane %v3566, 4
    %v3568 = vadd.f32 %v3566, %v3567
    %v3569 = vrot.slane %v3568, 2
    %v3570 = vadd.f32 %v3568, %v3569
    %v3571 = vrot.slane %v3570, 1
    %v3572 = vadd.f32 %v3570, %v3571
    %v3573 = vmul.f32 %v3550, %v3550
    %v3574 = vmul.f32 %v3553, %v3553
    %v3575 = vmul.f32 %v3558, %v3558
    %v3576 = vmul.f32 %v3561, %v3561
    %v3577 = vadd.f32 %v3573, %v3574
    %v3578 = vadd.f32 %v3577, %v3575
    %v3579 = vadd.f32 %v3578, %v3576
    %v3580 = vrot.slane %v3579, 4
    %v3581 = vadd.f32 %v3579, %v3580
    %v3582 = vrot.slane %v3581, 2
    %v3583 = vadd.f32 %v3581, %v3582
    %v3584 = vrot.slane %v3583, 1
    %v3585 = vadd.f32 %v3583, %v3584
    %v3586 = vmul.f32 %v3572, 0.125
    %v3587 = vmul.f32 %v3585, 0.125
    %v3588 = vmul.f32 %v3586, %v3586
    %v3589 = vsub.f32 %v3587, %v3588
    %v3590 = vmax.f32 %v3589, 0.0
    %s3591 = scalar_lea.vmem [#allocation7], 9
    %v3592 = vld [vmem:[%s3591] sm:$0x1]
    %v3593 = vadd.f32 %v3590, 1e-05
    %v3594 = vrsqrt.pop %v3593
    %v3595 = vmul.f32 %v3592, %v3594
    %s3596 = scalar_lea.vmem [#allocation9], 9
    %v3597 = vld [vmem:[%s3596] sm:$0x1]
    %v3598 = vmul.f32 %v3586, %v3595
    %v3599 = vsub.f32 %v3597, %v3598
    %v3601 = vlaneseq
    %v3602 = vshrl.u32 %v3601, 7
    %v3603 = vsub.s32 0, %v3602
    %v3604 = vrot.slane %v3595, %v3603
    %v3606 = vmul.f32 %v3550, %v3604
    %v3607 = vmul.f32 %v3553, %v3604
    %v3608 = vmul.f32 %v3558, %v3604
    %v3609 = vmul.f32 %v3561, %v3604
    %v3611 = vlaneseq
    %v3612 = vshrl.u32 %v3611, 7
    %v3613 = vsub.s32 0, %v3612
    %v3614 = vrot.slane %v3599, %v3613
    %v3616 = vadd.f32 %v3606, %v3614
    %v3617 = vadd.f32 %v3607, %v3614
    %v3618 = vadd.f32 %v3608, %v3614
    %v3619 = vadd.f32 %v3609, %v3614
    %v3620 = vmax.f32 %v3616, 0.0
    %v3621 = vmax.f32 %v3617, 0.0
    %v3622 = vmax.f32 %v3618, 0.0
    %v3623 = vmax.f32 %v3619, 0.0
    %v3624 = vsel %vm2764, %v3620, 0.0
    %v3625 = vsel %vm2765, %v3621, 0.0
    %v3626 = vsel %vm2766, %v3622, 0.0
    %v3627 = vsel %vm2767, %v3623, 0.0
    %v3628 = vpack.c.bf16 %v3625, %v3624
    %v3629 = vpack.c.bf16 %v3627, %v3626
    %s3630 = scalar_lea.vmem %s1, 288
    %v3631 = vld [vmem:[%s3630] sm:$0xf]
    %v3632 = vld [vmem:[%s3630 + $0x4] sm:$0xf]
    %v3633 = vld [vmem:[%s3630 + $0x8] sm:$0xf]
    %v3634 = vld [vmem:[%s3630 + $0xc] sm:$0xf]
    %v3639 = vunpack.c.l.b16 %v3631
    %v3640 = vunpack.c.l.b16 %v3632
    %v3641 = vunpack.c.l.b16 %v3633
    %v3642 = vunpack.c.l.b16 %v3634
    %v3643 = vpack.c.b16 %v3640, %v3639
    %v3644 = vpack.c.b16 %v3642, %v3641
    %v3646 = vsel %vm403, %v3643, 0
    %v3649 = vsel %vm403, %v3644, 0
    %3651 = vmatprep.subr.bf16.mxu0 0
    %3652 = vmatpush1.bf16.msra.mxu0 %v3628
    %3653 = vmatprep.subr.bf16.mxu0 0
    %3654 = vmatpush1.bf16.msra.mxu0 %v3629
    %3655 = vmatprep.subr.bf16.mxu0 0
    %3656 = vmatpush1.bf16.msra.mxu0 0
    %3657 = vmatprep.subr.bf16.mxu0 0
    %3658 = vmatpush1.bf16.msra.mxu0 0
    %3659 = vmatprep.subr.bf16.mxu0 0
    %3660 = vmatpush1.bf16.msra.mxu0 0
    %3661 = vmatprep.subr.bf16.mxu0 0
    %3662 = vmatpush1.bf16.msra.mxu0 0
    %3663 = vmatprep.subr.bf16.mxu0 0
    %3664 = vmatpush1.bf16.msra.mxu0 0
    %3665 = vmatprep.subr.bf16.mxu0 0
    %3666 = vmatpush1.bf16.msra.mxu0 0
    %3667 = vmatprep.subr.bf16.mxu0 0
    %3668 = vmatpush1.bf16.msra.mxu0 0
    %3669 = vmatprep.subr.bf16.mxu0 0
    %3670 = vmatpush1.bf16.msra.mxu0 0
    %3671 = vmatprep.subr.bf16.mxu0 0
    %3672 = vmatpush1.bf16.msra.mxu0 0
    %3673 = vmatprep.subr.bf16.mxu0 0
    %3674 = vmatpush1.bf16.msra.mxu0 0
    %3675 = vmatprep.subr.bf16.mxu0 0
    %3676 = vmatpush1.bf16.msra.mxu0 0
    %3677 = vmatprep.subr.bf16.mxu0 0
    %3678 = vmatpush1.bf16.msra.mxu0 0
    %3679 = vmatprep.subr.bf16.mxu0 0
    %3680 = vmatpush1.bf16.msra.mxu0 0
    %3681 = vmatprep.subr.bf16.mxu0 0
    %3682 = vmatpush1.bf16.msra.mxu0 0
    %3683 = vmatprep.mubr.bf16.mxu0 0
    %3684 = vmatmul.mubr.bf16.gmra.mrb[0].mxu0 %v3646
    %v3685 = vpop.f32.mrb[0].mxu0
    %v3686 = vadd.f32 0.0, %v3685
    %v3687 = vpop.f32.mrb[0].mxu0
    %v3688 = vpop.f32.mrb[0].mxu0
    %v3689 = vadd.f32 0.0, %v3688
    %v3690 = vpop.f32.mrb[0].mxu0
    %3691 = vmatprep.mubr.bf16.mxu0 0
    %3692 = vmatmul.mubr.bf16.gmra.mrb[0].mxu0 %v3649
    %v3693 = vpop.f32.mrb[0].mxu0
    %v3694 = vadd.f32 0.0, %v3693
    %v3695 = vpop.f32.mrb[0].mxu0
    %v3696 = vpop.f32.mrb[0].mxu0
    %v3697 = vadd.f32 0.0, %v3696
    %v3698 = vpop.f32.mrb[0].mxu0
    %3699 = vdwg.mxu0
    %v3700 = vpack.c.bf16 %v3689, %v3686
    %v3701 = vpack.c.bf16 %v3697, %v3694
    %s3702 = scalar_lea.vmem %s1, 304
    %v3703 = vld [vmem:[%s3702] sm:$0xf]
    %v3704 = vld [vmem:[%s3702 + $0x4] sm:$0xf]
    %v3705 = vld [vmem:[%s3702 + $0x8] sm:$0xf]
    %v3706 = vld [vmem:[%s3702 + $0xc] sm:$0xf]
    %v3711 = vunpack.c.l.b16 %v3703
    %v3712 = vunpack.c.l.b16 %v3704
    %v3713 = vunpack.c.l.b16 %v3705
    %v3714 = vunpack.c.l.b16 %v3706
    %v3715 = vpack.c.b16 %v3712, %v3711
    %v3716 = vpack.c.b16 %v3714, %v3713
    %v3718 = vsel %vm403, %v3715, 0
    %v3721 = vsel %vm403, %v3716, 0
    %3723 = vmatprep.subr.bf16.mxu0 0
    %3724 = vmatpush1.bf16.msra.mxu0 %v3628
    %3725 = vmatprep.subr.bf16.mxu0 0
    %3726 = vmatpush1.bf16.msra.mxu0 %v3629
    %3727 = vmatprep.subr.bf16.mxu0 0
    %3728 = vmatpush1.bf16.msra.mxu0 0
    %3729 = vmatprep.subr.bf16.mxu0 0
    %3730 = vmatpush1.bf16.msra.mxu0 0
    %3731 = vmatprep.subr.bf16.mxu0 0
    %3732 = vmatpush1.bf16.msra.mxu0 0
    %3733 = vmatprep.subr.bf16.mxu0 0
    %3734 = vmatpush1.bf16.msra.mxu0 0
    %3735 = vmatprep.subr.bf16.mxu0 0
    %3736 = vmatpush1.bf16.msra.mxu0 0
    %3737 = vmatprep.subr.bf16.mxu0 0
    %3738 = vmatpush1.bf16.msra.mxu0 0
    %3739 = vmatprep.subr.bf16.mxu0 0
    %3740 = vmatpush1.bf16.msra.mxu0 0
    %3741 = vmatprep.subr.bf16.mxu0 0
    %3742 = vmatpush1.bf16.msra.mxu0 0
    %3743 = vmatprep.subr.bf16.mxu0 0
    %3744 = vmatpush1.bf16.msra.mxu0 0
    %3745 = vmatprep.subr.bf16.mxu0 0
    %3746 = vmatpush1.bf16.msra.mxu0 0
    %3747 = vmatprep.subr.bf16.mxu0 0
    %3748 = vmatpush1.bf16.msra.mxu0 0
    %3749 = vmatprep.subr.bf16.mxu0 0
    %3750 = vmatpush1.bf16.msra.mxu0 0
    %3751 = vmatprep.subr.bf16.mxu0 0
    %3752 = vmatpush1.bf16.msra.mxu0 0
    %3753 = vmatprep.subr.bf16.mxu0 0
    %3754 = vmatpush1.bf16.msra.mxu0 0
    %3755 = vmatprep.mubr.bf16.mxu0 0
    %3756 = vmatmul.mubr.bf16.gmra.mrb[0].mxu0 %v3718
    %v3757 = vpop.f32.mrb[0].mxu0
    %v3758 = vadd.f32 0.0, %v3757
    %v3759 = vpop.f32.mrb[0].mxu0
    %v3760 = vpop.f32.mrb[0].mxu0
    %v3761 = vadd.f32 0.0, %v3760
    %v3762 = vpop.f32.mrb[0].mxu0
    %3763 = vmatprep.mubr.bf16.mxu0 0
    %3764 = vmatmul.mubr.bf16.gmra.mrb[0].mxu0 %v3721
    %v3765 = vpop.f32.mrb[0].mxu0
    %v3766 = vadd.f32 0.0, %v3765
    %v3767 = vpop.f32.mrb[0].mxu0
    %v3768 = vpop.f32.mrb[0].mxu0
    %v3769 = vadd.f32 0.0, %v3768
    %v3770 = vpop.f32.mrb[0].mxu0
    %3771 = vdwg.mxu0
    %v3772 = vpack.c.bf16 %v3761, %v3758
    %v3773 = vpack.c.bf16 %v3769, %v3766
    %s3774 = sshll.u32 %s534, 4
    %3775 = dma.done %s231, %s3774
    %v3776 = vld [vmem:[%s230] sm:$0xff]
    %v3777 = vld [vmem:[%s230 + $0x8] sm:$0xff]
    %v3778 = vld [vmem:[%s230 + $0x10] sm:$0xff]
    %v3779 = vld [vmem:[%s230 + $0x18] sm:$0xff]
    %v3780 = vld [vmem:[%s230 + $0x20] sm:$0xff]
    %v3781 = vld [vmem:[%s230 + $0x28] sm:$0xff]
    %v3782 = vld [vmem:[%s230 + $0x30] sm:$0xff]
    %v3783 = vld [vmem:[%s230 + $0x38] sm:$0xff]
    %v3784 = vld [vmem:[%s230 + $0x40] sm:$0xff]
    %v3785 = vld [vmem:[%s230 + $0x48] sm:$0xff]
    %v3786 = vld [vmem:[%s230 + $0x50] sm:$0xff]
    %v3787 = vld [vmem:[%s230 + $0x58] sm:$0xff]
    %v3788 = vld [vmem:[%s230 + $0x60] sm:$0xff]
    %v3789 = vld [vmem:[%s230 + $0x68] sm:$0xff]
    %v3790 = vld [vmem:[%s230 + $0x70] sm:$0xff]
    %v3791 = vld [vmem:[%s230 + $0x78] sm:$0xff]
    %v3792 = vld [vmem:[%s230 + $0x80] sm:$0xff]
    %v3793 = vld [vmem:[%s230 + $0x88] sm:$0xff]
    %v3794 = vld [vmem:[%s230 + $0x90] sm:$0xff]
    %v3795 = vld [vmem:[%s230 + $0x98] sm:$0xff]
    %v3796 = vld [vmem:[%s230 + $0xa0] sm:$0xff]
    %v3797 = vld [vmem:[%s230 + $0xa8] sm:$0xff]
    %v3798 = vld [vmem:[%s230 + $0xb0] sm:$0xff]
    %v3799 = vld [vmem:[%s230 + $0xb8] sm:$0xff]
    %3800 = vmatprep.subr.bf16.mxu0 0
    %3801 = vmatpush1.bf16.msra.mxu0 %v3776
    %3802 = vmatprep.subr.bf16.mxu0 0
    %3803 = vmatpush1.bf16.msra.mxu0 %v3777
    %3804 = vmatprep.subr.bf16.mxu0 0
    %3805 = vmatpush1.bf16.msra.mxu0 %v3778
    %3806 = vmatprep.subr.bf16.mxu0 0
    %3807 = vmatpush1.bf16.msra.mxu0 %v3779
    %3808 = vmatprep.subr.bf16.mxu0 0
    %3809 = vmatpush1.bf16.msra.mxu0 %v3780
    %3810 = vmatprep.subr.bf16.mxu0 0
    %3811 = vmatpush1.bf16.msra.mxu0 %v3781
    %3812 = vmatprep.subr.bf16.mxu0 0
    %3813 = vmatpush1.bf16.msra.mxu0 %v3782
    %3814 = vmatprep.subr.bf16.mxu0 0
    %3815 = vmatpush1.bf16.msra.mxu0 %v3783
    %3816 = vmatprep.subr.bf16.mxu0 0
    %3817 = vmatpush1.bf16.msra.mxu0 %v3784
    %3818 = vmatprep.subr.bf16.mxu0 0
    %3819 = vmatpush1.bf16.msra.mxu0 %v3785
    %3820 = vmatprep.subr.bf16.mxu0 0
    %3821 = vmatpush1.bf16.msra.mxu0 %v3786
    %3822 = vmatprep.subr.bf16.mxu0 0
    %3823 = vmatpush1.bf16.msra.mxu0 %v3787
    %3824 = vmatprep.subr.bf16.mxu0 0
    %3825 = vmatpush1.bf16.msra.mxu0 %v3788
    %3826 = vmatprep.subr.bf16.mxu0 0
    %3827 = vmatpush1.bf16.msra.mxu0 %v3789
    %3828 = vmatprep.subr.bf16.mxu0 0
    %3829 = vmatpush1.bf16.msra.mxu0 %v3790
    %3830 = vmatprep.subr.bf16.mxu0 0
    %3831 = vmatpush1.bf16.msra.mxu0 %v3791
    %3832 = vmatprep.mubr.bf16.mxu0 %v3628
    %3833 = vmatmul.mubr.bf16.gmra.mrb[0].mxu0 %v3700
    %v3834 = vpop.f32.mrb[0].mxu0
    %v3835 = vadd.f32 0.0, %v3834
    %v3836 = vpop.f32.mrb[0].mxu0
    %v3837 = vpop.f32.mrb[0].mxu0
    %v3838 = vadd.f32 0.0, %v3837
    %v3839 = vpop.f32.mrb[0].mxu0
    %3840 = vmatprep.mubr.bf16.mxu0 %v3629
    %3841 = vmatmul.mubr.bf16.gmra.mrb[0].mxu0 %v3701
    %v3842 = vpop.f32.mrb[0].mxu0
    %v3843 = vadd.f32 0.0, %v3842
    %v3844 = vpop.f32.mrb[0].mxu0
    %v3845 = vpop.f32.mrb[0].mxu0
    %v3846 = vadd.f32 0.0, %v3845
    %v3847 = vpop.f32.mrb[0].mxu0
    %3848 = vdwg.mxu0
    %3849 = vmatprep.subr.bf16.mxu0 0
    %3850 = vmatpush1.bf16.msra.mxu0 %v3792
    %3851 = vmatprep.subr.bf16.mxu0 0
    %3852 = vmatpush1.bf16.msra.mxu0 %v3793
    %3853 = vmatprep.subr.bf16.mxu0 0
    %3854 = vmatpush1.bf16.msra.mxu0 %v3794
    %3855 = vmatprep.subr.bf16.mxu0 0
    %3856 = vmatpush1.bf16.msra.mxu0 %v3795
    %3857 = vmatprep.subr.bf16.mxu0 0
    %3858 = vmatpush1.bf16.msra.mxu0 %v3796
    %3859 = vmatprep.subr.bf16.mxu0 0
    %3860 = vmatpush1.bf16.msra.mxu0 %v3797
    %3861 = vmatprep.subr.bf16.mxu0 0
    %3862 = vmatpush1.bf16.msra.mxu0 %v3798
    %3863 = vmatprep.subr.bf16.mxu0 0
    %3864 = vmatpush1.bf16.msra.mxu0 %v3799
    %3865 = vmatprep.subr.bf16.mxu0 0
    %3866 = vmatpush1.bf16.msra.mxu0 0
    %3867 = vmatprep.subr.bf16.mxu0 0
    %3868 = vmatpush1.bf16.msra.mxu0 0
    %3869 = vmatprep.subr.bf16.mxu0 0
    %3870 = vmatpush1.bf16.msra.mxu0 0
    %3871 = vmatprep.subr.bf16.mxu0 0
    %3872 = vmatpush1.bf16.msra.mxu0 0
    %3873 = vmatprep.subr.bf16.mxu0 0
    %3874 = vmatpush1.bf16.msra.mxu0 0
    %3875 = vmatprep.subr.bf16.mxu0 0
    %3876 = vmatpush1.bf16.msra.mxu0 0
    %3877 = vmatprep.subr.bf16.mxu0 0
    %3878 = vmatpush1.bf16.msra.mxu0 0
    %3879 = vmatprep.subr.bf16.mxu0 0
    %3880 = vmatpush1.bf16.msra.mxu0 0
    %3881 = vmatprep.mubr.bf16.mxu0 0
    %3882 = vmatmul.mubr.bf16.gmra.mrb[0].mxu0 %v3772
    %v3883 = vpop.f32.mrb[0].mxu0
    %v3884 = vadd.f32 %v3835, %v3883
    %v3885 = vpop.f32.mrb[0].mxu0
    %v3886 = vpop.f32.mrb[0].mxu0
    %v3887 = vadd.f32 %v3838, %v3886
    %v3888 = vpop.f32.mrb[0].mxu0
    %3889 = vmatprep.mubr.bf16.mxu0 0
    %3890 = vmatmul.mubr.bf16.gmra.mrb[0].mxu0 %v3773
    %v3891 = vpop.f32.mrb[0].mxu0
    %v3892 = vadd.f32 %v3843, %v3891
    %v3893 = vpop.f32.mrb[0].mxu0
    %v3894 = vpop.f32.mrb[0].mxu0
    %v3895 = vadd.f32 %v3846, %v3894
    %v3896 = vpop.f32.mrb[0].mxu0
    %3897 = vdwg.mxu0
    %v3898 = vadd.f32 %v3884, %v3887
    %v3899 = vadd.f32 %v3898, %v3892
    %v3900 = vadd.f32 %v3899, %v3895
    %v3901 = vrot.slane %v3900, 4
    %v3902 = vadd.f32 %v3900, %v3901
    %v3903 = vrot.slane %v3902, 2
    %v3904 = vadd.f32 %v3902, %v3903
    %v3905 = vrot.slane %v3904, 1
    %v3906 = vadd.f32 %v3904, %v3905
    %v3907 = vmul.f32 %v3884, %v3884
    %v3908 = vmul.f32 %v3887, %v3887
    %v3909 = vmul.f32 %v3892, %v3892
    %v3910 = vmul.f32 %v3895, %v3895
    %v3911 = vadd.f32 %v3907, %v3908
    %v3912 = vadd.f32 %v3911, %v3909
    %v3913 = vadd.f32 %v3912, %v3910
    %v3914 = vrot.slane %v3913, 4
    %v3915 = vadd.f32 %v3913, %v3914
    %v3916 = vrot.slane %v3915, 2
    %v3917 = vadd.f32 %v3915, %v3916
    %v3918 = vrot.slane %v3917, 1
    %v3919 = vadd.f32 %v3917, %v3918
    %v3920 = vmul.f32 %v3906, 0.125
    %v3921 = vmul.f32 %v3919, 0.125
    %v3922 = vmul.f32 %v3920, %v3920
    %v3923 = vsub.f32 %v3921, %v3922
    %v3924 = vmax.f32 %v3923, 0.0
    %s3925 = scalar_lea.vmem [#allocation7], 10
    %v3926 = vld [vmem:[%s3925] sm:$0x1]
    %v3927 = vadd.f32 %v3924, 1e-05
    %v3928 = vrsqrt.pop %v3927
    %v3929 = vmul.f32 %v3926, %v3928
    %s3930 = scalar_lea.vmem [#allocation9], 10
    %v3931 = vld [vmem:[%s3930] sm:$0x1]
    %v3932 = vmul.f32 %v3920, %v3929
    %v3933 = vsub.f32 %v3931, %v3932
    %v3935 = vlaneseq
    %v3936 = vshrl.u32 %v3935, 7
    %v3937 = vsub.s32 0, %v3936
    %v3938 = vrot.slane %v3929, %v3937
    %v3940 = vmul.f32 %v3884, %v3938
    %v3941 = vmul.f32 %v3887, %v3938
    %v3942 = vmul.f32 %v3892, %v3938
    %v3943 = vmul.f32 %v3895, %v3938
    %v3945 = vlaneseq
    %v3946 = vshrl.u32 %v3945, 7
    %v3947 = vsub.s32 0, %v3946
    %v3948 = vrot.slane %v3933, %v3947
    %v3950 = vadd.f32 %v3940, %v3948
    %v3951 = vadd.f32 %v3941, %v3948
    %v3952 = vadd.f32 %v3942, %v3948
    %v3953 = vadd.f32 %v3943, %v3948
    %v3954 = vadd.f32 %v3950, %v3290
    %v3955 = vadd.f32 %v3951, %v3291
    %v3956 = vadd.f32 %v3952, %v3292
    %v3957 = vadd.f32 %v3953, %v3293
    %v3958 = vmax.f32 %v3954, 0.0
    %v3959 = vmax.f32 %v3955, 0.0
    %v3960 = vmax.f32 %v3956, 0.0
    %v3961 = vmax.f32 %v3957, 0.0
    %v3962 = vsel %vm2764, %v3958, 0.0
    %v3963 = vsel %vm2765, %v3959, 0.0
    %v3964 = vsel %vm2766, %v3960, 0.0
    %v3965 = vsel %vm2767, %v3961, 0.0
    %v3966 = vpack.c.bf16 %v3963, %v3962
    %v3967 = vpack.c.bf16 %v3965, %v3964
    %s3968 = scalar_lea.vmem %s1, 320
    %v3969 = vld [vmem:[%s3968] sm:$0xf]
    %v3970 = vld [vmem:[%s3968 + $0x4] sm:$0xf]
    %v3971 = vld [vmem:[%s3968 + $0x8] sm:$0xf]
    %v3972 = vld [vmem:[%s3968 + $0xc] sm:$0xf]
    %v3977 = vunpack.c.l.b16 %v3969
    %v3978 = vunpack.c.l.b16 %v3970
    %v3979 = vunpack.c.l.b16 %v3971
    %v3980 = vunpack.c.l.b16 %v3972
    %v3981 = vpack.c.b16 %v3978, %v3977
    %v3982 = vpack.c.b16 %v3980, %v3979
    %v3984 = vsel %vm403, %v3981, 0
    %v3987 = vsel %vm403, %v3982, 0
    %3989 = vmatprep.subr.bf16.mxu0 0
    %3990 = vmatpush1.bf16.msra.mxu0 %v3966
    %3991 = vmatprep.subr.bf16.mxu0 0
    %3992 = vmatpush1.bf16.msra.mxu0 %v3967
    %3993 = vmatprep.subr.bf16.mxu0 0
    %3994 = vmatpush1.bf16.msra.mxu0 0
    %3995 = vmatprep.subr.bf16.mxu0 0
    %3996 = vmatpush1.bf16.msra.mxu0 0
    %3997 = vmatprep.subr.bf16.mxu0 0
    %3998 = vmatpush1.bf16.msra.mxu0 0
    %3999 = vmatprep.subr.bf16.mxu0 0
    %4000 = vmatpush1.bf16.msra.mxu0 0
    %4001 = vmatprep.subr.bf16.mxu0 0
    %4002 = vmatpush1.bf16.msra.mxu0 0
    %4003 = vmatprep.subr.bf16.mxu0 0
    %4004 = vmatpush1.bf16.msra.mxu0 0
    %4005 = vmatprep.subr.bf16.mxu0 0
    %4006 = vmatpush1.bf16.msra.mxu0 0
    %4007 = vmatprep.subr.bf16.mxu0 0
    %4008 = vmatpush1.bf16.msra.mxu0 0
    %4009 = vmatprep.subr.bf16.mxu0 0
    %4010 = vmatpush1.bf16.msra.mxu0 0
    %4011 = vmatprep.subr.bf16.mxu0 0
    %4012 = vmatpush1.bf16.msra.mxu0 0
    %4013 = vmatprep.subr.bf16.mxu0 0
    %4014 = vmatpush1.bf16.msra.mxu0 0
    %4015 = vmatprep.subr.bf16.mxu0 0
    %4016 = vmatpush1.bf16.msra.mxu0 0
    %4017 = vmatprep.subr.bf16.mxu0 0
    %4018 = vmatpush1.bf16.msra.mxu0 0
    %4019 = vmatprep.subr.bf16.mxu0 0
    %4020 = vmatpush1.bf16.msra.mxu0 0
    %4021 = vmatprep.mubr.bf16.mxu0 0
    %4022 = vmatmul.mubr.bf16.gmra.mrb[0].mxu0 %v3984
    %v4023 = vpop.f32.mrb[0].mxu0
    %v4024 = vadd.f32 0.0, %v4023
    %v4025 = vpop.f32.mrb[0].mxu0
    %v4026 = vpop.f32.mrb[0].mxu0
    %v4027 = vadd.f32 0.0, %v4026
    %v4028 = vpop.f32.mrb[0].mxu0
    %4029 = vmatprep.mubr.bf16.mxu0 0
    %4030 = vmatmul.mubr.bf16.gmra.mrb[0].mxu0 %v3987
    %v4031 = vpop.f32.mrb[0].mxu0
    %v4032 = vadd.f32 0.0, %v4031
    %v4033 = vpop.f32.mrb[0].mxu0
    %v4034 = vpop.f32.mrb[0].mxu0
    %v4035 = vadd.f32 0.0, %v4034
    %v4036 = vpop.f32.mrb[0].mxu0
    %4037 = vdwg.mxu0
    %v4038 = vpack.c.bf16 %v4027, %v4024
    %v4039 = vpack.c.bf16 %v4035, %v4032
    %s4040 = scalar_lea.vmem %s1, 336
    %v4041 = vld [vmem:[%s4040] sm:$0xf]
    %v4042 = vld [vmem:[%s4040 + $0x4] sm:$0xf]
    %v4043 = vld [vmem:[%s4040 + $0x8] sm:$0xf]
    %v4044 = vld [vmem:[%s4040 + $0xc] sm:$0xf]
    %v4049 = vunpack.c.l.b16 %v4041
    %v4050 = vunpack.c.l.b16 %v4042
    %v4051 = vunpack.c.l.b16 %v4043
    %v4052 = vunpack.c.l.b16 %v4044
    %v4053 = vpack.c.b16 %v4050, %v4049
    %v4054 = vpack.c.b16 %v4052, %v4051
    %v4056 = vsel %vm403, %v4053, 0
    %v4059 = vsel %vm403, %v4054, 0
    %4061 = vmatprep.subr.bf16.mxu0 0
    %4062 = vmatpush1.bf16.msra.mxu0 %v3966
    %4063 = vmatprep.subr.bf16.mxu0 0
    %4064 = vmatpush1.bf16.msra.mxu0 %v3967
    %4065 = vmatprep.subr.bf16.mxu0 0
    %4066 = vmatpush1.bf16.msra.mxu0 0
    %4067 = vmatprep.subr.bf16.mxu0 0
    %4068 = vmatpush1.bf16.msra.mxu0 0
    %4069 = vmatprep.subr.bf16.mxu0 0
    %4070 = vmatpush1.bf16.msra.mxu0 0
    %4071 = vmatprep.subr.bf16.mxu0 0
    %4072 = vmatpush1.bf16.msra.mxu0 0
    %4073 = vmatprep.subr.bf16.mxu0 0
    %4074 = vmatpush1.bf16.msra.mxu0 0
    %4075 = vmatprep.subr.bf16.mxu0 0
    %4076 = vmatpush1.bf16.msra.mxu0 0
    %4077 = vmatprep.subr.bf16.mxu0 0
    %4078 = vmatpush1.bf16.msra.mxu0 0
    %4079 = vmatprep.subr.bf16.mxu0 0
    %4080 = vmatpush1.bf16.msra.mxu0 0
    %4081 = vmatprep.subr.bf16.mxu0 0
    %4082 = vmatpush1.bf16.msra.mxu0 0
    %4083 = vmatprep.subr.bf16.mxu0 0
    %4084 = vmatpush1.bf16.msra.mxu0 0
    %4085 = vmatprep.subr.bf16.mxu0 0
    %4086 = vmatpush1.bf16.msra.mxu0 0
    %4087 = vmatprep.subr.bf16.mxu0 0
    %4088 = vmatpush1.bf16.msra.mxu0 0
    %4089 = vmatprep.subr.bf16.mxu0 0
    %4090 = vmatpush1.bf16.msra.mxu0 0
    %4091 = vmatprep.subr.bf16.mxu0 0
    %4092 = vmatpush1.bf16.msra.mxu0 0
    %4093 = vmatprep.mubr.bf16.mxu0 0
    %4094 = vmatmul.mubr.bf16.gmra.mrb[0].mxu0 %v4056
    %v4095 = vpop.f32.mrb[0].mxu0
    %v4096 = vadd.f32 0.0, %v4095
    %v4097 = vpop.f32.mrb[0].mxu0
    %v4098 = vpop.f32.mrb[0].mxu0
    %v4099 = vadd.f32 0.0, %v4098
    %v4100 = vpop.f32.mrb[0].mxu0
    %4101 = vmatprep.mubr.bf16.mxu0 0
    %4102 = vmatmul.mubr.bf16.gmra.mrb[0].mxu0 %v4059
    %v4103 = vpop.f32.mrb[0].mxu0
    %v4104 = vadd.f32 0.0, %v4103
    %v4105 = vpop.f32.mrb[0].mxu0
    %v4106 = vpop.f32.mrb[0].mxu0
    %v4107 = vadd.f32 0.0, %v4106
    %v4108 = vpop.f32.mrb[0].mxu0
    %4109 = vdwg.mxu0
    %v4110 = vpack.c.bf16 %v4099, %v4096
    %v4111 = vpack.c.bf16 %v4107, %v4104
    %s4112 = scalar_lea.vmem %s1, 352
    %v4113 = vld [vmem:[%s4112] sm:$0xf]
    %v4114 = vld [vmem:[%s4112 + $0x4] sm:$0xf]
    %v4115 = vld [vmem:[%s4112 + $0x8] sm:$0xf]
    %v4116 = vld [vmem:[%s4112 + $0xc] sm:$0xf]
    %v4121 = vunpack.c.l.b16 %v4113
    %v4122 = vunpack.c.l.b16 %v4114
    %v4123 = vunpack.c.l.b16 %v4115
    %v4124 = vunpack.c.l.b16 %v4116
    %v4125 = vpack.c.b16 %v4122, %v4121
    %v4126 = vpack.c.b16 %v4124, %v4123
    %v4128 = vsel %vm403, %v4125, 0
    %v4131 = vsel %vm403, %v4126, 0
    %4133 = vmatprep.subr.bf16.mxu0 0
    %4134 = vmatpush1.bf16.msra.mxu0 %v3966
    %4135 = vmatprep.subr.bf16.mxu0 0
    %4136 = vmatpush1.bf16.msra.mxu0 %v3967
    %4137 = vmatprep.subr.bf16.mxu0 0
    %4138 = vmatpush1.bf16.msra.mxu0 0
    %4139 = vmatprep.subr.bf16.mxu0 0
    %4140 = vmatpush1.bf16.msra.mxu0 0
    %4141 = vmatprep.subr.bf16.mxu0 0
    %4142 = vmatpush1.bf16.msra.mxu0 0
    %4143 = vmatprep.subr.bf16.mxu0 0
    %4144 = vmatpush1.bf16.msra.mxu0 0
    %4145 = vmatprep.subr.bf16.mxu0 0
    %4146 = vmatpush1.bf16.msra.mxu0 0
    %4147 = vmatprep.subr.bf16.mxu0 0
    %4148 = vmatpush1.bf16.msra.mxu0 0
    %4149 = vmatprep.subr.bf16.mxu0 0
    %4150 = vmatpush1.bf16.msra.mxu0 0
    %4151 = vmatprep.subr.bf16.mxu0 0
    %4152 = vmatpush1.bf16.msra.mxu0 0
    %4153 = vmatprep.subr.bf16.mxu0 0
    %4154 = vmatpush1.bf16.msra.mxu0 0
    %4155 = vmatprep.subr.bf16.mxu0 0
    %4156 = vmatpush1.bf16.msra.mxu0 0
    %4157 = vmatprep.subr.bf16.mxu0 0
    %4158 = vmatpush1.bf16.msra.mxu0 0
    %4159 = vmatprep.subr.bf16.mxu0 0
    %4160 = vmatpush1.bf16.msra.mxu0 0
    %4161 = vmatprep.subr.bf16.mxu0 0
    %4162 = vmatpush1.bf16.msra.mxu0 0
    %4163 = vmatprep.subr.bf16.mxu0 0
    %4164 = vmatpush1.bf16.msra.mxu0 0
    %4165 = vmatprep.mubr.bf16.mxu0 0
    %4166 = vmatmul.mubr.bf16.gmra.mrb[0].mxu0 %v4128
    %v4167 = vpop.f32.mrb[0].mxu0
    %v4168 = vadd.f32 0.0, %v4167
    %v4169 = vpop.f32.mrb[0].mxu0
    %v4170 = vpop.f32.mrb[0].mxu0
    %v4171 = vadd.f32 0.0, %v4170
    %v4172 = vpop.f32.mrb[0].mxu0
    %4173 = vmatprep.mubr.bf16.mxu0 0
    %4174 = vmatmul.mubr.bf16.gmra.mrb[0].mxu0 %v4131
    %v4175 = vpop.f32.mrb[0].mxu0
    %v4176 = vadd.f32 0.0, %v4175
    %v4177 = vpop.f32.mrb[0].mxu0
    %v4178 = vpop.f32.mrb[0].mxu0
    %v4179 = vadd.f32 0.0, %v4178
    %v4180 = vpop.f32.mrb[0].mxu0
    %4181 = vdwg.mxu0
    %v4182 = vpack.c.bf16 %v4171, %v4168
    %v4183 = vpack.c.bf16 %v4179, %v4176
    %s4184 = sshll.u32 %s534, 4
    %4185 = dma.done %s245, %s4184
    %v4186 = vld [vmem:[%s244] sm:$0xff]
    %v4187 = vld [vmem:[%s244 + $0x8] sm:$0xff]
    %v4188 = vld [vmem:[%s244 + $0x10] sm:$0xff]
    %v4189 = vld [vmem:[%s244 + $0x18] sm:$0xff]
    %v4190 = vld [vmem:[%s244 + $0x20] sm:$0xff]
    %v4191 = vld [vmem:[%s244 + $0x28] sm:$0xff]
    %v4192 = vld [vmem:[%s244 + $0x30] sm:$0xff]
    %v4193 = vld [vmem:[%s244 + $0x38] sm:$0xff]
    %v4194 = vld [vmem:[%s244 + $0x40] sm:$0xff]
    %v4195 = vld [vmem:[%s244 + $0x48] sm:$0xff]
    %v4196 = vld [vmem:[%s244 + $0x50] sm:$0xff]
    %v4197 = vld [vmem:[%s244 + $0x58] sm:$0xff]
    %v4198 = vld [vmem:[%s244 + $0x60] sm:$0xff]
    %v4199 = vld [vmem:[%s244 + $0x68] sm:$0xff]
    %v4200 = vld [vmem:[%s244 + $0x70] sm:$0xff]
    %v4201 = vld [vmem:[%s244 + $0x78] sm:$0xff]
    %v4202 = vld [vmem:[%s244 + $0x80] sm:$0xff]
    %v4203 = vld [vmem:[%s244 + $0x88] sm:$0xff]
    %v4204 = vld [vmem:[%s244 + $0x90] sm:$0xff]
    %v4205 = vld [vmem:[%s244 + $0x98] sm:$0xff]
    %v4206 = vld [vmem:[%s244 + $0xa0] sm:$0xff]
    %v4207 = vld [vmem:[%s244 + $0xa8] sm:$0xff]
    %v4208 = vld [vmem:[%s244 + $0xb0] sm:$0xff]
    %v4209 = vld [vmem:[%s244 + $0xb8] sm:$0xff]
    %4210 = vmatprep.subr.bf16.mxu0 0
    %4211 = vmatpush1.bf16.msra.mxu0 %v4186
    %4212 = vmatprep.subr.bf16.mxu0 0
    %4213 = vmatpush1.bf16.msra.mxu0 %v4187
    %4214 = vmatprep.subr.bf16.mxu0 0
    %4215 = vmatpush1.bf16.msra.mxu0 %v4188
    %4216 = vmatprep.subr.bf16.mxu0 0
    %4217 = vmatpush1.bf16.msra.mxu0 %v4189
    %4218 = vmatprep.subr.bf16.mxu0 0
    %4219 = vmatpush1.bf16.msra.mxu0 %v4190
    %4220 = vmatprep.subr.bf16.mxu0 0
    %4221 = vmatpush1.bf16.msra.mxu0 %v4191
    %4222 = vmatprep.subr.bf16.mxu0 0
    %4223 = vmatpush1.bf16.msra.mxu0 %v4192
    %4224 = vmatprep.subr.bf16.mxu0 0
    %4225 = vmatpush1.bf16.msra.mxu0 %v4193
    %4226 = vmatprep.subr.bf16.mxu0 0
    %4227 = vmatpush1.bf16.msra.mxu0 %v4194
    %4228 = vmatprep.subr.bf16.mxu0 0
    %4229 = vmatpush1.bf16.msra.mxu0 %v4195
    %4230 = vmatprep.subr.bf16.mxu0 0
    %4231 = vmatpush1.bf16.msra.mxu0 %v4196
    %4232 = vmatprep.subr.bf16.mxu0 0
    %4233 = vmatpush1.bf16.msra.mxu0 %v4197
    %4234 = vmatprep.subr.bf16.mxu0 0
    %4235 = vmatpush1.bf16.msra.mxu0 %v4198
    %4236 = vmatprep.subr.bf16.mxu0 0
    %4237 = vmatpush1.bf16.msra.mxu0 %v4199
    %4238 = vmatprep.subr.bf16.mxu0 0
    %4239 = vmatpush1.bf16.msra.mxu0 %v4200
    %4240 = vmatprep.subr.bf16.mxu0 0
    %4241 = vmatpush1.bf16.msra.mxu0 %v4201
    %4242 = vmatprep.mubr.bf16.mxu0 %v4110
    %4243 = vmatmul.mubr.bf16.gmra.mrb[0].mxu0 %v4038
    %v4244 = vpop.f32.mrb[0].mxu0
    %v4245 = vadd.f32 0.0, %v4244
    %v4246 = vpop.f32.mrb[0].mxu0
    %v4247 = vpop.f32.mrb[0].mxu0
    %v4248 = vadd.f32 0.0, %v4247
    %v4249 = vpop.f32.mrb[0].mxu0
    %4250 = vmatprep.mubr.bf16.mxu0 %v4111
    %4251 = vmatmul.mubr.bf16.gmra.mrb[0].mxu0 %v4039
    %v4252 = vpop.f32.mrb[0].mxu0
    %v4253 = vadd.f32 0.0, %v4252
    %v4254 = vpop.f32.mrb[0].mxu0
    %v4255 = vpop.f32.mrb[0].mxu0
    %v4256 = vadd.f32 0.0, %v4255
    %v4257 = vpop.f32.mrb[0].mxu0
    %4258 = vdwg.mxu0
    %4259 = vmatprep.subr.bf16.mxu0 0
    %4260 = vmatpush1.bf16.msra.mxu0 %v4202
    %4261 = vmatprep.subr.bf16.mxu0 0
    %4262 = vmatpush1.bf16.msra.mxu0 %v4203
    %4263 = vmatprep.subr.bf16.mxu0 0
    %4264 = vmatpush1.bf16.msra.mxu0 %v4204
    %4265 = vmatprep.subr.bf16.mxu0 0
    %4266 = vmatpush1.bf16.msra.mxu0 %v4205
    %4267 = vmatprep.subr.bf16.mxu0 0
    %4268 = vmatpush1.bf16.msra.mxu0 %v4206
    %4269 = vmatprep.subr.bf16.mxu0 0
    %4270 = vmatpush1.bf16.msra.mxu0 %v4207
    %4271 = vmatprep.subr.bf16.mxu0 0
    %4272 = vmatpush1.bf16.msra.mxu0 %v4208
    %4273 = vmatprep.subr.bf16.mxu0 0
    %4274 = vmatpush1.bf16.msra.mxu0 %v4209
    %4275 = vmatprep.subr.bf16.mxu0 0
    %4276 = vmatpush1.bf16.msra.mxu0 0
    %4277 = vmatprep.subr.bf16.mxu0 0
    %4278 = vmatpush1.bf16.msra.mxu0 0
    %4279 = vmatprep.subr.bf16.mxu0 0
    %4280 = vmatpush1.bf16.msra.mxu0 0
    %4281 = vmatprep.subr.bf16.mxu0 0
    %4282 = vmatpush1.bf16.msra.mxu0 0
    %4283 = vmatprep.subr.bf16.mxu0 0
    %4284 = vmatpush1.bf16.msra.mxu0 0
    %4285 = vmatprep.subr.bf16.mxu0 0
    %4286 = vmatpush1.bf16.msra.mxu0 0
    %4287 = vmatprep.subr.bf16.mxu0 0
    %4288 = vmatpush1.bf16.msra.mxu0 0
    %4289 = vmatprep.subr.bf16.mxu0 0
    %4290 = vmatpush1.bf16.msra.mxu0 0
    %4291 = vmatprep.mubr.bf16.mxu0 0
    %4292 = vmatmul.mubr.bf16.gmra.mrb[0].mxu0 %v4182
    %v4293 = vpop.f32.mrb[0].mxu0
    %v4294 = vadd.f32 %v4245, %v4293
    %v4295 = vpop.f32.mrb[0].mxu0
    %v4296 = vpop.f32.mrb[0].mxu0
    %v4297 = vadd.f32 %v4248, %v4296
    %v4298 = vpop.f32.mrb[0].mxu0
    %4299 = vmatprep.mubr.bf16.mxu0 0
    %4300 = vmatmul.mubr.bf16.gmra.mrb[0].mxu0 %v4183
    %v4301 = vpop.f32.mrb[0].mxu0
    %v4302 = vadd.f32 %v4253, %v4301
    %v4303 = vpop.f32.mrb[0].mxu0
    %v4304 = vpop.f32.mrb[0].mxu0
    %v4305 = vadd.f32 %v4256, %v4304
    %v4306 = vpop.f32.mrb[0].mxu0
    %4307 = vdwg.mxu0
    %v4308 = vadd.f32 %v4294, %v4297
    %v4309 = vadd.f32 %v4308, %v4302
    %v4310 = vadd.f32 %v4309, %v4305
    %v4311 = vrot.slane %v4310, 4
    %v4312 = vadd.f32 %v4310, %v4311
    %v4313 = vrot.slane %v4312, 2
    %v4314 = vadd.f32 %v4312, %v4313
    %v4315 = vrot.slane %v4314, 1
    %v4316 = vadd.f32 %v4314, %v4315
    %v4317 = vmul.f32 %v4294, %v4294
    %v4318 = vmul.f32 %v4297, %v4297
    %v4319 = vmul.f32 %v4302, %v4302
    %v4320 = vmul.f32 %v4305, %v4305
    %v4321 = vadd.f32 %v4317, %v4318
    %v4322 = vadd.f32 %v4321, %v4319
    %v4323 = vadd.f32 %v4322, %v4320
    %v4324 = vrot.slane %v4323, 4
    %v4325 = vadd.f32 %v4323, %v4324
    %v4326 = vrot.slane %v4325, 2
    %v4327 = vadd.f32 %v4325, %v4326
    %v4328 = vrot.slane %v4327, 1
    %v4329 = vadd.f32 %v4327, %v4328
    %v4330 = vmul.f32 %v4316, 0.25
    %v4331 = vmul.f32 %v4329, 0.25
    %v4332 = vmul.f32 %v4330, %v4330
    %v4333 = vsub.f32 %v4331, %v4332
    %v4334 = vmax.f32 %v4333, 0.0
    %s4335 = scalar_lea.vmem [#allocation7], 11
    %v4336 = vld [vmem:[%s4335] sm:$0x1]
    %v4337 = vadd.f32 %v4334, 1e-05
    %v4338 = vrsqrt.pop %v4337
    %v4339 = vmul.f32 %v4336, %v4338
    %s4340 = scalar_lea.vmem [#allocation9], 11
    %v4341 = vld [vmem:[%s4340] sm:$0x1]
    %v4342 = vmul.f32 %v4330, %v4339
    %v4343 = vsub.f32 %v4341, %v4342
    %v4345 = vlaneseq
    %v4346 = vshrl.u32 %v4345, 7
    %v4347 = vsub.s32 0, %v4346
    %v4348 = vrot.slane %v4339, %v4347
    %v4350 = vmul.f32 %v4294, %v4348
    %v4351 = vmul.f32 %v4297, %v4348
    %v4352 = vmul.f32 %v4302, %v4348
    %v4353 = vmul.f32 %v4305, %v4348
    %v4355 = vlaneseq
    %v4356 = vshrl.u32 %v4355, 7
    %v4357 = vsub.s32 0, %v4356
    %v4358 = vrot.slane %v4343, %v4357
    %v4360 = vadd.f32 %v4350, %v4358
    %v4361 = vadd.f32 %v4351, %v4358
    %v4362 = vadd.f32 %v4352, %v4358
    %v4363 = vadd.f32 %v4353, %v4358
    %v4364 = vmax.f32 %v4360, 0.0
    %v4365 = vmax.f32 %v4361, 0.0
    %v4366 = vmax.f32 %v4362, 0.0
    %v4367 = vmax.f32 %v4363, 0.0
    %vm4368 = vcmp.lt.s32.totalorder %v1116, 2
    %vm4369 = vcmp.lt.s32.totalorder %v1117, 2
    %vm4370 = vcmp.lt.s32.totalorder %v1118, 2
    %vm4371 = vcmp.lt.s32.totalorder %v1119, 2
    %vm4372 = vmand %vm1120, %vm4368
    %vm4373 = vmand %vm1121, %vm4369
    %vm4374 = vmand %vm1122, %vm4370
    %vm4375 = vmand %vm1123, %vm4371
    %vm4376 = vcmp.lt.s32.totalorder %v1116, 18
    %vm4377 = vcmp.lt.s32.totalorder %v1117, 18
    %vm4378 = vcmp.lt.s32.totalorder %v1118, 18
    %vm4379 = vcmp.lt.s32.totalorder %v1119, 18
    %vm4380 = vmand %vm1132, %vm4376
    %vm4381 = vmand %vm1133, %vm4377
    %vm4382 = vmand %vm1134, %vm4378
    %vm4383 = vmand %vm1135, %vm4379
    %vm4384 = vmor %vm4372, %vm4380
    %vm4385 = vmor %vm4373, %vm4381
    %vm4386 = vmor %vm4374, %vm4382
    %vm4387 = vmor %vm4375, %vm4383
    %v4388 = vsel %vm4384, %v4364, 0.0
    %v4389 = vsel %vm4385, %v4365, 0.0
    %v4390 = vsel %vm4386, %v4366, 0.0
    %v4391 = vsel %vm4387, %v4367, 0.0
    %s4392 = sshll.u32 %s534, 4
    %4393 = dma.done %s259, %s4392
    %v4394 = vld [vmem:[%s258] sm:$0xff]
    %v4395 = vld [vmem:[%s258 + $0x8] sm:$0xff]
    %v4396 = vld [vmem:[%s258 + $0x10] sm:$0xff]
    %v4397 = vld [vmem:[%s258 + $0x18] sm:$0xff]
    %v4398 = vld [vmem:[%s258 + $0x20] sm:$0xff]
    %v4399 = vld [vmem:[%s258 + $0x28] sm:$0xff]
    %v4400 = vld [vmem:[%s258 + $0x30] sm:$0xff]
    %v4401 = vld [vmem:[%s258 + $0x38] sm:$0xff]
    %v4402 = vld [vmem:[%s258 + $0x40] sm:$0xff]
    %v4403 = vld [vmem:[%s258 + $0x48] sm:$0xff]
    %v4404 = vld [vmem:[%s258 + $0x50] sm:$0xff]
    %v4405 = vld [vmem:[%s258 + $0x58] sm:$0xff]
    %v4406 = vld [vmem:[%s258 + $0x60] sm:$0xff]
    %v4407 = vld [vmem:[%s258 + $0x68] sm:$0xff]
    %v4408 = vld [vmem:[%s258 + $0x70] sm:$0xff]
    %v4409 = vld [vmem:[%s258 + $0x78] sm:$0xff]
    %v4410 = vld [vmem:[%s258 + $0x80] sm:$0xff]
    %v4411 = vld [vmem:[%s258 + $0x88] sm:$0xff]
    %v4412 = vld [vmem:[%s258 + $0x90] sm:$0xff]
    %v4413 = vld [vmem:[%s258 + $0x98] sm:$0xff]
    %v4414 = vld [vmem:[%s258 + $0xa0] sm:$0xff]
    %v4415 = vld [vmem:[%s258 + $0xa8] sm:$0xff]
    %v4416 = vld [vmem:[%s258 + $0xb0] sm:$0xff]
    %v4417 = vld [vmem:[%s258 + $0xb8] sm:$0xff]
    %4418 = vmatprep.subr.bf16.mxu0 0
    %4419 = vmatpush1.bf16.msra.mxu0 %v4394
    %4420 = vmatprep.subr.bf16.mxu0 0
    %4421 = vmatpush1.bf16.msra.mxu0 %v4395
    %4422 = vmatprep.subr.bf16.mxu0 0
    %4423 = vmatpush1.bf16.msra.mxu0 %v4396
    %4424 = vmatprep.subr.bf16.mxu0 0
    %4425 = vmatpush1.bf16.msra.mxu0 %v4397
    %4426 = vmatprep.subr.bf16.mxu0 0
    %4427 = vmatpush1.bf16.msra.mxu0 %v4398
    %4428 = vmatprep.subr.bf16.mxu0 0
    %4429 = vmatpush1.bf16.msra.mxu0 %v4399
    %4430 = vmatprep.subr.bf16.mxu0 0
    %4431 = vmatpush1.bf16.msra.mxu0 %v4400
    %4432 = vmatprep.subr.bf16.mxu0 0
    %4433 = vmatpush1.bf16.msra.mxu0 %v4401
    %4434 = vmatprep.subr.bf16.mxu0 0
    %4435 = vmatpush1.bf16.msra.mxu0 %v4402
    %4436 = vmatprep.subr.bf16.mxu0 0
    %4437 = vmatpush1.bf16.msra.mxu0 %v4403
    %4438 = vmatprep.subr.bf16.mxu0 0
    %4439 = vmatpush1.bf16.msra.mxu0 %v4404
    %4440 = vmatprep.subr.bf16.mxu0 0
    %4441 = vmatpush1.bf16.msra.mxu0 %v4405
    %4442 = vmatprep.subr.bf16.mxu0 0
    %4443 = vmatpush1.bf16.msra.mxu0 %v4406
    %4444 = vmatprep.subr.bf16.mxu0 0
    %4445 = vmatpush1.bf16.msra.mxu0 %v4407
    %4446 = vmatprep.subr.bf16.mxu0 0
    %4447 = vmatpush1.bf16.msra.mxu0 %v4408
    %4448 = vmatprep.subr.bf16.mxu0 0
    %4449 = vmatpush1.bf16.msra.mxu0 %v4409
    %4450 = vmatprep.mubr.bf16.mxu0 %v4110
    %4451 = vmatmul.mubr.bf16.gmra.mrb[0].mxu0 %v4038
    %v4452 = vpop.f32.mrb[0].mxu0
    %v4453 = vadd.f32 0.0, %v4452
    %v4454 = vpop.f32.mrb[0].mxu0
    %v4455 = vpop.f32.mrb[0].mxu0
    %v4456 = vadd.f32 0.0, %v4455
    %v4457 = vpop.f32.mrb[0].mxu0
    %4458 = vmatprep.mubr.bf16.mxu0 %v4111
    %4459 = vmatmul.mubr.bf16.gmra.mrb[0].mxu0 %v4039
    %v4460 = vpop.f32.mrb[0].mxu0
    %v4461 = vadd.f32 0.0, %v4460
    %v4462 = vpop.f32.mrb[0].mxu0
    %v4463 = vpop.f32.mrb[0].mxu0
    %v4464 = vadd.f32 0.0, %v4463
    %v4465 = vpop.f32.mrb[0].mxu0
    %4466 = vdwg.mxu0
    %4467 = vmatprep.subr.bf16.mxu0 0
    %4468 = vmatpush1.bf16.msra.mxu0 %v4410
    %4469 = vmatprep.subr.bf16.mxu0 0
    %4470 = vmatpush1.bf16.msra.mxu0 %v4411
    %4471 = vmatprep.subr.bf16.mxu0 0
    %4472 = vmatpush1.bf16.msra.mxu0 %v4412
    %4473 = vmatprep.subr.bf16.mxu0 0
    %4474 = vmatpush1.bf16.msra.mxu0 %v4413
    %4475 = vmatprep.subr.bf16.mxu0 0
    %4476 = vmatpush1.bf16.msra.mxu0 %v4414
    %4477 = vmatprep.subr.bf16.mxu0 0
    %4478 = vmatpush1.bf16.msra.mxu0 %v4415
    %4479 = vmatprep.subr.bf16.mxu0 0
    %4480 = vmatpush1.bf16.msra.mxu0 %v4416
    %4481 = vmatprep.subr.bf16.mxu0 0
    %4482 = vmatpush1.bf16.msra.mxu0 %v4417
    %4483 = vmatprep.subr.bf16.mxu0 0
    %4484 = vmatpush1.bf16.msra.mxu0 0
    %4485 = vmatprep.subr.bf16.mxu0 0
    %4486 = vmatpush1.bf16.msra.mxu0 0
    %4487 = vmatprep.subr.bf16.mxu0 0
    %4488 = vmatpush1.bf16.msra.mxu0 0
    %4489 = vmatprep.subr.bf16.mxu0 0
    %4490 = vmatpush1.bf16.msra.mxu0 0
    %4491 = vmatprep.subr.bf16.mxu0 0
    %4492 = vmatpush1.bf16.msra.mxu0 0
    %4493 = vmatprep.subr.bf16.mxu0 0
    %4494 = vmatpush1.bf16.msra.mxu0 0
    %4495 = vmatprep.subr.bf16.mxu0 0
    %4496 = vmatpush1.bf16.msra.mxu0 0
    %4497 = vmatprep.subr.bf16.mxu0 0
    %4498 = vmatpush1.bf16.msra.mxu0 0
    %4499 = vmatprep.mubr.bf16.mxu0 0
    %4500 = vmatmul.mubr.bf16.gmra.mrb[0].mxu0 %v4182
    %v4501 = vpop.f32.mrb[0].mxu0
    %v4502 = vadd.f32 %v4453, %v4501
    %v4503 = vpop.f32.mrb[0].mxu0
    %v4504 = vpop.f32.mrb[0].mxu0
    %v4505 = vadd.f32 %v4456, %v4504
    %v4506 = vpop.f32.mrb[0].mxu0
    %4507 = vmatprep.mubr.bf16.mxu0 0
    %4508 = vmatmul.mubr.bf16.gmra.mrb[0].mxu0 %v4183
    %v4509 = vpop.f32.mrb[0].mxu0
    %v4510 = vadd.f32 %v4461, %v4509
    %v4511 = vpop.f32.mrb[0].mxu0
    %v4512 = vpop.f32.mrb[0].mxu0
    %v4513 = vadd.f32 %v4464, %v4512
    %v4514 = vpop.f32.mrb[0].mxu0
    %4515 = vdwg.mxu0
    %v4516 = vadd.f32 %v4502, %v4505
    %v4517 = vadd.f32 %v4516, %v4510
    %v4518 = vadd.f32 %v4517, %v4513
    %v4519 = vrot.slane %v4518, 4
    %v4520 = vadd.f32 %v4518, %v4519
    %v4521 = vrot.slane %v4520, 2
    %v4522 = vadd.f32 %v4520, %v4521
    %v4523 = vrot.slane %v4522, 1
    %v4524 = vadd.f32 %v4522, %v4523
    %v4525 = vmul.f32 %v4502, %v4502
    %v4526 = vmul.f32 %v4505, %v4505
    %v4527 = vmul.f32 %v4510, %v4510
    %v4528 = vmul.f32 %v4513, %v4513
    %v4529 = vadd.f32 %v4525, %v4526
    %v4530 = vadd.f32 %v4529, %v4527
    %v4531 = vadd.f32 %v4530, %v4528
    %v4532 = vrot.slane %v4531, 4
    %v4533 = vadd.f32 %v4531, %v4532
    %v4534 = vrot.slane %v4533, 2
    %v4535 = vadd.f32 %v4533, %v4534
    %v4536 = vrot.slane %v4535, 1
    %v4537 = vadd.f32 %v4535, %v4536
    %v4538 = vmul.f32 %v4524, 0.25
    %v4539 = vmul.f32 %v4537, 0.25
    %v4540 = vmul.f32 %v4538, %v4538
    %v4541 = vsub.f32 %v4539, %v4540
    %v4542 = vmax.f32 %v4541, 0.0
    %s4543 = scalar_lea.vmem [#allocation7], 12
    %v4544 = vld [vmem:[%s4543] sm:$0x1]
    %v4545 = vadd.f32 %v4542, 1e-05
    %v4546 = vrsqrt.pop %v4545
    %v4547 = vmul.f32 %v4544, %v4546
    %s4548 = scalar_lea.vmem [#allocation9], 12
    %v4549 = vld [vmem:[%s4548] sm:$0x1]
    %v4550 = vmul.f32 %v4538, %v4547
    %v4551 = vsub.f32 %v4549, %v4550
    %v4553 = vlaneseq
    %v4554 = vshrl.u32 %v4553, 7
    %v4555 = vsub.s32 0, %v4554
    %v4556 = vrot.slane %v4547, %v4555
    %v4558 = vmul.f32 %v4502, %v4556
    %v4559 = vmul.f32 %v4505, %v4556
    %v4560 = vmul.f32 %v4510, %v4556
    %v4561 = vmul.f32 %v4513, %v4556
    %v4563 = vlaneseq
    %v4564 = vshrl.u32 %v4563, 7
    %v4565 = vsub.s32 0, %v4564
    %v4566 = vrot.slane %v4551, %v4565
    %v4568 = vadd.f32 %v4558, %v4566
    %v4569 = vadd.f32 %v4559, %v4566
    %v4570 = vadd.f32 %v4560, %v4566
    %v4571 = vadd.f32 %v4561, %v4566
    %v4572 = vsel %vm4384, %v4568, 0.0
    %v4573 = vsel %vm4385, %v4569, 0.0
    %v4574 = vsel %vm4386, %v4570, 0.0
    %v4575 = vsel %vm4387, %v4571, 0.0
    %v4576 = vpack.c.bf16 %v4389, %v4388
    %v4577 = vpack.c.bf16 %v4391, %v4390
    %s4578 = scalar_lea.vmem %s1, 368
    %v4579 = vld [vmem:[%s4578] sm:$0xf]
    %v4580 = vld [vmem:[%s4578 + $0x4] sm:$0xf]
    %v4581 = vld [vmem:[%s4578 + $0x8] sm:$0xf]
    %v4582 = vld [vmem:[%s4578 + $0xc] sm:$0xf]
    %v4587 = vunpack.c.l.b16 %v4579
    %v4588 = vunpack.c.l.b16 %v4580
    %v4589 = vunpack.c.l.b16 %v4581
    %v4590 = vunpack.c.l.b16 %v4582
    %v4591 = vpack.c.b16 %v4588, %v4587
    %v4592 = vpack.c.b16 %v4590, %v4589
    %v4594 = vsel %vm403, %v4591, 0
    %v4597 = vsel %vm403, %v4592, 0
    %4599 = vmatprep.subr.bf16.mxu0 0
    %4600 = vmatpush1.bf16.msra.mxu0 %v4576
    %4601 = vmatprep.subr.bf16.mxu0 0
    %4602 = vmatpush1.bf16.msra.mxu0 %v4577
    %4603 = vmatprep.subr.bf16.mxu0 0
    %4604 = vmatpush1.bf16.msra.mxu0 0
    %4605 = vmatprep.subr.bf16.mxu0 0
    %4606 = vmatpush1.bf16.msra.mxu0 0
    %4607 = vmatprep.subr.bf16.mxu0 0
    %4608 = vmatpush1.bf16.msra.mxu0 0
    %4609 = vmatprep.subr.bf16.mxu0 0
    %4610 = vmatpush1.bf16.msra.mxu0 0
    %4611 = vmatprep.subr.bf16.mxu0 0
    %4612 = vmatpush1.bf16.msra.mxu0 0
    %4613 = vmatprep.subr.bf16.mxu0 0
    %4614 = vmatpush1.bf16.msra.mxu0 0
    %4615 = vmatprep.subr.bf16.mxu0 0
    %4616 = vmatpush1.bf16.msra.mxu0 0
    %4617 = vmatprep.subr.bf16.mxu0 0
    %4618 = vmatpush1.bf16.msra.mxu0 0
    %4619 = vmatprep.subr.bf16.mxu0 0
    %4620 = vmatpush1.bf16.msra.mxu0 0
    %4621 = vmatprep.subr.bf16.mxu0 0
    %4622 = vmatpush1.bf16.msra.mxu0 0
    %4623 = vmatprep.subr.bf16.mxu0 0
    %4624 = vmatpush1.bf16.msra.mxu0 0
    %4625 = vmatprep.subr.bf16.mxu0 0
    %4626 = vmatpush1.bf16.msra.mxu0 0
    %4627 = vmatprep.subr.bf16.mxu0 0
    %4628 = vmatpush1.bf16.msra.mxu0 0
    %4629 = vmatprep.subr.bf16.mxu0 0
    %4630 = vmatpush1.bf16.msra.mxu0 0
    %4631 = vmatprep.mubr.bf16.mxu0 0
    %4632 = vmatmul.mubr.bf16.gmra.mrb[0].mxu0 %v4594
    %v4633 = vpop.f32.mrb[0].mxu0
    %v4634 = vadd.f32 0.0, %v4633
    %v4635 = vpop.f32.mrb[0].mxu0
    %v4636 = vpop.f32.mrb[0].mxu0
    %v4637 = vadd.f32 0.0, %v4636
    %v4638 = vpop.f32.mrb[0].mxu0
    %4639 = vmatprep.mubr.bf16.mxu0 0
    %4640 = vmatmul.mubr.bf16.gmra.mrb[0].mxu0 %v4597
    %v4641 = vpop.f32.mrb[0].mxu0
    %v4642 = vadd.f32 0.0, %v4641
    %v4643 = vpop.f32.mrb[0].mxu0
    %v4644 = vpop.f32.mrb[0].mxu0
    %v4645 = vadd.f32 0.0, %v4644
    %v4646 = vpop.f32.mrb[0].mxu0
    %4647 = vdwg.mxu0
    %v4648 = vpack.c.bf16 %v4637, %v4634
    %v4649 = vpack.c.bf16 %v4645, %v4642
    %s4650 = scalar_lea.vmem %s1, 384
    %v4651 = vld [vmem:[%s4650] sm:$0xf]
    %v4652 = vld [vmem:[%s4650 + $0x4] sm:$0xf]
    %v4653 = vld [vmem:[%s4650 + $0x8] sm:$0xf]
    %v4654 = vld [vmem:[%s4650 + $0xc] sm:$0xf]
    %v4659 = vunpack.c.l.b16 %v4651
    %v4660 = vunpack.c.l.b16 %v4652
    %v4661 = vunpack.c.l.b16 %v4653
    %v4662 = vunpack.c.l.b16 %v4654
    %v4663 = vpack.c.b16 %v4660, %v4659
    %v4664 = vpack.c.b16 %v4662, %v4661
    %v4666 = vsel %vm403, %v4663, 0
    %v4669 = vsel %vm403, %v4664, 0
    %4671 = vmatprep.subr.bf16.mxu0 0
    %4672 = vmatpush1.bf16.msra.mxu0 %v4576
    %4673 = vmatprep.subr.bf16.mxu0 0
    %4674 = vmatpush1.bf16.msra.mxu0 %v4577
    %4675 = vmatprep.subr.bf16.mxu0 0
    %4676 = vmatpush1.bf16.msra.mxu0 0
    %4677 = vmatprep.subr.bf16.mxu0 0
    %4678 = vmatpush1.bf16.msra.mxu0 0
    %4679 = vmatprep.subr.bf16.mxu0 0
    %4680 = vmatpush1.bf16.msra.mxu0 0
    %4681 = vmatprep.subr.bf16.mxu0 0
    %4682 = vmatpush1.bf16.msra.mxu0 0
    %4683 = vmatprep.subr.bf16.mxu0 0
    %4684 = vmatpush1.bf16.msra.mxu0 0
    %4685 = vmatprep.subr.bf16.mxu0 0
    %4686 = vmatpush1.bf16.msra.mxu0 0
    %4687 = vmatprep.subr.bf16.mxu0 0
    %4688 = vmatpush1.bf16.msra.mxu0 0
    %4689 = vmatprep.subr.bf16.mxu0 0
    %4690 = vmatpush1.bf16.msra.mxu0 0
    %4691 = vmatprep.subr.bf16.mxu0 0
    %4692 = vmatpush1.bf16.msra.mxu0 0
    %4693 = vmatprep.subr.bf16.mxu0 0
    %4694 = vmatpush1.bf16.msra.mxu0 0
    %4695 = vmatprep.subr.bf16.mxu0 0
    %4696 = vmatpush1.bf16.msra.mxu0 0
    %4697 = vmatprep.subr.bf16.mxu0 0
    %4698 = vmatpush1.bf16.msra.mxu0 0
    %4699 = vmatprep.subr.bf16.mxu0 0
    %4700 = vmatpush1.bf16.msra.mxu0 0
    %4701 = vmatprep.subr.bf16.mxu0 0
    %4702 = vmatpush1.bf16.msra.mxu0 0
    %4703 = vmatprep.mubr.bf16.mxu0 0
    %4704 = vmatmul.mubr.bf16.gmra.mrb[0].mxu0 %v4666
    %v4705 = vpop.f32.mrb[0].mxu0
    %v4706 = vadd.f32 0.0, %v4705
    %v4707 = vpop.f32.mrb[0].mxu0
    %v4708 = vpop.f32.mrb[0].mxu0
    %v4709 = vadd.f32 0.0, %v4708
    %v4710 = vpop.f32.mrb[0].mxu0
    %4711 = vmatprep.mubr.bf16.mxu0 0
    %4712 = vmatmul.mubr.bf16.gmra.mrb[0].mxu0 %v4669
    %v4713 = vpop.f32.mrb[0].mxu0
    %v4714 = vadd.f32 0.0, %v4713
    %v4715 = vpop.f32.mrb[0].mxu0
    %v4716 = vpop.f32.mrb[0].mxu0
    %v4717 = vadd.f32 0.0, %v4716
    %v4718 = vpop.f32.mrb[0].mxu0
    %4719 = vdwg.mxu0
    %v4720 = vpack.c.bf16 %v4709, %v4706
    %v4721 = vpack.c.bf16 %v4717, %v4714
    %s4722 = sshll.u32 %s534, 4
    %4723 = dma.done %s273, %s4722
    %v4724 = vld [vmem:[%s272] sm:$0xff]
    %v4725 = vld [vmem:[%s272 + $0x8] sm:$0xff]
    %v4726 = vld [vmem:[%s272 + $0x10] sm:$0xff]
    %v4727 = vld [vmem:[%s272 + $0x18] sm:$0xff]
    %v4728 = vld [vmem:[%s272 + $0x20] sm:$0xff]
    %v4729 = vld [vmem:[%s272 + $0x28] sm:$0xff]
    %v4730 = vld [vmem:[%s272 + $0x30] sm:$0xff]
    %v4731 = vld [vmem:[%s272 + $0x38] sm:$0xff]
    %v4732 = vld [vmem:[%s272 + $0x40] sm:$0xff]
    %v4733 = vld [vmem:[%s272 + $0x48] sm:$0xff]
    %v4734 = vld [vmem:[%s272 + $0x50] sm:$0xff]
    %v4735 = vld [vmem:[%s272 + $0x58] sm:$0xff]
    %v4736 = vld [vmem:[%s272 + $0x60] sm:$0xff]
    %v4737 = vld [vmem:[%s272 + $0x68] sm:$0xff]
    %v4738 = vld [vmem:[%s272 + $0x70] sm:$0xff]
    %v4739 = vld [vmem:[%s272 + $0x78] sm:$0xff]
    %v4740 = vld [vmem:[%s272 + $0x80] sm:$0xff]
    %v4741 = vld [vmem:[%s272 + $0x88] sm:$0xff]
    %v4742 = vld [vmem:[%s272 + $0x90] sm:$0xff]
    %v4743 = vld [vmem:[%s272 + $0x98] sm:$0xff]
    %v4744 = vld [vmem:[%s272 + $0xa0] sm:$0xff]
    %v4745 = vld [vmem:[%s272 + $0xa8] sm:$0xff]
    %v4746 = vld [vmem:[%s272 + $0xb0] sm:$0xff]
    %v4747 = vld [vmem:[%s272 + $0xb8] sm:$0xff]
    %4748 = vmatprep.subr.bf16.mxu0 0
    %4749 = vmatpush1.bf16.msra.mxu0 %v4724
    %4750 = vmatprep.subr.bf16.mxu0 0
    %4751 = vmatpush1.bf16.msra.mxu0 %v4725
    %4752 = vmatprep.subr.bf16.mxu0 0
    %4753 = vmatpush1.bf16.msra.mxu0 %v4726
    %4754 = vmatprep.subr.bf16.mxu0 0
    %4755 = vmatpush1.bf16.msra.mxu0 %v4727
    %4756 = vmatprep.subr.bf16.mxu0 0
    %4757 = vmatpush1.bf16.msra.mxu0 %v4728
    %4758 = vmatprep.subr.bf16.mxu0 0
    %4759 = vmatpush1.bf16.msra.mxu0 %v4729
    %4760 = vmatprep.subr.bf16.mxu0 0
    %4761 = vmatpush1.bf16.msra.mxu0 %v4730
    %4762 = vmatprep.subr.bf16.mxu0 0
    %4763 = vmatpush1.bf16.msra.mxu0 %v4731
    %4764 = vmatprep.subr.bf16.mxu0 0
    %4765 = vmatpush1.bf16.msra.mxu0 %v4732
    %4766 = vmatprep.subr.bf16.mxu0 0
    %4767 = vmatpush1.bf16.msra.mxu0 %v4733
    %4768 = vmatprep.subr.bf16.mxu0 0
    %4769 = vmatpush1.bf16.msra.mxu0 %v4734
    %4770 = vmatprep.subr.bf16.mxu0 0
    %4771 = vmatpush1.bf16.msra.mxu0 %v4735
    %4772 = vmatprep.subr.bf16.mxu0 0
    %4773 = vmatpush1.bf16.msra.mxu0 %v4736
    %4774 = vmatprep.subr.bf16.mxu0 0
    %4775 = vmatpush1.bf16.msra.mxu0 %v4737
    %4776 = vmatprep.subr.bf16.mxu0 0
    %4777 = vmatpush1.bf16.msra.mxu0 %v4738
    %4778 = vmatprep.subr.bf16.mxu0 0
    %4779 = vmatpush1.bf16.msra.mxu0 %v4739
    %4780 = vmatprep.mubr.bf16.mxu0 %v4576
    %4781 = vmatmul.mubr.bf16.gmra.mrb[0].mxu0 %v4648
    %v4782 = vpop.f32.mrb[0].mxu0
    %v4783 = vadd.f32 0.0, %v4782
    %v4784 = vpop.f32.mrb[0].mxu0
    %v4785 = vpop.f32.mrb[0].mxu0
    %v4786 = vadd.f32 0.0, %v4785
    %v4787 = vpop.f32.mrb[0].mxu0
    %4788 = vmatprep.mubr.bf16.mxu0 %v4577
    %4789 = vmatmul.mubr.bf16.gmra.mrb[0].mxu0 %v4649
    %v4790 = vpop.f32.mrb[0].mxu0
    %v4791 = vadd.f32 0.0, %v4790
    %v4792 = vpop.f32.mrb[0].mxu0
    %v4793 = vpop.f32.mrb[0].mxu0
    %v4794 = vadd.f32 0.0, %v4793
    %v4795 = vpop.f32.mrb[0].mxu0
    %4796 = vdwg.mxu0
    %4797 = vmatprep.subr.bf16.mxu0 0
    %4798 = vmatpush1.bf16.msra.mxu0 %v4740
    %4799 = vmatprep.subr.bf16.mxu0 0
    %4800 = vmatpush1.bf16.msra.mxu0 %v4741
    %4801 = vmatprep.subr.bf16.mxu0 0
    %4802 = vmatpush1.bf16.msra.mxu0 %v4742
    %4803 = vmatprep.subr.bf16.mxu0 0
    %4804 = vmatpush1.bf16.msra.mxu0 %v4743
    %4805 = vmatprep.subr.bf16.mxu0 0
    %4806 = vmatpush1.bf16.msra.mxu0 %v4744
    %4807 = vmatprep.subr.bf16.mxu0 0
    %4808 = vmatpush1.bf16.msra.mxu0 %v4745
    %4809 = vmatprep.subr.bf16.mxu0 0
    %4810 = vmatpush1.bf16.msra.mxu0 %v4746
    %4811 = vmatprep.subr.bf16.mxu0 0
    %4812 = vmatpush1.bf16.msra.mxu0 %v4747
    %4813 = vmatprep.subr.bf16.mxu0 0
    %4814 = vmatpush1.bf16.msra.mxu0 0
    %4815 = vmatprep.subr.bf16.mxu0 0
    %4816 = vmatpush1.bf16.msra.mxu0 0
    %4817 = vmatprep.subr.bf16.mxu0 0
    %4818 = vmatpush1.bf16.msra.mxu0 0
    %4819 = vmatprep.subr.bf16.mxu0 0
    %4820 = vmatpush1.bf16.msra.mxu0 0
    %4821 = vmatprep.subr.bf16.mxu0 0
    %4822 = vmatpush1.bf16.msra.mxu0 0
    %4823 = vmatprep.subr.bf16.mxu0 0
    %4824 = vmatpush1.bf16.msra.mxu0 0
    %4825 = vmatprep.subr.bf16.mxu0 0
    %4826 = vmatpush1.bf16.msra.mxu0 0
    %4827 = vmatprep.subr.bf16.mxu0 0
    %4828 = vmatpush1.bf16.msra.mxu0 0
    %4829 = vmatprep.mubr.bf16.mxu0 0
    %4830 = vmatmul.mubr.bf16.gmra.mrb[0].mxu0 %v4720
    %v4831 = vpop.f32.mrb[0].mxu0
    %v4832 = vadd.f32 %v4783, %v4831
    %v4833 = vpop.f32.mrb[0].mxu0
    %v4834 = vpop.f32.mrb[0].mxu0
    %v4835 = vadd.f32 %v4786, %v4834
    %v4836 = vpop.f32.mrb[0].mxu0
    %4837 = vmatprep.mubr.bf16.mxu0 0
    %4838 = vmatmul.mubr.bf16.gmra.mrb[0].mxu0 %v4721
    %v4839 = vpop.f32.mrb[0].mxu0
    %v4840 = vadd.f32 %v4791, %v4839
    %v4841 = vpop.f32.mrb[0].mxu0
    %v4842 = vpop.f32.mrb[0].mxu0
    %v4843 = vadd.f32 %v4794, %v4842
    %v4844 = vpop.f32.mrb[0].mxu0
    %4845 = vdwg.mxu0
    %v4846 = vadd.f32 %v4832, %v4835
    %v4847 = vadd.f32 %v4846, %v4840
    %v4848 = vadd.f32 %v4847, %v4843
    %v4849 = vrot.slane %v4848, 4
    %v4850 = vadd.f32 %v4848, %v4849
    %v4851 = vrot.slane %v4850, 2
    %v4852 = vadd.f32 %v4850, %v4851
    %v4853 = vrot.slane %v4852, 1
    %v4854 = vadd.f32 %v4852, %v4853
    %v4855 = vmul.f32 %v4832, %v4832
    %v4856 = vmul.f32 %v4835, %v4835
    %v4857 = vmul.f32 %v4840, %v4840
    %v4858 = vmul.f32 %v4843, %v4843
    %v4859 = vadd.f32 %v4855, %v4856
    %v4860 = vadd.f32 %v4859, %v4857
    %v4861 = vadd.f32 %v4860, %v4858
    %v4862 = vrot.slane %v4861, 4
    %v4863 = vadd.f32 %v4861, %v4862
    %v4864 = vrot.slane %v4863, 2
    %v4865 = vadd.f32 %v4863, %v4864
    %v4866 = vrot.slane %v4865, 1
    %v4867 = vadd.f32 %v4865, %v4866
    %v4868 = vmul.f32 %v4854, 0.25
    %v4869 = vmul.f32 %v4867, 0.25
    %v4870 = vmul.f32 %v4868, %v4868
    %v4871 = vsub.f32 %v4869, %v4870
    %v4872 = vmax.f32 %v4871, 0.0
    %s4873 = scalar_lea.vmem [#allocation7], 13
    %v4874 = vld [vmem:[%s4873] sm:$0x1]
    %v4875 = vadd.f32 %v4872, 1e-05
    %v4876 = vrsqrt.pop %v4875
    %v4877 = vmul.f32 %v4874, %v4876
    %s4878 = scalar_lea.vmem [#allocation9], 13
    %v4879 = vld [vmem:[%s4878] sm:$0x1]
    %v4880 = vmul.f32 %v4868, %v4877
    %v4881 = vsub.f32 %v4879, %v4880
    %v4883 = vlaneseq
    %v4884 = vshrl.u32 %v4883, 7
    %v4885 = vsub.s32 0, %v4884
    %v4886 = vrot.slane %v4877, %v4885
    %v4888 = vmul.f32 %v4832, %v4886
    %v4889 = vmul.f32 %v4835, %v4886
    %v4890 = vmul.f32 %v4840, %v4886
    %v4891 = vmul.f32 %v4843, %v4886
    %v4893 = vlaneseq
    %v4894 = vshrl.u32 %v4893, 7
    %v4895 = vsub.s32 0, %v4894
    %v4896 = vrot.slane %v4881, %v4895
    %v4898 = vadd.f32 %v4888, %v4896
    %v4899 = vadd.f32 %v4889, %v4896
    %v4900 = vadd.f32 %v4890, %v4896
    %v4901 = vadd.f32 %v4891, %v4896
    %v4902 = vadd.f32 %v4898, %v4572
    %v4903 = vadd.f32 %v4899, %v4573
    %v4904 = vadd.f32 %v4900, %v4574
    %v4905 = vadd.f32 %v4901, %v4575
    %v4906 = vmax.f32 %v4902, 0.0
    %v4907 = vmax.f32 %v4903, 0.0
    %v4908 = vmax.f32 %v4904, 0.0
    %v4909 = vmax.f32 %v4905, 0.0
    %v4910 = vsel %vm4384, %v4906, 0.0
    %v4911 = vsel %vm4385, %v4907, 0.0
    %v4912 = vsel %vm4386, %v4908, 0.0
    %v4913 = vsel %vm4387, %v4909, 0.0
    %v4914 = vpack.c.bf16 %v4911, %v4910
    %v4915 = vpack.c.bf16 %v4913, %v4912
    %s4916 = scalar_lea.vmem %s1, 400
    %v4917 = vld [vmem:[%s4916] sm:$0xf]
    %v4918 = vld [vmem:[%s4916 + $0x4] sm:$0xf]
    %v4919 = vld [vmem:[%s4916 + $0x8] sm:$0xf]
    %v4920 = vld [vmem:[%s4916 + $0xc] sm:$0xf]
    %v4925 = vunpack.c.l.b16 %v4917
    %v4926 = vunpack.c.l.b16 %v4918
    %v4927 = vunpack.c.l.b16 %v4919
    %v4928 = vunpack.c.l.b16 %v4920
    %v4929 = vpack.c.b16 %v4926, %v4925
    %v4930 = vpack.c.b16 %v4928, %v4927
    %v4932 = vsel %vm403, %v4929, 0
    %v4935 = vsel %vm403, %v4930, 0
    %4937 = vmatprep.subr.bf16.mxu0 0
    %4938 = vmatpush1.bf16.msra.mxu0 %v4914
    %4939 = vmatprep.subr.bf16.mxu0 0
    %4940 = vmatpush1.bf16.msra.mxu0 %v4915
    %4941 = vmatprep.subr.bf16.mxu0 0
    %4942 = vmatpush1.bf16.msra.mxu0 0
    %4943 = vmatprep.subr.bf16.mxu0 0
    %4944 = vmatpush1.bf16.msra.mxu0 0
    %4945 = vmatprep.subr.bf16.mxu0 0
    %4946 = vmatpush1.bf16.msra.mxu0 0
    %4947 = vmatprep.subr.bf16.mxu0 0
    %4948 = vmatpush1.bf16.msra.mxu0 0
    %4949 = vmatprep.subr.bf16.mxu0 0
    %4950 = vmatpush1.bf16.msra.mxu0 0
    %4951 = vmatprep.subr.bf16.mxu0 0
    %4952 = vmatpush1.bf16.msra.mxu0 0
    %4953 = vmatprep.subr.bf16.mxu0 0
    %4954 = vmatpush1.bf16.msra.mxu0 0
    %4955 = vmatprep.subr.bf16.mxu0 0
    %4956 = vmatpush1.bf16.msra.mxu0 0
    %4957 = vmatprep.subr.bf16.mxu0 0
    %4958 = vmatpush1.bf16.msra.mxu0 0
    %4959 = vmatprep.subr.bf16.mxu0 0
    %4960 = vmatpush1.bf16.msra.mxu0 0
    %4961 = vmatprep.subr.bf16.mxu0 0
    %4962 = vmatpush1.bf16.msra.mxu0 0
    %4963 = vmatprep.subr.bf16.mxu0 0
    %4964 = vmatpush1.bf16.msra.mxu0 0
    %4965 = vmatprep.subr.bf16.mxu0 0
    %4966 = vmatpush1.bf16.msra.mxu0 0
    %4967 = vmatprep.subr.bf16.mxu0 0
    %4968 = vmatpush1.bf16.msra.mxu0 0
    %4969 = vmatprep.mubr.bf16.mxu0 0
    %4970 = vmatmul.mubr.bf16.gmra.mrb[0].mxu0 %v4932
    %v4971 = vpop.f32.mrb[0].mxu0
    %v4972 = vadd.f32 0.0, %v4971
    %v4973 = vpop.f32.mrb[0].mxu0
    %v4974 = vpop.f32.mrb[0].mxu0
    %v4975 = vadd.f32 0.0, %v4974
    %v4976 = vpop.f32.mrb[0].mxu0
    %4977 = vmatprep.mubr.bf16.mxu0 0
    %4978 = vmatmul.mubr.bf16.gmra.mrb[0].mxu0 %v4935
    %v4979 = vpop.f32.mrb[0].mxu0
    %v4980 = vadd.f32 0.0, %v4979
    %v4981 = vpop.f32.mrb[0].mxu0
    %v4982 = vpop.f32.mrb[0].mxu0
    %v4983 = vadd.f32 0.0, %v4982
    %v4984 = vpop.f32.mrb[0].mxu0
    %4985 = vdwg.mxu0
    %v4986 = vpack.c.bf16 %v4975, %v4972
    %v4987 = vpack.c.bf16 %v4983, %v4980
    %s4988 = scalar_lea.vmem %s1, 416
    %v4989 = vld [vmem:[%s4988] sm:$0xf]
    %v4990 = vld [vmem:[%s4988 + $0x4] sm:$0xf]
    %v4991 = vld [vmem:[%s4988 + $0x8] sm:$0xf]
    %v4992 = vld [vmem:[%s4988 + $0xc] sm:$0xf]
    %v4997 = vunpack.c.l.b16 %v4989
    %v4998 = vunpack.c.l.b16 %v4990
    %v4999 = vunpack.c.l.b16 %v4991
    %v5000 = vunpack.c.l.b16 %v4992
    %v5001 = vpack.c.b16 %v4998, %v4997
    %v5002 = vpack.c.b16 %v5000, %v4999
    %v5004 = vsel %vm403, %v5001, 0
    %v5007 = vsel %vm403, %v5002, 0
    %5009 = vmatprep.subr.bf16.mxu0 0
    %5010 = vmatpush1.bf16.msra.mxu0 %v4914
    %5011 = vmatprep.subr.bf16.mxu0 0
    %5012 = vmatpush1.bf16.msra.mxu0 %v4915
    %5013 = vmatprep.subr.bf16.mxu0 0
    %5014 = vmatpush1.bf16.msra.mxu0 0
    %5015 = vmatprep.subr.bf16.mxu0 0
    %5016 = vmatpush1.bf16.msra.mxu0 0
    %5017 = vmatprep.subr.bf16.mxu0 0
    %5018 = vmatpush1.bf16.msra.mxu0 0
    %5019 = vmatprep.subr.bf16.mxu0 0
    %5020 = vmatpush1.bf16.msra.mxu0 0
    %5021 = vmatprep.subr.bf16.mxu0 0
    %5022 = vmatpush1.bf16.msra.mxu0 0
    %5023 = vmatprep.subr.bf16.mxu0 0
    %5024 = vmatpush1.bf16.msra.mxu0 0
    %5025 = vmatprep.subr.bf16.mxu0 0
    %5026 = vmatpush1.bf16.msra.mxu0 0
    %5027 = vmatprep.subr.bf16.mxu0 0
    %5028 = vmatpush1.bf16.msra.mxu0 0
    %5029 = vmatprep.subr.bf16.mxu0 0
    %5030 = vmatpush1.bf16.msra.mxu0 0
    %5031 = vmatprep.subr.bf16.mxu0 0
    %5032 = vmatpush1.bf16.msra.mxu0 0
    %5033 = vmatprep.subr.bf16.mxu0 0
    %5034 = vmatpush1.bf16.msra.mxu0 0
    %5035 = vmatprep.subr.bf16.mxu0 0
    %5036 = vmatpush1.bf16.msra.mxu0 0
    %5037 = vmatprep.subr.bf16.mxu0 0
    %5038 = vmatpush1.bf16.msra.mxu0 0
    %5039 = vmatprep.subr.bf16.mxu0 0
    %5040 = vmatpush1.bf16.msra.mxu0 0
    %5041 = vmatprep.mubr.bf16.mxu0 0
    %5042 = vmatmul.mubr.bf16.gmra.mrb[0].mxu0 %v5004
    %v5043 = vpop.f32.mrb[0].mxu0
    %v5044 = vadd.f32 0.0, %v5043
    %v5045 = vpop.f32.mrb[0].mxu0
    %v5046 = vpop.f32.mrb[0].mxu0
    %v5047 = vadd.f32 0.0, %v5046
    %v5048 = vpop.f32.mrb[0].mxu0
    %5049 = vmatprep.mubr.bf16.mxu0 0
    %5050 = vmatmul.mubr.bf16.gmra.mrb[0].mxu0 %v5007
    %v5051 = vpop.f32.mrb[0].mxu0
    %v5052 = vadd.f32 0.0, %v5051
    %v5053 = vpop.f32.mrb[0].mxu0
    %v5054 = vpop.f32.mrb[0].mxu0
    %v5055 = vadd.f32 0.0, %v5054
    %v5056 = vpop.f32.mrb[0].mxu0
    %5057 = vdwg.mxu0
    %v5058 = vpack.c.bf16 %v5047, %v5044
    %v5059 = vpack.c.bf16 %v5055, %v5052
    %s5060 = sshll.u32 %s534, 4
    %5061 = dma.done %s287, %s5060
    %v5062 = vld [vmem:[%s286] sm:$0xff]
    %v5063 = vld [vmem:[%s286 + $0x8] sm:$0xff]
    %v5064 = vld [vmem:[%s286 + $0x10] sm:$0xff]
    %v5065 = vld [vmem:[%s286 + $0x18] sm:$0xff]
    %v5066 = vld [vmem:[%s286 + $0x20] sm:$0xff]
    %v5067 = vld [vmem:[%s286 + $0x28] sm:$0xff]
    %v5068 = vld [vmem:[%s286 + $0x30] sm:$0xff]
    %v5069 = vld [vmem:[%s286 + $0x38] sm:$0xff]
    %v5070 = vld [vmem:[%s286 + $0x40] sm:$0xff]
    %v5071 = vld [vmem:[%s286 + $0x48] sm:$0xff]
    %v5072 = vld [vmem:[%s286 + $0x50] sm:$0xff]
    %v5073 = vld [vmem:[%s286 + $0x58] sm:$0xff]
    %v5074 = vld [vmem:[%s286 + $0x60] sm:$0xff]
    %v5075 = vld [vmem:[%s286 + $0x68] sm:$0xff]
    %v5076 = vld [vmem:[%s286 + $0x70] sm:$0xff]
    %v5077 = vld [vmem:[%s286 + $0x78] sm:$0xff]
    %v5078 = vld [vmem:[%s286 + $0x80] sm:$0xff]
    %v5079 = vld [vmem:[%s286 + $0x88] sm:$0xff]
    %v5080 = vld [vmem:[%s286 + $0x90] sm:$0xff]
    %v5081 = vld [vmem:[%s286 + $0x98] sm:$0xff]
    %v5082 = vld [vmem:[%s286 + $0xa0] sm:$0xff]
    %v5083 = vld [vmem:[%s286 + $0xa8] sm:$0xff]
    %v5084 = vld [vmem:[%s286 + $0xb0] sm:$0xff]
    %v5085 = vld [vmem:[%s286 + $0xb8] sm:$0xff]
    %5086 = vmatprep.subr.bf16.mxu0 0
    %5087 = vmatpush1.bf16.msra.mxu0 %v5062
    %5088 = vmatprep.subr.bf16.mxu0 0
    %5089 = vmatpush1.bf16.msra.mxu0 %v5063
    %5090 = vmatprep.subr.bf16.mxu0 0
    %5091 = vmatpush1.bf16.msra.mxu0 %v5064
    %5092 = vmatprep.subr.bf16.mxu0 0
    %5093 = vmatpush1.bf16.msra.mxu0 %v5065
    %5094 = vmatprep.subr.bf16.mxu0 0
    %5095 = vmatpush1.bf16.msra.mxu0 %v5066
    %5096 = vmatprep.subr.bf16.mxu0 0
    %5097 = vmatpush1.bf16.msra.mxu0 %v5067
    %5098 = vmatprep.subr.bf16.mxu0 0
    %5099 = vmatpush1.bf16.msra.mxu0 %v5068
    %5100 = vmatprep.subr.bf16.mxu0 0
    %5101 = vmatpush1.bf16.msra.mxu0 %v5069
    %5102 = vmatprep.subr.bf16.mxu0 0
    %5103 = vmatpush1.bf16.msra.mxu0 %v5070
    %5104 = vmatprep.subr.bf16.mxu0 0
    %5105 = vmatpush1.bf16.msra.mxu0 %v5071
    %5106 = vmatprep.subr.bf16.mxu0 0
    %5107 = vmatpush1.bf16.msra.mxu0 %v5072
    %5108 = vmatprep.subr.bf16.mxu0 0
    %5109 = vmatpush1.bf16.msra.mxu0 %v5073
    %5110 = vmatprep.subr.bf16.mxu0 0
    %5111 = vmatpush1.bf16.msra.mxu0 %v5074
    %5112 = vmatprep.subr.bf16.mxu0 0
    %5113 = vmatpush1.bf16.msra.mxu0 %v5075
    %5114 = vmatprep.subr.bf16.mxu0 0
    %5115 = vmatpush1.bf16.msra.mxu0 %v5076
    %5116 = vmatprep.subr.bf16.mxu0 0
    %5117 = vmatpush1.bf16.msra.mxu0 %v5077
    %5118 = vmatprep.mubr.bf16.mxu0 %v4914
    %5119 = vmatmul.mubr.bf16.gmra.mrb[0].mxu0 %v4986
    %v5120 = vpop.f32.mrb[0].mxu0
    %v5121 = vadd.f32 0.0, %v5120
    %v5122 = vpop.f32.mrb[0].mxu0
    %v5123 = vpop.f32.mrb[0].mxu0
    %v5124 = vadd.f32 0.0, %v5123
    %v5125 = vpop.f32.mrb[0].mxu0
    %5126 = vmatprep.mubr.bf16.mxu0 %v4915
    %5127 = vmatmul.mubr.bf16.gmra.mrb[0].mxu0 %v4987
    %v5128 = vpop.f32.mrb[0].mxu0
    %v5129 = vadd.f32 0.0, %v5128
    %v5130 = vpop.f32.mrb[0].mxu0
    %v5131 = vpop.f32.mrb[0].mxu0
    %v5132 = vadd.f32 0.0, %v5131
    %v5133 = vpop.f32.mrb[0].mxu0
    %5134 = vdwg.mxu0
    %5135 = vmatprep.subr.bf16.mxu0 0
    %5136 = vmatpush1.bf16.msra.mxu0 %v5078
    %5137 = vmatprep.subr.bf16.mxu0 0
    %5138 = vmatpush1.bf16.msra.mxu0 %v5079
    %5139 = vmatprep.subr.bf16.mxu0 0
    %5140 = vmatpush1.bf16.msra.mxu0 %v5080
    %5141 = vmatprep.subr.bf16.mxu0 0
    %5142 = vmatpush1.bf16.msra.mxu0 %v5081
    %5143 = vmatprep.subr.bf16.mxu0 0
    %5144 = vmatpush1.bf16.msra.mxu0 %v5082
    %5145 = vmatprep.subr.bf16.mxu0 0
    %5146 = vmatpush1.bf16.msra.mxu0 %v5083
    %5147 = vmatprep.subr.bf16.mxu0 0
    %5148 = vmatpush1.bf16.msra.mxu0 %v5084
    %5149 = vmatprep.subr.bf16.mxu0 0
    %5150 = vmatpush1.bf16.msra.mxu0 %v5085
    %5151 = vmatprep.subr.bf16.mxu0 0
    %5152 = vmatpush1.bf16.msra.mxu0 0
    %5153 = vmatprep.subr.bf16.mxu0 0
    %5154 = vmatpush1.bf16.msra.mxu0 0
    %5155 = vmatprep.subr.bf16.mxu0 0
    %5156 = vmatpush1.bf16.msra.mxu0 0
    %5157 = vmatprep.subr.bf16.mxu0 0
    %5158 = vmatpush1.bf16.msra.mxu0 0
    %5159 = vmatprep.subr.bf16.mxu0 0
    %5160 = vmatpush1.bf16.msra.mxu0 0
    %5161 = vmatprep.subr.bf16.mxu0 0
    %5162 = vmatpush1.bf16.msra.mxu0 0
    %5163 = vmatprep.subr.bf16.mxu0 0
    %5164 = vmatpush1.bf16.msra.mxu0 0
    %5165 = vmatprep.subr.bf16.mxu0 0
    %5166 = vmatpush1.bf16.msra.mxu0 0
    %5167 = vmatprep.mubr.bf16.mxu0 0
    %5168 = vmatmul.mubr.bf16.gmra.mrb[0].mxu0 %v5058
    %v5169 = vpop.f32.mrb[0].mxu0
    %v5170 = vadd.f32 %v5121, %v5169
    %v5171 = vpop.f32.mrb[0].mxu0
    %v5172 = vpop.f32.mrb[0].mxu0
    %v5173 = vadd.f32 %v5124, %v5172
    %v5174 = vpop.f32.mrb[0].mxu0
    %5175 = vmatprep.mubr.bf16.mxu0 0
    %5176 = vmatmul.mubr.bf16.gmra.mrb[0].mxu0 %v5059
    %v5177 = vpop.f32.mrb[0].mxu0
    %v5178 = vadd.f32 %v5129, %v5177
    %v5179 = vpop.f32.mrb[0].mxu0
    %v5180 = vpop.f32.mrb[0].mxu0
    %v5181 = vadd.f32 %v5132, %v5180
    %v5182 = vpop.f32.mrb[0].mxu0
    %5183 = vdwg.mxu0
    %v5184 = vadd.f32 %v5170, %v5173
    %v5185 = vadd.f32 %v5184, %v5178
    %v5186 = vadd.f32 %v5185, %v5181
    %v5187 = vrot.slane %v5186, 4
    %v5188 = vadd.f32 %v5186, %v5187
    %v5189 = vrot.slane %v5188, 2
    %v5190 = vadd.f32 %v5188, %v5189
    %v5191 = vrot.slane %v5190, 1
    %v5192 = vadd.f32 %v5190, %v5191
    %v5193 = vmul.f32 %v5170, %v5170
    %v5194 = vmul.f32 %v5173, %v5173
    %v5195 = vmul.f32 %v5178, %v5178
    %v5196 = vmul.f32 %v5181, %v5181
    %v5197 = vadd.f32 %v5193, %v5194
    %v5198 = vadd.f32 %v5197, %v5195
    %v5199 = vadd.f32 %v5198, %v5196
    %v5200 = vrot.slane %v5199, 4
    %v5201 = vadd.f32 %v5199, %v5200
    %v5202 = vrot.slane %v5201, 2
    %v5203 = vadd.f32 %v5201, %v5202
    %v5204 = vrot.slane %v5203, 1
    %v5205 = vadd.f32 %v5203, %v5204
    %v5206 = vmul.f32 %v5192, 0.25
    %v5207 = vmul.f32 %v5205, 0.25
    %v5208 = vmul.f32 %v5206, %v5206
    %v5209 = vsub.f32 %v5207, %v5208
    %v5210 = vmax.f32 %v5209, 0.0
    %s5211 = scalar_lea.vmem [#allocation7], 14
    %v5212 = vld [vmem:[%s5211] sm:$0x1]
    %v5213 = vadd.f32 %v5210, 1e-05
    %v5214 = vrsqrt.pop %v5213
    %v5215 = vmul.f32 %v5212, %v5214
    %s5216 = scalar_lea.vmem [#allocation9], 14
    %v5217 = vld [vmem:[%s5216] sm:$0x1]
    %v5218 = vmul.f32 %v5206, %v5215
    %v5219 = vsub.f32 %v5217, %v5218
    %v5221 = vlaneseq
    %v5222 = vshrl.u32 %v5221, 7
    %v5223 = vsub.s32 0, %v5222
    %v5224 = vrot.slane %v5215, %v5223
    %v5226 = vmul.f32 %v5170, %v5224
    %v5227 = vmul.f32 %v5173, %v5224
    %v5228 = vmul.f32 %v5178, %v5224
    %v5229 = vmul.f32 %v5181, %v5224
    %v5231 = vlaneseq
    %v5232 = vshrl.u32 %v5231, 7
    %v5233 = vsub.s32 0, %v5232
    %v5234 = vrot.slane %v5219, %v5233
    %v5236 = vadd.f32 %v5226, %v5234
    %v5237 = vadd.f32 %v5227, %v5234
    %v5238 = vadd.f32 %v5228, %v5234
    %v5239 = vadd.f32 %v5229, %v5234
    %v5240 = vmax.f32 %v5236, 0.0
    %v5241 = vmax.f32 %v5237, 0.0
    %v5242 = vmax.f32 %v5238, 0.0
    %v5243 = vmax.f32 %v5239, 0.0
    %v5244 = vsel %vm4384, %v5240, 0.0
    %v5245 = vsel %vm4385, %v5241, 0.0
    %v5246 = vsel %vm4386, %v5242, 0.0
    %v5247 = vsel %vm4387, %v5243, 0.0
    %v5248 = vpack.c.bf16 %v5245, %v5244
    %v5249 = vpack.c.bf16 %v5247, %v5246
    %s5250 = scalar_lea.vmem %s1, 432
    %v5251 = vld [vmem:[%s5250] sm:$0xf]
    %v5252 = vld [vmem:[%s5250 + $0x4] sm:$0xf]
    %v5253 = vld [vmem:[%s5250 + $0x8] sm:$0xf]
    %v5254 = vld [vmem:[%s5250 + $0xc] sm:$0xf]
    %v5259 = vunpack.c.l.b16 %v5251
    %v5260 = vunpack.c.l.b16 %v5252
    %v5261 = vunpack.c.l.b16 %v5253
    %v5262 = vunpack.c.l.b16 %v5254
    %v5263 = vpack.c.b16 %v5260, %v5259
    %v5264 = vpack.c.b16 %v5262, %v5261
    %v5266 = vsel %vm403, %v5263, 0
    %v5269 = vsel %vm403, %v5264, 0
    %5271 = vmatprep.subr.bf16.mxu0 0
    %5272 = vmatpush1.bf16.msra.mxu0 %v5248
    %5273 = vmatprep.subr.bf16.mxu0 0
    %5274 = vmatpush1.bf16.msra.mxu0 %v5249
    %5275 = vmatprep.subr.bf16.mxu0 0
    %5276 = vmatpush1.bf16.msra.mxu0 0
    %5277 = vmatprep.subr.bf16.mxu0 0
    %5278 = vmatpush1.bf16.msra.mxu0 0
    %5279 = vmatprep.subr.bf16.mxu0 0
    %5280 = vmatpush1.bf16.msra.mxu0 0
    %5281 = vmatprep.subr.bf16.mxu0 0
    %5282 = vmatpush1.bf16.msra.mxu0 0
    %5283 = vmatprep.subr.bf16.mxu0 0
    %5284 = vmatpush1.bf16.msra.mxu0 0
    %5285 = vmatprep.subr.bf16.mxu0 0
    %5286 = vmatpush1.bf16.msra.mxu0 0
    %5287 = vmatprep.subr.bf16.mxu0 0
    %5288 = vmatpush1.bf16.msra.mxu0 0
    %5289 = vmatprep.subr.bf16.mxu0 0
    %5290 = vmatpush1.bf16.msra.mxu0 0
    %5291 = vmatprep.subr.bf16.mxu0 0
    %5292 = vmatpush1.bf16.msra.mxu0 0
    %5293 = vmatprep.subr.bf16.mxu0 0
    %5294 = vmatpush1.bf16.msra.mxu0 0
    %5295 = vmatprep.subr.bf16.mxu0 0
    %5296 = vmatpush1.bf16.msra.mxu0 0
    %5297 = vmatprep.subr.bf16.mxu0 0
    %5298 = vmatpush1.bf16.msra.mxu0 0
    %5299 = vmatprep.subr.bf16.mxu0 0
    %5300 = vmatpush1.bf16.msra.mxu0 0
    %5301 = vmatprep.subr.bf16.mxu0 0
    %5302 = vmatpush1.bf16.msra.mxu0 0
    %5303 = vmatprep.mubr.bf16.mxu0 0
    %5304 = vmatmul.mubr.bf16.gmra.mrb[0].mxu0 %v5266
    %v5305 = vpop.f32.mrb[0].mxu0
    %v5306 = vadd.f32 0.0, %v5305
    %v5307 = vpop.f32.mrb[0].mxu0
    %v5308 = vpop.f32.mrb[0].mxu0
    %v5309 = vadd.f32 0.0, %v5308
    %v5310 = vpop.f32.mrb[0].mxu0
    %5311 = vmatprep.mubr.bf16.mxu0 0
    %5312 = vmatmul.mubr.bf16.gmra.mrb[0].mxu0 %v5269
    %v5313 = vpop.f32.mrb[0].mxu0
    %v5314 = vadd.f32 0.0, %v5313
    %v5315 = vpop.f32.mrb[0].mxu0
    %v5316 = vpop.f32.mrb[0].mxu0
    %v5317 = vadd.f32 0.0, %v5316
    %v5318 = vpop.f32.mrb[0].mxu0
    %5319 = vdwg.mxu0
    %v5320 = vpack.c.bf16 %v5309, %v5306
    %v5321 = vpack.c.bf16 %v5317, %v5314
    %s5322 = scalar_lea.vmem %s1, 448
    %v5323 = vld [vmem:[%s5322] sm:$0xf]
    %v5324 = vld [vmem:[%s5322 + $0x4] sm:$0xf]
    %v5325 = vld [vmem:[%s5322 + $0x8] sm:$0xf]
    %v5326 = vld [vmem:[%s5322 + $0xc] sm:$0xf]
    %v5331 = vunpack.c.l.b16 %v5323
    %v5332 = vunpack.c.l.b16 %v5324
    %v5333 = vunpack.c.l.b16 %v5325
    %v5334 = vunpack.c.l.b16 %v5326
    %v5335 = vpack.c.b16 %v5332, %v5331
    %v5336 = vpack.c.b16 %v5334, %v5333
    %v5338 = vsel %vm403, %v5335, 0
    %v5341 = vsel %vm403, %v5336, 0
    %5343 = vmatprep.subr.bf16.mxu0 0
    %5344 = vmatpush1.bf16.msra.mxu0 %v5248
    %5345 = vmatprep.subr.bf16.mxu0 0
    %5346 = vmatpush1.bf16.msra.mxu0 %v5249
    %5347 = vmatprep.subr.bf16.mxu0 0
    %5348 = vmatpush1.bf16.msra.mxu0 0
    %5349 = vmatprep.subr.bf16.mxu0 0
    %5350 = vmatpush1.bf16.msra.mxu0 0
    %5351 = vmatprep.subr.bf16.mxu0 0
    %5352 = vmatpush1.bf16.msra.mxu0 0
    %5353 = vmatprep.subr.bf16.mxu0 0
    %5354 = vmatpush1.bf16.msra.mxu0 0
    %5355 = vmatprep.subr.bf16.mxu0 0
    %5356 = vmatpush1.bf16.msra.mxu0 0
    %5357 = vmatprep.subr.bf16.mxu0 0
    %5358 = vmatpush1.bf16.msra.mxu0 0
    %5359 = vmatprep.subr.bf16.mxu0 0
    %5360 = vmatpush1.bf16.msra.mxu0 0
    %5361 = vmatprep.subr.bf16.mxu0 0
    %5362 = vmatpush1.bf16.msra.mxu0 0
    %5363 = vmatprep.subr.bf16.mxu0 0
    %5364 = vmatpush1.bf16.msra.mxu0 0
    %5365 = vmatprep.subr.bf16.mxu0 0
    %5366 = vmatpush1.bf16.msra.mxu0 0
    %5367 = vmatprep.subr.bf16.mxu0 0
    %5368 = vmatpush1.bf16.msra.mxu0 0
    %5369 = vmatprep.subr.bf16.mxu0 0
    %5370 = vmatpush1.bf16.msra.mxu0 0
    %5371 = vmatprep.subr.bf16.mxu0 0
    %5372 = vmatpush1.bf16.msra.mxu0 0
    %5373 = vmatprep.subr.bf16.mxu0 0
    %5374 = vmatpush1.bf16.msra.mxu0 0
    %5375 = vmatprep.mubr.bf16.mxu0 0
    %5376 = vmatmul.mubr.bf16.gmra.mrb[0].mxu0 %v5338
    %v5377 = vpop.f32.mrb[0].mxu0
    %v5378 = vadd.f32 0.0, %v5377
    %v5379 = vpop.f32.mrb[0].mxu0
    %v5380 = vpop.f32.mrb[0].mxu0
    %v5381 = vadd.f32 0.0, %v5380
    %v5382 = vpop.f32.mrb[0].mxu0
    %5383 = vmatprep.mubr.bf16.mxu0 0
    %5384 = vmatmul.mubr.bf16.gmra.mrb[0].mxu0 %v5341
    %v5385 = vpop.f32.mrb[0].mxu0
    %v5386 = vadd.f32 0.0, %v5385
    %v5387 = vpop.f32.mrb[0].mxu0
    %v5388 = vpop.f32.mrb[0].mxu0
    %v5389 = vadd.f32 0.0, %v5388
    %v5390 = vpop.f32.mrb[0].mxu0
    %5391 = vdwg.mxu0
    %v5392 = vpack.c.bf16 %v5381, %v5378
    %v5393 = vpack.c.bf16 %v5389, %v5386
    %s5394 = sshll.u32 %s534, 4
    %5395 = dma.done %s301, %s5394
    %v5396 = vld [vmem:[%s300] sm:$0xff]
    %v5397 = vld [vmem:[%s300 + $0x8] sm:$0xff]
    %v5398 = vld [vmem:[%s300 + $0x10] sm:$0xff]
    %v5399 = vld [vmem:[%s300 + $0x18] sm:$0xff]
    %v5400 = vld [vmem:[%s300 + $0x20] sm:$0xff]
    %v5401 = vld [vmem:[%s300 + $0x28] sm:$0xff]
    %v5402 = vld [vmem:[%s300 + $0x30] sm:$0xff]
    %v5403 = vld [vmem:[%s300 + $0x38] sm:$0xff]
    %v5404 = vld [vmem:[%s300 + $0x40] sm:$0xff]
    %v5405 = vld [vmem:[%s300 + $0x48] sm:$0xff]
    %v5406 = vld [vmem:[%s300 + $0x50] sm:$0xff]
    %v5407 = vld [vmem:[%s300 + $0x58] sm:$0xff]
    %v5408 = vld [vmem:[%s300 + $0x60] sm:$0xff]
    %v5409 = vld [vmem:[%s300 + $0x68] sm:$0xff]
    %v5410 = vld [vmem:[%s300 + $0x70] sm:$0xff]
    %v5411 = vld [vmem:[%s300 + $0x78] sm:$0xff]
    %v5412 = vld [vmem:[%s300 + $0x80] sm:$0xff]
    %v5413 = vld [vmem:[%s300 + $0x88] sm:$0xff]
    %v5414 = vld [vmem:[%s300 + $0x90] sm:$0xff]
    %v5415 = vld [vmem:[%s300 + $0x98] sm:$0xff]
    %v5416 = vld [vmem:[%s300 + $0xa0] sm:$0xff]
    %v5417 = vld [vmem:[%s300 + $0xa8] sm:$0xff]
    %v5418 = vld [vmem:[%s300 + $0xb0] sm:$0xff]
    %v5419 = vld [vmem:[%s300 + $0xb8] sm:$0xff]
    %5420 = vmatprep.subr.bf16.mxu0 0
    %5421 = vmatpush1.bf16.msra.mxu0 %v5396
    %5422 = vmatprep.subr.bf16.mxu0 0
    %5423 = vmatpush1.bf16.msra.mxu0 %v5397
    %5424 = vmatprep.subr.bf16.mxu0 0
    %5425 = vmatpush1.bf16.msra.mxu0 %v5398
    %5426 = vmatprep.subr.bf16.mxu0 0
    %5427 = vmatpush1.bf16.msra.mxu0 %v5399
    %5428 = vmatprep.subr.bf16.mxu0 0
    %5429 = vmatpush1.bf16.msra.mxu0 %v5400
    %5430 = vmatprep.subr.bf16.mxu0 0
    %5431 = vmatpush1.bf16.msra.mxu0 %v5401
    %5432 = vmatprep.subr.bf16.mxu0 0
    %5433 = vmatpush1.bf16.msra.mxu0 %v5402
    %5434 = vmatprep.subr.bf16.mxu0 0
    %5435 = vmatpush1.bf16.msra.mxu0 %v5403
    %5436 = vmatprep.subr.bf16.mxu0 0
    %5437 = vmatpush1.bf16.msra.mxu0 %v5404
    %5438 = vmatprep.subr.bf16.mxu0 0
    %5439 = vmatpush1.bf16.msra.mxu0 %v5405
    %5440 = vmatprep.subr.bf16.mxu0 0
    %5441 = vmatpush1.bf16.msra.mxu0 %v5406
    %5442 = vmatprep.subr.bf16.mxu0 0
    %5443 = vmatpush1.bf16.msra.mxu0 %v5407
    %5444 = vmatprep.subr.bf16.mxu0 0
    %5445 = vmatpush1.bf16.msra.mxu0 %v5408
    %5446 = vmatprep.subr.bf16.mxu0 0
    %5447 = vmatpush1.bf16.msra.mxu0 %v5409
    %5448 = vmatprep.subr.bf16.mxu0 0
    %5449 = vmatpush1.bf16.msra.mxu0 %v5410
    %5450 = vmatprep.subr.bf16.mxu0 0
    %5451 = vmatpush1.bf16.msra.mxu0 %v5411
    %5452 = vmatprep.mubr.bf16.mxu0 %v5248
    %5453 = vmatmul.mubr.bf16.gmra.mrb[0].mxu0 %v5320
    %v5454 = vpop.f32.mrb[0].mxu0
    %v5455 = vadd.f32 0.0, %v5454
    %v5456 = vpop.f32.mrb[0].mxu0
    %v5457 = vpop.f32.mrb[0].mxu0
    %v5458 = vadd.f32 0.0, %v5457
    %v5459 = vpop.f32.mrb[0].mxu0
    %5460 = vmatprep.mubr.bf16.mxu0 %v5249
    %5461 = vmatmul.mubr.bf16.gmra.mrb[0].mxu0 %v5321
    %v5462 = vpop.f32.mrb[0].mxu0
    %v5463 = vadd.f32 0.0, %v5462
    %v5464 = vpop.f32.mrb[0].mxu0
    %v5465 = vpop.f32.mrb[0].mxu0
    %v5466 = vadd.f32 0.0, %v5465
    %v5467 = vpop.f32.mrb[0].mxu0
    %5468 = vdwg.mxu0
    %5469 = vmatprep.subr.bf16.mxu0 0
    %5470 = vmatpush1.bf16.msra.mxu0 %v5412
    %5471 = vmatprep.subr.bf16.mxu0 0
    %5472 = vmatpush1.bf16.msra.mxu0 %v5413
    %5473 = vmatprep.subr.bf16.mxu0 0
    %5474 = vmatpush1.bf16.msra.mxu0 %v5414
    %5475 = vmatprep.subr.bf16.mxu0 0
    %5476 = vmatpush1.bf16.msra.mxu0 %v5415
    %5477 = vmatprep.subr.bf16.mxu0 0
    %5478 = vmatpush1.bf16.msra.mxu0 %v5416
    %5479 = vmatprep.subr.bf16.mxu0 0
    %5480 = vmatpush1.bf16.msra.mxu0 %v5417
    %5481 = vmatprep.subr.bf16.mxu0 0
    %5482 = vmatpush1.bf16.msra.mxu0 %v5418
    %5483 = vmatprep.subr.bf16.mxu0 0
    %5484 = vmatpush1.bf16.msra.mxu0 %v5419
    %5485 = vmatprep.subr.bf16.mxu0 0
    %5486 = vmatpush1.bf16.msra.mxu0 0
    %5487 = vmatprep.subr.bf16.mxu0 0
    %5488 = vmatpush1.bf16.msra.mxu0 0
    %5489 = vmatprep.subr.bf16.mxu0 0
    %5490 = vmatpush1.bf16.msra.mxu0 0
    %5491 = vmatprep.subr.bf16.mxu0 0
    %5492 = vmatpush1.bf16.msra.mxu0 0
    %5493 = vmatprep.subr.bf16.mxu0 0
    %5494 = vmatpush1.bf16.msra.mxu0 0
    %5495 = vmatprep.subr.bf16.mxu0 0
    %5496 = vmatpush1.bf16.msra.mxu0 0
    %5497 = vmatprep.subr.bf16.mxu0 0
    %5498 = vmatpush1.bf16.msra.mxu0 0
    %5499 = vmatprep.subr.bf16.mxu0 0
    %5500 = vmatpush1.bf16.msra.mxu0 0
    %5501 = vmatprep.mubr.bf16.mxu0 0
    %5502 = vmatmul.mubr.bf16.gmra.mrb[0].mxu0 %v5392
    %v5503 = vpop.f32.mrb[0].mxu0
    %v5504 = vadd.f32 %v5455, %v5503
    %v5505 = vpop.f32.mrb[0].mxu0
    %v5506 = vpop.f32.mrb[0].mxu0
    %v5507 = vadd.f32 %v5458, %v5506
    %v5508 = vpop.f32.mrb[0].mxu0
    %5509 = vmatprep.mubr.bf16.mxu0 0
    %5510 = vmatmul.mubr.bf16.gmra.mrb[0].mxu0 %v5393
    %v5511 = vpop.f32.mrb[0].mxu0
    %v5512 = vadd.f32 %v5463, %v5511
    %v5513 = vpop.f32.mrb[0].mxu0
    %v5514 = vpop.f32.mrb[0].mxu0
    %v5515 = vadd.f32 %v5466, %v5514
    %v5516 = vpop.f32.mrb[0].mxu0
    %5517 = vdwg.mxu0
    %v5518 = vadd.f32 %v5504, %v5507
    %v5519 = vadd.f32 %v5518, %v5512
    %v5520 = vadd.f32 %v5519, %v5515
    %v5521 = vrot.slane %v5520, 4
    %v5522 = vadd.f32 %v5520, %v5521
    %v5523 = vrot.slane %v5522, 2
    %v5524 = vadd.f32 %v5522, %v5523
    %v5525 = vrot.slane %v5524, 1
    %v5526 = vadd.f32 %v5524, %v5525
    %v5527 = vmul.f32 %v5504, %v5504
    %v5528 = vmul.f32 %v5507, %v5507
    %v5529 = vmul.f32 %v5512, %v5512
    %v5530 = vmul.f32 %v5515, %v5515
    %v5531 = vadd.f32 %v5527, %v5528
    %v5532 = vadd.f32 %v5531, %v5529
    %v5533 = vadd.f32 %v5532, %v5530
    %v5534 = vrot.slane %v5533, 4
    %v5535 = vadd.f32 %v5533, %v5534
    %v5536 = vrot.slane %v5535, 2
    %v5537 = vadd.f32 %v5535, %v5536
    %v5538 = vrot.slane %v5537, 1
    %v5539 = vadd.f32 %v5537, %v5538
    %v5540 = vmul.f32 %v5526, 0.25
    %v5541 = vmul.f32 %v5539, 0.25
    %v5542 = vmul.f32 %v5540, %v5540
    %v5543 = vsub.f32 %v5541, %v5542
    %v5544 = vmax.f32 %v5543, 0.0
    %s5545 = scalar_lea.vmem [#allocation7], 15
    %v5546 = vld [vmem:[%s5545] sm:$0x1]
    %v5547 = vadd.f32 %v5544, 1e-05
    %v5548 = vrsqrt.pop %v5547
    %v5549 = vmul.f32 %v5546, %v5548
    %s5550 = scalar_lea.vmem [#allocation9], 15
    %v5551 = vld [vmem:[%s5550] sm:$0x1]
    %v5552 = vmul.f32 %v5540, %v5549
    %v5553 = vsub.f32 %v5551, %v5552
    %v5555 = vlaneseq
    %v5556 = vshrl.u32 %v5555, 7
    %v5557 = vsub.s32 0, %v5556
    %v5558 = vrot.slane %v5549, %v5557
    %v5560 = vmul.f32 %v5504, %v5558
    %v5561 = vmul.f32 %v5507, %v5558
    %v5562 = vmul.f32 %v5512, %v5558
    %v5563 = vmul.f32 %v5515, %v5558
    %v5565 = vlaneseq
    %v5566 = vshrl.u32 %v5565, 7
    %v5567 = vsub.s32 0, %v5566
    %v5568 = vrot.slane %v5553, %v5567
    %v5570 = vadd.f32 %v5560, %v5568
    %v5571 = vadd.f32 %v5561, %v5568
    %v5572 = vadd.f32 %v5562, %v5568
    %v5573 = vadd.f32 %v5563, %v5568
    %v5574 = vadd.f32 %v5570, %v4910
    %v5575 = vadd.f32 %v5571, %v4911
    %v5576 = vadd.f32 %v5572, %v4912
    %v5577 = vadd.f32 %v5573, %v4913
    %v5578 = vmax.f32 %v5574, 0.0
    %v5579 = vmax.f32 %v5575, 0.0
    %v5580 = vmax.f32 %v5576, 0.0
    %v5581 = vmax.f32 %v5577, 0.0
    %v5582 = vsel %vm4384, %v5578, 0.0
    %v5583 = vsel %vm4385, %v5579, 0.0
    %v5584 = vsel %vm4386, %v5580, 0.0
    %v5585 = vsel %vm4387, %v5581, 0.0
    %v5586 = vpack.c.bf16 %v5583, %v5582
    %v5587 = vpack.c.bf16 %v5585, %v5584
    %s5588 = scalar_lea.vmem %s1, 480
    %v5589 = vld [vmem:[%s5588] sm:$0xf]
    %v5590 = vld [vmem:[%s5588 + $0x4] sm:$0xf]
    %v5591 = vld [vmem:[%s5588 + $0x8] sm:$0xf]
    %v5592 = vld [vmem:[%s5588 + $0xc] sm:$0xf]
    %v5597 = vunpack.c.l.b16 %v5589
    %v5598 = vunpack.c.l.b16 %v5590
    %v5599 = vunpack.c.l.b16 %v5591
    %v5600 = vunpack.c.l.b16 %v5592
    %v5601 = vpack.c.b16 %v5598, %v5597
    %v5602 = vpack.c.b16 %v5600, %v5599
    %v5604 = vsel %vm403, %v5601, 0
    %v5607 = vsel %vm403, %v5602, 0
    %5609 = vmatprep.subr.bf16.mxu0 0
    %5610 = vmatpush1.bf16.msra.mxu0 %v5586
    %5611 = vmatprep.subr.bf16.mxu0 0
    %5612 = vmatpush1.bf16.msra.mxu0 %v5587
    %5613 = vmatprep.subr.bf16.mxu0 0
    %5614 = vmatpush1.bf16.msra.mxu0 0
    %5615 = vmatprep.subr.bf16.mxu0 0
    %5616 = vmatpush1.bf16.msra.mxu0 0
    %5617 = vmatprep.subr.bf16.mxu0 0
    %5618 = vmatpush1.bf16.msra.mxu0 0
    %5619 = vmatprep.subr.bf16.mxu0 0
    %5620 = vmatpush1.bf16.msra.mxu0 0
    %5621 = vmatprep.subr.bf16.mxu0 0
    %5622 = vmatpush1.bf16.msra.mxu0 0
    %5623 = vmatprep.subr.bf16.mxu0 0
    %5624 = vmatpush1.bf16.msra.mxu0 0
    %5625 = vmatprep.subr.bf16.mxu0 0
    %5626 = vmatpush1.bf16.msra.mxu0 0
    %5627 = vmatprep.subr.bf16.mxu0 0
    %5628 = vmatpush1.bf16.msra.mxu0 0
    %5629 = vmatprep.subr.bf16.mxu0 0
    %5630 = vmatpush1.bf16.msra.mxu0 0
    %5631 = vmatprep.subr.bf16.mxu0 0
    %5632 = vmatpush1.bf16.msra.mxu0 0
    %5633 = vmatprep.subr.bf16.mxu0 0
    %5634 = vmatpush1.bf16.msra.mxu0 0
    %5635 = vmatprep.subr.bf16.mxu0 0
    %5636 = vmatpush1.bf16.msra.mxu0 0
    %5637 = vmatprep.subr.bf16.mxu0 0
    %5638 = vmatpush1.bf16.msra.mxu0 0
    %5639 = vmatprep.subr.bf16.mxu0 0
    %5640 = vmatpush1.bf16.msra.mxu0 0
    %5641 = vmatprep.mubr.bf16.mxu0 0
    %5642 = vmatmul.mubr.bf16.gmra.mrb[0].mxu0 %v5604
    %v5643 = vpop.f32.mrb[0].mxu0
    %v5644 = vadd.f32 0.0, %v5643
    %v5645 = vpop.f32.mrb[0].mxu0
    %v5646 = vpop.f32.mrb[0].mxu0
    %v5647 = vadd.f32 0.0, %v5646
    %v5648 = vpop.f32.mrb[0].mxu0
    %5649 = vmatprep.mubr.bf16.mxu0 0
    %5650 = vmatmul.mubr.bf16.gmra.mrb[0].mxu0 %v5607
    %v5651 = vpop.f32.mrb[0].mxu0
    %v5652 = vadd.f32 0.0, %v5651
    %v5653 = vpop.f32.mrb[0].mxu0
    %v5654 = vpop.f32.mrb[0].mxu0
    %v5655 = vadd.f32 0.0, %v5654
    %v5656 = vpop.f32.mrb[0].mxu0
    %5657 = vdwg.mxu0
    %v5658 = vpack.c.bf16 %v5647, %v5644
    %v5659 = vpack.c.bf16 %v5655, %v5652
    %s5660 = scalar_lea.vmem %s1, 496
    %v5661 = vld [vmem:[%s5660] sm:$0xf]
    %v5662 = vld [vmem:[%s5660 + $0x4] sm:$0xf]
    %v5663 = vld [vmem:[%s5660 + $0x8] sm:$0xf]
    %v5664 = vld [vmem:[%s5660 + $0xc] sm:$0xf]
    %v5669 = vunpack.c.l.b16 %v5661
    %v5670 = vunpack.c.l.b16 %v5662
    %v5671 = vunpack.c.l.b16 %v5663
    %v5672 = vunpack.c.l.b16 %v5664
    %v5673 = vpack.c.b16 %v5670, %v5669
    %v5674 = vpack.c.b16 %v5672, %v5671
    %v5676 = vsel %vm403, %v5673, 0
    %v5679 = vsel %vm403, %v5674, 0
    %5681 = vmatprep.subr.bf16.mxu0 0
    %5682 = vmatpush1.bf16.msra.mxu0 %v5586
    %5683 = vmatprep.subr.bf16.mxu0 0
    %5684 = vmatpush1.bf16.msra.mxu0 %v5587
    %5685 = vmatprep.subr.bf16.mxu0 0
    %5686 = vmatpush1.bf16.msra.mxu0 0
    %5687 = vmatprep.subr.bf16.mxu0 0
    %5688 = vmatpush1.bf16.msra.mxu0 0
    %5689 = vmatprep.subr.bf16.mxu0 0
    %5690 = vmatpush1.bf16.msra.mxu0 0
    %5691 = vmatprep.subr.bf16.mxu0 0
    %5692 = vmatpush1.bf16.msra.mxu0 0
    %5693 = vmatprep.subr.bf16.mxu0 0
    %5694 = vmatpush1.bf16.msra.mxu0 0
    %5695 = vmatprep.subr.bf16.mxu0 0
    %5696 = vmatpush1.bf16.msra.mxu0 0
    %5697 = vmatprep.subr.bf16.mxu0 0
    %5698 = vmatpush1.bf16.msra.mxu0 0
    %5699 = vmatprep.subr.bf16.mxu0 0
    %5700 = vmatpush1.bf16.msra.mxu0 0
    %5701 = vmatprep.subr.bf16.mxu0 0
    %5702 = vmatpush1.bf16.msra.mxu0 0
    %5703 = vmatprep.subr.bf16.mxu0 0
    %5704 = vmatpush1.bf16.msra.mxu0 0
    %5705 = vmatprep.subr.bf16.mxu0 0
    %5706 = vmatpush1.bf16.msra.mxu0 0
    %5707 = vmatprep.subr.bf16.mxu0 0
    %5708 = vmatpush1.bf16.msra.mxu0 0
    %5709 = vmatprep.subr.bf16.mxu0 0
    %5710 = vmatpush1.bf16.msra.mxu0 0
    %5711 = vmatprep.subr.bf16.mxu0 0
    %5712 = vmatpush1.bf16.msra.mxu0 0
    %5713 = vmatprep.mubr.bf16.mxu0 0
    %5714 = vmatmul.mubr.bf16.gmra.mrb[0].mxu0 %v5676
    %v5715 = vpop.f32.mrb[0].mxu0
    %v5716 = vadd.f32 0.0, %v5715
    %v5717 = vpop.f32.mrb[0].mxu0
    %v5718 = vpop.f32.mrb[0].mxu0
    %v5719 = vadd.f32 0.0, %v5718
    %v5720 = vpop.f32.mrb[0].mxu0
    %5721 = vmatprep.mubr.bf16.mxu0 0
    %5722 = vmatmul.mubr.bf16.gmra.mrb[0].mxu0 %v5679
    %v5723 = vpop.f32.mrb[0].mxu0
    %v5724 = vadd.f32 0.0, %v5723
    %v5725 = vpop.f32.mrb[0].mxu0
    %v5726 = vpop.f32.mrb[0].mxu0
    %v5727 = vadd.f32 0.0, %v5726
    %v5728 = vpop.f32.mrb[0].mxu0
    %5729 = vdwg.mxu0
    %v5730 = vpack.c.bf16 %v5719, %v5716
    %v5731 = vpack.c.bf16 %v5727, %v5724
    %s5732 = sshll.u32 %s534, 4
    %5733 = dma.done %s315, %s5732
    %v5734 = vld [vmem:[%s314] sm:$0xff]
    %v5735 = vld [vmem:[%s314 + $0x8] sm:$0xff]
    %v5736 = vld [vmem:[%s314 + $0x10] sm:$0xff]
    %v5737 = vld [vmem:[%s314 + $0x18] sm:$0xff]
    %v5738 = vld [vmem:[%s314 + $0x20] sm:$0xff]
    %v5739 = vld [vmem:[%s314 + $0x28] sm:$0xff]
    %v5740 = vld [vmem:[%s314 + $0x30] sm:$0xff]
    %v5741 = vld [vmem:[%s314 + $0x38] sm:$0xff]
    %v5742 = vld [vmem:[%s314 + $0x40] sm:$0xff]
    %v5743 = vld [vmem:[%s314 + $0x48] sm:$0xff]
    %v5744 = vld [vmem:[%s314 + $0x50] sm:$0xff]
    %v5745 = vld [vmem:[%s314 + $0x58] sm:$0xff]
    %v5746 = vld [vmem:[%s314 + $0x60] sm:$0xff]
    %v5747 = vld [vmem:[%s314 + $0x68] sm:$0xff]
    %v5748 = vld [vmem:[%s314 + $0x70] sm:$0xff]
    %v5749 = vld [vmem:[%s314 + $0x78] sm:$0xff]
    %v5750 = vld [vmem:[%s314 + $0x80] sm:$0xff]
    %v5751 = vld [vmem:[%s314 + $0x88] sm:$0xff]
    %v5752 = vld [vmem:[%s314 + $0x90] sm:$0xff]
    %v5753 = vld [vmem:[%s314 + $0x98] sm:$0xff]
    %v5754 = vld [vmem:[%s314 + $0xa0] sm:$0xff]
    %v5755 = vld [vmem:[%s314 + $0xa8] sm:$0xff]
    %v5756 = vld [vmem:[%s314 + $0xb0] sm:$0xff]
    %v5757 = vld [vmem:[%s314 + $0xb8] sm:$0xff]
    %5758 = vmatprep.subr.bf16.mxu0 0
    %5759 = vmatpush1.bf16.msra.mxu0 %v5734
    %5760 = vmatprep.subr.bf16.mxu0 0
    %5761 = vmatpush1.bf16.msra.mxu0 %v5735
    %5762 = vmatprep.subr.bf16.mxu0 0
    %5763 = vmatpush1.bf16.msra.mxu0 %v5736
    %5764 = vmatprep.subr.bf16.mxu0 0
    %5765 = vmatpush1.bf16.msra.mxu0 %v5737
    %5766 = vmatprep.subr.bf16.mxu0 0
    %5767 = vmatpush1.bf16.msra.mxu0 %v5738
    %5768 = vmatprep.subr.bf16.mxu0 0
    %5769 = vmatpush1.bf16.msra.mxu0 %v5739
    %5770 = vmatprep.subr.bf16.mxu0 0
    %5771 = vmatpush1.bf16.msra.mxu0 %v5740
    %5772 = vmatprep.subr.bf16.mxu0 0
    %5773 = vmatpush1.bf16.msra.mxu0 %v5741
    %5774 = vmatprep.subr.bf16.mxu0 0
    %5775 = vmatpush1.bf16.msra.mxu0 %v5742
    %5776 = vmatprep.subr.bf16.mxu0 0
    %5777 = vmatpush1.bf16.msra.mxu0 %v5743
    %5778 = vmatprep.subr.bf16.mxu0 0
    %5779 = vmatpush1.bf16.msra.mxu0 %v5744
    %5780 = vmatprep.subr.bf16.mxu0 0
    %5781 = vmatpush1.bf16.msra.mxu0 %v5745
    %5782 = vmatprep.subr.bf16.mxu0 0
    %5783 = vmatpush1.bf16.msra.mxu0 %v5746
    %5784 = vmatprep.subr.bf16.mxu0 0
    %5785 = vmatpush1.bf16.msra.mxu0 %v5747
    %5786 = vmatprep.subr.bf16.mxu0 0
    %5787 = vmatpush1.bf16.msra.mxu0 %v5748
    %5788 = vmatprep.subr.bf16.mxu0 0
    %5789 = vmatpush1.bf16.msra.mxu0 %v5749
    %5790 = vmatprep.mubr.bf16.mxu0 %v5658
    %5791 = vmatmul.mubr.bf16.gmra.mrb[0].mxu0 0
    %v5792 = vpop.f32.mrb[0].mxu0
    %v5793 = vadd.f32 0.0, %v5792
    %v5794 = vpop.f32.mrb[0].mxu0
    %v5795 = vpop.f32.mrb[0].mxu0
    %v5796 = vadd.f32 0.0, %v5795
    %v5797 = vpop.f32.mrb[0].mxu0
    %5798 = vmatprep.mubr.bf16.mxu0 %v5659
    %5799 = vmatmul.mubr.bf16.gmra.mrb[0].mxu0 0
    %v5800 = vpop.f32.mrb[0].mxu0
    %v5801 = vadd.f32 0.0, %v5800
    %v5802 = vpop.f32.mrb[0].mxu0
    %v5803 = vpop.f32.mrb[0].mxu0
    %v5804 = vadd.f32 0.0, %v5803
    %v5805 = vpop.f32.mrb[0].mxu0
    %5806 = vdwg.mxu0
    %5807 = vmatprep.subr.bf16.mxu0 0
    %5808 = vmatpush1.bf16.msra.mxu0 %v5750
    %5809 = vmatprep.subr.bf16.mxu0 0
    %5810 = vmatpush1.bf16.msra.mxu0 %v5751
    %5811 = vmatprep.subr.bf16.mxu0 0
    %5812 = vmatpush1.bf16.msra.mxu0 %v5752
    %5813 = vmatprep.subr.bf16.mxu0 0
    %5814 = vmatpush1.bf16.msra.mxu0 %v5753
    %5815 = vmatprep.subr.bf16.mxu0 0
    %5816 = vmatpush1.bf16.msra.mxu0 %v5754
    %5817 = vmatprep.subr.bf16.mxu0 0
    %5818 = vmatpush1.bf16.msra.mxu0 %v5755
    %5819 = vmatprep.subr.bf16.mxu0 0
    %5820 = vmatpush1.bf16.msra.mxu0 %v5756
    %5821 = vmatprep.subr.bf16.mxu0 0
    %5822 = vmatpush1.bf16.msra.mxu0 %v5757
    %5823 = vmatprep.subr.bf16.mxu0 0
    %5824 = vmatpush1.bf16.msra.mxu0 0
    %5825 = vmatprep.subr.bf16.mxu0 0
    %5826 = vmatpush1.bf16.msra.mxu0 0
    %5827 = vmatprep.subr.bf16.mxu0 0
    %5828 = vmatpush1.bf16.msra.mxu0 0
    %5829 = vmatprep.subr.bf16.mxu0 0
    %5830 = vmatpush1.bf16.msra.mxu0 0
    %5831 = vmatprep.subr.bf16.mxu0 0
    %5832 = vmatpush1.bf16.msra.mxu0 0
    %5833 = vmatprep.subr.bf16.mxu0 0
    %5834 = vmatpush1.bf16.msra.mxu0 0
    %5835 = vmatprep.subr.bf16.mxu0 0
    %5836 = vmatpush1.bf16.msra.mxu0 0
    %5837 = vmatprep.subr.bf16.mxu0 0
    %5838 = vmatpush1.bf16.msra.mxu0 0
    %5839 = vmatprep.mubr.bf16.mxu0 0
    %5840 = vmatmul.mubr.bf16.gmra.mrb[0].mxu0 %v5730
    %v5841 = vpop.f32.mrb[0].mxu0
    %v5842 = vadd.f32 %v5793, %v5841
    %v5843 = vpop.f32.mrb[0].mxu0
    %v5844 = vpop.f32.mrb[0].mxu0
    %v5845 = vadd.f32 %v5796, %v5844
    %v5846 = vpop.f32.mrb[0].mxu0
    %5847 = vmatprep.mubr.bf16.mxu0 0
    %5848 = vmatmul.mubr.bf16.gmra.mrb[0].mxu0 %v5731
    %v5849 = vpop.f32.mrb[0].mxu0
    %v5850 = vadd.f32 %v5801, %v5849
    %v5851 = vpop.f32.mrb[0].mxu0
    %v5852 = vpop.f32.mrb[0].mxu0
    %v5853 = vadd.f32 %v5804, %v5852
    %v5854 = vpop.f32.mrb[0].mxu0
    %5855 = vdwg.mxu0
    %v5856 = vadd.f32 %v5842, %v5845
    %v5857 = vadd.f32 %v5856, %v5850
    %v5858 = vadd.f32 %v5857, %v5853
    %v5859 = vrot.slane %v5858, 4
    %v5860 = vadd.f32 %v5858, %v5859
    %v5861 = vrot.slane %v5860, 2
    %v5862 = vadd.f32 %v5860, %v5861
    %v5863 = vrot.slane %v5862, 1
    %v5864 = vadd.f32 %v5862, %v5863
    %v5865 = vmul.f32 %v5842, %v5842
    %v5866 = vmul.f32 %v5845, %v5845
    %v5867 = vmul.f32 %v5850, %v5850
    %v5868 = vmul.f32 %v5853, %v5853
    %v5869 = vadd.f32 %v5865, %v5866
    %v5870 = vadd.f32 %v5869, %v5867
    %v5871 = vadd.f32 %v5870, %v5868
    %v5872 = vrot.slane %v5871, 4
    %v5873 = vadd.f32 %v5871, %v5872
    %v5874 = vrot.slane %v5873, 2
    %v5875 = vadd.f32 %v5873, %v5874
    %v5876 = vrot.slane %v5875, 1
    %v5877 = vadd.f32 %v5875, %v5876
    %v5878 = vmul.f32 %v5864, 0.5
    %v5879 = vmul.f32 %v5877, 0.5
    %v5880 = vmul.f32 %v5878, %v5878
    %v5881 = vsub.f32 %v5879, %v5880
    %v5882 = vmax.f32 %v5881, 0.0
    %s5883 = scalar_lea.vmem [#allocation7], 16
    %v5884 = vld [vmem:[%s5883] sm:$0x1]
    %v5885 = vadd.f32 %v5882, 1e-05
    %v5886 = vrsqrt.pop %v5885
    %v5887 = vmul.f32 %v5884, %v5886
    %s5888 = scalar_lea.vmem [#allocation9], 16
    %v5889 = vld [vmem:[%s5888] sm:$0x1]
    %v5890 = vmul.f32 %v5878, %v5887
    %v5891 = vsub.f32 %v5889, %v5890
    %v5893 = vlaneseq
    %v5894 = vshrl.u32 %v5893, 7
    %v5895 = vsub.s32 0, %v5894
    %v5896 = vrot.slane %v5887, %v5895
    %v5898 = vmul.f32 %v5842, %v5896
    %v5899 = vmul.f32 %v5845, %v5896
    %v5900 = vmul.f32 %v5850, %v5896
    %v5901 = vmul.f32 %v5853, %v5896
    %v5903 = vlaneseq
    %v5904 = vshrl.u32 %v5903, 7
    %v5905 = vsub.s32 0, %v5904
    %v5906 = vrot.slane %v5891, %v5905
    %v5908 = vadd.f32 %v5898, %v5906
    %v5909 = vadd.f32 %v5899, %v5906
    %v5910 = vadd.f32 %v5900, %v5906
    %v5911 = vadd.f32 %v5901, %v5906
    %v5912 = vmax.f32 %v5908, 0.0
    %v5913 = vmax.f32 %v5909, 0.0
    %v5914 = vmax.f32 %v5910, 0.0
    %v5915 = vmax.f32 %v5911, 0.0
    %vm5916 = vcmp.lt.s32.totalorder %v1116, 1
    %vm5917 = vcmp.lt.s32.totalorder %v1117, 1
    %vm5918 = vcmp.lt.s32.totalorder %v1118, 1
    %vm5919 = vcmp.lt.s32.totalorder %v1119, 1
    %vm5920 = vmand %vm1120, %vm5916
    %vm5921 = vmand %vm1121, %vm5917
    %vm5922 = vmand %vm1122, %vm5918
    %vm5923 = vmand %vm1123, %vm5919
    %vm5924 = vcmp.lt.s32.totalorder %v1116, 17
    %vm5925 = vcmp.lt.s32.totalorder %v1117, 17
    %vm5926 = vcmp.lt.s32.totalorder %v1118, 17
    %vm5927 = vcmp.lt.s32.totalorder %v1119, 17
    %vm5928 = vmand %vm1132, %vm5924
    %vm5929 = vmand %vm1133, %vm5925
    %vm5930 = vmand %vm1134, %vm5926
    %vm5931 = vmand %vm1135, %vm5927
    %vm5932 = vmor %vm5920, %vm5928
    %vm5933 = vmor %vm5921, %vm5929
    %vm5934 = vmor %vm5922, %vm5930
    %vm5935 = vmor %vm5923, %vm5931
    %v5936 = vsel %vm5932, %v5912, 0.0
    %v5937 = vsel %vm5933, %v5913, 0.0
    %v5938 = vsel %vm5934, %v5914, 0.0
    %v5939 = vsel %vm5935, %v5915, 0.0
    %s5940 = sshll.u32 %s534, 4
    %5941 = dma.done %s329, %s5940
    %v5942 = vld [vmem:[%s328] sm:$0xff]
    %v5943 = vld [vmem:[%s328 + $0x8] sm:$0xff]
    %v5944 = vld [vmem:[%s328 + $0x10] sm:$0xff]
    %v5945 = vld [vmem:[%s328 + $0x18] sm:$0xff]
    %v5946 = vld [vmem:[%s328 + $0x20] sm:$0xff]
    %v5947 = vld [vmem:[%s328 + $0x28] sm:$0xff]
    %v5948 = vld [vmem:[%s328 + $0x30] sm:$0xff]
    %v5949 = vld [vmem:[%s328 + $0x38] sm:$0xff]
    %v5950 = vld [vmem:[%s328 + $0x40] sm:$0xff]
    %v5951 = vld [vmem:[%s328 + $0x48] sm:$0xff]
    %v5952 = vld [vmem:[%s328 + $0x50] sm:$0xff]
    %v5953 = vld [vmem:[%s328 + $0x58] sm:$0xff]
    %v5954 = vld [vmem:[%s328 + $0x60] sm:$0xff]
    %v5955 = vld [vmem:[%s328 + $0x68] sm:$0xff]
    %v5956 = vld [vmem:[%s328 + $0x70] sm:$0xff]
    %v5957 = vld [vmem:[%s328 + $0x78] sm:$0xff]
    %v5958 = vld [vmem:[%s328 + $0x80] sm:$0xff]
    %v5959 = vld [vmem:[%s328 + $0x88] sm:$0xff]
    %v5960 = vld [vmem:[%s328 + $0x90] sm:$0xff]
    %v5961 = vld [vmem:[%s328 + $0x98] sm:$0xff]
    %v5962 = vld [vmem:[%s328 + $0xa0] sm:$0xff]
    %v5963 = vld [vmem:[%s328 + $0xa8] sm:$0xff]
    %v5964 = vld [vmem:[%s328 + $0xb0] sm:$0xff]
    %v5965 = vld [vmem:[%s328 + $0xb8] sm:$0xff]
    %5966 = vmatprep.subr.bf16.mxu0 0
    %5967 = vmatpush1.bf16.msra.mxu0 %v5942
    %5968 = vmatprep.subr.bf16.mxu0 0
    %5969 = vmatpush1.bf16.msra.mxu0 %v5943
    %5970 = vmatprep.subr.bf16.mxu0 0
    %5971 = vmatpush1.bf16.msra.mxu0 %v5944
    %5972 = vmatprep.subr.bf16.mxu0 0
    %5973 = vmatpush1.bf16.msra.mxu0 %v5945
    %5974 = vmatprep.subr.bf16.mxu0 0
    %5975 = vmatpush1.bf16.msra.mxu0 %v5946
    %5976 = vmatprep.subr.bf16.mxu0 0
    %5977 = vmatpush1.bf16.msra.mxu0 %v5947
    %5978 = vmatprep.subr.bf16.mxu0 0
    %5979 = vmatpush1.bf16.msra.mxu0 %v5948
    %5980 = vmatprep.subr.bf16.mxu0 0
    %5981 = vmatpush1.bf16.msra.mxu0 %v5949
    %5982 = vmatprep.subr.bf16.mxu0 0
    %5983 = vmatpush1.bf16.msra.mxu0 %v5950
    %5984 = vmatprep.subr.bf16.mxu0 0
    %5985 = vmatpush1.bf16.msra.mxu0 %v5951
    %5986 = vmatprep.subr.bf16.mxu0 0
    %5987 = vmatpush1.bf16.msra.mxu0 %v5952
    %5988 = vmatprep.subr.bf16.mxu0 0
    %5989 = vmatpush1.bf16.msra.mxu0 %v5953
    %5990 = vmatprep.subr.bf16.mxu0 0
    %5991 = vmatpush1.bf16.msra.mxu0 %v5954
    %5992 = vmatprep.subr.bf16.mxu0 0
    %5993 = vmatpush1.bf16.msra.mxu0 %v5955
    %5994 = vmatprep.subr.bf16.mxu0 0
    %5995 = vmatpush1.bf16.msra.mxu0 %v5956
    %5996 = vmatprep.subr.bf16.mxu0 0
    %5997 = vmatpush1.bf16.msra.mxu0 %v5957
    %5998 = vmatprep.mubr.bf16.mxu0 %v5658
    %5999 = vmatmul.mubr.bf16.gmra.mrb[0].mxu0 0
    %v6000 = vpop.f32.mrb[0].mxu0
    %v6001 = vadd.f32 0.0, %v6000
    %v6002 = vpop.f32.mrb[0].mxu0
    %v6003 = vpop.f32.mrb[0].mxu0
    %v6004 = vadd.f32 0.0, %v6003
    %v6005 = vpop.f32.mrb[0].mxu0
    %6006 = vmatprep.mubr.bf16.mxu0 %v5659
    %6007 = vmatmul.mubr.bf16.gmra.mrb[0].mxu0 0
    %v6008 = vpop.f32.mrb[0].mxu0
    %v6009 = vadd.f32 0.0, %v6008
    %v6010 = vpop.f32.mrb[0].mxu0
    %v6011 = vpop.f32.mrb[0].mxu0
    %v6012 = vadd.f32 0.0, %v6011
    %v6013 = vpop.f32.mrb[0].mxu0
    %6014 = vdwg.mxu0
    %6015 = vmatprep.subr.bf16.mxu0 0
    %6016 = vmatpush1.bf16.msra.mxu0 %v5958
    %6017 = vmatprep.subr.bf16.mxu0 0
    %6018 = vmatpush1.bf16.msra.mxu0 %v5959
    %6019 = vmatprep.subr.bf16.mxu0 0
    %6020 = vmatpush1.bf16.msra.mxu0 %v5960
    %6021 = vmatprep.subr.bf16.mxu0 0
    %6022 = vmatpush1.bf16.msra.mxu0 %v5961
    %6023 = vmatprep.subr.bf16.mxu0 0
    %6024 = vmatpush1.bf16.msra.mxu0 %v5962
    %6025 = vmatprep.subr.bf16.mxu0 0
    %6026 = vmatpush1.bf16.msra.mxu0 %v5963
    %6027 = vmatprep.subr.bf16.mxu0 0
    %6028 = vmatpush1.bf16.msra.mxu0 %v5964
    %6029 = vmatprep.subr.bf16.mxu0 0
    %6030 = vmatpush1.bf16.msra.mxu0 %v5965
    %6031 = vmatprep.subr.bf16.mxu0 0
    %6032 = vmatpush1.bf16.msra.mxu0 0
    %6033 = vmatprep.subr.bf16.mxu0 0
    %6034 = vmatpush1.bf16.msra.mxu0 0
    %6035 = vmatprep.subr.bf16.mxu0 0
    %6036 = vmatpush1.bf16.msra.mxu0 0
    %6037 = vmatprep.subr.bf16.mxu0 0
    %6038 = vmatpush1.bf16.msra.mxu0 0
    %6039 = vmatprep.subr.bf16.mxu0 0
    %6040 = vmatpush1.bf16.msra.mxu0 0
    %6041 = vmatprep.subr.bf16.mxu0 0
    %6042 = vmatpush1.bf16.msra.mxu0 0
    %6043 = vmatprep.subr.bf16.mxu0 0
    %6044 = vmatpush1.bf16.msra.mxu0 0
    %6045 = vmatprep.subr.bf16.mxu0 0
    %6046 = vmatpush1.bf16.msra.mxu0 0
    %6047 = vmatprep.mubr.bf16.mxu0 0
    %6048 = vmatmul.mubr.bf16.gmra.mrb[0].mxu0 %v5730
    %v6049 = vpop.f32.mrb[0].mxu0
    %v6050 = vadd.f32 %v6001, %v6049
    %v6051 = vpop.f32.mrb[0].mxu0
    %v6052 = vpop.f32.mrb[0].mxu0
    %v6053 = vadd.f32 %v6004, %v6052
    %v6054 = vpop.f32.mrb[0].mxu0
    %6055 = vmatprep.mubr.bf16.mxu0 0
    %6056 = vmatmul.mubr.bf16.gmra.mrb[0].mxu0 %v5731
    %v6057 = vpop.f32.mrb[0].mxu0
    %v6058 = vadd.f32 %v6009, %v6057
    %v6059 = vpop.f32.mrb[0].mxu0
    %v6060 = vpop.f32.mrb[0].mxu0
    %v6061 = vadd.f32 %v6012, %v6060
    %v6062 = vpop.f32.mrb[0].mxu0
    %6063 = vdwg.mxu0
    %v6064 = vadd.f32 %v6050, %v6053
    %v6065 = vadd.f32 %v6064, %v6058
    %v6066 = vadd.f32 %v6065, %v6061
    %v6067 = vrot.slane %v6066, 4
    %v6068 = vadd.f32 %v6066, %v6067
    %v6069 = vrot.slane %v6068, 2
    %v6070 = vadd.f32 %v6068, %v6069
    %v6071 = vrot.slane %v6070, 1
    %v6072 = vadd.f32 %v6070, %v6071
    %v6073 = vmul.f32 %v6050, %v6050
    %v6074 = vmul.f32 %v6053, %v6053
    %v6075 = vmul.f32 %v6058, %v6058
    %v6076 = vmul.f32 %v6061, %v6061
    %v6077 = vadd.f32 %v6073, %v6074
    %v6078 = vadd.f32 %v6077, %v6075
    %v6079 = vadd.f32 %v6078, %v6076
    %v6080 = vrot.slane %v6079, 4
    %v6081 = vadd.f32 %v6079, %v6080
    %v6082 = vrot.slane %v6081, 2
    %v6083 = vadd.f32 %v6081, %v6082
    %v6084 = vrot.slane %v6083, 1
    %v6085 = vadd.f32 %v6083, %v6084
    %v6086 = vmul.f32 %v6072, 0.5
    %v6087 = vmul.f32 %v6085, 0.5
    %v6088 = vmul.f32 %v6086, %v6086
    %v6089 = vsub.f32 %v6087, %v6088
    %v6090 = vmax.f32 %v6089, 0.0
    %s6091 = scalar_lea.vmem [#allocation7], 17
    %v6092 = vld [vmem:[%s6091] sm:$0x1]
    %v6093 = vadd.f32 %v6090, 1e-05
    %v6094 = vrsqrt.pop %v6093
    %v6095 = vmul.f32 %v6092, %v6094
    %s6096 = scalar_lea.vmem [#allocation9], 17
    %v6097 = vld [vmem:[%s6096] sm:$0x1]
    %v6098 = vmul.f32 %v6086, %v6095
    %v6099 = vsub.f32 %v6097, %v6098
    %v6101 = vlaneseq
    %v6102 = vshrl.u32 %v6101, 7
    %v6103 = vsub.s32 0, %v6102
    %v6104 = vrot.slane %v6095, %v6103
    %v6106 = vmul.f32 %v6050, %v6104
    %v6107 = vmul.f32 %v6053, %v6104
    %v6108 = vmul.f32 %v6058, %v6104
    %v6109 = vmul.f32 %v6061, %v6104
    %v6111 = vlaneseq
    %v6112 = vshrl.u32 %v6111, 7
    %v6113 = vsub.s32 0, %v6112
    %v6114 = vrot.slane %v6099, %v6113
    %v6116 = vadd.f32 %v6106, %v6114
    %v6117 = vadd.f32 %v6107, %v6114
    %v6118 = vadd.f32 %v6108, %v6114
    %v6119 = vadd.f32 %v6109, %v6114
    %v6120 = vsel %vm5932, %v6116, 0.0
    %v6121 = vsel %vm5933, %v6117, 0.0
    %v6122 = vsel %vm5934, %v6118, 0.0
    %v6123 = vsel %vm5935, %v6119, 0.0
    %v6124 = vpack.c.bf16 %v5937, %v5936
    %v6125 = vpack.c.bf16 %v5939, %v5938
    %s6126 = sshll.u32 %s534, 4
    %6127 = dma.done %s343, %s6126
    %v6128 = vld [vmem:[%s342] sm:$0xff]
    %v6129 = vld [vmem:[%s342 + $0x8] sm:$0xff]
    %v6130 = vld [vmem:[%s342 + $0x10] sm:$0xff]
    %v6131 = vld [vmem:[%s342 + $0x18] sm:$0xff]
    %v6132 = vld [vmem:[%s342 + $0x20] sm:$0xff]
    %v6133 = vld [vmem:[%s342 + $0x28] sm:$0xff]
    %v6134 = vld [vmem:[%s342 + $0x30] sm:$0xff]
    %v6135 = vld [vmem:[%s342 + $0x38] sm:$0xff]
    %v6136 = vld [vmem:[%s342 + $0x40] sm:$0xff]
    %v6137 = vld [vmem:[%s342 + $0x48] sm:$0xff]
    %v6138 = vld [vmem:[%s342 + $0x50] sm:$0xff]
    %v6139 = vld [vmem:[%s342 + $0x58] sm:$0xff]
    %v6140 = vld [vmem:[%s342 + $0x60] sm:$0xff]
    %v6141 = vld [vmem:[%s342 + $0x68] sm:$0xff]
    %v6142 = vld [vmem:[%s342 + $0x70] sm:$0xff]
    %v6143 = vld [vmem:[%s342 + $0x78] sm:$0xff]
    %v6144 = vld [vmem:[%s342 + $0x80] sm:$0xff]
    %v6145 = vld [vmem:[%s342 + $0x88] sm:$0xff]
    %v6146 = vld [vmem:[%s342 + $0x90] sm:$0xff]
    %v6147 = vld [vmem:[%s342 + $0x98] sm:$0xff]
    %v6148 = vld [vmem:[%s342 + $0xa0] sm:$0xff]
    %v6149 = vld [vmem:[%s342 + $0xa8] sm:$0xff]
    %v6150 = vld [vmem:[%s342 + $0xb0] sm:$0xff]
    %v6151 = vld [vmem:[%s342 + $0xb8] sm:$0xff]
    %6152 = vmatprep.subr.bf16.mxu0 0
    %6153 = vmatpush1.bf16.msra.mxu0 %v6128
    %6154 = vmatprep.subr.bf16.mxu0 0
    %6155 = vmatpush1.bf16.msra.mxu0 %v6129
    %6156 = vmatprep.subr.bf16.mxu0 0
    %6157 = vmatpush1.bf16.msra.mxu0 %v6130
    %6158 = vmatprep.subr.bf16.mxu0 0
    %6159 = vmatpush1.bf16.msra.mxu0 %v6131
    %6160 = vmatprep.subr.bf16.mxu0 0
    %6161 = vmatpush1.bf16.msra.mxu0 %v6132
    %6162 = vmatprep.subr.bf16.mxu0 0
    %6163 = vmatpush1.bf16.msra.mxu0 %v6133
    %6164 = vmatprep.subr.bf16.mxu0 0
    %6165 = vmatpush1.bf16.msra.mxu0 %v6134
    %6166 = vmatprep.subr.bf16.mxu0 0
    %6167 = vmatpush1.bf16.msra.mxu0 %v6135
    %6168 = vmatprep.subr.bf16.mxu0 0
    %6169 = vmatpush1.bf16.msra.mxu0 %v6136
    %6170 = vmatprep.subr.bf16.mxu0 0
    %6171 = vmatpush1.bf16.msra.mxu0 %v6137
    %6172 = vmatprep.subr.bf16.mxu0 0
    %6173 = vmatpush1.bf16.msra.mxu0 %v6138
    %6174 = vmatprep.subr.bf16.mxu0 0
    %6175 = vmatpush1.bf16.msra.mxu0 %v6139
    %6176 = vmatprep.subr.bf16.mxu0 0
    %6177 = vmatpush1.bf16.msra.mxu0 %v6140
    %6178 = vmatprep.subr.bf16.mxu0 0
    %6179 = vmatpush1.bf16.msra.mxu0 %v6141
    %6180 = vmatprep.subr.bf16.mxu0 0
    %6181 = vmatpush1.bf16.msra.mxu0 %v6142
    %6182 = vmatprep.subr.bf16.mxu0 0
    %6183 = vmatpush1.bf16.msra.mxu0 %v6143
    %6184 = vmatprep.mubr.bf16.mxu0 %v6124
    %6185 = vmatmul.mubr.bf16.gmra.mrb[0].mxu0 0
    %v6186 = vpop.f32.mrb[0].mxu0
    %v6187 = vadd.f32 0.0, %v6186
    %v6188 = vpop.f32.mrb[0].mxu0
    %v6189 = vpop.f32.mrb[0].mxu0
    %v6190 = vadd.f32 0.0, %v6189
    %v6191 = vpop.f32.mrb[0].mxu0
    %6192 = vmatprep.mubr.bf16.mxu0 %v6125
    %6193 = vmatmul.mubr.bf16.gmra.mrb[0].mxu0 0
    %v6194 = vpop.f32.mrb[0].mxu0
    %v6195 = vadd.f32 0.0, %v6194
    %v6196 = vpop.f32.mrb[0].mxu0
    %v6197 = vpop.f32.mrb[0].mxu0
    %v6198 = vadd.f32 0.0, %v6197
    %v6199 = vpop.f32.mrb[0].mxu0
    %6200 = vdwg.mxu0
    %6201 = vmatprep.subr.bf16.mxu0 0
    %6202 = vmatpush1.bf16.msra.mxu0 %v6144
    %6203 = vmatprep.subr.bf16.mxu0 0
    %6204 = vmatpush1.bf16.msra.mxu0 %v6145
    %6205 = vmatprep.subr.bf16.mxu0 0
    %6206 = vmatpush1.bf16.msra.mxu0 %v6146
    %6207 = vmatprep.subr.bf16.mxu0 0
    %6208 = vmatpush1.bf16.msra.mxu0 %v6147
    %6209 = vmatprep.subr.bf16.mxu0 0
    %6210 = vmatpush1.bf16.msra.mxu0 %v6148
    %6211 = vmatprep.subr.bf16.mxu0 0
    %6212 = vmatpush1.bf16.msra.mxu0 %v6149
    %6213 = vmatprep.subr.bf16.mxu0 0
    %6214 = vmatpush1.bf16.msra.mxu0 %v6150
    %6215 = vmatprep.subr.bf16.mxu0 0
    %6216 = vmatpush1.bf16.msra.mxu0 %v6151
    %6217 = vmatprep.subr.bf16.mxu0 0
    %6218 = vmatpush1.bf16.msra.mxu0 0
    %6219 = vmatprep.subr.bf16.mxu0 0
    %6220 = vmatpush1.bf16.msra.mxu0 0
    %6221 = vmatprep.subr.bf16.mxu0 0
    %6222 = vmatpush1.bf16.msra.mxu0 0
    %6223 = vmatprep.subr.bf16.mxu0 0
    %6224 = vmatpush1.bf16.msra.mxu0 0
    %6225 = vmatprep.subr.bf16.mxu0 0
    %6226 = vmatpush1.bf16.msra.mxu0 0
    %6227 = vmatprep.subr.bf16.mxu0 0
    %6228 = vmatpush1.bf16.msra.mxu0 0
    %6229 = vmatprep.subr.bf16.mxu0 0
    %6230 = vmatpush1.bf16.msra.mxu0 0
    %6231 = vmatprep.subr.bf16.mxu0 0
    %6232 = vmatpush1.bf16.msra.mxu0 0
    %6233 = vmatprep.mubr.bf16.mxu0 0
    %6234 = vmatmul.mubr.bf16.gmra.mrb[0].mxu0 0
    %v6235 = vpop.f32.mrb[0].mxu0
    %v6236 = vadd.f32 %v6187, %v6235
    %v6237 = vpop.f32.mrb[0].mxu0
    %v6238 = vpop.f32.mrb[0].mxu0
    %v6239 = vadd.f32 %v6190, %v6238
    %v6240 = vpop.f32.mrb[0].mxu0
    %6241 = vmatprep.mubr.bf16.mxu0 0
    %6242 = vmatmul.mubr.bf16.gmra.mrb[0].mxu0 0
    %v6243 = vpop.f32.mrb[0].mxu0
    %v6244 = vadd.f32 %v6195, %v6243
    %v6245 = vpop.f32.mrb[0].mxu0
    %v6246 = vpop.f32.mrb[0].mxu0
    %v6247 = vadd.f32 %v6198, %v6246
    %v6248 = vpop.f32.mrb[0].mxu0
    %6249 = vdwg.mxu0
    %v6250 = vadd.f32 %v6236, %v6239
    %v6251 = vadd.f32 %v6250, %v6244
    %v6252 = vadd.f32 %v6251, %v6247
    %v6253 = vrot.slane %v6252, 4
    %v6254 = vadd.f32 %v6252, %v6253
    %v6255 = vrot.slane %v6254, 2
    %v6256 = vadd.f32 %v6254, %v6255
    %v6257 = vrot.slane %v6256, 1
    %v6258 = vadd.f32 %v6256, %v6257
    %v6259 = vmul.f32 %v6236, %v6236
    %v6260 = vmul.f32 %v6239, %v6239
    %v6261 = vmul.f32 %v6244, %v6244
    %v6262 = vmul.f32 %v6247, %v6247
    %v6263 = vadd.f32 %v6259, %v6260
    %v6264 = vadd.f32 %v6263, %v6261
    %v6265 = vadd.f32 %v6264, %v6262
    %v6266 = vrot.slane %v6265, 4
    %v6267 = vadd.f32 %v6265, %v6266
    %v6268 = vrot.slane %v6267, 2
    %v6269 = vadd.f32 %v6267, %v6268
    %v6270 = vrot.slane %v6269, 1
    %v6271 = vadd.f32 %v6269, %v6270
    %v6272 = vmul.f32 %v6258, 0.5
    %v6273 = vmul.f32 %v6271, 0.5
    %v6274 = vmul.f32 %v6272, %v6272
    %v6275 = vsub.f32 %v6273, %v6274
    %v6276 = vmax.f32 %v6275, 0.0
    %s6277 = scalar_lea.vmem [#allocation7], 18
    %v6278 = vld [vmem:[%s6277] sm:$0x1]
    %v6279 = vadd.f32 %v6276, 1e-05
    %v6280 = vrsqrt.pop %v6279
    %v6281 = vmul.f32 %v6278, %v6280
    %s6282 = scalar_lea.vmem [#allocation9], 18
    %v6283 = vld [vmem:[%s6282] sm:$0x1]
    %v6284 = vmul.f32 %v6272, %v6281
    %v6285 = vsub.f32 %v6283, %v6284
    %v6287 = vlaneseq
    %v6288 = vshrl.u32 %v6287, 7
    %v6289 = vsub.s32 0, %v6288
    %v6290 = vrot.slane %v6281, %v6289
    %v6292 = vmul.f32 %v6236, %v6290
    %v6293 = vmul.f32 %v6239, %v6290
    %v6294 = vmul.f32 %v6244, %v6290
    %v6295 = vmul.f32 %v6247, %v6290
    %v6297 = vlaneseq
    %v6298 = vshrl.u32 %v6297, 7
    %v6299 = vsub.s32 0, %v6298
    %v6300 = vrot.slane %v6285, %v6299
    %v6302 = vadd.f32 %v6292, %v6300
    %v6303 = vadd.f32 %v6293, %v6300
    %v6304 = vadd.f32 %v6294, %v6300
    %v6305 = vadd.f32 %v6295, %v6300
    %v6306 = vadd.f32 %v6302, %v6120
    %v6307 = vadd.f32 %v6303, %v6121
    %v6308 = vadd.f32 %v6304, %v6122
    %v6309 = vadd.f32 %v6305, %v6123
    %v6310 = vmax.f32 %v6306, 0.0
    %v6311 = vmax.f32 %v6307, 0.0
    %v6312 = vmax.f32 %v6308, 0.0
    %v6313 = vmax.f32 %v6309, 0.0
    %v6314 = vsel %vm5932, %v6310, 0.0
    %v6315 = vsel %vm5933, %v6311, 0.0
    %v6316 = vsel %vm5934, %v6312, 0.0
    %v6317 = vsel %vm5935, %v6313, 0.0
    %v6318 = vpack.c.bf16 %v6315, %v6314
    %v6319 = vpack.c.bf16 %v6317, %v6316
    %s6320 = sshll.u32 %s534, 4
    %6321 = dma.done %s357, %s6320
    %v6322 = vld [vmem:[%s356] sm:$0xff]
    %v6323 = vld [vmem:[%s356 + $0x8] sm:$0xff]
    %v6324 = vld [vmem:[%s356 + $0x10] sm:$0xff]
    %v6325 = vld [vmem:[%s356 + $0x18] sm:$0xff]
    %v6326 = vld [vmem:[%s356 + $0x20] sm:$0xff]
    %v6327 = vld [vmem:[%s356 + $0x28] sm:$0xff]
    %v6328 = vld [vmem:[%s356 + $0x30] sm:$0xff]
    %v6329 = vld [vmem:[%s356 + $0x38] sm:$0xff]
    %v6330 = vld [vmem:[%s356 + $0x40] sm:$0xff]
    %v6331 = vld [vmem:[%s356 + $0x48] sm:$0xff]
    %v6332 = vld [vmem:[%s356 + $0x50] sm:$0xff]
    %v6333 = vld [vmem:[%s356 + $0x58] sm:$0xff]
    %v6334 = vld [vmem:[%s356 + $0x60] sm:$0xff]
    %v6335 = vld [vmem:[%s356 + $0x68] sm:$0xff]
    %v6336 = vld [vmem:[%s356 + $0x70] sm:$0xff]
    %v6337 = vld [vmem:[%s356 + $0x78] sm:$0xff]
    %v6338 = vld [vmem:[%s356 + $0x80] sm:$0xff]
    %v6339 = vld [vmem:[%s356 + $0x88] sm:$0xff]
    %v6340 = vld [vmem:[%s356 + $0x90] sm:$0xff]
    %v6341 = vld [vmem:[%s356 + $0x98] sm:$0xff]
    %v6342 = vld [vmem:[%s356 + $0xa0] sm:$0xff]
    %v6343 = vld [vmem:[%s356 + $0xa8] sm:$0xff]
    %v6344 = vld [vmem:[%s356 + $0xb0] sm:$0xff]
    %v6345 = vld [vmem:[%s356 + $0xb8] sm:$0xff]
    %6346 = vmatprep.subr.bf16.mxu0 0
    %6347 = vmatpush1.bf16.msra.mxu0 %v6322
    %6348 = vmatprep.subr.bf16.mxu0 0
    %6349 = vmatpush1.bf16.msra.mxu0 %v6323
    %6350 = vmatprep.subr.bf16.mxu0 0
    %6351 = vmatpush1.bf16.msra.mxu0 %v6324
    %6352 = vmatprep.subr.bf16.mxu0 0
    %6353 = vmatpush1.bf16.msra.mxu0 %v6325
    %6354 = vmatprep.subr.bf16.mxu0 0
    %6355 = vmatpush1.bf16.msra.mxu0 %v6326
    %6356 = vmatprep.subr.bf16.mxu0 0
    %6357 = vmatpush1.bf16.msra.mxu0 %v6327
    %6358 = vmatprep.subr.bf16.mxu0 0
    %6359 = vmatpush1.bf16.msra.mxu0 %v6328
    %6360 = vmatprep.subr.bf16.mxu0 0
    %6361 = vmatpush1.bf16.msra.mxu0 %v6329
    %6362 = vmatprep.subr.bf16.mxu0 0
    %6363 = vmatpush1.bf16.msra.mxu0 %v6330
    %6364 = vmatprep.subr.bf16.mxu0 0
    %6365 = vmatpush1.bf16.msra.mxu0 %v6331
    %6366 = vmatprep.subr.bf16.mxu0 0
    %6367 = vmatpush1.bf16.msra.mxu0 %v6332
    %6368 = vmatprep.subr.bf16.mxu0 0
    %6369 = vmatpush1.bf16.msra.mxu0 %v6333
    %6370 = vmatprep.subr.bf16.mxu0 0
    %6371 = vmatpush1.bf16.msra.mxu0 %v6334
    %6372 = vmatprep.subr.bf16.mxu0 0
    %6373 = vmatpush1.bf16.msra.mxu0 %v6335
    %6374 = vmatprep.subr.bf16.mxu0 0
    %6375 = vmatpush1.bf16.msra.mxu0 %v6336
    %6376 = vmatprep.subr.bf16.mxu0 0
    %6377 = vmatpush1.bf16.msra.mxu0 %v6337
    %6378 = vmatprep.mubr.bf16.mxu0 %v6318
    %6379 = vmatmul.mubr.bf16.gmra.mrb[0].mxu0 0
    %v6380 = vpop.f32.mrb[0].mxu0
    %v6381 = vadd.f32 0.0, %v6380
    %v6382 = vpop.f32.mrb[0].mxu0
    %v6383 = vpop.f32.mrb[0].mxu0
    %v6384 = vadd.f32 0.0, %v6383
    %v6385 = vpop.f32.mrb[0].mxu0
    %6386 = vmatprep.mubr.bf16.mxu0 %v6319
    %6387 = vmatmul.mubr.bf16.gmra.mrb[0].mxu0 0
    %v6388 = vpop.f32.mrb[0].mxu0
    %v6389 = vadd.f32 0.0, %v6388
    %v6390 = vpop.f32.mrb[0].mxu0
    %v6391 = vpop.f32.mrb[0].mxu0
    %v6392 = vadd.f32 0.0, %v6391
    %v6393 = vpop.f32.mrb[0].mxu0
    %6394 = vdwg.mxu0
    %6395 = vmatprep.subr.bf16.mxu0 0
    %6396 = vmatpush1.bf16.msra.mxu0 %v6338
    %6397 = vmatprep.subr.bf16.mxu0 0
    %6398 = vmatpush1.bf16.msra.mxu0 %v6339
    %6399 = vmatprep.subr.bf16.mxu0 0
    %6400 = vmatpush1.bf16.msra.mxu0 %v6340
    %6401 = vmatprep.subr.bf16.mxu0 0
    %6402 = vmatpush1.bf16.msra.mxu0 %v6341
    %6403 = vmatprep.subr.bf16.mxu0 0
    %6404 = vmatpush1.bf16.msra.mxu0 %v6342
    %6405 = vmatprep.subr.bf16.mxu0 0
    %6406 = vmatpush1.bf16.msra.mxu0 %v6343
    %6407 = vmatprep.subr.bf16.mxu0 0
    %6408 = vmatpush1.bf16.msra.mxu0 %v6344
    %6409 = vmatprep.subr.bf16.mxu0 0
    %6410 = vmatpush1.bf16.msra.mxu0 %v6345
    %6411 = vmatprep.subr.bf16.mxu0 0
    %6412 = vmatpush1.bf16.msra.mxu0 0
    %6413 = vmatprep.subr.bf16.mxu0 0
    %6414 = vmatpush1.bf16.msra.mxu0 0
    %6415 = vmatprep.subr.bf16.mxu0 0
    %6416 = vmatpush1.bf16.msra.mxu0 0
    %6417 = vmatprep.subr.bf16.mxu0 0
    %6418 = vmatpush1.bf16.msra.mxu0 0
    %6419 = vmatprep.subr.bf16.mxu0 0
    %6420 = vmatpush1.bf16.msra.mxu0 0
    %6421 = vmatprep.subr.bf16.mxu0 0
    %6422 = vmatpush1.bf16.msra.mxu0 0
    %6423 = vmatprep.subr.bf16.mxu0 0
    %6424 = vmatpush1.bf16.msra.mxu0 0
    %6425 = vmatprep.subr.bf16.mxu0 0
    %6426 = vmatpush1.bf16.msra.mxu0 0
    %6427 = vmatprep.mubr.bf16.mxu0 0
    %6428 = vmatmul.mubr.bf16.gmra.mrb[0].mxu0 0
    %v6429 = vpop.f32.mrb[0].mxu0
    %v6430 = vadd.f32 %v6381, %v6429
    %v6431 = vpop.f32.mrb[0].mxu0
    %v6432 = vpop.f32.mrb[0].mxu0
    %v6433 = vadd.f32 %v6384, %v6432
    %v6434 = vpop.f32.mrb[0].mxu0
    %6435 = vmatprep.mubr.bf16.mxu0 0
    %6436 = vmatmul.mubr.bf16.gmra.mrb[0].mxu0 0
    %v6437 = vpop.f32.mrb[0].mxu0
    %v6438 = vadd.f32 %v6389, %v6437
    %v6439 = vpop.f32.mrb[0].mxu0
    %v6440 = vpop.f32.mrb[0].mxu0
    %v6441 = vadd.f32 %v6392, %v6440
    %v6442 = vpop.f32.mrb[0].mxu0
    %6443 = vdwg.mxu0
    %v6444 = vadd.f32 %v6430, %v6433
    %v6445 = vadd.f32 %v6444, %v6438
    %v6446 = vadd.f32 %v6445, %v6441
    %v6447 = vrot.slane %v6446, 4
    %v6448 = vadd.f32 %v6446, %v6447
    %v6449 = vrot.slane %v6448, 2
    %v6450 = vadd.f32 %v6448, %v6449
    %v6451 = vrot.slane %v6450, 1
    %v6452 = vadd.f32 %v6450, %v6451
    %v6453 = vmul.f32 %v6430, %v6430
    %v6454 = vmul.f32 %v6433, %v6433
    %v6455 = vmul.f32 %v6438, %v6438
    %v6456 = vmul.f32 %v6441, %v6441
    %v6457 = vadd.f32 %v6453, %v6454
    %v6458 = vadd.f32 %v6457, %v6455
    %v6459 = vadd.f32 %v6458, %v6456
    %v6460 = vrot.slane %v6459, 4
    %v6461 = vadd.f32 %v6459, %v6460
    %v6462 = vrot.slane %v6461, 2
    %v6463 = vadd.f32 %v6461, %v6462
    %v6464 = vrot.slane %v6463, 1
    %v6465 = vadd.f32 %v6463, %v6464
    %v6466 = vmul.f32 %v6452, 0.5
    %v6467 = vmul.f32 %v6465, 0.5
    %v6468 = vmul.f32 %v6466, %v6466
    %v6469 = vsub.f32 %v6467, %v6468
    %v6470 = vmax.f32 %v6469, 0.0
    %s6471 = scalar_lea.vmem [#allocation7], 19
    %v6472 = vld [vmem:[%s6471] sm:$0x1]
    %v6473 = vadd.f32 %v6470, 1e-05
    %v6474 = vrsqrt.pop %v6473
    %v6475 = vmul.f32 %v6472, %v6474
    %s6476 = scalar_lea.vmem [#allocation9], 19
    %v6477 = vld [vmem:[%s6476] sm:$0x1]
    %v6478 = vmul.f32 %v6466, %v6475
    %v6479 = vsub.f32 %v6477, %v6478
    %v6481 = vlaneseq
    %v6482 = vshrl.u32 %v6481, 7
    %v6483 = vsub.s32 0, %v6482
    %v6484 = vrot.slane %v6475, %v6483
    %v6486 = vmul.f32 %v6430, %v6484
    %v6487 = vmul.f32 %v6433, %v6484
    %v6488 = vmul.f32 %v6438, %v6484
    %v6489 = vmul.f32 %v6441, %v6484
    %v6491 = vlaneseq
    %v6492 = vshrl.u32 %v6491, 7
    %v6493 = vsub.s32 0, %v6492
    %v6494 = vrot.slane %v6479, %v6493
    %v6496 = vadd.f32 %v6486, %v6494
    %v6497 = vadd.f32 %v6487, %v6494
    %v6498 = vadd.f32 %v6488, %v6494
    %v6499 = vadd.f32 %v6489, %v6494
    %v6500 = vmax.f32 %v6496, 0.0
    %v6501 = vmax.f32 %v6497, 0.0
    %v6502 = vmax.f32 %v6498, 0.0
    %v6503 = vmax.f32 %v6499, 0.0
    %v6504 = vsel %vm5932, %v6500, 0.0
    %v6505 = vsel %vm5933, %v6501, 0.0
    %v6506 = vsel %vm5934, %v6502, 0.0
    %v6507 = vsel %vm5935, %v6503, 0.0
    %v6508 = vpack.c.bf16 %v6505, %v6504
    %v6509 = vpack.c.bf16 %v6507, %v6506
    %s6510 = sshll.u32 %s534, 4
    %6511 = dma.done %s371, %s6510
    %v6512 = vld [vmem:[%s370] sm:$0xff]
    %v6513 = vld [vmem:[%s370 + $0x8] sm:$0xff]
    %v6514 = vld [vmem:[%s370 + $0x10] sm:$0xff]
    %v6515 = vld [vmem:[%s370 + $0x18] sm:$0xff]
    %v6516 = vld [vmem:[%s370 + $0x20] sm:$0xff]
    %v6517 = vld [vmem:[%s370 + $0x28] sm:$0xff]
    %v6518 = vld [vmem:[%s370 + $0x30] sm:$0xff]
    %v6519 = vld [vmem:[%s370 + $0x38] sm:$0xff]
    %v6520 = vld [vmem:[%s370 + $0x40] sm:$0xff]
    %v6521 = vld [vmem:[%s370 + $0x48] sm:$0xff]
    %v6522 = vld [vmem:[%s370 + $0x50] sm:$0xff]
    %v6523 = vld [vmem:[%s370 + $0x58] sm:$0xff]
    %v6524 = vld [vmem:[%s370 + $0x60] sm:$0xff]
    %v6525 = vld [vmem:[%s370 + $0x68] sm:$0xff]
    %v6526 = vld [vmem:[%s370 + $0x70] sm:$0xff]
    %v6527 = vld [vmem:[%s370 + $0x78] sm:$0xff]
    %v6528 = vld [vmem:[%s370 + $0x80] sm:$0xff]
    %v6529 = vld [vmem:[%s370 + $0x88] sm:$0xff]
    %v6530 = vld [vmem:[%s370 + $0x90] sm:$0xff]
    %v6531 = vld [vmem:[%s370 + $0x98] sm:$0xff]
    %v6532 = vld [vmem:[%s370 + $0xa0] sm:$0xff]
    %v6533 = vld [vmem:[%s370 + $0xa8] sm:$0xff]
    %v6534 = vld [vmem:[%s370 + $0xb0] sm:$0xff]
    %v6535 = vld [vmem:[%s370 + $0xb8] sm:$0xff]
    %6536 = vmatprep.subr.bf16.mxu0 0
    %6537 = vmatpush1.bf16.msra.mxu0 %v6512
    %6538 = vmatprep.subr.bf16.mxu0 0
    %6539 = vmatpush1.bf16.msra.mxu0 %v6513
    %6540 = vmatprep.subr.bf16.mxu0 0
    %6541 = vmatpush1.bf16.msra.mxu0 %v6514
    %6542 = vmatprep.subr.bf16.mxu0 0
    %6543 = vmatpush1.bf16.msra.mxu0 %v6515
    %6544 = vmatprep.subr.bf16.mxu0 0
    %6545 = vmatpush1.bf16.msra.mxu0 %v6516
    %6546 = vmatprep.subr.bf16.mxu0 0
    %6547 = vmatpush1.bf16.msra.mxu0 %v6517
    %6548 = vmatprep.subr.bf16.mxu0 0
    %6549 = vmatpush1.bf16.msra.mxu0 %v6518
    %6550 = vmatprep.subr.bf16.mxu0 0
    %6551 = vmatpush1.bf16.msra.mxu0 %v6519
    %6552 = vmatprep.subr.bf16.mxu0 0
    %6553 = vmatpush1.bf16.msra.mxu0 %v6520
    %6554 = vmatprep.subr.bf16.mxu0 0
    %6555 = vmatpush1.bf16.msra.mxu0 %v6521
    %6556 = vmatprep.subr.bf16.mxu0 0
    %6557 = vmatpush1.bf16.msra.mxu0 %v6522
    %6558 = vmatprep.subr.bf16.mxu0 0
    %6559 = vmatpush1.bf16.msra.mxu0 %v6523
    %6560 = vmatprep.subr.bf16.mxu0 0
    %6561 = vmatpush1.bf16.msra.mxu0 %v6524
    %6562 = vmatprep.subr.bf16.mxu0 0
    %6563 = vmatpush1.bf16.msra.mxu0 %v6525
    %6564 = vmatprep.subr.bf16.mxu0 0
    %6565 = vmatpush1.bf16.msra.mxu0 %v6526
    %6566 = vmatprep.subr.bf16.mxu0 0
    %6567 = vmatpush1.bf16.msra.mxu0 %v6527
    %6568 = vmatprep.mubr.bf16.mxu0 %v6508
    %6569 = vmatmul.mubr.bf16.gmra.mrb[0].mxu0 0
    %v6570 = vpop.f32.mrb[0].mxu0
    %v6571 = vadd.f32 0.0, %v6570
    %v6572 = vpop.f32.mrb[0].mxu0
    %v6573 = vpop.f32.mrb[0].mxu0
    %v6574 = vadd.f32 0.0, %v6573
    %v6575 = vpop.f32.mrb[0].mxu0
    %6576 = vmatprep.mubr.bf16.mxu0 %v6509
    %6577 = vmatmul.mubr.bf16.gmra.mrb[0].mxu0 0
    %v6578 = vpop.f32.mrb[0].mxu0
    %v6579 = vadd.f32 0.0, %v6578
    %v6580 = vpop.f32.mrb[0].mxu0
    %v6581 = vpop.f32.mrb[0].mxu0
    %v6582 = vadd.f32 0.0, %v6581
    %v6583 = vpop.f32.mrb[0].mxu0
    %6584 = vdwg.mxu0
    %6585 = vmatprep.subr.bf16.mxu0 0
    %6586 = vmatpush1.bf16.msra.mxu0 %v6528
    %6587 = vmatprep.subr.bf16.mxu0 0
    %6588 = vmatpush1.bf16.msra.mxu0 %v6529
    %6589 = vmatprep.subr.bf16.mxu0 0
    %6590 = vmatpush1.bf16.msra.mxu0 %v6530
    %6591 = vmatprep.subr.bf16.mxu0 0
    %6592 = vmatpush1.bf16.msra.mxu0 %v6531
    %6593 = vmatprep.subr.bf16.mxu0 0
    %6594 = vmatpush1.bf16.msra.mxu0 %v6532
    %6595 = vmatprep.subr.bf16.mxu0 0
    %6596 = vmatpush1.bf16.msra.mxu0 %v6533
    %6597 = vmatprep.subr.bf16.mxu0 0
    %6598 = vmatpush1.bf16.msra.mxu0 %v6534
    %6599 = vmatprep.subr.bf16.mxu0 0
    %6600 = vmatpush1.bf16.msra.mxu0 %v6535
    %6601 = vmatprep.subr.bf16.mxu0 0
    %6602 = vmatpush1.bf16.msra.mxu0 0
    %6603 = vmatprep.subr.bf16.mxu0 0
    %6604 = vmatpush1.bf16.msra.mxu0 0
    %6605 = vmatprep.subr.bf16.mxu0 0
    %6606 = vmatpush1.bf16.msra.mxu0 0
    %6607 = vmatprep.subr.bf16.mxu0 0
    %6608 = vmatpush1.bf16.msra.mxu0 0
    %6609 = vmatprep.subr.bf16.mxu0 0
    %6610 = vmatpush1.bf16.msra.mxu0 0
    %6611 = vmatprep.subr.bf16.mxu0 0
    %6612 = vmatpush1.bf16.msra.mxu0 0
    %6613 = vmatprep.subr.bf16.mxu0 0
    %6614 = vmatpush1.bf16.msra.mxu0 0
    %6615 = vmatprep.subr.bf16.mxu0 0
    %6616 = vmatpush1.bf16.msra.mxu0 0
    %6617 = vmatprep.mubr.bf16.mxu0 0
    %6618 = vmatmul.mubr.bf16.gmra.mrb[0].mxu0 0
    %v6619 = vpop.f32.mrb[0].mxu0
    %v6620 = vadd.f32 %v6571, %v6619
    %v6621 = vpop.f32.mrb[0].mxu0
    %v6622 = vpop.f32.mrb[0].mxu0
    %v6623 = vadd.f32 %v6574, %v6622
    %v6624 = vpop.f32.mrb[0].mxu0
    %6625 = vmatprep.mubr.bf16.mxu0 0
    %6626 = vmatmul.mubr.bf16.gmra.mrb[0].mxu0 0
    %v6627 = vpop.f32.mrb[0].mxu0
    %v6628 = vadd.f32 %v6579, %v6627
    %v6629 = vpop.f32.mrb[0].mxu0
    %v6630 = vpop.f32.mrb[0].mxu0
    %v6631 = vadd.f32 %v6582, %v6630
    %v6632 = vpop.f32.mrb[0].mxu0
    %6633 = vdwg.mxu0
    %v6634 = vadd.f32 %v6620, %v6623
    %v6635 = vadd.f32 %v6634, %v6628
    %v6636 = vadd.f32 %v6635, %v6631
    %v6637 = vrot.slane %v6636, 4
    %v6638 = vadd.f32 %v6636, %v6637
    %v6639 = vrot.slane %v6638, 2
    %v6640 = vadd.f32 %v6638, %v6639
    %v6641 = vrot.slane %v6640, 1
    %v6642 = vadd.f32 %v6640, %v6641
    %v6643 = vmul.f32 %v6620, %v6620
    %v6644 = vmul.f32 %v6623, %v6623
    %v6645 = vmul.f32 %v6628, %v6628
    %v6646 = vmul.f32 %v6631, %v6631
    %v6647 = vadd.f32 %v6643, %v6644
    %v6648 = vadd.f32 %v6647, %v6645
    %v6649 = vadd.f32 %v6648, %v6646
    %v6650 = vrot.slane %v6649, 4
    %v6651 = vadd.f32 %v6649, %v6650
    %v6652 = vrot.slane %v6651, 2
    %v6653 = vadd.f32 %v6651, %v6652
    %v6654 = vrot.slane %v6653, 1
    %v6655 = vadd.f32 %v6653, %v6654
    %v6656 = vmul.f32 %v6642, 0.5
    %v6657 = vmul.f32 %v6655, 0.5
    %v6658 = vmul.f32 %v6656, %v6656
    %v6659 = vsub.f32 %v6657, %v6658
    %v6660 = vmax.f32 %v6659, 0.0
    %s6661 = scalar_lea.vmem [#allocation7], 20
    %v6662 = vld [vmem:[%s6661] sm:$0x1]
    %v6663 = vadd.f32 %v6660, 1e-05
    %v6664 = vrsqrt.pop %v6663
    %v6665 = vmul.f32 %v6662, %v6664
    %s6666 = scalar_lea.vmem [#allocation9], 20
    %v6667 = vld [vmem:[%s6666] sm:$0x1]
    %v6668 = vmul.f32 %v6656, %v6665
    %v6669 = vsub.f32 %v6667, %v6668
    %v6671 = vlaneseq
    %v6672 = vshrl.u32 %v6671, 7
    %v6673 = vsub.s32 0, %v6672
    %v6674 = vrot.slane %v6665, %v6673
    %v6676 = vmul.f32 %v6620, %v6674
    %v6677 = vmul.f32 %v6623, %v6674
    %v6678 = vmul.f32 %v6628, %v6674
    %v6679 = vmul.f32 %v6631, %v6674
    %v6681 = vlaneseq
    %v6682 = vshrl.u32 %v6681, 7
    %v6683 = vsub.s32 0, %v6682
    %v6684 = vrot.slane %v6669, %v6683
    %v6686 = vadd.f32 %v6676, %v6684
    %v6687 = vadd.f32 %v6677, %v6684
    %v6688 = vadd.f32 %v6678, %v6684
    %v6689 = vadd.f32 %v6679, %v6684
    %v6690 = vadd.f32 %v6686, %v6314
    %v6691 = vadd.f32 %v6687, %v6315
    %v6692 = vadd.f32 %v6688, %v6316
    %v6693 = vadd.f32 %v6689, %v6317
    %v6694 = vmax.f32 %v6690, 0.0
    %v6695 = vmax.f32 %v6691, 0.0
    %v6696 = vmax.f32 %v6692, 0.0
    %v6697 = vmax.f32 %v6693, 0.0
    %v6698 = vsel %vm5932, %v6694, 0.0
    %v6699 = vsel %vm5933, %v6695, 0.0
    %v6700 = vsel %vm5934, %v6696, 0.0
    %v6701 = vsel %vm5935, %v6697, 0.0
    %v6702 = vpack.c.bf16 %v6699, %v6698
    %v6703 = vpack.c.bf16 %v6701, %v6700
    %v6704 = vld [vmem:[#allocation10] sm:$0xf]
    %v6705 = vld [vmem:[#allocation10 + $0x4] sm:$0xf]
    %v6706 = vld [vmem:[#allocation10 + $0x8] sm:$0xf]
    %v6707 = vld [vmem:[#allocation10 + $0xc] sm:$0xf]
    %v6708 = vld [vmem:[#allocation10 + $0x10] sm:$0xf]
    %v6709 = vld [vmem:[#allocation10 + $0x14] sm:$0xf]
    %v6710 = vld [vmem:[#allocation10 + $0x18] sm:$0xf]
    %v6711 = vld [vmem:[#allocation10 + $0x1c] sm:$0xf]
    %v6712 = vld [vmem:[#allocation10 + $0x20] sm:$0xf]
    %v6713 = vld [vmem:[#allocation10 + $0x24] sm:$0xf]
    %v6714 = vld [vmem:[#allocation10 + $0x28] sm:$0xf]
    %v6715 = vld [vmem:[#allocation10 + $0x2c] sm:$0xf]
    %v6716 = vld [vmem:[#allocation10 + $0x30] sm:$0xf]
    %v6717 = vld [vmem:[#allocation10 + $0x34] sm:$0xf]
    %v6718 = vld [vmem:[#allocation10 + $0x38] sm:$0xf]
    %v6719 = vld [vmem:[#allocation10 + $0x3c] sm:$0xf]
    %v6720 = vld [vmem:[#allocation12] sm:$0x1]
    %v6722 = vlaneseq
    %v6723 = vshrl.u32 %v6722, 7
    %v6724 = vsub.s32 0, %v6723
    %v6725 = vrot.slane %v6720, %v6724
    %v6743 = vunpack.c.l.b16 %v6704
    %v6744 = vunpack.c.l.b16 %v6705
    %v6745 = vunpack.c.l.b16 %v6706
    %v6746 = vunpack.c.l.b16 %v6707
    %v6747 = vunpack.c.l.b16 %v6708
    %v6748 = vunpack.c.l.b16 %v6709
    %v6749 = vunpack.c.l.b16 %v6710
    %v6750 = vunpack.c.l.b16 %v6711
    %v6751 = vunpack.c.l.b16 %v6712
    %v6752 = vunpack.c.l.b16 %v6713
    %v6753 = vunpack.c.l.b16 %v6714
    %v6754 = vunpack.c.l.b16 %v6715
    %v6755 = vunpack.c.l.b16 %v6716
    %v6756 = vunpack.c.l.b16 %v6717
    %v6757 = vunpack.c.l.b16 %v6718
    %v6758 = vunpack.c.l.b16 %v6719
    %v6759 = vpack.c.b16 %v6744, %v6743
    %v6760 = vpack.c.b16 %v6746, %v6745
    %v6761 = vpack.c.b16 %v6748, %v6747
    %v6762 = vpack.c.b16 %v6750, %v6749
    %v6763 = vpack.c.b16 %v6752, %v6751
    %v6764 = vpack.c.b16 %v6754, %v6753
    %v6765 = vpack.c.b16 %v6756, %v6755
    %v6766 = vpack.c.b16 %v6758, %v6757
    %6775 = vmatprep.subr.bf16.mxu0 0
    %6776 = vmatpush1.bf16.msra.mxu0 %v6759
    %6777 = vmatprep.subr.bf16.mxu0 0
    %6778 = vmatpush1.bf16.msra.mxu0 %v6760
    %6779 = vmatprep.subr.bf16.mxu0 0
    %6780 = vmatpush1.bf16.msra.mxu0 %v6761
    %6781 = vmatprep.subr.bf16.mxu0 0
    %6782 = vmatpush1.bf16.msra.mxu0 %v6762
    %6783 = vmatprep.subr.bf16.mxu0 0
    %6784 = vmatpush1.bf16.msra.mxu0 %v6763
    %6785 = vmatprep.subr.bf16.mxu0 0
    %6786 = vmatpush1.bf16.msra.mxu0 %v6764
    %6787 = vmatprep.subr.bf16.mxu0 0
    %6788 = vmatpush1.bf16.msra.mxu0 %v6765
    %6789 = vmatprep.subr.bf16.mxu0 0
    %6790 = vmatpush1.bf16.msra.mxu0 %v6766
    %6791 = vmatprep.subr.bf16.mxu0 0
    %6792 = vmatpush1.bf16.msra.mxu0 0
    %6793 = vmatprep.subr.bf16.mxu0 0
    %6794 = vmatpush1.bf16.msra.mxu0 0
    %6795 = vmatprep.subr.bf16.mxu0 0
    %6796 = vmatpush1.bf16.msra.mxu0 0
    %6797 = vmatprep.subr.bf16.mxu0 0
    %6798 = vmatpush1.bf16.msra.mxu0 0
    %6799 = vmatprep.subr.bf16.mxu0 0
    %6800 = vmatpush1.bf16.msra.mxu0 0
    %6801 = vmatprep.subr.bf16.mxu0 0
    %6802 = vmatpush1.bf16.msra.mxu0 0
    %6803 = vmatprep.subr.bf16.mxu0 0
    %6804 = vmatpush1.bf16.msra.mxu0 0
    %6805 = vmatprep.subr.bf16.mxu0 0
    %6806 = vmatpush1.bf16.msra.mxu0 0
    %6807 = vmatprep.mubr.bf16.mxu0 0
    %6808 = vmatmul.mubr.bf16.gmra.mrb[0].mxu0 %v6702
    %v6809 = vpop.f32.mrb[0].mxu0
    %v6810 = vadd.f32 %v6725, %v6809
    %v6811 = vpop.f32.mrb[0].mxu0
    %v6812 = vpop.f32.mrb[0].mxu0
    %v6813 = vadd.f32 %v6725, %v6812
    %v6814 = vpop.f32.mrb[0].mxu0
    %6815 = vmatprep.mubr.bf16.mxu0 0
    %6816 = vmatmul.mubr.bf16.gmra.mrb[0].mxu0 %v6703
    %v6817 = vpop.f32.mrb[0].mxu0
    %v6818 = vadd.f32 %v6725, %v6817
    %v6819 = vpop.f32.mrb[0].mxu0
    %v6820 = vpop.f32.mrb[0].mxu0
    %v6821 = vadd.f32 %v6725, %v6820
    %v6822 = vpop.f32.mrb[0].mxu0
    %6823 = vdwg.mxu0
    %v6824 = vlaneseq
    %v6825 = vand.u32 %v6824, 127
    %vm6826 = vcmp.ge.s32.totalorder %v6825, 3
    %v6827 = vmax.f32 %v6810, 0.0
    %v6828 = vmax.f32 %v6813, 0.0
    %v6829 = vmax.f32 %v6818, 0.0
    %v6830 = vmax.f32 %v6821, 0.0
    %v6831 = vsel %vm6826, %v6827, %v6810
    %v6832 = vsel %vm6826, %v6828, %v6813
    %v6833 = vsel %vm6826, %v6829, %v6818
    %v6834 = vsel %vm6826, %v6830, %v6821
    %6835 = vst [vmem:[#allocation13] sm:$0xff] %v6831
    %6836 = vst [vmem:[#allocation13 + $0x8] sm:$0xff] %v6832
    %6837 = vst [vmem:[#allocation13 + $0x10] sm:$0xff] %v6833
    %6838 = vst [vmem:[#allocation13 + $0x18] sm:$0xff] %v6834
    // Predicated region
    $region130: #{tpu_custom_call.1} parent=1 // pred_check
      _
    $region131: #{tpu_custom_call.1} parent=1 // pred_check_branch
      %6840 = sbr.rel (0) target = $region133
    $region132: #{tpu_custom_call.1} parent=1 // pred_region
      %s6842 = ssub.s32 512, 512
      %6843 = vsyncadd [#allocation6], %s6842
      %s6844 = sshll.u32 [#allocation13], 4
      %s6845 = int_to_ptr.vmem [resolvable:$true] %s6844
      %6850 = dma.vmem_to_hbm [thread:$0]  %s6845, 512, %s7, [#allocation6], 128, 128, 8
    $region133: #{tpu_custom_call.1} parent=1 // pred_fallthru
      _
    // Predicated region
    $region134: #{tpu_custom_call.1} parent=1 // pred_check
      _
    $region135: #{tpu_custom_call.1} parent=1 // pred_check_branch
      %6852 = sbr.rel (0) target = $region137
    $region136: #{tpu_custom_call.1} parent=1 // pred_region
      %6853 = dma.done [#allocation6], 512
    $region137: #{tpu_custom_call.1} parent=1 // pred_fallthru
      _
    %6854 = vsyncpa [#allocation5], 1
    %6855 = vsyncpa [#allocation8], 1
    %6856 = vsyncpa [#allocation11], 1
    %6857 = vsyncpa [#allocation6], 1
  %6858 = vsyncmov [#allocation3]
  %s6859 = vpop.sfrf %6858
  %p6860 = scmp.eq.s32.totalorder %s6859, 0
  %p6861 = pneg %p6860
  %6863 = shalt.err (%p6861)
  %s6864 = scalar_lea.sflag [#allocation3], 1
  %6865 = vsyncmov %s6864
  %s6866 = vpop.sfrf %6865
  %p6867 = scmp.eq.s32.totalorder %s6866, 0
  %p6868 = pneg %p6867
  %6870 = shalt.err (%p6868)
  %s6871 = scalar_lea.sflag [#allocation3], 2
  %6872 = vsyncmov %s6871
  %s6873 = vpop.sfrf %6872
  %p6874 = scmp.eq.s32.totalorder %s6873, 0
  %p6875 = pneg %p6874
  %6877 = shalt.err (%p6875)
  %s6878 = scalar_lea.sflag [#allocation3], 3
  %6879 = vsyncmov %s6878
  %s6880 = vpop.sfrf %6879
  %p6881 = scmp.eq.s32.totalorder %s6880, 0
  %p6882 = pneg %p6881
  %6884 = shalt.err (%p6882)
  %s6885 = scalar_lea.sflag [#allocation3], 4
  %6886 = vsyncmov %s6885
  %s6887 = vpop.sfrf %6886
  %p6888 = scmp.eq.s32.totalorder %s6887, 0
  %p6889 = pneg %p6888
  %6891 = shalt.err (%p6889)
  %s6892 = scalar_lea.sflag [#allocation3], 5
  %6893 = vsyncmov %s6892
  %s6894 = vpop.sfrf %6893
  %p6895 = scmp.eq.s32.totalorder %s6894, 0
  %p6896 = pneg %p6895
  %6898 = shalt.err (%p6896)
  %s6899 = scalar_lea.sflag [#allocation3], 6
  %6900 = vsyncmov %s6899
  %s6901 = vpop.sfrf %6900
  %p6902 = scmp.eq.s32.totalorder %s6901, 0
  %p6903 = pneg %p6902
  %6905 = shalt.err (%p6903)
  %s6906 = scalar_lea.sflag [#allocation3], 7
  %6907 = vsyncmov %s6906
  %s6908 = vpop.sfrf %6907
  %p6909 = scmp.eq.s32.totalorder %s6908, 0
  %p6910 = pneg %p6909
  %6912 = shalt.err (%p6910)
  %s6913 = scalar_lea.sflag [#allocation3], 8
  %6914 = vsyncmov %s6913
  %s6915 = vpop.sfrf %6914
  %p6916 = scmp.eq.s32.totalorder %s6915, 0
  %p6917 = pneg %p6916
  %6919 = shalt.err (%p6917)
  %s6920 = scalar_lea.sflag [#allocation3], 9
  %6921 = vsyncmov %s6920
  %s6922 = vpop.sfrf %6921
  %p6923 = scmp.eq.s32.totalorder %s6922, 0
  %p6924 = pneg %p6923
  %6926 = shalt.err (%p6924)
  %s6927 = scalar_lea.sflag [#allocation3], 10
  %6928 = vsyncmov %s6927
  %s6929 = vpop.sfrf %6928
  %p6930 = scmp.eq.s32.totalorder %s6929, 0
  %p6931 = pneg %p6930
  %6933 = shalt.err (%p6931)
  %s6934 = scalar_lea.sflag [#allocation3], 11
  %6935 = vsyncmov %s6934
  %s6936 = vpop.sfrf %6935
  %p6937 = scmp.eq.s32.totalorder %s6936, 0
  %p6938 = pneg %p6937
  %6940 = shalt.err (%p6938)
  %s6941 = scalar_lea.sflag [#allocation3], 12
  %6942 = vsyncmov %s6941
  %s6943 = vpop.sfrf %6942
  %p6944 = scmp.eq.s32.totalorder %s6943, 0
  %p6945 = pneg %p6944
  %6947 = shalt.err (%p6945)
  %s6948 = scalar_lea.sflag [#allocation3], 13
  %6949 = vsyncmov %s6948
  %s6950 = vpop.sfrf %6949
  %p6951 = scmp.eq.s32.totalorder %s6950, 0
  %p6952 = pneg %p6951
  %6954 = shalt.err (%p6952)
  %s6955 = scalar_lea.sflag [#allocation3], 14
  %6956 = vsyncmov %s6955
  %s6957 = vpop.sfrf %6956
  %p6958 = scmp.eq.s32.totalorder %s6957, 0
  %p6959 = pneg %p6958
  %6961 = shalt.err (%p6959)
  %s6962 = scalar_lea.sflag [#allocation3], 15
  %6963 = vsyncmov %s6962
  %s6964 = vpop.sfrf %6963
  %p6965 = scmp.eq.s32.totalorder %s6964, 0
  %p6966 = pneg %p6965
  %6968 = shalt.err (%p6966)
  %s6969 = scalar_lea.sflag [#allocation3], 16
  %6970 = vsyncmov %s6969
  %s6971 = vpop.sfrf %6970
  %p6972 = scmp.eq.s32.totalorder %s6971, 0
  %p6973 = pneg %p6972
  %6975 = shalt.err (%p6973)
  %s6976 = scalar_lea.sflag [#allocation3], 17
  %6977 = vsyncmov %s6976
  %s6978 = vpop.sfrf %6977
  %p6979 = scmp.eq.s32.totalorder %s6978, 0
  %p6980 = pneg %p6979
  %6982 = shalt.err (%p6980)
  %s6983 = scalar_lea.sflag [#allocation3], 18
  %6984 = vsyncmov %s6983
  %s6985 = vpop.sfrf %6984
  %p6986 = scmp.eq.s32.totalorder %s6985, 0
  %p6987 = pneg %p6986
  %6989 = shalt.err (%p6987)
  %s6990 = scalar_lea.sflag [#allocation3], 19
  %6991 = vsyncmov %s6990
  %s6992 = vpop.sfrf %6991
  %p6993 = scmp.eq.s32.totalorder %s6992, 0
  %p6994 = pneg %p6993
  %6996 = shalt.err (%p6994)
  %s6997 = scalar_lea.sflag [#allocation3], 20
  %6998 = vsyncmov %s6997
  %s6999 = vpop.sfrf %6998
  %p7000 = scmp.eq.s32.totalorder %s6999, 0
  %p7001 = pneg %p7000
  %7003 = shalt.err (%p7001)

</llo_original>
